<compile_context>
chip_gen: v5e
topology: v5e:2x2
jax: 0.10.0
libtpu: 0.0.40
codegen_flags: <defaults>
</compile_context>

<pallas_src>
import jax
import jax.numpy as jnp
from jax.experimental import pallas as pl
from jax.experimental.pallas import tpu as pltpu

INPUT_DIM = 10
PADDED_INPUT_DIM = 16          # pad K of the first matmul to a multiple of 8
HIDDEN_DIM = 512
ENC_DIM = HIDDEN_DIM // 2      # 256
FUSED_DIM = HIDDEN_DIM + ENC_DIM   # 768: [0:512] decoder branch, [512:768] rooms branch
OUTPUT_DIM = 1024
ROOMS_DIM = 64
ROOMS_PADDED = 128             # lane-dense store width; sliced to 64 in wrapper
BATCH = 8
BN_EPS = 1e-5


# ----------------------------------------------------------------------------- kernel
def design_generator_kernel(
    x_ref,
    w1_ref, b1_ref,            # encoder Linear(16pad, 512)   (BN1 folded into w2/b2)
    w2_ref, b2_ref,            # encoder Linear(512, 256)     (BN2 folded into w35/b35)
    w35_ref, b35_ref,          # fused Linear(256, 768) = [decoder Linear3 | rooms Linear5]
    w4_ref, b4_ref,            # decoder Linear(512, 1024) -> tanh (BN3 folded in)
    w6_ref, b6_ref,            # rooms   Linear(256, 128)
    w7_ref, b7_ref,            # rooms   Linear(128, 128pad) (cols >= 64 are zero)
    layout_ref, rooms_ref,
):
    f32 = jnp.float32
    bf16 = jnp.bfloat16

    # bf16 activations straight to the MXU against the bf16 weights; the MXU
    # accumulates in f32 (preferred_element_type).  No in-kernel weight upcast.
    def layer(a, w_ref, b_ref, relu=True):
        y = jnp.dot(a.astype(bf16), w_ref[...], preferred_element_type=f32) + b_ref[...]
        return jnp.maximum(y, 0.0) if relu else y

    # ---------------- encoder ---------------- (Dropout(0.2): identity in eval)
    h = layer(x_ref[...], w1_ref, b1_ref)         # ReLU; BN1 folded downstream
    encoded = layer(h, w2_ref, b2_ref)            # ReLU; BN2 folded downstream

    # One fused matmul for decoder-Linear3 and rooms-Linear5 (both read `encoded`).
    dr = layer(encoded, w35_ref, b35_ref)         # (tb, 768), already ReLU'd
    d = dr[:, :HIDDEN_DIM]                        # decoder branch (tb, 512); 512 is lane-aligned
    r = dr[:, HIDDEN_DIM:]                        # rooms branch   (tb, 256)

    # ---------------- decoder ----------------
    layout_ref[...] = jnp.tanh(layer(d, w4_ref, b4_ref, relu=False))

    # ------------- room generator -------------
    r = layer(r, w6_ref, b6_ref)
    rooms_ref[...] = layer(r, w7_ref, b7_ref, relu=False)   # (tb, 128), cols 64+ are zero


# ----------------------------------------------------------------------------- wrapper
def _build_specs(tb, kparams, single_buffer_weights):
    def batch_spec(cols):
        return pl.BlockSpec((tb, cols), lambda i: (i, 0))

    if single_buffer_weights:
        # Constant index_map => the block never changes; a second pipeline
        # buffer is dead VMEM, so request single-buffering.
        def resident_spec(shape):
            return pl.BlockSpec(shape, lambda i: (0, 0), pipeline_mode=pl.Buffered(1))
    else:
        def resident_spec(shape):
            return pl.BlockSpec(shape, lambda i: (0, 0))

    in_specs = [batch_spec(PADDED_INPUT_DIM)] + [resident_spec(p.shape) for p in kparams]
    out_specs = (batch_spec(OUTPUT_DIM), batch_spec(ROOMS_PADDED))
    return in_specs, out_specs


def design_generator(x, kparams, *, batch_tile=512):
    """x: (B, INPUT_DIM) f32 -> (layout (B, OUTPUT_DIM), rooms (B, ROOMS_DIM))."""
    B, k = x.shape
    assert k == INPUT_DIM
    xp = jnp.pad(x.astype(jnp.float32), ((0, 0), (0, PADDED_INPUT_DIM - k)))

    # Batch tile: multiple of 8 sublanes, up to 512 rows per grid step.
    tb = min(batch_tile, B)
    tb = max(8, ((tb + 7) // 8) * 8)
    Bp = ((B + tb - 1) // tb) * tb
    if Bp != B:
        xp = jnp.pad(xp, ((0, Bp - B), (0, 0)))
    grid = (Bp // tb,)

    def run(single_buffer_weights):
        in_specs, out_specs = _build_specs(tb, kparams, single_buffer_weights)
        return pl.pallas_call(
            design_generator_kernel,
            out_shape=(
                jax.ShapeDtypeStruct((Bp, OUTPUT_DIM), jnp.float32),
                jax.ShapeDtypeStruct((Bp, ROOMS_PADDED), jnp.float32),
            ),
            grid=grid,
            in_specs=in_specs,
            out_specs=out_specs,
            compiler_params=pltpu.CompilerParams(dimension_semantics=("parallel",)),
        )(xp, *kparams)

    try:
        layout, rooms_padded = run(single_buffer_weights=True)
    except Exception:
        # Fallback if this jax/backend combination rejects pl.Buffered(1) on a
        # top-level pallas_call BlockSpec; semantics are identical.
        layout, rooms_padded = run(single_buffer_weights=False)

    return layout[:B], rooms_padded[:B, :ROOMS_DIM]


# ----------------------------------------------------------------------------- params
def _linear(key, fan_in, fan_out):
    kw, kb = jax.random.split(key)
    bound = 1.0 / jnp.sqrt(jnp.float32(fan_in))
    w = jax.random.uniform(kw, (fan_in, fan_out), jnp.float32, -bound, bound)
    b = jax.random.uniform(kb, (1, fan_out), jnp.float32, -bound, bound)
    return w, b


def _batchnorm(key, dim):
    # Eval-mode BatchNorm1d with (deterministically randomized) running stats,
    # expressed directly as a per-feature affine: y = x * scale + shift.
    kg, kb, km, kv = jax.random.split(key, 4)
    gamma = 1.0 + 0.1 * jax.random.normal(kg, (1, dim), jnp.float32)
    beta = 0.1 * jax.random.normal(kb, (1, dim), jnp.float32)
    running_mean = 0.1 * jax.random.normal(km, (1, dim), jnp.float32)
    running_var = 1.0 + 0.1 * jax.random.uniform(kv, (1, dim), jnp.float32)
    scale = gamma * jax.lax.rsqrt(running_var + BN_EPS)
    shift = beta - running_mean * scale
    return scale, shift


def init_raw_params(key):
    """PyTorch-layout parameters of the original module (BN as eval affine)."""
    keys = jax.random.split(key, 10)
    w1, b1 = _linear(keys[0], INPUT_DIM, HIDDEN_DIM)
    s1, t1 = _batchnorm(keys[1], HIDDEN_DIM)
    w2, b2 = _linear(keys[2], HIDDEN_DIM, ENC_DIM)
    s2, t2 = _batchnorm(keys[3], ENC_DIM)
    w3, b3 = _linear(keys[4], ENC_DIM, HIDDEN_DIM)
    s3, t3 = _batchnorm(keys[5], HIDDEN_DIM)
    w4, b4 = _linear(keys[6], HIDDEN_DIM, OUTPUT_DIM)
    w5, b5 = _linear(keys[7], ENC_DIM, 256)
    w6, b6 = _linear(keys[8], 256, 128)
    w7, b7 = _linear(keys[9], 128, ROOMS_DIM)
    return (w1, b1, s1, t1, w2, b2, s2, t2, w3, b3, s3, t3,
            w4, b4, w5, b5, w6, b6, w7, b7)


def fold_params(raw):
    """Fold eval BN affines into the following Linear; fuse w3/w5; pad; cast to bf16."""
    (w1, b1, s1, t1, w2, b2, s2, t2, w3, b3, s3, t3,
     w4, b4, w5, b5, w6, b6, w7, b7) = raw

    # (relu_out * s + t) @ W + b  ==  relu_out @ (s^T * W) + (t @ W + b)
    w2f, b2f = s1.reshape(-1, 1) * w2, t1 @ w2 + b2          # BN1 -> Linear2
    w3f, b3f = s2.reshape(-1, 1) * w3, t2 @ w3 + b3          # BN2 -> decoder Linear3
    w5f, b5f = s2.reshape(-1, 1) * w5, t2 @ w5 + b5          # BN2 -> rooms Linear5
    w4f, b4f = s3.reshape(-1, 1) * w4, t3 @ w4 + b4          # BN3 -> Linear4

    # Fuse the two matmuls that both read `encoded` into one (256, 768) weight.
    w35 = jnp.concatenate([w3f, w5f], axis=1)
    b35 = jnp.concatenate([b3f, b5f], axis=1)

    # Pad first matmul's K (10 -> 16) and rooms output N (64 -> 128) with zeros.
    w1p = jnp.pad(w1, ((0, PADDED_INPUT_DIM - INPUT_DIM), (0, 0)))
    w7p = jnp.pad(w7, ((0, 0), (0, ROOMS_PADDED - ROOMS_DIM)))
    b7p = jnp.pad(b7, ((0, 0), (0, ROOMS_PADDED - ROOMS_DIM)))

    bf16 = jnp.bfloat16
    return (
        w1p.astype(bf16), b1,
        w2f.astype(bf16), b2f,
        w35.astype(bf16), b35,
        w4f.astype(bf16), b4f,
        w6.astype(bf16), b6,
        w7p.astype(bf16), b7p,
    )


# ----------------------------------------------------------------------------- references
def _mm(a, w_bf16):
    # Mirrors the kernel: bf16 operands, f32 accumulation.
    return jnp.dot(a.astype(jnp.bfloat16), w_bf16, preferred_element_type=jnp.float32)


def reference_forward_folded(x, kp):
    """Identical math to the kernel (folded BN, bf16 operands, f32 accumulation)."""
    (w1, b1, w2, b2, w35, b35, w4, b4, w6, b6, w7, b7) = kp
    xp = jnp.pad(x, ((0, 0), (0, PADDED_INPUT_DIM - x.shape[1])))
    h = jnp.maximum(_mm(xp, w1) + b1, 0.0)
    e = jnp.maximum(_mm(h, w2) + b2, 0.0)
    dr = jnp.maximum(_mm(e, w35) + b35, 0.0)
    d, r = dr[:, :HIDDEN_DIM], dr[:, HIDDEN_DIM:]
    layout = jnp.tanh(_mm(d, w4) + b4)
    r = jnp.maximum(_mm(r, w6) + b6, 0.0)
    rooms = (_mm(r, w7) + b7)[:, :ROOMS_DIM]
    return layout, rooms


def reference_forward_spec(x, raw):
    """Straight transcription of the PyTorch module (eval mode, f32 weights)."""
    (w1, b1, s1, t1, w2, b2, s2, t2, w3, b3, s3, t3,
     w4, b4, w5, b5, w6, b6, w7, b7) = raw
    h = jnp.maximum(x @ w1 + b1, 0.0) * s1 + t1          # Dropout(0.2): identity (eval)
    enc = jnp.maximum(h @ w2 + b2, 0.0) * s2 + t2
    d = jnp.maximum(enc @ w3 + b3, 0.0) * s3 + t3
    layout = jnp.tanh(d @ w4 + b4)
    r = jnp.maximum(enc @ w5 + b5, 0.0)
    r = jnp.maximum(r @ w6 + b6, 0.0)
    rooms = r @ w7 + b7
    return layout, rooms


# ----------------------------------------------------------------------------- main
if __name__ == "__main__":
    key = jax.random.PRNGKey(0)
    kx, kp = jax.random.split(key)
    x = jax.random.normal(kx, (BATCH, INPUT_DIM), jnp.float32)

    raw = init_raw_params(kp)
    kparams = fold_params(raw)

    layout, rooms = design_generator(x, kparams)
    jax.block_until_ready((layout, rooms))

    assert layout.shape == (BATCH, OUTPUT_DIM) and layout.dtype == jnp.float32
    assert rooms.shape == (BATCH, ROOMS_DIM) and rooms.dtype == jnp.float32

    # Tight check: same bf16-operand / f32-accumulate math in plain JAX.
    ref_l, ref_r = reference_forward_folded(x, kparams)
    assert jnp.allclose(layout, ref_l, atol=1e-2, rtol=1e-2), "folded-ref mismatch (layout)"
    assert jnp.allclose(rooms, ref_r, atol=1e-2, rtol=1e-2), "folded-ref mismatch (rooms)"

    # Semantics check vs. the original (unfolded, f32-weight) module; looser
    # tolerance accounts for bf16 weight + activation quantization.
    spec_l, spec_r = reference_forward_spec(x, raw)
    assert jnp.allclose(layout, spec_l, atol=7e-2, rtol=7e-2), "spec mismatch (layout)"
    assert jnp.allclose(rooms, spec_r, atol=7e-2, rtol=7e-2), "spec mismatch (rooms)"

    print("KERNEL_OK")
</pallas_src>

<mosaic_0001>
module attributes {stable_mosaic.version = 11 : i64} {
  func.func @design_generator_kernel(%arg0: i32, %arg1: memref<8x16xf32, #tpu.memory_space<vmem>>, %arg2: memref<16x512xbf16, #tpu.memory_space<vmem>>, %arg3: memref<1x512xf32, #tpu.memory_space<vmem>>, %arg4: memref<512x256xbf16, #tpu.memory_space<vmem>>, %arg5: memref<1x256xf32, #tpu.memory_space<vmem>>, %arg6: memref<256x768xbf16, #tpu.memory_space<vmem>>, %arg7: memref<1x768xf32, #tpu.memory_space<vmem>>, %arg8: memref<512x1024xbf16, #tpu.memory_space<vmem>>, %arg9: memref<1x1024xf32, #tpu.memory_space<vmem>>, %arg10: memref<256x128xbf16, #tpu.memory_space<vmem>>, %arg11: memref<1x128xf32, #tpu.memory_space<vmem>>, %arg12: memref<128x128xbf16, #tpu.memory_space<vmem>>, %arg13: memref<1x128xf32, #tpu.memory_space<vmem>>, %arg14: memref<8x1024xf32, #tpu.memory_space<vmem>>, %arg15: memref<8x128xf32, #tpu.memory_space<vmem>>) attributes {dimension_semantics = [#tpu.dimension_semantics<parallel>], iteration_bounds = array<i64: 1>, scalar_prefetch = 0 : i64, scratch_operands = 0 : i64, tpu.core_type = #tpu.core_type<tc>, window_params = [{transform_indices = @transform_0, window_bounds = array<i64: 8, 16>}, {pipeline_mode = #tpu.pipeline_mode<synchronous>, transform_indices = @transform_1, window_bounds = array<i64: 16, 512>}, {pipeline_mode = #tpu.pipeline_mode<synchronous>, transform_indices = @transform_2, window_bounds = array<i64: 1, 512>}, {pipeline_mode = #tpu.pipeline_mode<synchronous>, transform_indices = @transform_3, window_bounds = array<i64: 512, 256>}, {pipeline_mode = #tpu.pipeline_mode<synchronous>, transform_indices = @transform_4, window_bounds = array<i64: 1, 256>}, {pipeline_mode = #tpu.pipeline_mode<synchronous>, transform_indices = @transform_5, window_bounds = array<i64: 256, 768>}, {pipeline_mode = #tpu.pipeline_mode<synchronous>, transform_indices = @transform_6, window_bounds = array<i64: 1, 768>}, {pipeline_mode = #tpu.pipeline_mode<synchronous>, transform_indices = @transform_7, window_bounds = array<i64: 512, 1024>}, {pipeline_mode = #tpu.pipeline_mode<synchronous>, transform_indices = @transform_8, window_bounds = array<i64: 1, 1024>}, {pipeline_mode = #tpu.pipeline_mode<synchronous>, transform_indices = @transform_9, window_bounds = array<i64: 256, 128>}, {pipeline_mode = #tpu.pipeline_mode<synchronous>, transform_indices = @transform_10, window_bounds = array<i64: 1, 128>}, {pipeline_mode = #tpu.pipeline_mode<synchronous>, transform_indices = @transform_11, window_bounds = array<i64: 128, 128>}, {pipeline_mode = #tpu.pipeline_mode<synchronous>, transform_indices = @transform_12, window_bounds = array<i64: 1, 128>}, {transform_indices = @transform_13, window_bounds = array<i64: 8, 1024>}, {transform_indices = @transform_14, window_bounds = array<i64: 8, 128>}]} {
    %c0 = arith.constant 0 : index
    %c0_0 = arith.constant 0 : index
    %0 = vector.load %arg1[%c0, %c0_0] : memref<8x16xf32, #tpu.memory_space<vmem>>, vector<8x16xf32>
    %1 = arith.truncf %0 : vector<8x16xf32> to vector<8x16xbf16>
    %c0_1 = arith.constant 0 : index
    %c0_2 = arith.constant 0 : index
    %2 = vector.load %arg2[%c0_1, %c0_2] : memref<16x512xbf16, #tpu.memory_space<vmem>>, vector<16x512xbf16>
    %cst = arith.constant dense<0.000000e+00> : vector<8x512xf32>
    %3 = tpu.matmul %1, %2, %cst {dimension_numbers = #tpu.dot_dimension_numbers<[1], [0], [0], [1], [0, 0, 1, 1], [], []>} : vector<8x16xbf16>, vector<16x512xbf16>, vector<8x512xf32> -> vector<8x512xf32>
    %c0_3 = arith.constant 0 : index
    %c0_4 = arith.constant 0 : index
    %4 = vector.load %arg3[%c0_3, %c0_4] : memref<1x512xf32, #tpu.memory_space<vmem>>, vector<1x512xf32>
    %5 = vector.broadcast %4 : vector<1x512xf32> to vector<8x512xf32>
    %6 = arith.addf %3, %5 : vector<8x512xf32>
    %cst_5 = arith.constant 0.000000e+00 : f32
    %7 = vector.broadcast %cst_5 : f32 to vector<8x512xf32>
    %8 = arith.maximumf %6, %7 : vector<8x512xf32>
    %9 = arith.truncf %8 : vector<8x512xf32> to vector<8x512xbf16>
    %c0_6 = arith.constant 0 : index
    %c0_7 = arith.constant 0 : index
    %10 = vector.load %arg4[%c0_6, %c0_7] : memref<512x256xbf16, #tpu.memory_space<vmem>>, vector<512x256xbf16>
    %cst_8 = arith.constant dense<0.000000e+00> : vector<8x256xf32>
    %11 = tpu.matmul %9, %10, %cst_8 {dimension_numbers = #tpu.dot_dimension_numbers<[1], [0], [0], [1], [0, 0, 1, 1], [], []>} : vector<8x512xbf16>, vector<512x256xbf16>, vector<8x256xf32> -> vector<8x256xf32>
    %c0_9 = arith.constant 0 : index
    %c0_10 = arith.constant 0 : index
    %12 = vector.load %arg5[%c0_9, %c0_10] : memref<1x256xf32, #tpu.memory_space<vmem>>, vector<1x256xf32>
    %13 = vector.broadcast %12 : vector<1x256xf32> to vector<8x256xf32>
    %14 = arith.addf %11, %13 : vector<8x256xf32>
    %cst_11 = arith.constant 0.000000e+00 : f32
    %15 = vector.broadcast %cst_11 : f32 to vector<8x256xf32>
    %16 = arith.maximumf %14, %15 : vector<8x256xf32>
    %17 = arith.truncf %16 : vector<8x256xf32> to vector<8x256xbf16>
    %c0_12 = arith.constant 0 : index
    %c0_13 = arith.constant 0 : index
    %18 = vector.load %arg6[%c0_12, %c0_13] : memref<256x768xbf16, #tpu.memory_space<vmem>>, vector<256x768xbf16>
    %cst_14 = arith.constant dense<0.000000e+00> : vector<8x768xf32>
    %19 = tpu.matmul %17, %18, %cst_14 {dimension_numbers = #tpu.dot_dimension_numbers<[1], [0], [0], [1], [0, 0, 1, 1], [], []>} : vector<8x256xbf16>, vector<256x768xbf16>, vector<8x768xf32> -> vector<8x768xf32>
    %c0_15 = arith.constant 0 : index
    %c0_16 = arith.constant 0 : index
    %20 = vector.load %arg7[%c0_15, %c0_16] : memref<1x768xf32, #tpu.memory_space<vmem>>, vector<1x768xf32>
    %21 = vector.broadcast %20 : vector<1x768xf32> to vector<8x768xf32>
    %22 = arith.addf %19, %21 : vector<8x768xf32>
    %cst_17 = arith.constant 0.000000e+00 : f32
    %23 = vector.broadcast %cst_17 : f32 to vector<8x768xf32>
    %24 = arith.maximumf %22, %23 : vector<8x768xf32>
    %25 = vector.extract_strided_slice %24 {offsets = [0, 0], sizes = [8, 512], strides = [1, 1]} : vector<8x768xf32> to vector<8x512xf32>
    %26 = vector.extract_strided_slice %24 {offsets = [0, 512], sizes = [8, 256], strides = [1, 1]} : vector<8x768xf32> to vector<8x256xf32>
    %27 = arith.truncf %25 : vector<8x512xf32> to vector<8x512xbf16>
    %c0_18 = arith.constant 0 : index
    %c0_19 = arith.constant 0 : index
    %28 = vector.load %arg8[%c0_18, %c0_19] : memref<512x1024xbf16, #tpu.memory_space<vmem>>, vector<512x1024xbf16>
    %cst_20 = arith.constant dense<0.000000e+00> : vector<8x1024xf32>
    %29 = tpu.matmul %27, %28, %cst_20 {dimension_numbers = #tpu.dot_dimension_numbers<[1], [0], [0], [1], [0, 0, 1, 1], [], []>} : vector<8x512xbf16>, vector<512x1024xbf16>, vector<8x1024xf32> -> vector<8x1024xf32>
    %c0_21 = arith.constant 0 : index
    %c0_22 = arith.constant 0 : index
    %30 = vector.load %arg9[%c0_21, %c0_22] : memref<1x1024xf32, #tpu.memory_space<vmem>>, vector<1x1024xf32>
    %31 = vector.broadcast %30 : vector<1x1024xf32> to vector<8x1024xf32>
    %32 = arith.addf %29, %31 : vector<8x1024xf32>
    %33 = math.tanh %32 : vector<8x1024xf32>
    %c0_23 = arith.constant 0 : index
    %c0_24 = arith.constant 0 : index
    %34 = vector.load %arg14[%c0_23, %c0_24] : memref<8x1024xf32, #tpu.memory_space<vmem>>, vector<8x1024xf32>
    tpu.vector_store %arg14[%c0_23, %c0_24], %33 {strides = array<i32>} : memref<8x1024xf32, #tpu.memory_space<vmem>>, vector<8x1024xf32>,
    %35 = arith.truncf %26 : vector<8x256xf32> to vector<8x256xbf16>
    %c0_25 = arith.constant 0 : index
    %c0_26 = arith.constant 0 : index
    %36 = vector.load %arg10[%c0_25, %c0_26] : memref<256x128xbf16, #tpu.memory_space<vmem>>, vector<256x128xbf16>
    %cst_27 = arith.constant dense<0.000000e+00> : vector<8x128xf32>
    %37 = tpu.matmul %35, %36, %cst_27 {dimension_numbers = #tpu.dot_dimension_numbers<[1], [0], [0], [1], [0, 0, 1, 1], [], []>} : vector<8x256xbf16>, vector<256x128xbf16>, vector<8x128xf32> -> vector<8x128xf32>
    %c0_28 = arith.constant 0 : index
    %c0_29 = arith.constant 0 : index
    %38 = vector.load %arg11[%c0_28, %c0_29] : memref<1x128xf32, #tpu.memory_space<vmem>>, vector<1x128xf32>
    %39 = vector.broadcast %38 : vector<1x128xf32> to vector<8x128xf32>
    %40 = arith.addf %37, %39 : vector<8x128xf32>
    %cst_30 = arith.constant 0.000000e+00 : f32
    %41 = vector.broadcast %cst_30 : f32 to vector<8x128xf32>
    %42 = arith.maximumf %40, %41 : vector<8x128xf32>
    %43 = arith.truncf %42 : vector<8x128xf32> to vector<8x128xbf16>
    %c0_31 = arith.constant 0 : index
    %c0_32 = arith.constant 0 : index
    %44 = vector.load %arg12[%c0_31, %c0_32] : memref<128x128xbf16, #tpu.memory_space<vmem>>, vector<128x128xbf16>
    %cst_33 = arith.constant dense<0.000000e+00> : vector<8x128xf32>
    %45 = tpu.matmul %43, %44, %cst_33 {dimension_numbers = #tpu.dot_dimension_numbers<[1], [0], [0], [1], [0, 0, 1, 1], [], []>} : vector<8x128xbf16>, vector<128x128xbf16>, vector<8x128xf32> -> vector<8x128xf32>
    %c0_34 = arith.constant 0 : index
    %c0_35 = arith.constant 0 : index
    %46 = vector.load %arg13[%c0_34, %c0_35] : memref<1x128xf32, #tpu.memory_space<vmem>>, vector<1x128xf32>
    %47 = vector.broadcast %46 : vector<1x128xf32> to vector<8x128xf32>
    %48 = arith.addf %45, %47 : vector<8x128xf32>
    %c0_36 = arith.constant 0 : index
    %c0_37 = arith.constant 0 : index
    %49 = vector.load %arg15[%c0_36, %c0_37] : memref<8x128xf32, #tpu.memory_space<vmem>>, vector<8x128xf32>
    tpu.vector_store %arg15[%c0_36, %c0_37], %48 {strides = array<i32>} : memref<8x128xf32, #tpu.memory_space<vmem>>, vector<8x128xf32>,
    return
  }
  func.func @transform_0(%arg0: i32) -> (i32, i32) {
    %c0_i32 = arith.constant 0 : i32
    %c0_i32_0 = arith.constant 0 : i32
    return %arg0, %c0_i32 : i32, i32
  }
  func.func @transform_1(%arg0: i32) -> (i32, i32) {
    %c0_i32 = arith.constant 0 : i32
    %c0_i32_0 = arith.constant 0 : i32
    %c0_i32_1 = arith.constant 0 : i32
    return %c0_i32, %c0_i32_0 : i32, i32
  }
  func.func @transform_2(%arg0: i32) -> (i32, i32) {
    %c0_i32 = arith.constant 0 : i32
    %c0_i32_0 = arith.constant 0 : i32
    %c0_i32_1 = arith.constant 0 : i32
    return %c0_i32, %c0_i32_0 : i32, i32
  }
  func.func @transform_3(%arg0: i32) -> (i32, i32) {
    %c0_i32 = arith.constant 0 : i32
    %c0_i32_0 = arith.constant 0 : i32
    %c0_i32_1 = arith.constant 0 : i32
    return %c0_i32, %c0_i32_0 : i32, i32
  }
  func.func @transform_4(%arg0: i32) -> (i32, i32) {
    %c0_i32 = arith.constant 0 : i32
    %c0_i32_0 = arith.constant 0 : i32
    %c0_i32_1 = arith.constant 0 : i32
    return %c0_i32, %c0_i32_0 : i32, i32
  }
  func.func @transform_5(%arg0: i32) -> (i32, i32) {
    %c0_i32 = arith.constant 0 : i32
    %c0_i32_0 = arith.constant 0 : i32
    %c0_i32_1 = arith.constant 0 : i32
    return %c0_i32, %c0_i32_0 : i32, i32
  }
  func.func @transform_6(%arg0: i32) -> (i32, i32) {
    %c0_i32 = arith.constant 0 : i32
    %c0_i32_0 = arith.constant 0 : i32
    %c0_i32_1 = arith.constant 0 : i32
    return %c0_i32, %c0_i32_0 : i32, i32
  }
  func.func @transform_7(%arg0: i32) -> (i32, i32) {
    %c0_i32 = arith.constant 0 : i32
    %c0_i32_0 = arith.constant 0 : i32
    %c0_i32_1 = arith.constant 0 : i32
    return %c0_i32, %c0_i32_0 : i32, i32
  }
  func.func @transform_8(%arg0: i32) -> (i32, i32) {
    %c0_i32 = arith.constant 0 : i32
    %c0_i32_0 = arith.constant 0 : i32
    %c0_i32_1 = arith.constant 0 : i32
    return %c0_i32, %c0_i32_0 : i32, i32
  }
  func.func @transform_9(%arg0: i32) -> (i32, i32) {
    %c0_i32 = arith.constant 0 : i32
    %c0_i32_0 = arith.constant 0 : i32
    %c0_i32_1 = arith.constant 0 : i32
    return %c0_i32, %c0_i32_0 : i32, i32
  }
  func.func @transform_10(%arg0: i32) -> (i32, i32) {
    %c0_i32 = arith.constant 0 : i32
    %c0_i32_0 = arith.constant 0 : i32
    %c0_i32_1 = arith.constant 0 : i32
    return %c0_i32, %c0_i32_0 : i32, i32
  }
  func.func @transform_11(%arg0: i32) -> (i32, i32) {
    %c0_i32 = arith.constant 0 : i32
    %c0_i32_0 = arith.constant 0 : i32
    %c0_i32_1 = arith.constant 0 : i32
    return %c0_i32, %c0_i32_0 : i32, i32
  }
  func.func @transform_12(%arg0: i32) -> (i32, i32) {
    %c0_i32 = arith.constant 0 : i32
    %c0_i32_0 = arith.constant 0 : i32
    %c0_i32_1 = arith.constant 0 : i32
    return %c0_i32, %c0_i32_0 : i32, i32
  }
  func.func @transform_13(%arg0: i32) -> (i32, i32) {
    %c0_i32 = arith.constant 0 : i32
    %c0_i32_0 = arith.constant 0 : i32
    return %arg0, %c0_i32 : i32, i32
  }
  func.func @transform_14(%arg0: i32) -> (i32, i32) {
    %c0_i32 = arith.constant 0 : i32
    %c0_i32_0 = arith.constant 0 : i32
    return %arg0, %c0_i32 : i32, i32
  }
}

module attributes {stable_mosaic.version = 11 : i64} {
  func.func @design_generator_kernel(%arg0: i32, %arg1: memref<8x16xf32, #tpu.memory_space<vmem>>, %arg2: memref<16x512xbf16, #tpu.memory_space<vmem>>, %arg3: memref<1x512xf32, #tpu.memory_space<vmem>>, %arg4: memref<512x256xbf16, #tpu.memory_space<vmem>>, %arg5: memref<1x256xf32, #tpu.memory_space<vmem>>, %arg6: memref<256x768xbf16, #tpu.memory_space<vmem>>, %arg7: memref<1x768xf32, #tpu.memory_space<vmem>>, %arg8: memref<512x1024xbf16, #tpu.memory_space<vmem>>, %arg9: memref<1x1024xf32, #tpu.memory_space<vmem>>, %arg10: memref<256x128xbf16, #tpu.memory_space<vmem>>, %arg11: memref<1x128xf32, #tpu.memory_space<vmem>>, %arg12: memref<128x128xbf16, #tpu.memory_space<vmem>>, %arg13: memref<1x128xf32, #tpu.memory_space<vmem>>, %arg14: memref<8x1024xf32, #tpu.memory_space<vmem>>, %arg15: memref<8x128xf32, #tpu.memory_space<vmem>>) attributes {dimension_semantics = [#tpu.dimension_semantics<parallel>], iteration_bounds = array<i64: 1>, scalar_prefetch = 0 : i64, scratch_operands = 0 : i64, tpu.core_type = #tpu.core_type<tc>, window_params = [{transform_indices = @transform_0, window_bounds = array<i64: 8, 16>}, {pipeline_mode = #tpu.pipeline_mode<synchronous>, transform_indices = @transform_1, window_bounds = array<i64: 16, 512>}, {pipeline_mode = #tpu.pipeline_mode<synchronous>, transform_indices = @transform_2, window_bounds = array<i64: 1, 512>}, {pipeline_mode = #tpu.pipeline_mode<synchronous>, transform_indices = @transform_3, window_bounds = array<i64: 512, 256>}, {pipeline_mode = #tpu.pipeline_mode<synchronous>, transform_indices = @transform_4, window_bounds = array<i64: 1, 256>}, {pipeline_mode = #tpu.pipeline_mode<synchronous>, transform_indices = @transform_5, window_bounds = array<i64: 256, 768>}, {pipeline_mode = #tpu.pipeline_mode<synchronous>, transform_indices = @transform_6, window_bounds = array<i64: 1, 768>}, {pipeline_mode = #tpu.pipeline_mode<synchronous>, transform_indices = @transform_7, window_bounds = array<i64: 512, 1024>}, {pipeline_mode = #tpu.pipeline_mode<synchronous>, transform_indices = @transform_8, window_bounds = array<i64: 1, 1024>}, {pipeline_mode = #tpu.pipeline_mode<synchronous>, transform_indices = @transform_9, window_bounds = array<i64: 256, 128>}, {pipeline_mode = #tpu.pipeline_mode<synchronous>, transform_indices = @transform_10, window_bounds = array<i64: 1, 128>}, {pipeline_mode = #tpu.pipeline_mode<synchronous>, transform_indices = @transform_11, window_bounds = array<i64: 128, 128>}, {pipeline_mode = #tpu.pipeline_mode<synchronous>, transform_indices = @transform_12, window_bounds = array<i64: 1, 128>}, {transform_indices = @transform_13, window_bounds = array<i64: 8, 1024>}, {transform_indices = @transform_14, window_bounds = array<i64: 8, 128>}]} {
    %c0 = arith.constant 0 : index
    %c0_0 = arith.constant 0 : index
    %0 = vector.load %arg1[%c0, %c0_0] : memref<8x16xf32, #tpu.memory_space<vmem>>, vector<8x16xf32>
    %1 = arith.truncf %0 : vector<8x16xf32> to vector<8x16xbf16>
    %c0_1 = arith.constant 0 : index
    %c0_2 = arith.constant 0 : index
    %2 = vector.load %arg2[%c0_1, %c0_2] : memref<16x512xbf16, #tpu.memory_space<vmem>>, vector<16x512xbf16>
    %cst = arith.constant dense<0.000000e+00> : vector<8x512xf32>
    %3 = tpu.matmul %1, %2, %cst {dimension_numbers = #tpu.dot_dimension_numbers<[1], [0], [0], [1], [0, 0, 1, 1], [], []>} : vector<8x16xbf16>, vector<16x512xbf16>, vector<8x512xf32> -> vector<8x512xf32>
    %c0_3 = arith.constant 0 : index
    %c0_4 = arith.constant 0 : index
    %4 = vector.load %arg3[%c0_3, %c0_4] : memref<1x512xf32, #tpu.memory_space<vmem>>, vector<1x512xf32>
    %5 = vector.broadcast %4 : vector<1x512xf32> to vector<8x512xf32>
    %6 = arith.addf %3, %5 : vector<8x512xf32>
    %cst_5 = arith.constant 0.000000e+00 : f32
    %7 = vector.broadcast %cst_5 : f32 to vector<8x512xf32>
    %8 = arith.maximumf %6, %7 : vector<8x512xf32>
    %9 = arith.truncf %8 : vector<8x512xf32> to vector<8x512xbf16>
    %c0_6 = arith.constant 0 : index
    %c0_7 = arith.constant 0 : index
    %10 = vector.load %arg4[%c0_6, %c0_7] : memref<512x256xbf16, #tpu.memory_space<vmem>>, vector<512x256xbf16>
    %cst_8 = arith.constant dense<0.000000e+00> : vector<8x256xf32>
    %11 = tpu.matmul %9, %10, %cst_8 {dimension_numbers = #tpu.dot_dimension_numbers<[1], [0], [0], [1], [0, 0, 1, 1], [], []>} : vector<8x512xbf16>, vector<512x256xbf16>, vector<8x256xf32> -> vector<8x256xf32>
    %c0_9 = arith.constant 0 : index
    %c0_10 = arith.constant 0 : index
    %12 = vector.load %arg5[%c0_9, %c0_10] : memref<1x256xf32, #tpu.memory_space<vmem>>, vector<1x256xf32>
    %13 = vector.broadcast %12 : vector<1x256xf32> to vector<8x256xf32>
    %14 = arith.addf %11, %13 : vector<8x256xf32>
    %cst_11 = arith.constant 0.000000e+00 : f32
    %15 = vector.broadcast %cst_11 : f32 to vector<8x256xf32>
    %16 = arith.maximumf %14, %15 : vector<8x256xf32>
    %17 = arith.truncf %16 : vector<8x256xf32> to vector<8x256xbf16>
    %c0_12 = arith.constant 0 : index
    %c0_13 = arith.constant 0 : index
    %18 = vector.load %arg6[%c0_12, %c0_13] : memref<256x768xbf16, #tpu.memory_space<vmem>>, vector<256x768xbf16>
    %cst_14 = arith.constant dense<0.000000e+00> : vector<8x768xf32>
    %19 = tpu.matmul %17, %18, %cst_14 {dimension_numbers = #tpu.dot_dimension_numbers<[1], [0], [0], [1], [0, 0, 1, 1], [], []>} : vector<8x256xbf16>, vector<256x768xbf16>, vector<8x768xf32> -> vector<8x768xf32>
    %c0_15 = arith.constant 0 : index
    %c0_16 = arith.constant 0 : index
    %20 = vector.load %arg7[%c0_15, %c0_16] : memref<1x768xf32, #tpu.memory_space<vmem>>, vector<1x768xf32>
    %21 = vector.broadcast %20 : vector<1x768xf32> to vector<8x768xf32>
    %22 = arith.addf %19, %21 : vector<8x768xf32>
    %cst_17 = arith.constant 0.000000e+00 : f32
    %23 = vector.broadcast %cst_17 : f32 to vector<8x768xf32>
    %24 = arith.maximumf %22, %23 : vector<8x768xf32>
    %25 = vector.extract_strided_slice %24 {offsets = [0, 0], sizes = [8, 512], strides = [1, 1]} : vector<8x768xf32> to vector<8x512xf32>
    %26 = vector.extract_strided_slice %24 {offsets = [0, 512], sizes = [8, 256], strides = [1, 1]} : vector<8x768xf32> to vector<8x256xf32>
    %27 = arith.truncf %25 : vector<8x512xf32> to vector<8x512xbf16>
    %c0_18 = arith.constant 0 : index
    %c0_19 = arith.constant 0 : index
    %28 = vector.load %arg8[%c0_18, %c0_19] : memref<512x1024xbf16, #tpu.memory_space<vmem>>, vector<512x1024xbf16>
    %cst_20 = arith.constant dense<0.000000e+00> : vector<8x1024xf32>
    %29 = tpu.matmul %27, %28, %cst_20 {dimension_numbers = #tpu.dot_dimension_numbers<[1], [0], [0], [1], [0, 0, 1, 1], [], []>} : vector<8x512xbf16>, vector<512x1024xbf16>, vector<8x1024xf32> -> vector<8x1024xf32>
    %c0_21 = arith.constant 0 : index
    %c0_22 = arith.constant 0 : index
    %30 = vector.load %arg9[%c0_21, %c0_22] : memref<1x1024xf32, #tpu.memory_space<vmem>>, vector<1x1024xf32>
    %31 = vector.broadcast %30 : vector<1x1024xf32> to vector<8x1024xf32>
    %32 = arith.addf %29, %31 : vector<8x1024xf32>
    %33 = math.tanh %32 : vector<8x1024xf32>
    %c0_23 = arith.constant 0 : index
    %c0_24 = arith.constant 0 : index
    %34 = vector.load %arg14[%c0_23, %c0_24] : memref<8x1024xf32, #tpu.memory_space<vmem>>, vector<8x1024xf32>
    tpu.vector_store %arg14[%c0_23, %c0_24], %33 {strides = array<i32>} : memref<8x1024xf32, #tpu.memory_space<vmem>>, vector<8x1024xf32>,
    %35 = arith.truncf %26 : vector<8x256xf32> to vector<8x256xbf16>
    %c0_25 = arith.constant 0 : index
    %c0_26 = arith.constant 0 : index
    %36 = vector.load %arg10[%c0_25, %c0_26] : memref<256x128xbf16, #tpu.memory_space<vmem>>, vector<256x128xbf16>
    %cst_27 = arith.constant dense<0.000000e+00> : vector<8x128xf32>
    %37 = tpu.matmul %35, %36, %cst_27 {dimension_numbers = #tpu.dot_dimension_numbers<[1], [0], [0], [1], [0, 0, 1, 1], [], []>} : vector<8x256xbf16>, vector<256x128xbf16>, vector<8x128xf32> -> vector<8x128xf32>
    %c0_28 = arith.constant 0 : index
    %c0_29 = arith.constant 0 : index
    %38 = vector.load %arg11[%c0_28, %c0_29] : memref<1x128xf32, #tpu.memory_space<vmem>>, vector<1x128xf32>
    %39 = vector.broadcast %38 : vector<1x128xf32> to vector<8x128xf32>
    %40 = arith.addf %37, %39 : vector<8x128xf32>
    %cst_30 = arith.constant 0.000000e+00 : f32
    %41 = vector.broadcast %cst_30 : f32 to vector<8x128xf32>
    %42 = arith.maximumf %40, %41 : vector<8x128xf32>
    %43 = arith.truncf %42 : vector<8x128xf32> to vector<8x128xbf16>
    %c0_31 = arith.constant 0 : index
    %c0_32 = arith.constant 0 : index
    %44 = vector.load %arg12[%c0_31, %c0_32] : memref<128x128xbf16, #tpu.memory_space<vmem>>, vector<128x128xbf16>
    %cst_33 = arith.constant dense<0.000000e+00> : vector<8x128xf32>
    %45 = tpu.matmul %43, %44, %cst_33 {dimension_numbers = #tpu.dot_dimension_numbers<[1], [0], [0], [1], [0, 0, 1, 1], [], []>} : vector<8x128xbf16>, vector<128x128xbf16>, vector<8x128xf32> -> vector<8x128xf32>
    %c0_34 = arith.constant 0 : index
    %c0_35 = arith.constant 0 : index
    %46 = vector.load %arg13[%c0_34, %c0_35] : memref<1x128xf32, #tpu.memory_space<vmem>>, vector<1x128xf32>
    %47 = vector.broadcast %46 : vector<1x128xf32> to vector<8x128xf32>
    %48 = arith.addf %45, %47 : vector<8x128xf32>
    %c0_36 = arith.constant 0 : index
    %c0_37 = arith.constant 0 : index
    %49 = vector.load %arg15[%c0_36, %c0_37] : memref<8x128xf32, #tpu.memory_space<vmem>>, vector<8x128xf32>
    tpu.vector_store %arg15[%c0_36, %c0_37], %48 {strides = array<i32>} : memref<8x128xf32, #tpu.memory_space<vmem>>, vector<8x128xf32>,
    return
  }
  func.func @transform_0(%arg0: i32) -> (i32, i32) {
    %c0_i32 = arith.constant 0 : i32
    %c0_i32_0 = arith.constant 0 : i32
    return %arg0, %c0_i32 : i32, i32
  }
  func.func @transform_1(%arg0: i32) -> (i32, i32) {
    %c0_i32 = arith.constant 0 : i32
    %c0_i32_0 = arith.constant 0 : i32
    %c0_i32_1 = arith.constant 0 : i32
    return %c0_i32, %c0_i32_0 : i32, i32
  }
  func.func @transform_2(%arg0: i32) -> (i32, i32) {
    %c0_i32 = arith.constant 0 : i32
    %c0_i32_0 = arith.constant 0 : i32
    %c0_i32_1 = arith.constant 0 : i32
    return %c0_i32, %c0_i32_0 : i32, i32
  }
  func.func @transform_3(%arg0: i32) -> (i32, i32) {
    %c0_i32 = arith.constant 0 : i32
    %c0_i32_0 = arith.constant 0 : i32
    %c0_i32_1 = arith.constant 0 : i32
    return %c0_i32, %c0_i32_0 : i32, i32
  }
  func.func @transform_4(%arg0: i32) -> (i32, i32) {
    %c0_i32 = arith.constant 0 : i32
    %c0_i32_0 = arith.constant 0 : i32
    %c0_i32_1 = arith.constant 0 : i32
    return %c0_i32, %c0_i32_0 : i32, i32
  }
  func.func @transform_5(%arg0: i32) -> (i32, i32) {
    %c0_i32 = arith.constant 0 : i32
    %c0_i32_0 = arith.constant 0 : i32
    %c0_i32_1 = arith.constant 0 : i32
    return %c0_i32, %c0_i32_0 : i32, i32
  }
  func.func @transform_6(%arg0: i32) -> (i32, i32) {
    %c0_i32 = arith.constant 0 : i32
    %c0_i32_0 = arith.constant 0 : i32
    %c0_i32_1 = arith.constant 0 : i32
    return %c0_i32, %c0_i32_0 : i32, i32
  }
  func.func @transform_7(%arg0: i32) -> (i32, i32) {
    %c0_i32 = arith.constant 0 : i32
    %c0_i32_0 = arith.constant 0 : i32
    %c0_i32_1 = arith.constant 0 : i32
    return %c0_i32, %c0_i32_0 : i32, i32
  }
  func.func @transform_8(%arg0: i32) -> (i32, i32) {
    %c0_i32 = arith.constant 0 : i32
    %c0_i32_0 = arith.constant 0 : i32
    %c0_i32_1 = arith.constant 0 : i32
    return %c0_i32, %c0_i32_0 : i32, i32
  }
  func.func @transform_9(%arg0: i32) -> (i32, i32) {
    %c0_i32 = arith.constant 0 : i32
    %c0_i32_0 = arith.constant 0 : i32
    %c0_i32_1 = arith.constant 0 : i32
    return %c0_i32, %c0_i32_0 : i32, i32
  }
  func.func @transform_10(%arg0: i32) -> (i32, i32) {
    %c0_i32 = arith.constant 0 : i32
    %c0_i32_0 = arith.constant 0 : i32
    %c0_i32_1 = arith.constant 0 : i32
    return %c0_i32, %c0_i32_0 : i32, i32
  }
  func.func @transform_11(%arg0: i32) -> (i32, i32) {
    %c0_i32 = arith.constant 0 : i32
    %c0_i32_0 = arith.constant 0 : i32
    %c0_i32_1 = arith.constant 0 : i32
    return %c0_i32, %c0_i32_0 : i32, i32
  }
  func.func @transform_12(%arg0: i32) -> (i32, i32) {
    %c0_i32 = arith.constant 0 : i32
    %c0_i32_0 = arith.constant 0 : i32
    %c0_i32_1 = arith.constant 0 : i32
    return %c0_i32, %c0_i32_0 : i32, i32
  }
  func.func @transform_13(%arg0: i32) -> (i32, i32) {
    %c0_i32 = arith.constant 0 : i32
    %c0_i32_0 = arith.constant 0 : i32
    return %arg0, %c0_i32 : i32, i32
  }
  func.func @transform_14(%arg0: i32) -> (i32, i32) {
    %c0_i32 = arith.constant 0 : i32
    %c0_i32_0 = arith.constant 0 : i32
    return %arg0, %c0_i32 : i32, i32
  }
}

</mosaic_0001>

<llo_original>
// kernel: tpu_custom_call.1
$region0: #{tpu_custom_call.1}
  #allocation0 [shape = 'u32[]', space=smem, size = 0x4, offset = 0x4, fixed_abs, tag = 'smem constant byte address 0x4 - core index']
  #allocation1 [shape = 'u32[72,128]{1,0:T(1,128)}', space=vmem, size = 0x9000, scoped, tag = 'internal scratch']
  %s0 = inlined_call_operand.hbm [shape: f32[8,16], index: 0, kind: input, shape index: {}]
  %s1 = inlined_call_operand.hbm [shape: bf16[16,512], index: 1, kind: input, shape index: {}]
  %s2 = inlined_call_operand.hbm [shape: f32[1,512], index: 2, kind: input, shape index: {}]
  %s3 = inlined_call_operand.hbm [shape: bf16[512,256], index: 3, kind: input, shape index: {}]
  %s4 = inlined_call_operand.vmem [shape: f32[1,256], index: 4, kind: input, shape index: {}]
  %s5 = inlined_call_operand.hbm [shape: bf16[256,768], index: 5, kind: input, shape index: {}]
  %s6 = inlined_call_operand.hbm [shape: f32[1,768], index: 6, kind: input, shape index: {}]
  %s7 = inlined_call_operand.hbm [shape: bf16[512,1024], index: 7, kind: input, shape index: {}]
  %s8 = inlined_call_operand.hbm [shape: f32[1,1024], index: 8, kind: input, shape index: {}]
  %s9 = inlined_call_operand.hbm [shape: bf16[256,128], index: 9, kind: input, shape index: {}]
  %s10 = inlined_call_operand.vmem [shape: f32[1,128], index: 10, kind: input, shape index: {}]
  %s11 = inlined_call_operand.hbm [shape: bf16[128,128], index: 11, kind: input, shape index: {}]
  %s12 = inlined_call_operand.vmem [shape: f32[1,128], index: 12, kind: input, shape index: {}]
  %s13 = inlined_call_operand.hbm [shape: f32[8,1024], index: 13, kind: output, shape index: {0}]
  %s14 = inlined_call_operand.hbm [shape: f32[8,128], index: 14, kind: output, shape index: {1}]
  %15 = xla_tuple %s13, %s14
  %s16 = sld [smem:[#allocation0]]
  $region110: #{tpu_custom_call.1} parent=0
    _
  %s18 = ssub.s32 1, %s16
  %s19 = scalar_select 0, %s18, %s16
  $region1: #{tpu_custom_call.1} parent=0
    #allocation2 [shape = 'u8[4096]{0}', space=vmem, size = 0x1000, scoped, tag = 'input window, operand 0, single buffered']
    #allocation3 [shape = 's32[1]{0}', space=sflag, size = 0x4, scoped, tag = 'scoped memory for tpu_custom_call.1']
    #allocation4 [shape = 's32[1]{0}', space=sflag, size = 0x4, scoped, tag = 'scoped memory for tpu_custom_call.1']
    #allocation5 [shape = 'u8[16384]{0}', space=vmem, size = 0x4000, scoped, tag = 'input window, operand 1, single buffered']
    #allocation6 [shape = 's32[1]{0}', space=sflag, size = 0x4, scoped, tag = 'scoped memory for tpu_custom_call.1']
    #allocation7 [shape = 'u8[2048]{0}', space=vmem, size = 0x800, scoped, tag = 'input window, operand 2, single buffered']
    #allocation8 [shape = 'u8[262144]{0}', space=vmem, size = 0x40000, scoped, tag = 'input window, operand 3, single buffered']
    #allocation9 [shape = 's32[1]{0}', space=sflag, size = 0x4, scoped, tag = 'scoped memory for tpu_custom_call.1']
    #allocation10 [shape = 'u8[393216]{0}', space=vmem, size = 0x60000, scoped, tag = 'input window, operand 5, single buffered']
    #allocation11 [shape = 'u8[3072]{0}', space=vmem, size = 0xc00, scoped, tag = 'input window, operand 6, single buffered']
    #allocation12 [shape = 's32[1]{0}', space=sflag, size = 0x4, scoped, tag = 'scoped memory for tpu_custom_call.1']
    #allocation13 [shape = 'u8[1048576]{0}', space=vmem, size = 0x100000, scoped, tag = 'input window, operand 7, single buffered']
    #allocation14 [shape = 'u8[4096]{0}', space=vmem, size = 0x1000, scoped, tag = 'input window, operand 8, single buffered']
    #allocation15 [shape = 's32[1]{0}', space=sflag, size = 0x4, scoped, tag = 'scoped memory for tpu_custom_call.1']
    #allocation16 [shape = 'u8[65536]{0}', space=vmem, size = 0x10000, scoped, tag = 'input window, operand 9, single buffered']
    #allocation17 [shape = 'u8[32768]{0}', space=vmem, size = 0x8000, scoped, tag = 'input window, operand 11, single buffered']
    #allocation18 [shape = 's32[1]{0}', space=sflag, size = 0x4, scoped, tag = 'scoped memory for tpu_custom_call.1']
    #allocation19 [shape = 'u8[32768]{0}', space=vmem, size = 0x8000, scoped, tag = 'output window, operand 0, single buffered']
    #allocation20 [shape = 'u8[4096]{0}', space=vmem, size = 0x1000, scoped, tag = 'output window, operand 1, single buffered']
    #allocation21 [shape = 's32[1]{0}', space=sflag, size = 0x4, scoped, tag = 'scoped memory for tpu_custom_call.1']
    %20 = vsyncpa [#allocation3], 0
    %21 = vsyncpa [#allocation6], 0
    %22 = vsyncpa [#allocation9], 0
    %23 = vsyncpa [#allocation12], 0
    %24 = vsyncpa [#allocation15], 0
    %25 = vsyncpa [#allocation18], 0
    %26 = vsyncpa [#allocation4], 0
    %27 = vsyncpa [#allocation21], 0
    // Predicated region
    $region2: #{tpu_custom_call.1} parent=1 // pred_check
      _
    $region3: #{tpu_custom_call.1} parent=1 // pred_check_branch
      %29 = sbr.rel (0) target = $region5
    $region4: #{tpu_custom_call.1} parent=1 // pred_region
      %31 = vsyncadd [#allocation3], 0
      %s33 = sshll.u32 %s0, 4
      %s34 = int_to_ptr.hbm [resolvable:$true] %s33
      %s35 = sshll.u32 [#allocation2], 4
      %s36 = int_to_ptr.vmem [resolvable:$true] %s35
      %38 = dma.hbm_to_vmem [thread:$0]  %s34, 128, %s36, [#allocation3]
    $region5: #{tpu_custom_call.1} parent=1 // pred_fallthru
      _
    // Predicated region
    $region6: #{tpu_custom_call.1} parent=1 // pred_check
      _
    $region7: #{tpu_custom_call.1} parent=1 // pred_check_branch
      %40 = sbr.rel (0) target = $region9
    $region8: #{tpu_custom_call.1} parent=1 // pred_region
      %42 = vsyncadd [#allocation6], 0
      %s43 = sshll.u32 %s1, 4
      %s44 = int_to_ptr.hbm [resolvable:$true] %s43
      %s45 = sshll.u32 [#allocation5], 4
      %s46 = int_to_ptr.vmem [resolvable:$true] %s45
      %51 = dma.hbm_to_vmem [thread:$0]  %s44, 512, %s46, [#allocation6], 256, 256, 16
    $region9: #{tpu_custom_call.1} parent=1 // pred_fallthru
      _
    // Predicated region
    $region10: #{tpu_custom_call.1} parent=1 // pred_check
      _
    $region11: #{tpu_custom_call.1} parent=1 // pred_check_branch
      %53 = sbr.rel (0) target = $region13
    $region12: #{tpu_custom_call.1} parent=1 // pred_region
      %55 = vsyncadd [#allocation6], 0
      %s57 = sshll.u32 %s2, 4
      %s58 = int_to_ptr.hbm [resolvable:$true] %s57
      %s59 = sshll.u32 [#allocation7], 4
      %s60 = int_to_ptr.vmem [resolvable:$true] %s59
      %62 = dma.hbm_to_vmem [thread:$0]  %s58, 64, %s60, [#allocation6]
    $region13: #{tpu_custom_call.1} parent=1 // pred_fallthru
      _
    // Predicated region
    $region14: #{tpu_custom_call.1} parent=1 // pred_check
      _
    $region15: #{tpu_custom_call.1} parent=1 // pred_check_branch
      %64 = sbr.rel (0) target = $region17
    $region16: #{tpu_custom_call.1} parent=1 // pred_region
      %66 = vsyncadd [#allocation9], 0
      %s67 = sshll.u32 %s3, 4
      %s68 = int_to_ptr.hbm [resolvable:$true] %s67
      %s69 = sshll.u32 [#allocation8], 4
      %s70 = int_to_ptr.vmem [resolvable:$true] %s69
      %75 = dma.hbm_to_vmem [thread:$0]  %s68, 8192, %s70, [#allocation9], 128, 128, 8
    $region17: #{tpu_custom_call.1} parent=1 // pred_fallthru
      _
    // Predicated region
    $region18: #{tpu_custom_call.1} parent=1 // pred_check
      _
    $region19: #{tpu_custom_call.1} parent=1 // pred_check_branch
      %77 = sbr.rel (0) target = $region21
    $region20: #{tpu_custom_call.1} parent=1 // pred_region
      _
    $region21: #{tpu_custom_call.1} parent=1 // pred_fallthru
      _
    // Predicated region
    $region22: #{tpu_custom_call.1} parent=1 // pred_check
      _
    $region23: #{tpu_custom_call.1} parent=1 // pred_check_branch
      %79 = sbr.rel (0) target = $region25
    $region24: #{tpu_custom_call.1} parent=1 // pred_region
      %81 = vsyncadd [#allocation9], 0
      %s82 = sshll.u32 %s5, 4
      %s83 = int_to_ptr.hbm [resolvable:$true] %s82
      %s84 = sshll.u32 [#allocation10], 4
      %s85 = int_to_ptr.vmem [resolvable:$true] %s84
      %90 = dma.hbm_to_vmem [thread:$0]  %s83, 12288, %s85, [#allocation9], 384, 384, 24
    $region25: #{tpu_custom_call.1} parent=1 // pred_fallthru
      _
    // Predicated region
    $region26: #{tpu_custom_call.1} parent=1 // pred_check
      _
    $region27: #{tpu_custom_call.1} parent=1 // pred_check_branch
      %92 = sbr.rel (0) target = $region29
    $region28: #{tpu_custom_call.1} parent=1 // pred_region
      %94 = vsyncadd [#allocation12], 0
      %s96 = sshll.u32 %s6, 4
      %s97 = int_to_ptr.hbm [resolvable:$true] %s96
      %s98 = sshll.u32 [#allocation11], 4
      %s99 = int_to_ptr.vmem [resolvable:$true] %s98
      %101 = dma.hbm_to_vmem [thread:$0]  %s97, 96, %s99, [#allocation12]
    $region29: #{tpu_custom_call.1} parent=1 // pred_fallthru
      _
    // Predicated region
    $region30: #{tpu_custom_call.1} parent=1 // pred_check
      _
    $region31: #{tpu_custom_call.1} parent=1 // pred_check_branch
      %103 = sbr.rel (0) target = $region33
    $region32: #{tpu_custom_call.1} parent=1 // pred_region
      %105 = vsyncadd [#allocation12], 0
      %s106 = sshll.u32 %s7, 4
      %s107 = int_to_ptr.hbm [resolvable:$true] %s106
      %s108 = sshll.u32 [#allocation13], 4
      %s109 = int_to_ptr.vmem [resolvable:$true] %s108
      %114 = dma.hbm_to_vmem [thread:$0]  %s107, 32768, %s109, [#allocation12], 512, 512, 32
    $region33: #{tpu_custom_call.1} parent=1 // pred_fallthru
      _
    // Predicated region
    $region34: #{tpu_custom_call.1} parent=1 // pred_check
      _
    $region35: #{tpu_custom_call.1} parent=1 // pred_check_branch
      %116 = sbr.rel (0) target = $region37
    $region36: #{tpu_custom_call.1} parent=1 // pred_region
      %118 = vsyncadd [#allocation15], 0
      %s120 = sshll.u32 %s8, 4
      %s121 = int_to_ptr.hbm [resolvable:$true] %s120
      %s122 = sshll.u32 [#allocation14], 4
      %s123 = int_to_ptr.vmem [resolvable:$true] %s122
      %125 = dma.hbm_to_vmem [thread:$0]  %s121, 128, %s123, [#allocation15]
    $region37: #{tpu_custom_call.1} parent=1 // pred_fallthru
      _
    // Predicated region
    $region38: #{tpu_custom_call.1} parent=1 // pred_check
      _
    $region39: #{tpu_custom_call.1} parent=1 // pred_check_branch
      %127 = sbr.rel (0) target = $region41
    $region40: #{tpu_custom_call.1} parent=1 // pred_region
      %129 = vsyncadd [#allocation15], 0
      %s130 = sshll.u32 %s9, 4
      %s131 = int_to_ptr.hbm [resolvable:$true] %s130
      %s132 = sshll.u32 [#allocation16], 4
      %s133 = int_to_ptr.vmem [resolvable:$true] %s132
      %138 = dma.hbm_to_vmem [thread:$0]  %s131, 2048, %s133, [#allocation15], 64, 64, 4
    $region41: #{tpu_custom_call.1} parent=1 // pred_fallthru
      _
    // Predicated region
    $region42: #{tpu_custom_call.1} parent=1 // pred_check
      _
    $region43: #{tpu_custom_call.1} parent=1 // pred_check_branch
      %140 = sbr.rel (0) target = $region45
    $region44: #{tpu_custom_call.1} parent=1 // pred_region
      _
    $region45: #{tpu_custom_call.1} parent=1 // pred_fallthru
      _
    // Predicated region
    $region46: #{tpu_custom_call.1} parent=1 // pred_check
      _
    $region47: #{tpu_custom_call.1} parent=1 // pred_check_branch
      %142 = sbr.rel (0) target = $region49
    $region48: #{tpu_custom_call.1} parent=1 // pred_region
      %144 = vsyncadd [#allocation18], 0
      %s145 = sshll.u32 %s11, 4
      %s146 = int_to_ptr.hbm [resolvable:$true] %s145
      %s147 = sshll.u32 [#allocation17], 4
      %s148 = int_to_ptr.vmem [resolvable:$true] %s147
      %153 = dma.hbm_to_vmem [thread:$0]  %s146, 1024, %s148, [#allocation18], 64, 64, 4
    $region49: #{tpu_custom_call.1} parent=1 // pred_fallthru
      _
    // Predicated region
    $region50: #{tpu_custom_call.1} parent=1 // pred_check
      _
    $region51: #{tpu_custom_call.1} parent=1 // pred_check_branch
      %155 = sbr.rel (0) target = $region53
    $region52: #{tpu_custom_call.1} parent=1 // pred_region
      _
    $region53: #{tpu_custom_call.1} parent=1 // pred_fallthru
      _
    // Predicated region
    $region54: #{tpu_custom_call.1} parent=1 // pred_check
      _
    $region55: #{tpu_custom_call.1} parent=1 // pred_check_branch
      %157 = sbr.rel (0) target = $region57
    $region56: #{tpu_custom_call.1} parent=1 // pred_region
      %159 = dma.done [#allocation3], 128
    $region57: #{tpu_custom_call.1} parent=1 // pred_fallthru
      _
    // Predicated region
    $region58: #{tpu_custom_call.1} parent=1 // pred_check
      _
    $region59: #{tpu_custom_call.1} parent=1 // pred_check_branch
      %161 = sbr.rel (0) target = $region61
    $region60: #{tpu_custom_call.1} parent=1 // pred_region
      %163 = dma.done [#allocation6], 512
    $region61: #{tpu_custom_call.1} parent=1 // pred_fallthru
      _
    // Predicated region
    $region62: #{tpu_custom_call.1} parent=1 // pred_check
      _
    $region63: #{tpu_custom_call.1} parent=1 // pred_check_branch
      %165 = sbr.rel (0) target = $region65
    $region64: #{tpu_custom_call.1} parent=1 // pred_region
      %167 = dma.done [#allocation6], 64
    $region65: #{tpu_custom_call.1} parent=1 // pred_fallthru
      _
    // Predicated region
    $region66: #{tpu_custom_call.1} parent=1 // pred_check
      _
    $region67: #{tpu_custom_call.1} parent=1 // pred_check_branch
      %169 = sbr.rel (0) target = $region69
    $region68: #{tpu_custom_call.1} parent=1 // pred_region
      %171 = dma.done [#allocation9], 8192
    $region69: #{tpu_custom_call.1} parent=1 // pred_fallthru
      _
    // Predicated region
    $region70: #{tpu_custom_call.1} parent=1 // pred_check
      _
    $region71: #{tpu_custom_call.1} parent=1 // pred_check_branch
      %173 = sbr.rel (0) target = $region73
    $region72: #{tpu_custom_call.1} parent=1 // pred_region
      %175 = dma.done [#allocation9], 12288
    $region73: #{tpu_custom_call.1} parent=1 // pred_fallthru
      _
    // Predicated region
    $region74: #{tpu_custom_call.1} parent=1 // pred_check
      _
    $region75: #{tpu_custom_call.1} parent=1 // pred_check_branch
      %177 = sbr.rel (0) target = $region77
    $region76: #{tpu_custom_call.1} parent=1 // pred_region
      %179 = dma.done [#allocation12], 96
    $region77: #{tpu_custom_call.1} parent=1 // pred_fallthru
      _
    // Predicated region
    $region78: #{tpu_custom_call.1} parent=1 // pred_check
      _
    $region79: #{tpu_custom_call.1} parent=1 // pred_check_branch
      %181 = sbr.rel (0) target = $region81
    $region80: #{tpu_custom_call.1} parent=1 // pred_region
      %183 = dma.done [#allocation12], 32768
    $region81: #{tpu_custom_call.1} parent=1 // pred_fallthru
      _
    // Predicated region
    $region82: #{tpu_custom_call.1} parent=1 // pred_check
      _
    $region83: #{tpu_custom_call.1} parent=1 // pred_check_branch
      %185 = sbr.rel (0) target = $region85
    $region84: #{tpu_custom_call.1} parent=1 // pred_region
      %187 = dma.done [#allocation15], 128
    $region85: #{tpu_custom_call.1} parent=1 // pred_fallthru
      _
    // Predicated region
    $region86: #{tpu_custom_call.1} parent=1 // pred_check
      _
    $region87: #{tpu_custom_call.1} parent=1 // pred_check_branch
      %189 = sbr.rel (0) target = $region89
    $region88: #{tpu_custom_call.1} parent=1 // pred_region
      %191 = dma.done [#allocation15], 2048
    $region89: #{tpu_custom_call.1} parent=1 // pred_fallthru
      _
    // Predicated region
    $region90: #{tpu_custom_call.1} parent=1 // pred_check
      _
    $region91: #{tpu_custom_call.1} parent=1 // pred_check_branch
      %193 = sbr.rel (0) target = $region93
    $region92: #{tpu_custom_call.1} parent=1 // pred_region
      %195 = dma.done [#allocation18], 1024
    $region93: #{tpu_custom_call.1} parent=1 // pred_fallthru
      _
    %v197 = vld [vmem:[#allocation2] sm:$0xff]
    %v198 = vpack.c.bf16 %v197, %v197
    %v199 = vld [vmem:[#allocation5] sm:$0xff]
    %v200 = vld [vmem:[#allocation5 + $0x8] sm:$0xff]
    %v201 = vld [vmem:[#allocation5 + $0x10] sm:$0xff]
    %v202 = vld [vmem:[#allocation5 + $0x18] sm:$0xff]
    %v203 = vld [vmem:[#allocation7] sm:$0xf]
    %v205 = vperm.slane %v203, 0
    %v206 = vperm.slane %v203, 1
    %v207 = vperm.slane %v203, 2
    %v208 = vperm.slane %v203, 3
    %v217 = vunpack.c.l.b16 %v199
    %v218 = vunpack.c.h.b16 %v199
    %v219 = vunpack.c.l.b16 %v200
    %v220 = vunpack.c.h.b16 %v200
    %v221 = vunpack.c.l.b16 %v201
    %v222 = vunpack.c.h.b16 %v201
    %v223 = vunpack.c.l.b16 %v202
    %v224 = vunpack.c.h.b16 %v202
    %v225 = vpack.c.b16 %v221, %v217
    %v226 = vpack.c.b16 %v222, %v218
    %v227 = vpack.c.b16 %v223, %v219
    %v228 = vpack.c.b16 %v224, %v220
    %vm233 = vcmask 130048
    %v235 = vsel %vm233, %v198, 0
    %237 = vmatpush.bf16.msra.mxu0 0
    %238 = vmatpush.bf16.msra.mxu0 0
    %239 = vmatpush.bf16.msra.mxu0 0
    %240 = vmatpush.bf16.msra.mxu0 0
    %241 = vmatpush.bf16.msra.mxu0 0
    %242 = vmatpush.bf16.msra.mxu0 0
    %243 = vmatpush.bf16.msra.mxu0 0
    %244 = vmatpush.bf16.msra.mxu0 %v225
    %245 = vmatmul.bf16.gmra.mxu0 %v235
    %v246 = vpop.f32.mrf.mxu0
    %v247 = vadd.f32 %v205, %v246
    %v248 = vpop.f32.mrf.mxu0
    %249 = vdwg.mxu0
    %250 = vmatpush.bf16.msra.mxu0 0
    %251 = vmatpush.bf16.msra.mxu0 0
    %252 = vmatpush.bf16.msra.mxu0 0
    %253 = vmatpush.bf16.msra.mxu0 0
    %254 = vmatpush.bf16.msra.mxu0 0
    %255 = vmatpush.bf16.msra.mxu0 0
    %256 = vmatpush.bf16.msra.mxu0 0
    %257 = vmatpush.bf16.msra.mxu0 %v226
    %258 = vmatmul.bf16.gmra.mxu0 %v235
    %v259 = vpop.f32.mrf.mxu0
    %v260 = vadd.f32 %v206, %v259
    %v261 = vpop.f32.mrf.mxu0
    %262 = vdwg.mxu0
    %263 = vmatpush.bf16.msra.mxu0 0
    %264 = vmatpush.bf16.msra.mxu0 0
    %265 = vmatpush.bf16.msra.mxu0 0
    %266 = vmatpush.bf16.msra.mxu0 0
    %267 = vmatpush.bf16.msra.mxu0 0
    %268 = vmatpush.bf16.msra.mxu0 0
    %269 = vmatpush.bf16.msra.mxu0 0
    %270 = vmatpush.bf16.msra.mxu0 %v227
    %271 = vmatmul.bf16.gmra.mxu0 %v235
    %v272 = vpop.f32.mrf.mxu0
    %v273 = vadd.f32 %v207, %v272
    %v274 = vpop.f32.mrf.mxu0
    %275 = vdwg.mxu0
    %276 = vmatpush.bf16.msra.mxu0 0
    %277 = vmatpush.bf16.msra.mxu0 0
    %278 = vmatpush.bf16.msra.mxu0 0
    %279 = vmatpush.bf16.msra.mxu0 0
    %280 = vmatpush.bf16.msra.mxu0 0
    %281 = vmatpush.bf16.msra.mxu0 0
    %282 = vmatpush.bf16.msra.mxu0 0
    %283 = vmatpush.bf16.msra.mxu0 %v228
    %284 = vmatmul.bf16.gmra.mxu0 %v235
    %v285 = vpop.f32.mrf.mxu0
    %v286 = vadd.f32 %v208, %v285
    %v287 = vpop.f32.mrf.mxu0
    %288 = vdwg.mxu0
    %v289 = vmax.f32 %v247, 0.0
    %v290 = vmax.f32 %v260, 0.0
    %v291 = vmax.f32 %v273, 0.0
    %v292 = vmax.f32 %v286, 0.0
    %v293 = vpack.c.bf16 %v289, %v289
    %v294 = vpack.c.bf16 %v290, %v290
    %v295 = vpack.c.bf16 %v291, %v291
    %v296 = vpack.c.bf16 %v292, %v292
    %v297 = vld [vmem:[#allocation8] sm:$0xff]
    %v298 = vld [vmem:[#allocation8 + $0x8] sm:$0xff]
    %v299 = vld [vmem:[#allocation8 + $0x10] sm:$0xff]
    %v300 = vld [vmem:[#allocation8 + $0x18] sm:$0xff]
    %v301 = vld [vmem:[#allocation8 + $0x20] sm:$0xff]
    %v302 = vld [vmem:[#allocation8 + $0x28] sm:$0xff]
    %v303 = vld [vmem:[#allocation8 + $0x30] sm:$0xff]
    %v304 = vld [vmem:[#allocation8 + $0x38] sm:$0xff]
    %v305 = vld [vmem:[#allocation8 + $0x40] sm:$0xff]
    %v306 = vld [vmem:[#allocation8 + $0x48] sm:$0xff]
    %v307 = vld [vmem:[#allocation8 + $0x50] sm:$0xff]
    %v308 = vld [vmem:[#allocation8 + $0x58] sm:$0xff]
    %v309 = vld [vmem:[#allocation8 + $0x60] sm:$0xff]
    %v310 = vld [vmem:[#allocation8 + $0x68] sm:$0xff]
    %v311 = vld [vmem:[#allocation8 + $0x70] sm:$0xff]
    %v312 = vld [vmem:[#allocation8 + $0x78] sm:$0xff]
    %v313 = vld [vmem:[#allocation8 + $0x80] sm:$0xff]
    %v314 = vld [vmem:[#allocation8 + $0x88] sm:$0xff]
    %v315 = vld [vmem:[#allocation8 + $0x90] sm:$0xff]
    %v316 = vld [vmem:[#allocation8 + $0x98] sm:$0xff]
    %v317 = vld [vmem:[#allocation8 + $0xa0] sm:$0xff]
    %v318 = vld [vmem:[#allocation8 + $0xa8] sm:$0xff]
    %v319 = vld [vmem:[#allocation8 + $0xb0] sm:$0xff]
    %v320 = vld [vmem:[#allocation8 + $0xb8] sm:$0xff]
    %v321 = vld [vmem:[#allocation8 + $0xc0] sm:$0xff]
    %v322 = vld [vmem:[#allocation8 + $0xc8] sm:$0xff]
    %v323 = vld [vmem:[#allocation8 + $0xd0] sm:$0xff]
    %v324 = vld [vmem:[#allocation8 + $0xd8] sm:$0xff]
    %v325 = vld [vmem:[#allocation8 + $0xe0] sm:$0xff]
    %v326 = vld [vmem:[#allocation8 + $0xe8] sm:$0xff]
    %v327 = vld [vmem:[#allocation8 + $0xf0] sm:$0xff]
    %v328 = vld [vmem:[#allocation8 + $0xf8] sm:$0xff]
    %v329 = vld [vmem:[#allocation8 + $0x100] sm:$0xff]
    %v330 = vld [vmem:[#allocation8 + $0x108] sm:$0xff]
    %v331 = vld [vmem:[#allocation8 + $0x110] sm:$0xff]
    %v332 = vld [vmem:[#allocation8 + $0x118] sm:$0xff]
    %v333 = vld [vmem:[#allocation8 + $0x120] sm:$0xff]
    %v334 = vld [vmem:[#allocation8 + $0x128] sm:$0xff]
    %v335 = vld [vmem:[#allocation8 + $0x130] sm:$0xff]
    %v336 = vld [vmem:[#allocation8 + $0x138] sm:$0xff]
    %v337 = vld [vmem:[#allocation8 + $0x140] sm:$0xff]
    %v338 = vld [vmem:[#allocation8 + $0x148] sm:$0xff]
    %v339 = vld [vmem:[#allocation8 + $0x150] sm:$0xff]
    %v340 = vld [vmem:[#allocation8 + $0x158] sm:$0xff]
    %v341 = vld [vmem:[#allocation8 + $0x160] sm:$0xff]
    %v342 = vld [vmem:[#allocation8 + $0x168] sm:$0xff]
    %v343 = vld [vmem:[#allocation8 + $0x170] sm:$0xff]
    %v344 = vld [vmem:[#allocation8 + $0x178] sm:$0xff]
    %v345 = vld [vmem:[#allocation8 + $0x180] sm:$0xff]
    %v346 = vld [vmem:[#allocation8 + $0x188] sm:$0xff]
    %v347 = vld [vmem:[#allocation8 + $0x190] sm:$0xff]
    %v348 = vld [vmem:[#allocation8 + $0x198] sm:$0xff]
    %v349 = vld [vmem:[#allocation8 + $0x1a0] sm:$0xff]
    %v350 = vld [vmem:[#allocation8 + $0x1a8] sm:$0xff]
    %v351 = vld [vmem:[#allocation8 + $0x1b0] sm:$0xff]
    %v352 = vld [vmem:[#allocation8 + $0x1b8] sm:$0xff]
    %v353 = vld [vmem:[#allocation8 + $0x1c0] sm:$0xff]
    %v354 = vld [vmem:[#allocation8 + $0x1c8] sm:$0xff]
    %v355 = vld [vmem:[#allocation8 + $0x1d0] sm:$0xff]
    %v356 = vld [vmem:[#allocation8 + $0x1d8] sm:$0xff]
    %v357 = vld [vmem:[#allocation8 + $0x1e0] sm:$0xff]
    %v358 = vld [vmem:[#allocation8 + $0x1e8] sm:$0xff]
    %v359 = vld [vmem:[#allocation8 + $0x1f0] sm:$0xff]
    %v360 = vld [vmem:[#allocation8 + $0x1f8] sm:$0xff]
    %v361 = vld [vmem:[%s4] sm:$0x3]
    %v363 = vperm.slane %v361, 0
    %v364 = vperm.slane %v361, 1
    %v431 = vunpack.c.l.b16 %v297
    %v432 = vunpack.c.h.b16 %v297
    %v433 = vunpack.c.l.b16 %v298
    %v434 = vunpack.c.h.b16 %v298
    %v435 = vunpack.c.l.b16 %v299
    %v436 = vunpack.c.h.b16 %v299
    %v437 = vunpack.c.l.b16 %v300
    %v438 = vunpack.c.h.b16 %v300
    %v439 = vunpack.c.l.b16 %v301
    %v440 = vunpack.c.h.b16 %v301
    %v441 = vunpack.c.l.b16 %v302
    %v442 = vunpack.c.h.b16 %v302
    %v443 = vunpack.c.l.b16 %v303
    %v444 = vunpack.c.h.b16 %v303
    %v445 = vunpack.c.l.b16 %v304
    %v446 = vunpack.c.h.b16 %v304
    %v447 = vunpack.c.l.b16 %v305
    %v448 = vunpack.c.h.b16 %v305
    %v449 = vunpack.c.l.b16 %v306
    %v450 = vunpack.c.h.b16 %v306
    %v451 = vunpack.c.l.b16 %v307
    %v452 = vunpack.c.h.b16 %v307
    %v453 = vunpack.c.l.b16 %v308
    %v454 = vunpack.c.h.b16 %v308
    %v455 = vunpack.c.l.b16 %v309
    %v456 = vunpack.c.h.b16 %v309
    %v457 = vunpack.c.l.b16 %v310
    %v458 = vunpack.c.h.b16 %v310
    %v459 = vunpack.c.l.b16 %v311
    %v460 = vunpack.c.h.b16 %v311
    %v461 = vunpack.c.l.b16 %v312
    %v462 = vunpack.c.h.b16 %v312
    %v463 = vunpack.c.l.b16 %v313
    %v464 = vunpack.c.h.b16 %v313
    %v465 = vunpack.c.l.b16 %v314
    %v466 = vunpack.c.h.b16 %v314
    %v467 = vunpack.c.l.b16 %v315
    %v468 = vunpack.c.h.b16 %v315
    %v469 = vunpack.c.l.b16 %v316
    %v470 = vunpack.c.h.b16 %v316
    %v471 = vunpack.c.l.b16 %v317
    %v472 = vunpack.c.h.b16 %v317
    %v473 = vunpack.c.l.b16 %v318
    %v474 = vunpack.c.h.b16 %v318
    %v475 = vunpack.c.l.b16 %v319
    %v476 = vunpack.c.h.b16 %v319
    %v477 = vunpack.c.l.b16 %v320
    %v478 = vunpack.c.h.b16 %v320
    %v479 = vunpack.c.l.b16 %v321
    %v480 = vunpack.c.h.b16 %v321
    %v481 = vunpack.c.l.b16 %v322
    %v482 = vunpack.c.h.b16 %v322
    %v483 = vunpack.c.l.b16 %v323
    %v484 = vunpack.c.h.b16 %v323
    %v485 = vunpack.c.l.b16 %v324
    %v486 = vunpack.c.h.b16 %v324
    %v487 = vunpack.c.l.b16 %v325
    %v488 = vunpack.c.h.b16 %v325
    %v489 = vunpack.c.l.b16 %v326
    %v490 = vunpack.c.h.b16 %v326
    %v491 = vunpack.c.l.b16 %v327
    %v492 = vunpack.c.h.b16 %v327
    %v493 = vunpack.c.l.b16 %v328
    %v494 = vunpack.c.h.b16 %v328
    %v495 = vunpack.c.l.b16 %v329
    %v496 = vunpack.c.h.b16 %v329
    %v497 = vunpack.c.l.b16 %v330
    %v498 = vunpack.c.h.b16 %v330
    %v499 = vunpack.c.l.b16 %v331
    %v500 = vunpack.c.h.b16 %v331
    %v501 = vunpack.c.l.b16 %v332
    %v502 = vunpack.c.h.b16 %v332
    %v503 = vunpack.c.l.b16 %v333
    %v504 = vunpack.c.h.b16 %v333
    %v505 = vunpack.c.l.b16 %v334
    %v506 = vunpack.c.h.b16 %v334
    %v507 = vunpack.c.l.b16 %v335
    %v508 = vunpack.c.h.b16 %v335
    %v509 = vunpack.c.l.b16 %v336
    %v510 = vunpack.c.h.b16 %v336
    %v511 = vunpack.c.l.b16 %v337
    %v512 = vunpack.c.h.b16 %v337
    %v513 = vunpack.c.l.b16 %v338
    %v514 = vunpack.c.h.b16 %v338
    %v515 = vunpack.c.l.b16 %v339
    %v516 = vunpack.c.h.b16 %v339
    %v517 = vunpack.c.l.b16 %v340
    %v518 = vunpack.c.h.b16 %v340
    %v519 = vunpack.c.l.b16 %v341
    %v520 = vunpack.c.h.b16 %v341
    %v521 = vunpack.c.l.b16 %v342
    %v522 = vunpack.c.h.b16 %v342
    %v523 = vunpack.c.l.b16 %v343
    %v524 = vunpack.c.h.b16 %v343
    %v525 = vunpack.c.l.b16 %v344
    %v526 = vunpack.c.h.b16 %v344
    %v527 = vunpack.c.l.b16 %v345
    %v528 = vunpack.c.h.b16 %v345
    %v529 = vunpack.c.l.b16 %v346
    %v530 = vunpack.c.h.b16 %v346
    %v531 = vunpack.c.l.b16 %v347
    %v532 = vunpack.c.h.b16 %v347
    %v533 = vunpack.c.l.b16 %v348
    %v534 = vunpack.c.h.b16 %v348
    %v535 = vunpack.c.l.b16 %v349
    %v536 = vunpack.c.h.b16 %v349
    %v537 = vunpack.c.l.b16 %v350
    %v538 = vunpack.c.h.b16 %v350
    %v539 = vunpack.c.l.b16 %v351
    %v540 = vunpack.c.h.b16 %v351
    %v541 = vunpack.c.l.b16 %v352
    %v542 = vunpack.c.h.b16 %v352
    %v543 = vunpack.c.l.b16 %v353
    %v544 = vunpack.c.h.b16 %v353
    %v545 = vunpack.c.l.b16 %v354
    %v546 = vunpack.c.h.b16 %v354
    %v547 = vunpack.c.l.b16 %v355
    %v548 = vunpack.c.h.b16 %v355
    %v549 = vunpack.c.l.b16 %v356
    %v550 = vunpack.c.h.b16 %v356
    %v551 = vunpack.c.l.b16 %v357
    %v552 = vunpack.c.h.b16 %v357
    %v553 = vunpack.c.l.b16 %v358
    %v554 = vunpack.c.h.b16 %v358
    %v555 = vunpack.c.l.b16 %v359
    %v556 = vunpack.c.h.b16 %v359
    %v557 = vunpack.c.l.b16 %v360
    %v558 = vunpack.c.h.b16 %v360
    %v559 = vpack.c.b16 %v433, %v431
    %v560 = vpack.c.b16 %v434, %v432
    %v561 = vpack.c.b16 %v437, %v435
    %v562 = vpack.c.b16 %v438, %v436
    %v563 = vpack.c.b16 %v441, %v439
    %v564 = vpack.c.b16 %v442, %v440
    %v565 = vpack.c.b16 %v445, %v443
    %v566 = vpack.c.b16 %v446, %v444
    %v567 = vpack.c.b16 %v449, %v447
    %v568 = vpack.c.b16 %v450, %v448
    %v569 = vpack.c.b16 %v453, %v451
    %v570 = vpack.c.b16 %v454, %v452
    %v571 = vpack.c.b16 %v457, %v455
    %v572 = vpack.c.b16 %v458, %v456
    %v573 = vpack.c.b16 %v461, %v459
    %v574 = vpack.c.b16 %v462, %v460
    %v575 = vpack.c.b16 %v465, %v463
    %v576 = vpack.c.b16 %v466, %v464
    %v577 = vpack.c.b16 %v469, %v467
    %v578 = vpack.c.b16 %v470, %v468
    %v579 = vpack.c.b16 %v473, %v471
    %v580 = vpack.c.b16 %v474, %v472
    %v581 = vpack.c.b16 %v477, %v475
    %v582 = vpack.c.b16 %v478, %v476
    %v583 = vpack.c.b16 %v481, %v479
    %v584 = vpack.c.b16 %v482, %v480
    %v585 = vpack.c.b16 %v485, %v483
    %v586 = vpack.c.b16 %v486, %v484
    %v587 = vpack.c.b16 %v489, %v487
    %v588 = vpack.c.b16 %v490, %v488
    %v589 = vpack.c.b16 %v493, %v491
    %v590 = vpack.c.b16 %v494, %v492
    %v591 = vpack.c.b16 %v497, %v495
    %v592 = vpack.c.b16 %v498, %v496
    %v593 = vpack.c.b16 %v501, %v499
    %v594 = vpack.c.b16 %v502, %v500
    %v595 = vpack.c.b16 %v505, %v503
    %v596 = vpack.c.b16 %v506, %v504
    %v597 = vpack.c.b16 %v509, %v507
    %v598 = vpack.c.b16 %v510, %v508
    %v599 = vpack.c.b16 %v513, %v511
    %v600 = vpack.c.b16 %v514, %v512
    %v601 = vpack.c.b16 %v517, %v515
    %v602 = vpack.c.b16 %v518, %v516
    %v603 = vpack.c.b16 %v521, %v519
    %v604 = vpack.c.b16 %v522, %v520
    %v605 = vpack.c.b16 %v525, %v523
    %v606 = vpack.c.b16 %v526, %v524
    %v607 = vpack.c.b16 %v529, %v527
    %v608 = vpack.c.b16 %v530, %v528
    %v609 = vpack.c.b16 %v533, %v531
    %v610 = vpack.c.b16 %v534, %v532
    %v611 = vpack.c.b16 %v537, %v535
    %v612 = vpack.c.b16 %v538, %v536
    %v613 = vpack.c.b16 %v541, %v539
    %v614 = vpack.c.b16 %v542, %v540
    %v615 = vpack.c.b16 %v545, %v543
    %v616 = vpack.c.b16 %v546, %v544
    %v617 = vpack.c.b16 %v549, %v547
    %v618 = vpack.c.b16 %v550, %v548
    %v619 = vpack.c.b16 %v553, %v551
    %v620 = vpack.c.b16 %v554, %v552
    %v621 = vpack.c.b16 %v557, %v555
    %v622 = vpack.c.b16 %v558, %v556
    %687 = vmatpush.bf16.msra.mxu0 %v573
    %688 = vmatpush.bf16.msra.mxu0 %v571
    %689 = vmatpush.bf16.msra.mxu0 %v569
    %690 = vmatpush.bf16.msra.mxu0 %v567
    %691 = vmatpush.bf16.msra.mxu0 %v565
    %692 = vmatpush.bf16.msra.mxu0 %v563
    %693 = vmatpush.bf16.msra.mxu0 %v561
    %694 = vmatpush.bf16.msra.mxu0 %v559
    %695 = vmatmul.bf16.gmra.mxu0 %v293
    %v696 = vpop.f32.mrf.mxu0
    %v697 = vadd.f32 %v363, %v696
    %v698 = vpop.f32.mrf.mxu0
    %699 = vdwg.mxu0
    %700 = vmatpush.bf16.msra.mxu0 %v589
    %701 = vmatpush.bf16.msra.mxu0 %v587
    %702 = vmatpush.bf16.msra.mxu0 %v585
    %703 = vmatpush.bf16.msra.mxu0 %v583
    %704 = vmatpush.bf16.msra.mxu0 %v581
    %705 = vmatpush.bf16.msra.mxu0 %v579
    %706 = vmatpush.bf16.msra.mxu0 %v577
    %707 = vmatpush.bf16.msra.mxu0 %v575
    %708 = vmatmul.bf16.gmra.mxu0 %v294
    %v709 = vpop.f32.mrf.mxu0
    %v710 = vadd.f32 %v697, %v709
    %v711 = vpop.f32.mrf.mxu0
    %712 = vdwg.mxu0
    %713 = vmatpush.bf16.msra.mxu0 %v605
    %714 = vmatpush.bf16.msra.mxu0 %v603
    %715 = vmatpush.bf16.msra.mxu0 %v601
    %716 = vmatpush.bf16.msra.mxu0 %v599
    %717 = vmatpush.bf16.msra.mxu0 %v597
    %718 = vmatpush.bf16.msra.mxu0 %v595
    %719 = vmatpush.bf16.msra.mxu0 %v593
    %720 = vmatpush.bf16.msra.mxu0 %v591
    %721 = vmatmul.bf16.gmra.mxu0 %v295
    %v722 = vpop.f32.mrf.mxu0
    %v723 = vadd.f32 %v710, %v722
    %v724 = vpop.f32.mrf.mxu0
    %725 = vdwg.mxu0
    %726 = vmatpush.bf16.msra.mxu0 %v621
    %727 = vmatpush.bf16.msra.mxu0 %v619
    %728 = vmatpush.bf16.msra.mxu0 %v617
    %729 = vmatpush.bf16.msra.mxu0 %v615
    %730 = vmatpush.bf16.msra.mxu0 %v613
    %731 = vmatpush.bf16.msra.mxu0 %v611
    %732 = vmatpush.bf16.msra.mxu0 %v609
    %733 = vmatpush.bf16.msra.mxu0 %v607
    %734 = vmatmul.bf16.gmra.mxu0 %v296
    %v735 = vpop.f32.mrf.mxu0
    %v736 = vadd.f32 %v723, %v735
    %v737 = vpop.f32.mrf.mxu0
    %738 = vdwg.mxu0
    %739 = vmatpush.bf16.msra.mxu0 %v574
    %740 = vmatpush.bf16.msra.mxu0 %v572
    %741 = vmatpush.bf16.msra.mxu0 %v570
    %742 = vmatpush.bf16.msra.mxu0 %v568
    %743 = vmatpush.bf16.msra.mxu0 %v566
    %744 = vmatpush.bf16.msra.mxu0 %v564
    %745 = vmatpush.bf16.msra.mxu0 %v562
    %746 = vmatpush.bf16.msra.mxu0 %v560
    %747 = vmatmul.bf16.gmra.mxu0 %v293
    %v748 = vpop.f32.mrf.mxu0
    %v749 = vadd.f32 %v364, %v748
    %v750 = vpop.f32.mrf.mxu0
    %751 = vdwg.mxu0
    %752 = vmatpush.bf16.msra.mxu0 %v590
    %753 = vmatpush.bf16.msra.mxu0 %v588
    %754 = vmatpush.bf16.msra.mxu0 %v586
    %755 = vmatpush.bf16.msra.mxu0 %v584
    %756 = vmatpush.bf16.msra.mxu0 %v582
    %757 = vmatpush.bf16.msra.mxu0 %v580
    %758 = vmatpush.bf16.msra.mxu0 %v578
    %759 = vmatpush.bf16.msra.mxu0 %v576
    %760 = vmatmul.bf16.gmra.mxu0 %v294
    %v761 = vpop.f32.mrf.mxu0
    %v762 = vadd.f32 %v749, %v761
    %v763 = vpop.f32.mrf.mxu0
    %764 = vdwg.mxu0
    %765 = vmatpush.bf16.msra.mxu0 %v606
    %766 = vmatpush.bf16.msra.mxu0 %v604
    %767 = vmatpush.bf16.msra.mxu0 %v602
    %768 = vmatpush.bf16.msra.mxu0 %v600
    %769 = vmatpush.bf16.msra.mxu0 %v598
    %770 = vmatpush.bf16.msra.mxu0 %v596
    %771 = vmatpush.bf16.msra.mxu0 %v594
    %772 = vmatpush.bf16.msra.mxu0 %v592
    %773 = vmatmul.bf16.gmra.mxu0 %v295
    %v774 = vpop.f32.mrf.mxu0
    %v775 = vadd.f32 %v762, %v774
    %v776 = vpop.f32.mrf.mxu0
    %777 = vdwg.mxu0
    %778 = vmatpush.bf16.msra.mxu0 %v622
    %779 = vmatpush.bf16.msra.mxu0 %v620
    %780 = vmatpush.bf16.msra.mxu0 %v618
    %781 = vmatpush.bf16.msra.mxu0 %v616
    %782 = vmatpush.bf16.msra.mxu0 %v614
    %783 = vmatpush.bf16.msra.mxu0 %v612
    %784 = vmatpush.bf16.msra.mxu0 %v610
    %785 = vmatpush.bf16.msra.mxu0 %v608
    %786 = vmatmul.bf16.gmra.mxu0 %v296
    %v787 = vpop.f32.mrf.mxu0
    %v788 = vadd.f32 %v775, %v787
    %v789 = vpop.f32.mrf.mxu0
    %790 = vdwg.mxu0
    %v791 = vmax.f32 %v736, 0.0
    %v792 = vmax.f32 %v788, 0.0
    %v793 = vpack.c.bf16 %v791, %v791
    %v794 = vpack.c.bf16 %v792, %v792
    %v795 = vld [vmem:[#allocation10] sm:$0xff]
    %v796 = vld [vmem:[#allocation10 + $0x8] sm:$0xff]
    %v797 = vld [vmem:[#allocation10 + $0x10] sm:$0xff]
    %v798 = vld [vmem:[#allocation10 + $0x18] sm:$0xff]
    %v799 = vld [vmem:[#allocation10 + $0x20] sm:$0xff]
    %v800 = vld [vmem:[#allocation10 + $0x28] sm:$0xff]
    %v801 = vld [vmem:[#allocation10 + $0x30] sm:$0xff]
    %v802 = vld [vmem:[#allocation10 + $0x38] sm:$0xff]
    %v803 = vld [vmem:[#allocation10 + $0x40] sm:$0xff]
    %v804 = vld [vmem:[#allocation10 + $0x48] sm:$0xff]
    %v805 = vld [vmem:[#allocation10 + $0x50] sm:$0xff]
    %v806 = vld [vmem:[#allocation10 + $0x58] sm:$0xff]
    %v807 = vld [vmem:[#allocation10 + $0x60] sm:$0xff]
    %v808 = vld [vmem:[#allocation10 + $0x68] sm:$0xff]
    %v809 = vld [vmem:[#allocation10 + $0x70] sm:$0xff]
    %v810 = vld [vmem:[#allocation10 + $0x78] sm:$0xff]
    %v811 = vld [vmem:[#allocation10 + $0x80] sm:$0xff]
    %v812 = vld [vmem:[#allocation10 + $0x88] sm:$0xff]
    %v813 = vld [vmem:[#allocation10 + $0x90] sm:$0xff]
    %v814 = vld [vmem:[#allocation10 + $0x98] sm:$0xff]
    %v815 = vld [vmem:[#allocation10 + $0xa0] sm:$0xff]
    %v816 = vld [vmem:[#allocation10 + $0xa8] sm:$0xff]
    %v817 = vld [vmem:[#allocation10 + $0xb0] sm:$0xff]
    %v818 = vld [vmem:[#allocation10 + $0xb8] sm:$0xff]
    %v819 = vld [vmem:[#allocation10 + $0xc0] sm:$0xff]
    %v820 = vld [vmem:[#allocation10 + $0xc8] sm:$0xff]
    %v821 = vld [vmem:[#allocation10 + $0xd0] sm:$0xff]
    %v822 = vld [vmem:[#allocation10 + $0xd8] sm:$0xff]
    %v823 = vld [vmem:[#allocation10 + $0xe0] sm:$0xff]
    %v824 = vld [vmem:[#allocation10 + $0xe8] sm:$0xff]
    %v825 = vld [vmem:[#allocation10 + $0xf0] sm:$0xff]
    %v826 = vld [vmem:[#allocation10 + $0xf8] sm:$0xff]
    %v827 = vld [vmem:[#allocation10 + $0x100] sm:$0xff]
    %v828 = vld [vmem:[#allocation10 + $0x108] sm:$0xff]
    %v829 = vld [vmem:[#allocation10 + $0x110] sm:$0xff]
    %v830 = vld [vmem:[#allocation10 + $0x118] sm:$0xff]
    %v831 = vld [vmem:[#allocation10 + $0x120] sm:$0xff]
    %v832 = vld [vmem:[#allocation10 + $0x128] sm:$0xff]
    %v833 = vld [vmem:[#allocation10 + $0x130] sm:$0xff]
    %v834 = vld [vmem:[#allocation10 + $0x138] sm:$0xff]
    %v835 = vld [vmem:[#allocation10 + $0x140] sm:$0xff]
    %v836 = vld [vmem:[#allocation10 + $0x148] sm:$0xff]
    %v837 = vld [vmem:[#allocation10 + $0x150] sm:$0xff]
    %v838 = vld [vmem:[#allocation10 + $0x158] sm:$0xff]
    %v839 = vld [vmem:[#allocation10 + $0x160] sm:$0xff]
    %v840 = vld [vmem:[#allocation10 + $0x168] sm:$0xff]
    %v841 = vld [vmem:[#allocation10 + $0x170] sm:$0xff]
    %v842 = vld [vmem:[#allocation10 + $0x178] sm:$0xff]
    %v843 = vld [vmem:[#allocation10 + $0x180] sm:$0xff]
    %v844 = vld [vmem:[#allocation10 + $0x188] sm:$0xff]
    %v845 = vld [vmem:[#allocation10 + $0x190] sm:$0xff]
    %v846 = vld [vmem:[#allocation10 + $0x198] sm:$0xff]
    %v847 = vld [vmem:[#allocation10 + $0x1a0] sm:$0xff]
    %v848 = vld [vmem:[#allocation10 + $0x1a8] sm:$0xff]
    %v849 = vld [vmem:[#allocation10 + $0x1b0] sm:$0xff]
    %v850 = vld [vmem:[#allocation10 + $0x1b8] sm:$0xff]
    %v851 = vld [vmem:[#allocation10 + $0x1c0] sm:$0xff]
    %v852 = vld [vmem:[#allocation10 + $0x1c8] sm:$0xff]
    %v853 = vld [vmem:[#allocation10 + $0x1d0] sm:$0xff]
    %v854 = vld [vmem:[#allocation10 + $0x1d8] sm:$0xff]
    %v855 = vld [vmem:[#allocation10 + $0x1e0] sm:$0xff]
    %v856 = vld [vmem:[#allocation10 + $0x1e8] sm:$0xff]
    %v857 = vld [vmem:[#allocation10 + $0x1f0] sm:$0xff]
    %v858 = vld [vmem:[#allocation10 + $0x1f8] sm:$0xff]
    %v859 = vld [vmem:[#allocation10 + $0x200] sm:$0xff]
    %v860 = vld [vmem:[#allocation10 + $0x208] sm:$0xff]
    %v861 = vld [vmem:[#allocation10 + $0x210] sm:$0xff]
    %v862 = vld [vmem:[#allocation10 + $0x218] sm:$0xff]
    %v863 = vld [vmem:[#allocation10 + $0x220] sm:$0xff]
    %v864 = vld [vmem:[#allocation10 + $0x228] sm:$0xff]
    %v865 = vld [vmem:[#allocation10 + $0x230] sm:$0xff]
    %v866 = vld [vmem:[#allocation10 + $0x238] sm:$0xff]
    %v867 = vld [vmem:[#allocation10 + $0x240] sm:$0xff]
    %v868 = vld [vmem:[#allocation10 + $0x248] sm:$0xff]
    %v869 = vld [vmem:[#allocation10 + $0x250] sm:$0xff]
    %v870 = vld [vmem:[#allocation10 + $0x258] sm:$0xff]
    %v871 = vld [vmem:[#allocation10 + $0x260] sm:$0xff]
    %v872 = vld [vmem:[#allocation10 + $0x268] sm:$0xff]
    %v873 = vld [vmem:[#allocation10 + $0x270] sm:$0xff]
    %v874 = vld [vmem:[#allocation10 + $0x278] sm:$0xff]
    %v875 = vld [vmem:[#allocation10 + $0x280] sm:$0xff]
    %v876 = vld [vmem:[#allocation10 + $0x288] sm:$0xff]
    %v877 = vld [vmem:[#allocation10 + $0x290] sm:$0xff]
    %v878 = vld [vmem:[#allocation10 + $0x298] sm:$0xff]
    %v879 = vld [vmem:[#allocation10 + $0x2a0] sm:$0xff]
    %v880 = vld [vmem:[#allocation10 + $0x2a8] sm:$0xff]
    %v881 = vld [vmem:[#allocation10 + $0x2b0] sm:$0xff]
    %v882 = vld [vmem:[#allocation10 + $0x2b8] sm:$0xff]
    %v883 = vld [vmem:[#allocation10 + $0x2c0] sm:$0xff]
    %v884 = vld [vmem:[#allocation10 + $0x2c8] sm:$0xff]
    %v885 = vld [vmem:[#allocation10 + $0x2d0] sm:$0xff]
    %v886 = vld [vmem:[#allocation10 + $0x2d8] sm:$0xff]
    %v887 = vld [vmem:[#allocation10 + $0x2e0] sm:$0xff]
    %v888 = vld [vmem:[#allocation10 + $0x2e8] sm:$0xff]
    %v889 = vld [vmem:[#allocation10 + $0x2f0] sm:$0xff]
    %v890 = vld [vmem:[#allocation10 + $0x2f8] sm:$0xff]
    %v891 = vld [vmem:[#allocation11] sm:$0x3f]
    %v893 = vperm.slane %v891, 0
    %v894 = vperm.slane %v891, 1
    %v895 = vperm.slane %v891, 2
    %v896 = vperm.slane %v891, 3
    %v897 = vperm.slane %v891, 4
    %v898 = vperm.slane %v891, 5
    %v1001 = vunpack.c.l.b16 %v795
    %v1002 = vunpack.c.h.b16 %v795
    %v1003 = vunpack.c.l.b16 %v796
    %v1004 = vunpack.c.h.b16 %v796
    %v1005 = vunpack.c.l.b16 %v797
    %v1006 = vunpack.c.h.b16 %v797
    %v1007 = vunpack.c.l.b16 %v798
    %v1008 = vunpack.c.h.b16 %v798
    %v1009 = vunpack.c.l.b16 %v799
    %v1010 = vunpack.c.h.b16 %v799
    %v1011 = vunpack.c.l.b16 %v800
    %v1012 = vunpack.c.h.b16 %v800
    %v1013 = vunpack.c.l.b16 %v801
    %v1014 = vunpack.c.h.b16 %v801
    %v1015 = vunpack.c.l.b16 %v802
    %v1016 = vunpack.c.h.b16 %v802
    %v1017 = vunpack.c.l.b16 %v803
    %v1018 = vunpack.c.h.b16 %v803
    %v1019 = vunpack.c.l.b16 %v804
    %v1020 = vunpack.c.h.b16 %v804
    %v1021 = vunpack.c.l.b16 %v805
    %v1022 = vunpack.c.h.b16 %v805
    %v1023 = vunpack.c.l.b16 %v806
    %v1024 = vunpack.c.h.b16 %v806
    %v1025 = vunpack.c.l.b16 %v807
    %v1026 = vunpack.c.h.b16 %v807
    %v1027 = vunpack.c.l.b16 %v808
    %v1028 = vunpack.c.h.b16 %v808
    %v1029 = vunpack.c.l.b16 %v809
    %v1030 = vunpack.c.h.b16 %v809
    %v1031 = vunpack.c.l.b16 %v810
    %v1032 = vunpack.c.h.b16 %v810
    %v1033 = vunpack.c.l.b16 %v811
    %v1034 = vunpack.c.h.b16 %v811
    %v1035 = vunpack.c.l.b16 %v812
    %v1036 = vunpack.c.h.b16 %v812
    %v1037 = vunpack.c.l.b16 %v813
    %v1038 = vunpack.c.h.b16 %v813
    %v1039 = vunpack.c.l.b16 %v814
    %v1040 = vunpack.c.h.b16 %v814
    %v1041 = vunpack.c.l.b16 %v815
    %v1042 = vunpack.c.h.b16 %v815
    %v1043 = vunpack.c.l.b16 %v816
    %v1044 = vunpack.c.h.b16 %v816
    %v1045 = vunpack.c.l.b16 %v817
    %v1046 = vunpack.c.h.b16 %v817
    %v1047 = vunpack.c.l.b16 %v818
    %v1048 = vunpack.c.h.b16 %v818
    %v1049 = vunpack.c.l.b16 %v819
    %v1050 = vunpack.c.h.b16 %v819
    %v1051 = vunpack.c.l.b16 %v820
    %v1052 = vunpack.c.h.b16 %v820
    %v1053 = vunpack.c.l.b16 %v821
    %v1054 = vunpack.c.h.b16 %v821
    %v1055 = vunpack.c.l.b16 %v822
    %v1056 = vunpack.c.h.b16 %v822
    %v1057 = vunpack.c.l.b16 %v823
    %v1058 = vunpack.c.h.b16 %v823
    %v1059 = vunpack.c.l.b16 %v824
    %v1060 = vunpack.c.h.b16 %v824
    %v1061 = vunpack.c.l.b16 %v825
    %v1062 = vunpack.c.h.b16 %v825
    %v1063 = vunpack.c.l.b16 %v826
    %v1064 = vunpack.c.h.b16 %v826
    %v1065 = vunpack.c.l.b16 %v827
    %v1066 = vunpack.c.h.b16 %v827
    %v1067 = vunpack.c.l.b16 %v828
    %v1068 = vunpack.c.h.b16 %v828
    %v1069 = vunpack.c.l.b16 %v829
    %v1070 = vunpack.c.h.b16 %v829
    %v1071 = vunpack.c.l.b16 %v830
    %v1072 = vunpack.c.h.b16 %v830
    %v1073 = vunpack.c.l.b16 %v831
    %v1074 = vunpack.c.h.b16 %v831
    %v1075 = vunpack.c.l.b16 %v832
    %v1076 = vunpack.c.h.b16 %v832
    %v1077 = vunpack.c.l.b16 %v833
    %v1078 = vunpack.c.h.b16 %v833
    %v1079 = vunpack.c.l.b16 %v834
    %v1080 = vunpack.c.h.b16 %v834
    %v1081 = vunpack.c.l.b16 %v835
    %v1082 = vunpack.c.h.b16 %v835
    %v1083 = vunpack.c.l.b16 %v836
    %v1084 = vunpack.c.h.b16 %v836
    %v1085 = vunpack.c.l.b16 %v837
    %v1086 = vunpack.c.h.b16 %v837
    %v1087 = vunpack.c.l.b16 %v838
    %v1088 = vunpack.c.h.b16 %v838
    %v1089 = vunpack.c.l.b16 %v839
    %v1090 = vunpack.c.h.b16 %v839
    %v1091 = vunpack.c.l.b16 %v840
    %v1092 = vunpack.c.h.b16 %v840
    %v1093 = vunpack.c.l.b16 %v841
    %v1094 = vunpack.c.h.b16 %v841
    %v1095 = vunpack.c.l.b16 %v842
    %v1096 = vunpack.c.h.b16 %v842
    %v1097 = vunpack.c.l.b16 %v843
    %v1098 = vunpack.c.h.b16 %v843
    %v1099 = vunpack.c.l.b16 %v844
    %v1100 = vunpack.c.h.b16 %v844
    %v1101 = vunpack.c.l.b16 %v845
    %v1102 = vunpack.c.h.b16 %v845
    %v1103 = vunpack.c.l.b16 %v846
    %v1104 = vunpack.c.h.b16 %v846
    %v1105 = vunpack.c.l.b16 %v847
    %v1106 = vunpack.c.h.b16 %v847
    %v1107 = vunpack.c.l.b16 %v848
    %v1108 = vunpack.c.h.b16 %v848
    %v1109 = vunpack.c.l.b16 %v849
    %v1110 = vunpack.c.h.b16 %v849
    %v1111 = vunpack.c.l.b16 %v850
    %v1112 = vunpack.c.h.b16 %v850
    %v1113 = vunpack.c.l.b16 %v851
    %v1114 = vunpack.c.h.b16 %v851
    %v1115 = vunpack.c.l.b16 %v852
    %v1116 = vunpack.c.h.b16 %v852
    %v1117 = vunpack.c.l.b16 %v853
    %v1118 = vunpack.c.h.b16 %v853
    %v1119 = vunpack.c.l.b16 %v854
    %v1120 = vunpack.c.h.b16 %v854
    %v1121 = vunpack.c.l.b16 %v855
    %v1122 = vunpack.c.h.b16 %v855
    %v1123 = vunpack.c.l.b16 %v856
    %v1124 = vunpack.c.h.b16 %v856
    %v1125 = vunpack.c.l.b16 %v857
    %v1126 = vunpack.c.h.b16 %v857
    %v1127 = vunpack.c.l.b16 %v858
    %v1128 = vunpack.c.h.b16 %v858
    %v1129 = vunpack.c.l.b16 %v859
    %v1130 = vunpack.c.h.b16 %v859
    %v1131 = vunpack.c.l.b16 %v860
    %v1132 = vunpack.c.h.b16 %v860
    %v1133 = vunpack.c.l.b16 %v861
    %v1134 = vunpack.c.h.b16 %v861
    %v1135 = vunpack.c.l.b16 %v862
    %v1136 = vunpack.c.h.b16 %v862
    %v1137 = vunpack.c.l.b16 %v863
    %v1138 = vunpack.c.h.b16 %v863
    %v1139 = vunpack.c.l.b16 %v864
    %v1140 = vunpack.c.h.b16 %v864
    %v1141 = vunpack.c.l.b16 %v865
    %v1142 = vunpack.c.h.b16 %v865
    %v1143 = vunpack.c.l.b16 %v866
    %v1144 = vunpack.c.h.b16 %v866
    %v1145 = vunpack.c.l.b16 %v867
    %v1146 = vunpack.c.h.b16 %v867
    %v1147 = vunpack.c.l.b16 %v868
    %v1148 = vunpack.c.h.b16 %v868
    %v1149 = vunpack.c.l.b16 %v869
    %v1150 = vunpack.c.h.b16 %v869
    %v1151 = vunpack.c.l.b16 %v870
    %v1152 = vunpack.c.h.b16 %v870
    %v1153 = vunpack.c.l.b16 %v871
    %v1154 = vunpack.c.h.b16 %v871
    %v1155 = vunpack.c.l.b16 %v872
    %v1156 = vunpack.c.h.b16 %v872
    %v1157 = vunpack.c.l.b16 %v873
    %v1158 = vunpack.c.h.b16 %v873
    %v1159 = vunpack.c.l.b16 %v874
    %v1160 = vunpack.c.h.b16 %v874
    %v1161 = vunpack.c.l.b16 %v875
    %v1162 = vunpack.c.h.b16 %v875
    %v1163 = vunpack.c.l.b16 %v876
    %v1164 = vunpack.c.h.b16 %v876
    %v1165 = vunpack.c.l.b16 %v877
    %v1166 = vunpack.c.h.b16 %v877
    %v1167 = vunpack.c.l.b16 %v878
    %v1168 = vunpack.c.h.b16 %v878
    %v1169 = vunpack.c.l.b16 %v879
    %v1170 = vunpack.c.h.b16 %v879
    %v1171 = vunpack.c.l.b16 %v880
    %v1172 = vunpack.c.h.b16 %v880
    %v1173 = vunpack.c.l.b16 %v881
    %v1174 = vunpack.c.h.b16 %v881
    %v1175 = vunpack.c.l.b16 %v882
    %v1176 = vunpack.c.h.b16 %v882
    %v1177 = vunpack.c.l.b16 %v883
    %v1178 = vunpack.c.h.b16 %v883
    %v1179 = vunpack.c.l.b16 %v884
    %v1180 = vunpack.c.h.b16 %v884
    %v1181 = vunpack.c.l.b16 %v885
    %v1182 = vunpack.c.h.b16 %v885
    %v1183 = vunpack.c.l.b16 %v886
    %v1184 = vunpack.c.h.b16 %v886
    %v1185 = vunpack.c.l.b16 %v887
    %v1186 = vunpack.c.h.b16 %v887
    %v1187 = vunpack.c.l.b16 %v888
    %v1188 = vunpack.c.h.b16 %v888
    %v1189 = vunpack.c.l.b16 %v889
    %v1190 = vunpack.c.h.b16 %v889
    %v1191 = vunpack.c.l.b16 %v890
    %v1192 = vunpack.c.h.b16 %v890
    %v1193 = vpack.c.b16 %v1007, %v1001
    %v1194 = vpack.c.b16 %v1008, %v1002
    %v1195 = vpack.c.b16 %v1009, %v1003
    %v1196 = vpack.c.b16 %v1010, %v1004
    %v1197 = vpack.c.b16 %v1011, %v1005
    %v1198 = vpack.c.b16 %v1012, %v1006
    %v1199 = vpack.c.b16 %v1019, %v1013
    %v1200 = vpack.c.b16 %v1020, %v1014
    %v1201 = vpack.c.b16 %v1021, %v1015
    %v1202 = vpack.c.b16 %v1022, %v1016
    %v1203 = vpack.c.b16 %v1023, %v1017
    %v1204 = vpack.c.b16 %v1024, %v1018
    %v1205 = vpack.c.b16 %v1031, %v1025
    %v1206 = vpack.c.b16 %v1032, %v1026
    %v1207 = vpack.c.b16 %v1033, %v1027
    %v1208 = vpack.c.b16 %v1034, %v1028
    %v1209 = vpack.c.b16 %v1035, %v1029
    %v1210 = vpack.c.b16 %v1036, %v1030
    %v1211 = vpack.c.b16 %v1043, %v1037
    %v1212 = vpack.c.b16 %v1044, %v1038
    %v1213 = vpack.c.b16 %v1045, %v1039
    %v1214 = vpack.c.b16 %v1046, %v1040
    %v1215 = vpack.c.b16 %v1047, %v1041
    %v1216 = vpack.c.b16 %v1048, %v1042
    %v1217 = vpack.c.b16 %v1055, %v1049
    %v1218 = vpack.c.b16 %v1056, %v1050
    %v1219 = vpack.c.b16 %v1057, %v1051
    %v1220 = vpack.c.b16 %v1058, %v1052
    %v1221 = vpack.c.b16 %v1059, %v1053
    %v1222 = vpack.c.b16 %v1060, %v1054
    %v1223 = vpack.c.b16 %v1067, %v1061
    %v1224 = vpack.c.b16 %v1068, %v1062
    %v1225 = vpack.c.b16 %v1069, %v1063
    %v1226 = vpack.c.b16 %v1070, %v1064
    %v1227 = vpack.c.b16 %v1071, %v1065
    %v1228 = vpack.c.b16 %v1072, %v1066
    %v1229 = vpack.c.b16 %v1079, %v1073
    %v1230 = vpack.c.b16 %v1080, %v1074
    %v1231 = vpack.c.b16 %v1081, %v1075
    %v1232 = vpack.c.b16 %v1082, %v1076
    %v1233 = vpack.c.b16 %v1083, %v1077
    %v1234 = vpack.c.b16 %v1084, %v1078
    %v1235 = vpack.c.b16 %v1091, %v1085
    %v1236 = vpack.c.b16 %v1092, %v1086
    %v1237 = vpack.c.b16 %v1093, %v1087
    %v1238 = vpack.c.b16 %v1094, %v1088
    %v1239 = vpack.c.b16 %v1095, %v1089
    %v1240 = vpack.c.b16 %v1096, %v1090
    %v1241 = vpack.c.b16 %v1103, %v1097
    %v1242 = vpack.c.b16 %v1104, %v1098
    %v1243 = vpack.c.b16 %v1105, %v1099
    %v1244 = vpack.c.b16 %v1106, %v1100
    %v1245 = vpack.c.b16 %v1107, %v1101
    %v1246 = vpack.c.b16 %v1108, %v1102
    %v1247 = vpack.c.b16 %v1115, %v1109
    %v1248 = vpack.c.b16 %v1116, %v1110
    %v1249 = vpack.c.b16 %v1117, %v1111
    %v1250 = vpack.c.b16 %v1118, %v1112
    %v1251 = vpack.c.b16 %v1119, %v1113
    %v1252 = vpack.c.b16 %v1120, %v1114
    %v1253 = vpack.c.b16 %v1127, %v1121
    %v1254 = vpack.c.b16 %v1128, %v1122
    %v1255 = vpack.c.b16 %v1129, %v1123
    %v1256 = vpack.c.b16 %v1130, %v1124
    %v1257 = vpack.c.b16 %v1131, %v1125
    %v1258 = vpack.c.b16 %v1132, %v1126
    %v1259 = vpack.c.b16 %v1139, %v1133
    %v1260 = vpack.c.b16 %v1140, %v1134
    %v1261 = vpack.c.b16 %v1141, %v1135
    %v1262 = vpack.c.b16 %v1142, %v1136
    %v1263 = vpack.c.b16 %v1143, %v1137
    %v1264 = vpack.c.b16 %v1144, %v1138
    %v1265 = vpack.c.b16 %v1151, %v1145
    %v1266 = vpack.c.b16 %v1152, %v1146
    %v1267 = vpack.c.b16 %v1153, %v1147
    %v1268 = vpack.c.b16 %v1154, %v1148
    %v1269 = vpack.c.b16 %v1155, %v1149
    %v1270 = vpack.c.b16 %v1156, %v1150
    %v1271 = vpack.c.b16 %v1163, %v1157
    %v1272 = vpack.c.b16 %v1164, %v1158
    %v1273 = vpack.c.b16 %v1165, %v1159
    %v1274 = vpack.c.b16 %v1166, %v1160
    %v1275 = vpack.c.b16 %v1167, %v1161
    %v1276 = vpack.c.b16 %v1168, %v1162
    %v1277 = vpack.c.b16 %v1175, %v1169
    %v1278 = vpack.c.b16 %v1176, %v1170
    %v1279 = vpack.c.b16 %v1177, %v1171
    %v1280 = vpack.c.b16 %v1178, %v1172
    %v1281 = vpack.c.b16 %v1179, %v1173
    %v1282 = vpack.c.b16 %v1180, %v1174
    %v1283 = vpack.c.b16 %v1187, %v1181
    %v1284 = vpack.c.b16 %v1188, %v1182
    %v1285 = vpack.c.b16 %v1189, %v1183
    %v1286 = vpack.c.b16 %v1190, %v1184
    %v1287 = vpack.c.b16 %v1191, %v1185
    %v1288 = vpack.c.b16 %v1192, %v1186
    %1385 = vmatpush.bf16.msra.mxu0 %v1235
    %1386 = vmatpush.bf16.msra.mxu0 %v1229
    %1387 = vmatpush.bf16.msra.mxu0 %v1223
    %1388 = vmatpush.bf16.msra.mxu0 %v1217
    %1389 = vmatpush.bf16.msra.mxu0 %v1211
    %1390 = vmatpush.bf16.msra.mxu0 %v1205
    %1391 = vmatpush.bf16.msra.mxu0 %v1199
    %1392 = vmatpush.bf16.msra.mxu0 %v1193
    %1393 = vmatmul.bf16.gmra.mxu0 %v793
    %v1394 = vpop.f32.mrf.mxu0
    %v1395 = vadd.f32 %v893, %v1394
    %v1396 = vpop.f32.mrf.mxu0
    %1397 = vdwg.mxu0
    %1398 = vmatpush.bf16.msra.mxu0 %v1283
    %1399 = vmatpush.bf16.msra.mxu0 %v1277
    %1400 = vmatpush.bf16.msra.mxu0 %v1271
    %1401 = vmatpush.bf16.msra.mxu0 %v1265
    %1402 = vmatpush.bf16.msra.mxu0 %v1259
    %1403 = vmatpush.bf16.msra.mxu0 %v1253
    %1404 = vmatpush.bf16.msra.mxu0 %v1247
    %1405 = vmatpush.bf16.msra.mxu0 %v1241
    %1406 = vmatmul.bf16.gmra.mxu0 %v794
    %v1407 = vpop.f32.mrf.mxu0
    %v1408 = vadd.f32 %v1395, %v1407
    %v1409 = vpop.f32.mrf.mxu0
    %1410 = vdwg.mxu0
    %1411 = vmatpush.bf16.msra.mxu0 %v1236
    %1412 = vmatpush.bf16.msra.mxu0 %v1230
    %1413 = vmatpush.bf16.msra.mxu0 %v1224
    %1414 = vmatpush.bf16.msra.mxu0 %v1218
    %1415 = vmatpush.bf16.msra.mxu0 %v1212
    %1416 = vmatpush.bf16.msra.mxu0 %v1206
    %1417 = vmatpush.bf16.msra.mxu0 %v1200
    %1418 = vmatpush.bf16.msra.mxu0 %v1194
    %1419 = vmatmul.bf16.gmra.mxu0 %v793
    %v1420 = vpop.f32.mrf.mxu0
    %v1421 = vadd.f32 %v894, %v1420
    %v1422 = vpop.f32.mrf.mxu0
    %1423 = vdwg.mxu0
    %1424 = vmatpush.bf16.msra.mxu0 %v1284
    %1425 = vmatpush.bf16.msra.mxu0 %v1278
    %1426 = vmatpush.bf16.msra.mxu0 %v1272
    %1427 = vmatpush.bf16.msra.mxu0 %v1266
    %1428 = vmatpush.bf16.msra.mxu0 %v1260
    %1429 = vmatpush.bf16.msra.mxu0 %v1254
    %1430 = vmatpush.bf16.msra.mxu0 %v1248
    %1431 = vmatpush.bf16.msra.mxu0 %v1242
    %1432 = vmatmul.bf16.gmra.mxu0 %v794
    %v1433 = vpop.f32.mrf.mxu0
    %v1434 = vadd.f32 %v1421, %v1433
    %v1435 = vpop.f32.mrf.mxu0
    %1436 = vdwg.mxu0
    %1437 = vmatpush.bf16.msra.mxu0 %v1237
    %1438 = vmatpush.bf16.msra.mxu0 %v1231
    %1439 = vmatpush.bf16.msra.mxu0 %v1225
    %1440 = vmatpush.bf16.msra.mxu0 %v1219
    %1441 = vmatpush.bf16.msra.mxu0 %v1213
    %1442 = vmatpush.bf16.msra.mxu0 %v1207
    %1443 = vmatpush.bf16.msra.mxu0 %v1201
    %1444 = vmatpush.bf16.msra.mxu0 %v1195
    %1445 = vmatmul.bf16.gmra.mxu0 %v793
    %v1446 = vpop.f32.mrf.mxu0
    %v1447 = vadd.f32 %v895, %v1446
    %v1448 = vpop.f32.mrf.mxu0
    %1449 = vdwg.mxu0
    %1450 = vmatpush.bf16.msra.mxu0 %v1285
    %1451 = vmatpush.bf16.msra.mxu0 %v1279
    %1452 = vmatpush.bf16.msra.mxu0 %v1273
    %1453 = vmatpush.bf16.msra.mxu0 %v1267
    %1454 = vmatpush.bf16.msra.mxu0 %v1261
    %1455 = vmatpush.bf16.msra.mxu0 %v1255
    %1456 = vmatpush.bf16.msra.mxu0 %v1249
    %1457 = vmatpush.bf16.msra.mxu0 %v1243
    %1458 = vmatmul.bf16.gmra.mxu0 %v794
    %v1459 = vpop.f32.mrf.mxu0
    %v1460 = vadd.f32 %v1447, %v1459
    %v1461 = vpop.f32.mrf.mxu0
    %1462 = vdwg.mxu0
    %1463 = vmatpush.bf16.msra.mxu0 %v1238
    %1464 = vmatpush.bf16.msra.mxu0 %v1232
    %1465 = vmatpush.bf16.msra.mxu0 %v1226
    %1466 = vmatpush.bf16.msra.mxu0 %v1220
    %1467 = vmatpush.bf16.msra.mxu0 %v1214
    %1468 = vmatpush.bf16.msra.mxu0 %v1208
    %1469 = vmatpush.bf16.msra.mxu0 %v1202
    %1470 = vmatpush.bf16.msra.mxu0 %v1196
    %1471 = vmatmul.bf16.gmra.mxu0 %v793
    %v1472 = vpop.f32.mrf.mxu0
    %v1473 = vadd.f32 %v896, %v1472
    %v1474 = vpop.f32.mrf.mxu0
    %1475 = vdwg.mxu0
    %1476 = vmatpush.bf16.msra.mxu0 %v1286
    %1477 = vmatpush.bf16.msra.mxu0 %v1280
    %1478 = vmatpush.bf16.msra.mxu0 %v1274
    %1479 = vmatpush.bf16.msra.mxu0 %v1268
    %1480 = vmatpush.bf16.msra.mxu0 %v1262
    %1481 = vmatpush.bf16.msra.mxu0 %v1256
    %1482 = vmatpush.bf16.msra.mxu0 %v1250
    %1483 = vmatpush.bf16.msra.mxu0 %v1244
    %1484 = vmatmul.bf16.gmra.mxu0 %v794
    %v1485 = vpop.f32.mrf.mxu0
    %v1486 = vadd.f32 %v1473, %v1485
    %v1487 = vpop.f32.mrf.mxu0
    %1488 = vdwg.mxu0
    %1489 = vmatpush.bf16.msra.mxu0 %v1239
    %1490 = vmatpush.bf16.msra.mxu0 %v1233
    %1491 = vmatpush.bf16.msra.mxu0 %v1227
    %1492 = vmatpush.bf16.msra.mxu0 %v1221
    %1493 = vmatpush.bf16.msra.mxu0 %v1215
    %1494 = vmatpush.bf16.msra.mxu0 %v1209
    %1495 = vmatpush.bf16.msra.mxu0 %v1203
    %1496 = vmatpush.bf16.msra.mxu0 %v1197
    %1497 = vmatmul.bf16.gmra.mxu0 %v793
    %v1498 = vpop.f32.mrf.mxu0
    %v1499 = vadd.f32 %v897, %v1498
    %v1500 = vpop.f32.mrf.mxu0
    %1501 = vdwg.mxu0
    %1502 = vmatpush.bf16.msra.mxu0 %v1287
    %1503 = vmatpush.bf16.msra.mxu0 %v1281
    %1504 = vmatpush.bf16.msra.mxu0 %v1275
    %1505 = vmatpush.bf16.msra.mxu0 %v1269
    %1506 = vmatpush.bf16.msra.mxu0 %v1263
    %1507 = vmatpush.bf16.msra.mxu0 %v1257
    %1508 = vmatpush.bf16.msra.mxu0 %v1251
    %1509 = vmatpush.bf16.msra.mxu0 %v1245
    %1510 = vmatmul.bf16.gmra.mxu0 %v794
    %v1511 = vpop.f32.mrf.mxu0
    %v1512 = vadd.f32 %v1499, %v1511
    %v1513 = vpop.f32.mrf.mxu0
    %1514 = vdwg.mxu0
    %1515 = vmatpush.bf16.msra.mxu0 %v1240
    %1516 = vmatpush.bf16.msra.mxu0 %v1234
    %1517 = vmatpush.bf16.msra.mxu0 %v1228
    %1518 = vmatpush.bf16.msra.mxu0 %v1222
    %1519 = vmatpush.bf16.msra.mxu0 %v1216
    %1520 = vmatpush.bf16.msra.mxu0 %v1210
    %1521 = vmatpush.bf16.msra.mxu0 %v1204
    %1522 = vmatpush.bf16.msra.mxu0 %v1198
    %1523 = vmatmul.bf16.gmra.mxu0 %v793
    %v1524 = vpop.f32.mrf.mxu0
    %v1525 = vadd.f32 %v898, %v1524
    %v1526 = vpop.f32.mrf.mxu0
    %1527 = vdwg.mxu0
    %1528 = vmatpush.bf16.msra.mxu0 %v1288
    %1529 = vmatpush.bf16.msra.mxu0 %v1282
    %1530 = vmatpush.bf16.msra.mxu0 %v1276
    %1531 = vmatpush.bf16.msra.mxu0 %v1270
    %1532 = vmatpush.bf16.msra.mxu0 %v1264
    %1533 = vmatpush.bf16.msra.mxu0 %v1258
    %1534 = vmatpush.bf16.msra.mxu0 %v1252
    %1535 = vmatpush.bf16.msra.mxu0 %v1246
    %1536 = vmatmul.bf16.gmra.mxu0 %v794
    %v1537 = vpop.f32.mrf.mxu0
    %v1538 = vadd.f32 %v1525, %v1537
    %v1539 = vpop.f32.mrf.mxu0
    %1540 = vdwg.mxu0
    %v1541 = vmax.f32 %v1408, 0.0
    %v1542 = vmax.f32 %v1434, 0.0
    %v1543 = vmax.f32 %v1460, 0.0
    %v1544 = vmax.f32 %v1486, 0.0
    %v1545 = vmax.f32 %v1512, 0.0
    %v1546 = vmax.f32 %v1538, 0.0
    %v1547 = vpack.c.bf16 %v1541, %v1541
    %v1548 = vpack.c.bf16 %v1542, %v1542
    %v1549 = vpack.c.bf16 %v1543, %v1543
    %v1550 = vpack.c.bf16 %v1544, %v1544
    %v1551 = vld [vmem:[#allocation13] sm:$0xff]
    %v1552 = vld [vmem:[#allocation13 + $0x8] sm:$0xff]
    %v1553 = vld [vmem:[#allocation13 + $0x10] sm:$0xff]
    %v1554 = vld [vmem:[#allocation13 + $0x18] sm:$0xff]
    %v1555 = vld [vmem:[#allocation13 + $0x20] sm:$0xff]
    %v1556 = vld [vmem:[#allocation13 + $0x28] sm:$0xff]
    %v1557 = vld [vmem:[#allocation13 + $0x30] sm:$0xff]
    %v1558 = vld [vmem:[#allocation13 + $0x38] sm:$0xff]
    %v1559 = vld [vmem:[#allocation13 + $0x40] sm:$0xff]
    %v1560 = vld [vmem:[#allocation13 + $0x48] sm:$0xff]
    %v1561 = vld [vmem:[#allocation13 + $0x50] sm:$0xff]
    %v1562 = vld [vmem:[#allocation13 + $0x58] sm:$0xff]
    %v1563 = vld [vmem:[#allocation13 + $0x60] sm:$0xff]
    %v1564 = vld [vmem:[#allocation13 + $0x68] sm:$0xff]
    %v1565 = vld [vmem:[#allocation13 + $0x70] sm:$0xff]
    %v1566 = vld [vmem:[#allocation13 + $0x78] sm:$0xff]
    %v1567 = vld [vmem:[#allocation13 + $0x80] sm:$0xff]
    %v1568 = vld [vmem:[#allocation13 + $0x88] sm:$0xff]
    %v1569 = vld [vmem:[#allocation13 + $0x90] sm:$0xff]
    %v1570 = vld [vmem:[#allocation13 + $0x98] sm:$0xff]
    %v1571 = vld [vmem:[#allocation13 + $0xa0] sm:$0xff]
    %v1572 = vld [vmem:[#allocation13 + $0xa8] sm:$0xff]
    %v1573 = vld [vmem:[#allocation13 + $0xb0] sm:$0xff]
    %v1574 = vld [vmem:[#allocation13 + $0xb8] sm:$0xff]
    %v1575 = vld [vmem:[#allocation13 + $0xc0] sm:$0xff]
    %v1576 = vld [vmem:[#allocation13 + $0xc8] sm:$0xff]
    %v1577 = vld [vmem:[#allocation13 + $0xd0] sm:$0xff]
    %v1578 = vld [vmem:[#allocation13 + $0xd8] sm:$0xff]
    %v1579 = vld [vmem:[#allocation13 + $0xe0] sm:$0xff]
    %v1580 = vld [vmem:[#allocation13 + $0xe8] sm:$0xff]
    %v1581 = vld [vmem:[#allocation13 + $0xf0] sm:$0xff]
    %v1582 = vld [vmem:[#allocation13 + $0xf8] sm:$0xff]
    %v1583 = vld [vmem:[#allocation13 + $0x100] sm:$0xff]
    %v1584 = vld [vmem:[#allocation13 + $0x108] sm:$0xff]
    %v1585 = vld [vmem:[#allocation13 + $0x110] sm:$0xff]
    %v1586 = vld [vmem:[#allocation13 + $0x118] sm:$0xff]
    %v1587 = vld [vmem:[#allocation13 + $0x120] sm:$0xff]
    %v1588 = vld [vmem:[#allocation13 + $0x128] sm:$0xff]
    %v1589 = vld [vmem:[#allocation13 + $0x130] sm:$0xff]
    %v1590 = vld [vmem:[#allocation13 + $0x138] sm:$0xff]
    %v1591 = vld [vmem:[#allocation13 + $0x140] sm:$0xff]
    %v1592 = vld [vmem:[#allocation13 + $0x148] sm:$0xff]
    %v1593 = vld [vmem:[#allocation13 + $0x150] sm:$0xff]
    %v1594 = vld [vmem:[#allocation13 + $0x158] sm:$0xff]
    %v1595 = vld [vmem:[#allocation13 + $0x160] sm:$0xff]
    %v1596 = vld [vmem:[#allocation13 + $0x168] sm:$0xff]
    %v1597 = vld [vmem:[#allocation13 + $0x170] sm:$0xff]
    %v1598 = vld [vmem:[#allocation13 + $0x178] sm:$0xff]
    %v1599 = vld [vmem:[#allocation13 + $0x180] sm:$0xff]
    %v1600 = vld [vmem:[#allocation13 + $0x188] sm:$0xff]
    %v1601 = vld [vmem:[#allocation13 + $0x190] sm:$0xff]
    %v1602 = vld [vmem:[#allocation13 + $0x198] sm:$0xff]
    %v1603 = vld [vmem:[#allocation13 + $0x1a0] sm:$0xff]
    %v1604 = vld [vmem:[#allocation13 + $0x1a8] sm:$0xff]
    %v1605 = vld [vmem:[#allocation13 + $0x1b0] sm:$0xff]
    %v1606 = vld [vmem:[#allocation13 + $0x1b8] sm:$0xff]
    %v1607 = vld [vmem:[#allocation13 + $0x1c0] sm:$0xff]
    %v1608 = vld [vmem:[#allocation13 + $0x1c8] sm:$0xff]
    %v1609 = vld [vmem:[#allocation13 + $0x1d0] sm:$0xff]
    %v1610 = vld [vmem:[#allocation13 + $0x1d8] sm:$0xff]
    %v1611 = vld [vmem:[#allocation13 + $0x1e0] sm:$0xff]
    %v1612 = vld [vmem:[#allocation13 + $0x1e8] sm:$0xff]
    %v1613 = vld [vmem:[#allocation13 + $0x1f0] sm:$0xff]
    %v1614 = vld [vmem:[#allocation13 + $0x1f8] sm:$0xff]
    %v1615 = vld [vmem:[#allocation13 + $0x200] sm:$0xff]
    %v1616 = vld [vmem:[#allocation13 + $0x208] sm:$0xff]
    %v1617 = vld [vmem:[#allocation13 + $0x210] sm:$0xff]
    %v1618 = vld [vmem:[#allocation13 + $0x218] sm:$0xff]
    %v1619 = vld [vmem:[#allocation13 + $0x220] sm:$0xff]
    %v1620 = vld [vmem:[#allocation13 + $0x228] sm:$0xff]
    %v1621 = vld [vmem:[#allocation13 + $0x230] sm:$0xff]
    %v1622 = vld [vmem:[#allocation13 + $0x238] sm:$0xff]
    %v1623 = vld [vmem:[#allocation13 + $0x240] sm:$0xff]
    %v1624 = vld [vmem:[#allocation13 + $0x248] sm:$0xff]
    %v1625 = vld [vmem:[#allocation13 + $0x250] sm:$0xff]
    %v1626 = vld [vmem:[#allocation13 + $0x258] sm:$0xff]
    %v1627 = vld [vmem:[#allocation13 + $0x260] sm:$0xff]
    %v1628 = vld [vmem:[#allocation13 + $0x268] sm:$0xff]
    %v1629 = vld [vmem:[#allocation13 + $0x270] sm:$0xff]
    %v1630 = vld [vmem:[#allocation13 + $0x278] sm:$0xff]
    %v1631 = vld [vmem:[#allocation13 + $0x280] sm:$0xff]
    %v1632 = vld [vmem:[#allocation13 + $0x288] sm:$0xff]
    %v1633 = vld [vmem:[#allocation13 + $0x290] sm:$0xff]
    %v1634 = vld [vmem:[#allocation13 + $0x298] sm:$0xff]
    %v1635 = vld [vmem:[#allocation13 + $0x2a0] sm:$0xff]
    %v1636 = vld [vmem:[#allocation13 + $0x2a8] sm:$0xff]
    %v1637 = vld [vmem:[#allocation13 + $0x2b0] sm:$0xff]
    %v1638 = vld [vmem:[#allocation13 + $0x2b8] sm:$0xff]
    %v1639 = vld [vmem:[#allocation13 + $0x2c0] sm:$0xff]
    %v1640 = vld [vmem:[#allocation13 + $0x2c8] sm:$0xff]
    %v1641 = vld [vmem:[#allocation13 + $0x2d0] sm:$0xff]
    %v1642 = vld [vmem:[#allocation13 + $0x2d8] sm:$0xff]
    %v1643 = vld [vmem:[#allocation13 + $0x2e0] sm:$0xff]
    %v1644 = vld [vmem:[#allocation13 + $0x2e8] sm:$0xff]
    %v1645 = vld [vmem:[#allocation13 + $0x2f0] sm:$0xff]
    %v1646 = vld [vmem:[#allocation13 + $0x2f8] sm:$0xff]
    %v1647 = vld [vmem:[#allocation13 + $0x300] sm:$0xff]
    %v1648 = vld [vmem:[#allocation13 + $0x308] sm:$0xff]
    %v1649 = vld [vmem:[#allocation13 + $0x310] sm:$0xff]
    %v1650 = vld [vmem:[#allocation13 + $0x318] sm:$0xff]
    %v1651 = vld [vmem:[#allocation13 + $0x320] sm:$0xff]
    %v1652 = vld [vmem:[#allocation13 + $0x328] sm:$0xff]
    %v1653 = vld [vmem:[#allocation13 + $0x330] sm:$0xff]
    %v1654 = vld [vmem:[#allocation13 + $0x338] sm:$0xff]
    %v1655 = vld [vmem:[#allocation13 + $0x340] sm:$0xff]
    %v1656 = vld [vmem:[#allocation13 + $0x348] sm:$0xff]
    %v1657 = vld [vmem:[#allocation13 + $0x350] sm:$0xff]
    %v1658 = vld [vmem:[#allocation13 + $0x358] sm:$0xff]
    %v1659 = vld [vmem:[#allocation13 + $0x360] sm:$0xff]
    %v1660 = vld [vmem:[#allocation13 + $0x368] sm:$0xff]
    %v1661 = vld [vmem:[#allocation13 + $0x370] sm:$0xff]
    %v1662 = vld [vmem:[#allocation13 + $0x378] sm:$0xff]
    %v1663 = vld [vmem:[#allocation13 + $0x380] sm:$0xff]
    %v1664 = vld [vmem:[#allocation13 + $0x388] sm:$0xff]
    %v1665 = vld [vmem:[#allocation13 + $0x390] sm:$0xff]
    %v1666 = vld [vmem:[#allocation13 + $0x398] sm:$0xff]
    %v1667 = vld [vmem:[#allocation13 + $0x3a0] sm:$0xff]
    %v1668 = vld [vmem:[#allocation13 + $0x3a8] sm:$0xff]
    %v1669 = vld [vmem:[#allocation13 + $0x3b0] sm:$0xff]
    %v1670 = vld [vmem:[#allocation13 + $0x3b8] sm:$0xff]
    %v1671 = vld [vmem:[#allocation13 + $0x3c0] sm:$0xff]
    %v1672 = vld [vmem:[#allocation13 + $0x3c8] sm:$0xff]
    %v1673 = vld [vmem:[#allocation13 + $0x3d0] sm:$0xff]
    %v1674 = vld [vmem:[#allocation13 + $0x3d8] sm:$0xff]
    %v1675 = vld [vmem:[#allocation13 + $0x3e0] sm:$0xff]
    %v1676 = vld [vmem:[#allocation13 + $0x3e8] sm:$0xff]
    %v1677 = vld [vmem:[#allocation13 + $0x3f0] sm:$0xff]
    %v1678 = vld [vmem:[#allocation13 + $0x3f8] sm:$0xff]
    %v1679 = vld [vmem:[#allocation13 + $0x400] sm:$0xff]
    %v1680 = vld [vmem:[#allocation13 + $0x408] sm:$0xff]
    %v1681 = vld [vmem:[#allocation13 + $0x410] sm:$0xff]
    %v1682 = vld [vmem:[#allocation13 + $0x418] sm:$0xff]
    %v1683 = vld [vmem:[#allocation13 + $0x420] sm:$0xff]
    %v1684 = vld [vmem:[#allocation13 + $0x428] sm:$0xff]
    %v1685 = vld [vmem:[#allocation13 + $0x430] sm:$0xff]
    %v1686 = vld [vmem:[#allocation13 + $0x438] sm:$0xff]
    %v1687 = vld [vmem:[#allocation13 + $0x440] sm:$0xff]
    %v1688 = vld [vmem:[#allocation13 + $0x448] sm:$0xff]
    %v1689 = vld [vmem:[#allocation13 + $0x450] sm:$0xff]
    %v1690 = vld [vmem:[#allocation13 + $0x458] sm:$0xff]
    %v1691 = vld [vmem:[#allocation13 + $0x460] sm:$0xff]
    %v1692 = vld [vmem:[#allocation13 + $0x468] sm:$0xff]
    %v1693 = vld [vmem:[#allocation13 + $0x470] sm:$0xff]
    %v1694 = vld [vmem:[#allocation13 + $0x478] sm:$0xff]
    %v1695 = vld [vmem:[#allocation13 + $0x480] sm:$0xff]
    %v1696 = vld [vmem:[#allocation13 + $0x488] sm:$0xff]
    %v1697 = vld [vmem:[#allocation13 + $0x490] sm:$0xff]
    %v1698 = vld [vmem:[#allocation13 + $0x498] sm:$0xff]
    %v1699 = vld [vmem:[#allocation13 + $0x4a0] sm:$0xff]
    %v1700 = vld [vmem:[#allocation13 + $0x4a8] sm:$0xff]
    %v1701 = vld [vmem:[#allocation13 + $0x4b0] sm:$0xff]
    %v1702 = vld [vmem:[#allocation13 + $0x4b8] sm:$0xff]
    %v1703 = vld [vmem:[#allocation13 + $0x4c0] sm:$0xff]
    %v1704 = vld [vmem:[#allocation13 + $0x4c8] sm:$0xff]
    %v1705 = vld [vmem:[#allocation13 + $0x4d0] sm:$0xff]
    %v1706 = vld [vmem:[#allocation13 + $0x4d8] sm:$0xff]
    %v1707 = vld [vmem:[#allocation13 + $0x4e0] sm:$0xff]
    %v1708 = vld [vmem:[#allocation13 + $0x4e8] sm:$0xff]
    %v1709 = vld [vmem:[#allocation13 + $0x4f0] sm:$0xff]
    %v1710 = vld [vmem:[#allocation13 + $0x4f8] sm:$0xff]
    %v1711 = vld [vmem:[#allocation13 + $0x500] sm:$0xff]
    %v1712 = vld [vmem:[#allocation13 + $0x508] sm:$0xff]
    %v1713 = vld [vmem:[#allocation13 + $0x510] sm:$0xff]
    %v1714 = vld [vmem:[#allocation13 + $0x518] sm:$0xff]
    %v1715 = vld [vmem:[#allocation13 + $0x520] sm:$0xff]
    %v1716 = vld [vmem:[#allocation13 + $0x528] sm:$0xff]
    %v1717 = vld [vmem:[#allocation13 + $0x530] sm:$0xff]
    %v1718 = vld [vmem:[#allocation13 + $0x538] sm:$0xff]
    %v1719 = vld [vmem:[#allocation13 + $0x540] sm:$0xff]
    %v1720 = vld [vmem:[#allocation13 + $0x548] sm:$0xff]
    %v1721 = vld [vmem:[#allocation13 + $0x550] sm:$0xff]
    %v1722 = vld [vmem:[#allocation13 + $0x558] sm:$0xff]
    %v1723 = vld [vmem:[#allocation13 + $0x560] sm:$0xff]
    %v1724 = vld [vmem:[#allocation13 + $0x568] sm:$0xff]
    %v1725 = vld [vmem:[#allocation13 + $0x570] sm:$0xff]
    %v1726 = vld [vmem:[#allocation13 + $0x578] sm:$0xff]
    %v1727 = vld [vmem:[#allocation13 + $0x580] sm:$0xff]
    %v1728 = vld [vmem:[#allocation13 + $0x588] sm:$0xff]
    %v1729 = vld [vmem:[#allocation13 + $0x590] sm:$0xff]
    %v1730 = vld [vmem:[#allocation13 + $0x598] sm:$0xff]
    %v1731 = vld [vmem:[#allocation13 + $0x5a0] sm:$0xff]
    %v1732 = vld [vmem:[#allocation13 + $0x5a8] sm:$0xff]
    %v1733 = vld [vmem:[#allocation13 + $0x5b0] sm:$0xff]
    %v1734 = vld [vmem:[#allocation13 + $0x5b8] sm:$0xff]
    %v1735 = vld [vmem:[#allocation13 + $0x5c0] sm:$0xff]
    %v1736 = vld [vmem:[#allocation13 + $0x5c8] sm:$0xff]
    %v1737 = vld [vmem:[#allocation13 + $0x5d0] sm:$0xff]
    %v1738 = vld [vmem:[#allocation13 + $0x5d8] sm:$0xff]
    %v1739 = vld [vmem:[#allocation13 + $0x5e0] sm:$0xff]
    %v1740 = vld [vmem:[#allocation13 + $0x5e8] sm:$0xff]
    %v1741 = vld [vmem:[#allocation13 + $0x5f0] sm:$0xff]
    %v1742 = vld [vmem:[#allocation13 + $0x5f8] sm:$0xff]
    %v1743 = vld [vmem:[#allocation13 + $0x600] sm:$0xff]
    %v1744 = vld [vmem:[#allocation13 + $0x608] sm:$0xff]
    %v1745 = vld [vmem:[#allocation13 + $0x610] sm:$0xff]
    %v1746 = vld [vmem:[#allocation13 + $0x618] sm:$0xff]
    %v1747 = vld [vmem:[#allocation13 + $0x620] sm:$0xff]
    %v1748 = vld [vmem:[#allocation13 + $0x628] sm:$0xff]
    %v1749 = vld [vmem:[#allocation13 + $0x630] sm:$0xff]
    %v1750 = vld [vmem:[#allocation13 + $0x638] sm:$0xff]
    %v1751 = vld [vmem:[#allocation13 + $0x640] sm:$0xff]
    %v1752 = vld [vmem:[#allocation13 + $0x648] sm:$0xff]
    %v1753 = vld [vmem:[#allocation13 + $0x650] sm:$0xff]
    %v1754 = vld [vmem:[#allocation13 + $0x658] sm:$0xff]
    %v1755 = vld [vmem:[#allocation13 + $0x660] sm:$0xff]
    %v1756 = vld [vmem:[#allocation13 + $0x668] sm:$0xff]
    %v1757 = vld [vmem:[#allocation13 + $0x670] sm:$0xff]
    %v1758 = vld [vmem:[#allocation13 + $0x678] sm:$0xff]
    %v1759 = vld [vmem:[#allocation13 + $0x680] sm:$0xff]
    %v1760 = vld [vmem:[#allocation13 + $0x688] sm:$0xff]
    %v1761 = vld [vmem:[#allocation13 + $0x690] sm:$0xff]
    %v1762 = vld [vmem:[#allocation13 + $0x698] sm:$0xff]
    %v1763 = vld [vmem:[#allocation13 + $0x6a0] sm:$0xff]
    %v1764 = vld [vmem:[#allocation13 + $0x6a8] sm:$0xff]
    %v1765 = vld [vmem:[#allocation13 + $0x6b0] sm:$0xff]
    %v1766 = vld [vmem:[#allocation13 + $0x6b8] sm:$0xff]
    %v1767 = vld [vmem:[#allocation13 + $0x6c0] sm:$0xff]
    %v1768 = vld [vmem:[#allocation13 + $0x6c8] sm:$0xff]
    %v1769 = vld [vmem:[#allocation13 + $0x6d0] sm:$0xff]
    %v1770 = vld [vmem:[#allocation13 + $0x6d8] sm:$0xff]
    %v1771 = vld [vmem:[#allocation13 + $0x6e0] sm:$0xff]
    %v1772 = vld [vmem:[#allocation13 + $0x6e8] sm:$0xff]
    %v1773 = vld [vmem:[#allocation13 + $0x6f0] sm:$0xff]
    %v1774 = vld [vmem:[#allocation13 + $0x6f8] sm:$0xff]
    %v1775 = vld [vmem:[#allocation13 + $0x700] sm:$0xff]
    %v1776 = vld [vmem:[#allocation13 + $0x708] sm:$0xff]
    %v1777 = vld [vmem:[#allocation13 + $0x710] sm:$0xff]
    %v1778 = vld [vmem:[#allocation13 + $0x718] sm:$0xff]
    %v1779 = vld [vmem:[#allocation13 + $0x720] sm:$0xff]
    %v1780 = vld [vmem:[#allocation13 + $0x728] sm:$0xff]
    %v1781 = vld [vmem:[#allocation13 + $0x730] sm:$0xff]
    %v1782 = vld [vmem:[#allocation13 + $0x738] sm:$0xff]
    %v1783 = vld [vmem:[#allocation13 + $0x740] sm:$0xff]
    %v1784 = vld [vmem:[#allocation13 + $0x748] sm:$0xff]
    %v1785 = vld [vmem:[#allocation13 + $0x750] sm:$0xff]
    %v1786 = vld [vmem:[#allocation13 + $0x758] sm:$0xff]
    %v1787 = vld [vmem:[#allocation13 + $0x760] sm:$0xff]
    %v1788 = vld [vmem:[#allocation13 + $0x768] sm:$0xff]
    %v1789 = vld [vmem:[#allocation13 + $0x770] sm:$0xff]
    %v1790 = vld [vmem:[#allocation13 + $0x778] sm:$0xff]
    %v1791 = vld [vmem:[#allocation13 + $0x780] sm:$0xff]
    %v1792 = vld [vmem:[#allocation13 + $0x788] sm:$0xff]
    %v1793 = vld [vmem:[#allocation13 + $0x790] sm:$0xff]
    %v1794 = vld [vmem:[#allocation13 + $0x798] sm:$0xff]
    %v1795 = vld [vmem:[#allocation13 + $0x7a0] sm:$0xff]
    %v1796 = vld [vmem:[#allocation13 + $0x7a8] sm:$0xff]
    %v1797 = vld [vmem:[#allocation13 + $0x7b0] sm:$0xff]
    %v1798 = vld [vmem:[#allocation13 + $0x7b8] sm:$0xff]
    %v1799 = vld [vmem:[#allocation13 + $0x7c0] sm:$0xff]
    %v1800 = vld [vmem:[#allocation13 + $0x7c8] sm:$0xff]
    %v1801 = vld [vmem:[#allocation13 + $0x7d0] sm:$0xff]
    %v1802 = vld [vmem:[#allocation13 + $0x7d8] sm:$0xff]
    %v1803 = vld [vmem:[#allocation13 + $0x7e0] sm:$0xff]
    %v1804 = vld [vmem:[#allocation13 + $0x7e8] sm:$0xff]
    %v1805 = vld [vmem:[#allocation13 + $0x7f0] sm:$0xff]
    %v1806 = vld [vmem:[#allocation13 + $0x7f8] sm:$0xff]
    %v1807 = vld [vmem:[#allocation14] sm:$0xff]
    %v1809 = vperm.slane %v1807, 0
    %v1810 = vperm.slane %v1807, 1
    %v1811 = vperm.slane %v1807, 2
    %v1812 = vperm.slane %v1807, 3
    %v1813 = vperm.slane %v1807, 4
    %v1814 = vperm.slane %v1807, 5
    %v1815 = vperm.slane %v1807, 6
    %v1816 = vperm.slane %v1807, 7
    %v2081 = vunpack.c.l.b16 %v1551
    %v2082 = vunpack.c.h.b16 %v1551
    %v2083 = vunpack.c.l.b16 %v1552
    %v2084 = vunpack.c.h.b16 %v1552
    %v2085 = vunpack.c.l.b16 %v1553
    %v2086 = vunpack.c.h.b16 %v1553
    %v2087 = vunpack.c.l.b16 %v1554
    %v2088 = vunpack.c.h.b16 %v1554
    %v2089 = vunpack.c.l.b16 %v1555
    %v2090 = vunpack.c.h.b16 %v1555
    %v2091 = vunpack.c.l.b16 %v1556
    %v2092 = vunpack.c.h.b16 %v1556
    %v2093 = vunpack.c.l.b16 %v1557
    %v2094 = vunpack.c.h.b16 %v1557
    %v2095 = vunpack.c.l.b16 %v1558
    %v2096 = vunpack.c.h.b16 %v1558
    %v2097 = vunpack.c.l.b16 %v1559
    %v2098 = vunpack.c.h.b16 %v1559
    %v2099 = vunpack.c.l.b16 %v1560
    %v2100 = vunpack.c.h.b16 %v1560
    %v2101 = vunpack.c.l.b16 %v1561
    %v2102 = vunpack.c.h.b16 %v1561
    %v2103 = vunpack.c.l.b16 %v1562
    %v2104 = vunpack.c.h.b16 %v1562
    %v2105 = vunpack.c.l.b16 %v1563
    %v2106 = vunpack.c.h.b16 %v1563
    %v2107 = vunpack.c.l.b16 %v1564
    %v2108 = vunpack.c.h.b16 %v1564
    %v2109 = vunpack.c.l.b16 %v1565
    %v2110 = vunpack.c.h.b16 %v1565
    %v2111 = vunpack.c.l.b16 %v1566
    %v2112 = vunpack.c.h.b16 %v1566
    %v2113 = vunpack.c.l.b16 %v1567
    %v2114 = vunpack.c.h.b16 %v1567
    %v2115 = vunpack.c.l.b16 %v1568
    %v2116 = vunpack.c.h.b16 %v1568
    %v2117 = vunpack.c.l.b16 %v1569
    %v2118 = vunpack.c.h.b16 %v1569
    %v2119 = vunpack.c.l.b16 %v1570
    %v2120 = vunpack.c.h.b16 %v1570
    %v2121 = vunpack.c.l.b16 %v1571
    %v2122 = vunpack.c.h.b16 %v1571
    %v2123 = vunpack.c.l.b16 %v1572
    %v2124 = vunpack.c.h.b16 %v1572
    %v2125 = vunpack.c.l.b16 %v1573
    %v2126 = vunpack.c.h.b16 %v1573
    %v2127 = vunpack.c.l.b16 %v1574
    %v2128 = vunpack.c.h.b16 %v1574
    %v2129 = vunpack.c.l.b16 %v1575
    %v2130 = vunpack.c.h.b16 %v1575
    %v2131 = vunpack.c.l.b16 %v1576
    %v2132 = vunpack.c.h.b16 %v1576
    %v2133 = vunpack.c.l.b16 %v1577
    %v2134 = vunpack.c.h.b16 %v1577
    %v2135 = vunpack.c.l.b16 %v1578
    %v2136 = vunpack.c.h.b16 %v1578
    %v2137 = vunpack.c.l.b16 %v1579
    %v2138 = vunpack.c.h.b16 %v1579
    %v2139 = vunpack.c.l.b16 %v1580
    %v2140 = vunpack.c.h.b16 %v1580
    %v2141 = vunpack.c.l.b16 %v1581
    %v2142 = vunpack.c.h.b16 %v1581
    %v2143 = vunpack.c.l.b16 %v1582
    %v2144 = vunpack.c.h.b16 %v1582
    %v2145 = vunpack.c.l.b16 %v1583
    %v2146 = vunpack.c.h.b16 %v1583
    %v2147 = vunpack.c.l.b16 %v1584
    %v2148 = vunpack.c.h.b16 %v1584
    %v2149 = vunpack.c.l.b16 %v1585
    %v2150 = vunpack.c.h.b16 %v1585
    %v2151 = vunpack.c.l.b16 %v1586
    %v2152 = vunpack.c.h.b16 %v1586
    %v2153 = vunpack.c.l.b16 %v1587
    %v2154 = vunpack.c.h.b16 %v1587
    %v2155 = vunpack.c.l.b16 %v1588
    %v2156 = vunpack.c.h.b16 %v1588
    %v2157 = vunpack.c.l.b16 %v1589
    %v2158 = vunpack.c.h.b16 %v1589
    %v2159 = vunpack.c.l.b16 %v1590
    %v2160 = vunpack.c.h.b16 %v1590
    %v2161 = vunpack.c.l.b16 %v1591
    %v2162 = vunpack.c.h.b16 %v1591
    %v2163 = vunpack.c.l.b16 %v1592
    %v2164 = vunpack.c.h.b16 %v1592
    %v2165 = vunpack.c.l.b16 %v1593
    %v2166 = vunpack.c.h.b16 %v1593
    %v2167 = vunpack.c.l.b16 %v1594
    %v2168 = vunpack.c.h.b16 %v1594
    %v2169 = vunpack.c.l.b16 %v1595
    %v2170 = vunpack.c.h.b16 %v1595
    %v2171 = vunpack.c.l.b16 %v1596
    %v2172 = vunpack.c.h.b16 %v1596
    %v2173 = vunpack.c.l.b16 %v1597
    %v2174 = vunpack.c.h.b16 %v1597
    %v2175 = vunpack.c.l.b16 %v1598
    %v2176 = vunpack.c.h.b16 %v1598
    %v2177 = vunpack.c.l.b16 %v1599
    %v2178 = vunpack.c.h.b16 %v1599
    %v2179 = vunpack.c.l.b16 %v1600
    %v2180 = vunpack.c.h.b16 %v1600
    %v2181 = vunpack.c.l.b16 %v1601
    %v2182 = vunpack.c.h.b16 %v1601
    %v2183 = vunpack.c.l.b16 %v1602
    %v2184 = vunpack.c.h.b16 %v1602
    %v2185 = vunpack.c.l.b16 %v1603
    %v2186 = vunpack.c.h.b16 %v1603
    %v2187 = vunpack.c.l.b16 %v1604
    %v2188 = vunpack.c.h.b16 %v1604
    %v2189 = vunpack.c.l.b16 %v1605
    %v2190 = vunpack.c.h.b16 %v1605
    %v2191 = vunpack.c.l.b16 %v1606
    %v2192 = vunpack.c.h.b16 %v1606
    %v2193 = vunpack.c.l.b16 %v1607
    %v2194 = vunpack.c.h.b16 %v1607
    %v2195 = vunpack.c.l.b16 %v1608
    %v2196 = vunpack.c.h.b16 %v1608
    %v2197 = vunpack.c.l.b16 %v1609
    %v2198 = vunpack.c.h.b16 %v1609
    %v2199 = vunpack.c.l.b16 %v1610
    %v2200 = vunpack.c.h.b16 %v1610
    %v2201 = vunpack.c.l.b16 %v1611
    %v2202 = vunpack.c.h.b16 %v1611
    %v2203 = vunpack.c.l.b16 %v1612
    %v2204 = vunpack.c.h.b16 %v1612
    %v2205 = vunpack.c.l.b16 %v1613
    %v2206 = vunpack.c.h.b16 %v1613
    %v2207 = vunpack.c.l.b16 %v1614
    %v2208 = vunpack.c.h.b16 %v1614
    %v2209 = vunpack.c.l.b16 %v1615
    %v2210 = vunpack.c.h.b16 %v1615
    %v2211 = vunpack.c.l.b16 %v1616
    %v2212 = vunpack.c.h.b16 %v1616
    %v2213 = vunpack.c.l.b16 %v1617
    %v2214 = vunpack.c.h.b16 %v1617
    %v2215 = vunpack.c.l.b16 %v1618
    %v2216 = vunpack.c.h.b16 %v1618
    %v2217 = vunpack.c.l.b16 %v1619
    %v2218 = vunpack.c.h.b16 %v1619
    %v2219 = vunpack.c.l.b16 %v1620
    %v2220 = vunpack.c.h.b16 %v1620
    %v2221 = vunpack.c.l.b16 %v1621
    %v2222 = vunpack.c.h.b16 %v1621
    %v2223 = vunpack.c.l.b16 %v1622
    %v2224 = vunpack.c.h.b16 %v1622
    %v2225 = vunpack.c.l.b16 %v1623
    %v2226 = vunpack.c.h.b16 %v1623
    %v2227 = vunpack.c.l.b16 %v1624
    %v2228 = vunpack.c.h.b16 %v1624
    %v2229 = vunpack.c.l.b16 %v1625
    %v2230 = vunpack.c.h.b16 %v1625
    %v2231 = vunpack.c.l.b16 %v1626
    %v2232 = vunpack.c.h.b16 %v1626
    %v2233 = vunpack.c.l.b16 %v1627
    %v2234 = vunpack.c.h.b16 %v1627
    %v2235 = vunpack.c.l.b16 %v1628
    %v2236 = vunpack.c.h.b16 %v1628
    %v2237 = vunpack.c.l.b16 %v1629
    %v2238 = vunpack.c.h.b16 %v1629
    %v2239 = vunpack.c.l.b16 %v1630
    %v2240 = vunpack.c.h.b16 %v1630
    %v2241 = vunpack.c.l.b16 %v1631
    %v2242 = vunpack.c.h.b16 %v1631
    %v2243 = vunpack.c.l.b16 %v1632
    %v2244 = vunpack.c.h.b16 %v1632
    %v2245 = vunpack.c.l.b16 %v1633
    %v2246 = vunpack.c.h.b16 %v1633
    %v2247 = vunpack.c.l.b16 %v1634
    %v2248 = vunpack.c.h.b16 %v1634
    %v2249 = vunpack.c.l.b16 %v1635
    %v2250 = vunpack.c.h.b16 %v1635
    %v2251 = vunpack.c.l.b16 %v1636
    %v2252 = vunpack.c.h.b16 %v1636
    %v2253 = vunpack.c.l.b16 %v1637
    %v2254 = vunpack.c.h.b16 %v1637
    %v2255 = vunpack.c.l.b16 %v1638
    %v2256 = vunpack.c.h.b16 %v1638
    %v2257 = vunpack.c.l.b16 %v1639
    %v2258 = vunpack.c.h.b16 %v1639
    %v2259 = vunpack.c.l.b16 %v1640
    %v2260 = vunpack.c.h.b16 %v1640
    %v2261 = vunpack.c.l.b16 %v1641
    %v2262 = vunpack.c.h.b16 %v1641
    %v2263 = vunpack.c.l.b16 %v1642
    %v2264 = vunpack.c.h.b16 %v1642
    %v2265 = vunpack.c.l.b16 %v1643
    %v2266 = vunpack.c.h.b16 %v1643
    %v2267 = vunpack.c.l.b16 %v1644
    %v2268 = vunpack.c.h.b16 %v1644
    %v2269 = vunpack.c.l.b16 %v1645
    %v2270 = vunpack.c.h.b16 %v1645
    %v2271 = vunpack.c.l.b16 %v1646
    %v2272 = vunpack.c.h.b16 %v1646
    %v2273 = vunpack.c.l.b16 %v1647
    %v2274 = vunpack.c.h.b16 %v1647
    %v2275 = vunpack.c.l.b16 %v1648
    %v2276 = vunpack.c.h.b16 %v1648
    %v2277 = vunpack.c.l.b16 %v1649
    %v2278 = vunpack.c.h.b16 %v1649
    %v2279 = vunpack.c.l.b16 %v1650
    %v2280 = vunpack.c.h.b16 %v1650
    %v2281 = vunpack.c.l.b16 %v1651
    %v2282 = vunpack.c.h.b16 %v1651
    %v2283 = vunpack.c.l.b16 %v1652
    %v2284 = vunpack.c.h.b16 %v1652
    %v2285 = vunpack.c.l.b16 %v1653
    %v2286 = vunpack.c.h.b16 %v1653
    %v2287 = vunpack.c.l.b16 %v1654
    %v2288 = vunpack.c.h.b16 %v1654
    %v2289 = vunpack.c.l.b16 %v1655
    %v2290 = vunpack.c.h.b16 %v1655
    %v2291 = vunpack.c.l.b16 %v1656
    %v2292 = vunpack.c.h.b16 %v1656
    %v2293 = vunpack.c.l.b16 %v1657
    %v2294 = vunpack.c.h.b16 %v1657
    %v2295 = vunpack.c.l.b16 %v1658
    %v2296 = vunpack.c.h.b16 %v1658
    %v2297 = vunpack.c.l.b16 %v1659
    %v2298 = vunpack.c.h.b16 %v1659
    %v2299 = vunpack.c.l.b16 %v1660
    %v2300 = vunpack.c.h.b16 %v1660
    %v2301 = vunpack.c.l.b16 %v1661
    %v2302 = vunpack.c.h.b16 %v1661
    %v2303 = vunpack.c.l.b16 %v1662
    %v2304 = vunpack.c.h.b16 %v1662
    %v2305 = vunpack.c.l.b16 %v1663
    %v2306 = vunpack.c.h.b16 %v1663
    %v2307 = vunpack.c.l.b16 %v1664
    %v2308 = vunpack.c.h.b16 %v1664
    %v2309 = vunpack.c.l.b16 %v1665
    %v2310 = vunpack.c.h.b16 %v1665
    %v2311 = vunpack.c.l.b16 %v1666
    %v2312 = vunpack.c.h.b16 %v1666
    %v2313 = vunpack.c.l.b16 %v1667
    %v2314 = vunpack.c.h.b16 %v1667
    %v2315 = vunpack.c.l.b16 %v1668
    %v2316 = vunpack.c.h.b16 %v1668
    %v2317 = vunpack.c.l.b16 %v1669
    %v2318 = vunpack.c.h.b16 %v1669
    %v2319 = vunpack.c.l.b16 %v1670
    %v2320 = vunpack.c.h.b16 %v1670
    %v2321 = vunpack.c.l.b16 %v1671
    %v2322 = vunpack.c.h.b16 %v1671
    %v2323 = vunpack.c.l.b16 %v1672
    %v2324 = vunpack.c.h.b16 %v1672
    %v2325 = vunpack.c.l.b16 %v1673
    %v2326 = vunpack.c.h.b16 %v1673
    %v2327 = vunpack.c.l.b16 %v1674
    %v2328 = vunpack.c.h.b16 %v1674
    %v2329 = vunpack.c.l.b16 %v1675
    %v2330 = vunpack.c.h.b16 %v1675
    %v2331 = vunpack.c.l.b16 %v1676
    %v2332 = vunpack.c.h.b16 %v1676
    %v2333 = vunpack.c.l.b16 %v1677
    %v2334 = vunpack.c.h.b16 %v1677
    %v2335 = vunpack.c.l.b16 %v1678
    %v2336 = vunpack.c.h.b16 %v1678
    %v2337 = vunpack.c.l.b16 %v1679
    %v2338 = vunpack.c.h.b16 %v1679
    %v2339 = vunpack.c.l.b16 %v1680
    %v2340 = vunpack.c.h.b16 %v1680
    %v2341 = vunpack.c.l.b16 %v1681
    %v2342 = vunpack.c.h.b16 %v1681
    %v2343 = vunpack.c.l.b16 %v1682
    %v2344 = vunpack.c.h.b16 %v1682
    %v2345 = vunpack.c.l.b16 %v1683
    %v2346 = vunpack.c.h.b16 %v1683
    %v2347 = vunpack.c.l.b16 %v1684
    %v2348 = vunpack.c.h.b16 %v1684
    %v2349 = vunpack.c.l.b16 %v1685
    %v2350 = vunpack.c.h.b16 %v1685
    %v2351 = vunpack.c.l.b16 %v1686
    %v2352 = vunpack.c.h.b16 %v1686
    %v2353 = vunpack.c.l.b16 %v1687
    %v2354 = vunpack.c.h.b16 %v1687
    %v2355 = vunpack.c.l.b16 %v1688
    %v2356 = vunpack.c.h.b16 %v1688
    %v2357 = vunpack.c.l.b16 %v1689
    %v2358 = vunpack.c.h.b16 %v1689
    %v2359 = vunpack.c.l.b16 %v1690
    %v2360 = vunpack.c.h.b16 %v1690
    %v2361 = vunpack.c.l.b16 %v1691
    %v2362 = vunpack.c.h.b16 %v1691
    %v2363 = vunpack.c.l.b16 %v1692
    %v2364 = vunpack.c.h.b16 %v1692
    %v2365 = vunpack.c.l.b16 %v1693
    %v2366 = vunpack.c.h.b16 %v1693
    %v2367 = vunpack.c.l.b16 %v1694
    %v2368 = vunpack.c.h.b16 %v1694
    %v2369 = vunpack.c.l.b16 %v1695
    %v2370 = vunpack.c.h.b16 %v1695
    %v2371 = vunpack.c.l.b16 %v1696
    %v2372 = vunpack.c.h.b16 %v1696
    %v2373 = vunpack.c.l.b16 %v1697
    %v2374 = vunpack.c.h.b16 %v1697
    %v2375 = vunpack.c.l.b16 %v1698
    %v2376 = vunpack.c.h.b16 %v1698
    %v2377 = vunpack.c.l.b16 %v1699
    %v2378 = vunpack.c.h.b16 %v1699
    %v2379 = vunpack.c.l.b16 %v1700
    %v2380 = vunpack.c.h.b16 %v1700
    %v2381 = vunpack.c.l.b16 %v1701
    %v2382 = vunpack.c.h.b16 %v1701
    %v2383 = vunpack.c.l.b16 %v1702
    %v2384 = vunpack.c.h.b16 %v1702
    %v2385 = vunpack.c.l.b16 %v1703
    %v2386 = vunpack.c.h.b16 %v1703
    %v2387 = vunpack.c.l.b16 %v1704
    %v2388 = vunpack.c.h.b16 %v1704
    %v2389 = vunpack.c.l.b16 %v1705
    %v2390 = vunpack.c.h.b16 %v1705
    %v2391 = vunpack.c.l.b16 %v1706
    %v2392 = vunpack.c.h.b16 %v1706
    %v2393 = vunpack.c.l.b16 %v1707
    %v2394 = vunpack.c.h.b16 %v1707
    %v2395 = vunpack.c.l.b16 %v1708
    %v2396 = vunpack.c.h.b16 %v1708
    %v2397 = vunpack.c.l.b16 %v1709
    %v2398 = vunpack.c.h.b16 %v1709
    %v2399 = vunpack.c.l.b16 %v1710
    %v2400 = vunpack.c.h.b16 %v1710
    %v2401 = vunpack.c.l.b16 %v1711
    %v2402 = vunpack.c.h.b16 %v1711
    %v2403 = vunpack.c.l.b16 %v1712
    %v2404 = vunpack.c.h.b16 %v1712
    %v2405 = vunpack.c.l.b16 %v1713
    %v2406 = vunpack.c.h.b16 %v1713
    %v2407 = vunpack.c.l.b16 %v1714
    %v2408 = vunpack.c.h.b16 %v1714
    %v2409 = vunpack.c.l.b16 %v1715
    %v2410 = vunpack.c.h.b16 %v1715
    %v2411 = vunpack.c.l.b16 %v1716
    %v2412 = vunpack.c.h.b16 %v1716
    %v2413 = vunpack.c.l.b16 %v1717
    %v2414 = vunpack.c.h.b16 %v1717
    %v2415 = vunpack.c.l.b16 %v1718
    %v2416 = vunpack.c.h.b16 %v1718
    %v2417 = vunpack.c.l.b16 %v1719
    %v2418 = vunpack.c.h.b16 %v1719
    %v2419 = vunpack.c.l.b16 %v1720
    %v2420 = vunpack.c.h.b16 %v1720
    %v2421 = vunpack.c.l.b16 %v1721
    %v2422 = vunpack.c.h.b16 %v1721
    %v2423 = vunpack.c.l.b16 %v1722
    %v2424 = vunpack.c.h.b16 %v1722
    %v2425 = vunpack.c.l.b16 %v1723
    %v2426 = vunpack.c.h.b16 %v1723
    %v2427 = vunpack.c.l.b16 %v1724
    %v2428 = vunpack.c.h.b16 %v1724
    %v2429 = vunpack.c.l.b16 %v1725
    %v2430 = vunpack.c.h.b16 %v1725
    %v2431 = vunpack.c.l.b16 %v1726
    %v2432 = vunpack.c.h.b16 %v1726
    %v2433 = vunpack.c.l.b16 %v1727
    %v2434 = vunpack.c.h.b16 %v1727
    %v2435 = vunpack.c.l.b16 %v1728
    %v2436 = vunpack.c.h.b16 %v1728
    %v2437 = vunpack.c.l.b16 %v1729
    %v2438 = vunpack.c.h.b16 %v1729
    %v2439 = vunpack.c.l.b16 %v1730
    %v2440 = vunpack.c.h.b16 %v1730
    %v2441 = vunpack.c.l.b16 %v1731
    %v2442 = vunpack.c.h.b16 %v1731
    %v2443 = vunpack.c.l.b16 %v1732
    %v2444 = vunpack.c.h.b16 %v1732
    %v2445 = vunpack.c.l.b16 %v1733
    %v2446 = vunpack.c.h.b16 %v1733
    %v2447 = vunpack.c.l.b16 %v1734
    %v2448 = vunpack.c.h.b16 %v1734
    %v2449 = vunpack.c.l.b16 %v1735
    %v2450 = vunpack.c.h.b16 %v1735
    %v2451 = vunpack.c.l.b16 %v1736
    %v2452 = vunpack.c.h.b16 %v1736
    %v2453 = vunpack.c.l.b16 %v1737
    %v2454 = vunpack.c.h.b16 %v1737
    %v2455 = vunpack.c.l.b16 %v1738
    %v2456 = vunpack.c.h.b16 %v1738
    %v2457 = vunpack.c.l.b16 %v1739
    %v2458 = vunpack.c.h.b16 %v1739
    %v2459 = vunpack.c.l.b16 %v1740
    %v2460 = vunpack.c.h.b16 %v1740
    %v2461 = vunpack.c.l.b16 %v1741
    %v2462 = vunpack.c.h.b16 %v1741
    %v2463 = vunpack.c.l.b16 %v1742
    %v2464 = vunpack.c.h.b16 %v1742
    %v2465 = vunpack.c.l.b16 %v1743
    %v2466 = vunpack.c.h.b16 %v1743
    %v2467 = vunpack.c.l.b16 %v1744
    %v2468 = vunpack.c.h.b16 %v1744
    %v2469 = vunpack.c.l.b16 %v1745
    %v2470 = vunpack.c.h.b16 %v1745
    %v2471 = vunpack.c.l.b16 %v1746
    %v2472 = vunpack.c.h.b16 %v1746
    %v2473 = vunpack.c.l.b16 %v1747
    %v2474 = vunpack.c.h.b16 %v1747
    %v2475 = vunpack.c.l.b16 %v1748
    %v2476 = vunpack.c.h.b16 %v1748
    %v2477 = vunpack.c.l.b16 %v1749
    %v2478 = vunpack.c.h.b16 %v1749
    %v2479 = vunpack.c.l.b16 %v1750
    %v2480 = vunpack.c.h.b16 %v1750
    %v2481 = vunpack.c.l.b16 %v1751
    %v2482 = vunpack.c.h.b16 %v1751
    %v2483 = vunpack.c.l.b16 %v1752
    %v2484 = vunpack.c.h.b16 %v1752
    %v2485 = vunpack.c.l.b16 %v1753
    %v2486 = vunpack.c.h.b16 %v1753
    %v2487 = vunpack.c.l.b16 %v1754
    %v2488 = vunpack.c.h.b16 %v1754
    %v2489 = vunpack.c.l.b16 %v1755
    %v2490 = vunpack.c.h.b16 %v1755
    %v2491 = vunpack.c.l.b16 %v1756
    %v2492 = vunpack.c.h.b16 %v1756
    %v2493 = vunpack.c.l.b16 %v1757
    %v2494 = vunpack.c.h.b16 %v1757
    %v2495 = vunpack.c.l.b16 %v1758
    %v2496 = vunpack.c.h.b16 %v1758
    %v2497 = vunpack.c.l.b16 %v1759
    %v2498 = vunpack.c.h.b16 %v1759
    %v2499 = vunpack.c.l.b16 %v1760
    %v2500 = vunpack.c.h.b16 %v1760
    %v2501 = vunpack.c.l.b16 %v1761
    %v2502 = vunpack.c.h.b16 %v1761
    %v2503 = vunpack.c.l.b16 %v1762
    %v2504 = vunpack.c.h.b16 %v1762
    %v2505 = vunpack.c.l.b16 %v1763
    %v2506 = vunpack.c.h.b16 %v1763
    %v2507 = vunpack.c.l.b16 %v1764
    %v2508 = vunpack.c.h.b16 %v1764
    %v2509 = vunpack.c.l.b16 %v1765
    %v2510 = vunpack.c.h.b16 %v1765
    %v2511 = vunpack.c.l.b16 %v1766
    %v2512 = vunpack.c.h.b16 %v1766
    %v2513 = vunpack.c.l.b16 %v1767
    %v2514 = vunpack.c.h.b16 %v1767
    %v2515 = vunpack.c.l.b16 %v1768
    %v2516 = vunpack.c.h.b16 %v1768
    %v2517 = vunpack.c.l.b16 %v1769
    %v2518 = vunpack.c.h.b16 %v1769
    %v2519 = vunpack.c.l.b16 %v1770
    %v2520 = vunpack.c.h.b16 %v1770
    %v2521 = vunpack.c.l.b16 %v1771
    %v2522 = vunpack.c.h.b16 %v1771
    %v2523 = vunpack.c.l.b16 %v1772
    %v2524 = vunpack.c.h.b16 %v1772
    %v2525 = vunpack.c.l.b16 %v1773
    %v2526 = vunpack.c.h.b16 %v1773
    %v2527 = vunpack.c.l.b16 %v1774
    %v2528 = vunpack.c.h.b16 %v1774
    %v2529 = vunpack.c.l.b16 %v1775
    %v2530 = vunpack.c.h.b16 %v1775
    %v2531 = vunpack.c.l.b16 %v1776
    %v2532 = vunpack.c.h.b16 %v1776
    %v2533 = vunpack.c.l.b16 %v1777
    %v2534 = vunpack.c.h.b16 %v1777
    %v2535 = vunpack.c.l.b16 %v1778
    %v2536 = vunpack.c.h.b16 %v1778
    %v2537 = vunpack.c.l.b16 %v1779
    %v2538 = vunpack.c.h.b16 %v1779
    %v2539 = vunpack.c.l.b16 %v1780
    %v2540 = vunpack.c.h.b16 %v1780
    %v2541 = vunpack.c.l.b16 %v1781
    %v2542 = vunpack.c.h.b16 %v1781
    %v2543 = vunpack.c.l.b16 %v1782
    %v2544 = vunpack.c.h.b16 %v1782
    %v2545 = vunpack.c.l.b16 %v1783
    %v2546 = vunpack.c.h.b16 %v1783
    %v2547 = vunpack.c.l.b16 %v1784
    %v2548 = vunpack.c.h.b16 %v1784
    %v2549 = vunpack.c.l.b16 %v1785
    %v2550 = vunpack.c.h.b16 %v1785
    %v2551 = vunpack.c.l.b16 %v1786
    %v2552 = vunpack.c.h.b16 %v1786
    %v2553 = vunpack.c.l.b16 %v1787
    %v2554 = vunpack.c.h.b16 %v1787
    %v2555 = vunpack.c.l.b16 %v1788
    %v2556 = vunpack.c.h.b16 %v1788
    %v2557 = vunpack.c.l.b16 %v1789
    %v2558 = vunpack.c.h.b16 %v1789
    %v2559 = vunpack.c.l.b16 %v1790
    %v2560 = vunpack.c.h.b16 %v1790
    %v2561 = vunpack.c.l.b16 %v1791
    %v2562 = vunpack.c.h.b16 %v1791
    %v2563 = vunpack.c.l.b16 %v1792
    %v2564 = vunpack.c.h.b16 %v1792
    %v2565 = vunpack.c.l.b16 %v1793
    %v2566 = vunpack.c.h.b16 %v1793
    %v2567 = vunpack.c.l.b16 %v1794
    %v2568 = vunpack.c.h.b16 %v1794
    %v2569 = vunpack.c.l.b16 %v1795
    %v2570 = vunpack.c.h.b16 %v1795
    %v2571 = vunpack.c.l.b16 %v1796
    %v2572 = vunpack.c.h.b16 %v1796
    %v2573 = vunpack.c.l.b16 %v1797
    %v2574 = vunpack.c.h.b16 %v1797
    %v2575 = vunpack.c.l.b16 %v1798
    %v2576 = vunpack.c.h.b16 %v1798
    %v2577 = vunpack.c.l.b16 %v1799
    %v2578 = vunpack.c.h.b16 %v1799
    %v2579 = vunpack.c.l.b16 %v1800
    %v2580 = vunpack.c.h.b16 %v1800
    %v2581 = vunpack.c.l.b16 %v1801
    %v2582 = vunpack.c.h.b16 %v1801
    %v2583 = vunpack.c.l.b16 %v1802
    %v2584 = vunpack.c.h.b16 %v1802
    %v2585 = vunpack.c.l.b16 %v1803
    %v2586 = vunpack.c.h.b16 %v1803
    %v2587 = vunpack.c.l.b16 %v1804
    %v2588 = vunpack.c.h.b16 %v1804
    %v2589 = vunpack.c.l.b16 %v1805
    %v2590 = vunpack.c.h.b16 %v1805
    %v2591 = vunpack.c.l.b16 %v1806
    %v2592 = vunpack.c.h.b16 %v1806
    %v2593 = vpack.c.b16 %v2089, %v2081
    %v2594 = vpack.c.b16 %v2090, %v2082
    %v2595 = vpack.c.b16 %v2091, %v2083
    %v2596 = vpack.c.b16 %v2092, %v2084
    %v2597 = vpack.c.b16 %v2093, %v2085
    %v2598 = vpack.c.b16 %v2094, %v2086
    %v2599 = vpack.c.b16 %v2095, %v2087
    %v2600 = vpack.c.b16 %v2096, %v2088
    %v2601 = vpack.c.b16 %v2105, %v2097
    %v2602 = vpack.c.b16 %v2106, %v2098
    %v2603 = vpack.c.b16 %v2107, %v2099
    %v2604 = vpack.c.b16 %v2108, %v2100
    %v2605 = vpack.c.b16 %v2109, %v2101
    %v2606 = vpack.c.b16 %v2110, %v2102
    %v2607 = vpack.c.b16 %v2111, %v2103
    %v2608 = vpack.c.b16 %v2112, %v2104
    %v2609 = vpack.c.b16 %v2121, %v2113
    %v2610 = vpack.c.b16 %v2122, %v2114
    %v2611 = vpack.c.b16 %v2123, %v2115
    %v2612 = vpack.c.b16 %v2124, %v2116
    %v2613 = vpack.c.b16 %v2125, %v2117
    %v2614 = vpack.c.b16 %v2126, %v2118
    %v2615 = vpack.c.b16 %v2127, %v2119
    %v2616 = vpack.c.b16 %v2128, %v2120
    %v2617 = vpack.c.b16 %v2137, %v2129
    %v2618 = vpack.c.b16 %v2138, %v2130
    %v2619 = vpack.c.b16 %v2139, %v2131
    %v2620 = vpack.c.b16 %v2140, %v2132
    %v2621 = vpack.c.b16 %v2141, %v2133
    %v2622 = vpack.c.b16 %v2142, %v2134
    %v2623 = vpack.c.b16 %v2143, %v2135
    %v2624 = vpack.c.b16 %v2144, %v2136
    %v2625 = vpack.c.b16 %v2153, %v2145
    %v2626 = vpack.c.b16 %v2154, %v2146
    %v2627 = vpack.c.b16 %v2155, %v2147
    %v2628 = vpack.c.b16 %v2156, %v2148
    %v2629 = vpack.c.b16 %v2157, %v2149
    %v2630 = vpack.c.b16 %v2158, %v2150
    %v2631 = vpack.c.b16 %v2159, %v2151
    %v2632 = vpack.c.b16 %v2160, %v2152
    %v2633 = vpack.c.b16 %v2169, %v2161
    %v2634 = vpack.c.b16 %v2170, %v2162
    %v2635 = vpack.c.b16 %v2171, %v2163
    %v2636 = vpack.c.b16 %v2172, %v2164
    %v2637 = vpack.c.b16 %v2173, %v2165
    %v2638 = vpack.c.b16 %v2174, %v2166
    %v2639 = vpack.c.b16 %v2175, %v2167
    %v2640 = vpack.c.b16 %v2176, %v2168
    %v2641 = vpack.c.b16 %v2185, %v2177
    %v2642 = vpack.c.b16 %v2186, %v2178
    %v2643 = vpack.c.b16 %v2187, %v2179
    %v2644 = vpack.c.b16 %v2188, %v2180
    %v2645 = vpack.c.b16 %v2189, %v2181
    %v2646 = vpack.c.b16 %v2190, %v2182
    %v2647 = vpack.c.b16 %v2191, %v2183
    %v2648 = vpack.c.b16 %v2192, %v2184
    %v2649 = vpack.c.b16 %v2201, %v2193
    %v2650 = vpack.c.b16 %v2202, %v2194
    %v2651 = vpack.c.b16 %v2203, %v2195
    %v2652 = vpack.c.b16 %v2204, %v2196
    %v2653 = vpack.c.b16 %v2205, %v2197
    %v2654 = vpack.c.b16 %v2206, %v2198
    %v2655 = vpack.c.b16 %v2207, %v2199
    %v2656 = vpack.c.b16 %v2208, %v2200
    %v2657 = vpack.c.b16 %v2217, %v2209
    %v2658 = vpack.c.b16 %v2218, %v2210
    %v2659 = vpack.c.b16 %v2219, %v2211
    %v2660 = vpack.c.b16 %v2220, %v2212
    %v2661 = vpack.c.b16 %v2221, %v2213
    %v2662 = vpack.c.b16 %v2222, %v2214
    %v2663 = vpack.c.b16 %v2223, %v2215
    %v2664 = vpack.c.b16 %v2224, %v2216
    %v2665 = vpack.c.b16 %v2233, %v2225
    %v2666 = vpack.c.b16 %v2234, %v2226
    %v2667 = vpack.c.b16 %v2235, %v2227
    %v2668 = vpack.c.b16 %v2236, %v2228
    %v2669 = vpack.c.b16 %v2237, %v2229
    %v2670 = vpack.c.b16 %v2238, %v2230
    %v2671 = vpack.c.b16 %v2239, %v2231
    %v2672 = vpack.c.b16 %v2240, %v2232
    %v2673 = vpack.c.b16 %v2249, %v2241
    %v2674 = vpack.c.b16 %v2250, %v2242
    %v2675 = vpack.c.b16 %v2251, %v2243
    %v2676 = vpack.c.b16 %v2252, %v2244
    %v2677 = vpack.c.b16 %v2253, %v2245
    %v2678 = vpack.c.b16 %v2254, %v2246
    %v2679 = vpack.c.b16 %v2255, %v2247
    %v2680 = vpack.c.b16 %v2256, %v2248
    %v2681 = vpack.c.b16 %v2265, %v2257
    %v2682 = vpack.c.b16 %v2266, %v2258
    %v2683 = vpack.c.b16 %v2267, %v2259
    %v2684 = vpack.c.b16 %v2268, %v2260
    %v2685 = vpack.c.b16 %v2269, %v2261
    %v2686 = vpack.c.b16 %v2270, %v2262
    %v2687 = vpack.c.b16 %v2271, %v2263
    %v2688 = vpack.c.b16 %v2272, %v2264
    %v2689 = vpack.c.b16 %v2281, %v2273
    %v2690 = vpack.c.b16 %v2282, %v2274
    %v2691 = vpack.c.b16 %v2283, %v2275
    %v2692 = vpack.c.b16 %v2284, %v2276
    %v2693 = vpack.c.b16 %v2285, %v2277
    %v2694 = vpack.c.b16 %v2286, %v2278
    %v2695 = vpack.c.b16 %v2287, %v2279
    %v2696 = vpack.c.b16 %v2288, %v2280
    %v2697 = vpack.c.b16 %v2297, %v2289
    %v2698 = vpack.c.b16 %v2298, %v2290
    %v2699 = vpack.c.b16 %v2299, %v2291
    %v2700 = vpack.c.b16 %v2300, %v2292
    %v2701 = vpack.c.b16 %v2301, %v2293
    %v2702 = vpack.c.b16 %v2302, %v2294
    %v2703 = vpack.c.b16 %v2303, %v2295
    %v2704 = vpack.c.b16 %v2304, %v2296
    %v2705 = vpack.c.b16 %v2313, %v2305
    %v2706 = vpack.c.b16 %v2314, %v2306
    %v2707 = vpack.c.b16 %v2315, %v2307
    %v2708 = vpack.c.b16 %v2316, %v2308
    %v2709 = vpack.c.b16 %v2317, %v2309
    %v2710 = vpack.c.b16 %v2318, %v2310
    %v2711 = vpack.c.b16 %v2319, %v2311
    %v2712 = vpack.c.b16 %v2320, %v2312
    %v2713 = vpack.c.b16 %v2329, %v2321
    %v2714 = vpack.c.b16 %v2330, %v2322
    %v2715 = vpack.c.b16 %v2331, %v2323
    %v2716 = vpack.c.b16 %v2332, %v2324
    %v2717 = vpack.c.b16 %v2333, %v2325
    %v2718 = vpack.c.b16 %v2334, %v2326
    %v2719 = vpack.c.b16 %v2335, %v2327
    %v2720 = vpack.c.b16 %v2336, %v2328
    %v2721 = vpack.c.b16 %v2345, %v2337
    %v2722 = vpack.c.b16 %v2346, %v2338
    %v2723 = vpack.c.b16 %v2347, %v2339
    %v2724 = vpack.c.b16 %v2348, %v2340
    %v2725 = vpack.c.b16 %v2349, %v2341
    %v2726 = vpack.c.b16 %v2350, %v2342
    %v2727 = vpack.c.b16 %v2351, %v2343
    %v2728 = vpack.c.b16 %v2352, %v2344
    %v2729 = vpack.c.b16 %v2361, %v2353
    %v2730 = vpack.c.b16 %v2362, %v2354
    %v2731 = vpack.c.b16 %v2363, %v2355
    %v2732 = vpack.c.b16 %v2364, %v2356
    %v2733 = vpack.c.b16 %v2365, %v2357
    %v2734 = vpack.c.b16 %v2366, %v2358
    %v2735 = vpack.c.b16 %v2367, %v2359
    %v2736 = vpack.c.b16 %v2368, %v2360
    %v2737 = vpack.c.b16 %v2377, %v2369
    %v2738 = vpack.c.b16 %v2378, %v2370
    %v2739 = vpack.c.b16 %v2379, %v2371
    %v2740 = vpack.c.b16 %v2380, %v2372
    %v2741 = vpack.c.b16 %v2381, %v2373
    %v2742 = vpack.c.b16 %v2382, %v2374
    %v2743 = vpack.c.b16 %v2383, %v2375
    %v2744 = vpack.c.b16 %v2384, %v2376
    %v2745 = vpack.c.b16 %v2393, %v2385
    %v2746 = vpack.c.b16 %v2394, %v2386
    %v2747 = vpack.c.b16 %v2395, %v2387
    %v2748 = vpack.c.b16 %v2396, %v2388
    %v2749 = vpack.c.b16 %v2397, %v2389
    %v2750 = vpack.c.b16 %v2398, %v2390
    %v2751 = vpack.c.b16 %v2399, %v2391
    %v2752 = vpack.c.b16 %v2400, %v2392
    %v2753 = vpack.c.b16 %v2409, %v2401
    %v2754 = vpack.c.b16 %v2410, %v2402
    %v2755 = vpack.c.b16 %v2411, %v2403
    %v2756 = vpack.c.b16 %v2412, %v2404
    %v2757 = vpack.c.b16 %v2413, %v2405
    %v2758 = vpack.c.b16 %v2414, %v2406
    %v2759 = vpack.c.b16 %v2415, %v2407
    %v2760 = vpack.c.b16 %v2416, %v2408
    %v2761 = vpack.c.b16 %v2425, %v2417
    %v2762 = vpack.c.b16 %v2426, %v2418
    %v2763 = vpack.c.b16 %v2427, %v2419
    %v2764 = vpack.c.b16 %v2428, %v2420
    %v2765 = vpack.c.b16 %v2429, %v2421
    %v2766 = vpack.c.b16 %v2430, %v2422
    %v2767 = vpack.c.b16 %v2431, %v2423
    %v2768 = vpack.c.b16 %v2432, %v2424
    %v2769 = vpack.c.b16 %v2441, %v2433
    %v2770 = vpack.c.b16 %v2442, %v2434
    %v2771 = vpack.c.b16 %v2443, %v2435
    %v2772 = vpack.c.b16 %v2444, %v2436
    %v2773 = vpack.c.b16 %v2445, %v2437
    %v2774 = vpack.c.b16 %v2446, %v2438
    %v2775 = vpack.c.b16 %v2447, %v2439
    %v2776 = vpack.c.b16 %v2448, %v2440
    %v2777 = vpack.c.b16 %v2457, %v2449
    %v2778 = vpack.c.b16 %v2458, %v2450
    %v2779 = vpack.c.b16 %v2459, %v2451
    %v2780 = vpack.c.b16 %v2460, %v2452
    %v2781 = vpack.c.b16 %v2461, %v2453
    %v2782 = vpack.c.b16 %v2462, %v2454
    %v2783 = vpack.c.b16 %v2463, %v2455
    %v2784 = vpack.c.b16 %v2464, %v2456
    %v2785 = vpack.c.b16 %v2473, %v2465
    %v2786 = vpack.c.b16 %v2474, %v2466
    %v2787 = vpack.c.b16 %v2475, %v2467
    %v2788 = vpack.c.b16 %v2476, %v2468
    %v2789 = vpack.c.b16 %v2477, %v2469
    %v2790 = vpack.c.b16 %v2478, %v2470
    %v2791 = vpack.c.b16 %v2479, %v2471
    %v2792 = vpack.c.b16 %v2480, %v2472
    %v2793 = vpack.c.b16 %v2489, %v2481
    %v2794 = vpack.c.b16 %v2490, %v2482
    %v2795 = vpack.c.b16 %v2491, %v2483
    %v2796 = vpack.c.b16 %v2492, %v2484
    %v2797 = vpack.c.b16 %v2493, %v2485
    %v2798 = vpack.c.b16 %v2494, %v2486
    %v2799 = vpack.c.b16 %v2495, %v2487
    %v2800 = vpack.c.b16 %v2496, %v2488
    %v2801 = vpack.c.b16 %v2505, %v2497
    %v2802 = vpack.c.b16 %v2506, %v2498
    %v2803 = vpack.c.b16 %v2507, %v2499
    %v2804 = vpack.c.b16 %v2508, %v2500
    %v2805 = vpack.c.b16 %v2509, %v2501
    %v2806 = vpack.c.b16 %v2510, %v2502
    %v2807 = vpack.c.b16 %v2511, %v2503
    %v2808 = vpack.c.b16 %v2512, %v2504
    %v2809 = vpack.c.b16 %v2521, %v2513
    %v2810 = vpack.c.b16 %v2522, %v2514
    %v2811 = vpack.c.b16 %v2523, %v2515
    %v2812 = vpack.c.b16 %v2524, %v2516
    %v2813 = vpack.c.b16 %v2525, %v2517
    %v2814 = vpack.c.b16 %v2526, %v2518
    %v2815 = vpack.c.b16 %v2527, %v2519
    %v2816 = vpack.c.b16 %v2528, %v2520
    %v2817 = vpack.c.b16 %v2537, %v2529
    %v2818 = vpack.c.b16 %v2538, %v2530
    %v2819 = vpack.c.b16 %v2539, %v2531
    %v2820 = vpack.c.b16 %v2540, %v2532
    %v2821 = vpack.c.b16 %v2541, %v2533
    %v2822 = vpack.c.b16 %v2542, %v2534
    %v2823 = vpack.c.b16 %v2543, %v2535
    %v2824 = vpack.c.b16 %v2544, %v2536
    %v2825 = vpack.c.b16 %v2553, %v2545
    %v2826 = vpack.c.b16 %v2554, %v2546
    %v2827 = vpack.c.b16 %v2555, %v2547
    %v2828 = vpack.c.b16 %v2556, %v2548
    %v2829 = vpack.c.b16 %v2557, %v2549
    %v2830 = vpack.c.b16 %v2558, %v2550
    %v2831 = vpack.c.b16 %v2559, %v2551
    %v2832 = vpack.c.b16 %v2560, %v2552
    %v2833 = vpack.c.b16 %v2569, %v2561
    %v2834 = vpack.c.b16 %v2570, %v2562
    %v2835 = vpack.c.b16 %v2571, %v2563
    %v2836 = vpack.c.b16 %v2572, %v2564
    %v2837 = vpack.c.b16 %v2573, %v2565
    %v2838 = vpack.c.b16 %v2574, %v2566
    %v2839 = vpack.c.b16 %v2575, %v2567
    %v2840 = vpack.c.b16 %v2576, %v2568
    %v2841 = vpack.c.b16 %v2585, %v2577
    %v2842 = vpack.c.b16 %v2586, %v2578
    %v2843 = vpack.c.b16 %v2587, %v2579
    %v2844 = vpack.c.b16 %v2588, %v2580
    %v2845 = vpack.c.b16 %v2589, %v2581
    %v2846 = vpack.c.b16 %v2590, %v2582
    %v2847 = vpack.c.b16 %v2591, %v2583
    %v2848 = vpack.c.b16 %v2592, %v2584
    %3105 = vmatpush.bf16.msra.mxu0 %v2649
    %3106 = vmatpush.bf16.msra.mxu0 %v2641
    %3107 = vmatpush.bf16.msra.mxu0 %v2633
    %3108 = vmatpush.bf16.msra.mxu0 %v2625
    %3109 = vmatpush.bf16.msra.mxu0 %v2617
    %3110 = vmatpush.bf16.msra.mxu0 %v2609
    %3111 = vmatpush.bf16.msra.mxu0 %v2601
    %3112 = vmatpush.bf16.msra.mxu0 %v2593
    %3113 = vmatmul.bf16.gmra.mxu0 %v1547
    %v3114 = vpop.f32.mrf.mxu0
    %v3115 = vadd.f32 %v1809, %v3114
    %v3116 = vpop.f32.mrf.mxu0
    %3117 = vdwg.mxu0
    %3118 = vmatpush.bf16.msra.mxu0 %v2713
    %3119 = vmatpush.bf16.msra.mxu0 %v2705
    %3120 = vmatpush.bf16.msra.mxu0 %v2697
    %3121 = vmatpush.bf16.msra.mxu0 %v2689
    %3122 = vmatpush.bf16.msra.mxu0 %v2681
    %3123 = vmatpush.bf16.msra.mxu0 %v2673
    %3124 = vmatpush.bf16.msra.mxu0 %v2665
    %3125 = vmatpush.bf16.msra.mxu0 %v2657
    %3126 = vmatmul.bf16.gmra.mxu0 %v1548
    %v3127 = vpop.f32.mrf.mxu0
    %v3128 = vadd.f32 %v3115, %v3127
    %v3129 = vpop.f32.mrf.mxu0
    %3130 = vdwg.mxu0
    %3131 = vmatpush.bf16.msra.mxu0 %v2777
    %3132 = vmatpush.bf16.msra.mxu0 %v2769
    %3133 = vmatpush.bf16.msra.mxu0 %v2761
    %3134 = vmatpush.bf16.msra.mxu0 %v2753
    %3135 = vmatpush.bf16.msra.mxu0 %v2745
    %3136 = vmatpush.bf16.msra.mxu0 %v2737
    %3137 = vmatpush.bf16.msra.mxu0 %v2729
    %3138 = vmatpush.bf16.msra.mxu0 %v2721
    %3139 = vmatmul.bf16.gmra.mxu0 %v1549
    %v3140 = vpop.f32.mrf.mxu0
    %v3141 = vadd.f32 %v3128, %v3140
    %v3142 = vpop.f32.mrf.mxu0
    %3143 = vdwg.mxu0
    %3144 = vmatpush.bf16.msra.mxu0 %v2841
    %3145 = vmatpush.bf16.msra.mxu0 %v2833
    %3146 = vmatpush.bf16.msra.mxu0 %v2825
    %3147 = vmatpush.bf16.msra.mxu0 %v2817
    %3148 = vmatpush.bf16.msra.mxu0 %v2809
    %3149 = vmatpush.bf16.msra.mxu0 %v2801
    %3150 = vmatpush.bf16.msra.mxu0 %v2793
    %3151 = vmatpush.bf16.msra.mxu0 %v2785
    %3152 = vmatmul.bf16.gmra.mxu0 %v1550
    %v3153 = vpop.f32.mrf.mxu0
    %v3154 = vadd.f32 %v3141, %v3153
    %v3155 = vpop.f32.mrf.mxu0
    %3156 = vdwg.mxu0
    %3157 = vmatpush.bf16.msra.mxu0 %v2650
    %3158 = vmatpush.bf16.msra.mxu0 %v2642
    %3159 = vmatpush.bf16.msra.mxu0 %v2634
    %3160 = vmatpush.bf16.msra.mxu0 %v2626
    %3161 = vmatpush.bf16.msra.mxu0 %v2618
    %3162 = vmatpush.bf16.msra.mxu0 %v2610
    %3163 = vmatpush.bf16.msra.mxu0 %v2602
    %3164 = vmatpush.bf16.msra.mxu0 %v2594
    %3165 = vmatmul.bf16.gmra.mxu0 %v1547
    %v3166 = vpop.f32.mrf.mxu0
    %v3167 = vadd.f32 %v1810, %v3166
    %v3168 = vpop.f32.mrf.mxu0
    %3169 = vdwg.mxu0
    %3170 = vmatpush.bf16.msra.mxu0 %v2714
    %3171 = vmatpush.bf16.msra.mxu0 %v2706
    %3172 = vmatpush.bf16.msra.mxu0 %v2698
    %3173 = vmatpush.bf16.msra.mxu0 %v2690
    %3174 = vmatpush.bf16.msra.mxu0 %v2682
    %3175 = vmatpush.bf16.msra.mxu0 %v2674
    %3176 = vmatpush.bf16.msra.mxu0 %v2666
    %3177 = vmatpush.bf16.msra.mxu0 %v2658
    %3178 = vmatmul.bf16.gmra.mxu0 %v1548
    %v3179 = vpop.f32.mrf.mxu0
    %v3180 = vadd.f32 %v3167, %v3179
    %v3181 = vpop.f32.mrf.mxu0
    %3182 = vdwg.mxu0
    %3183 = vmatpush.bf16.msra.mxu0 %v2778
    %3184 = vmatpush.bf16.msra.mxu0 %v2770
    %3185 = vmatpush.bf16.msra.mxu0 %v2762
    %3186 = vmatpush.bf16.msra.mxu0 %v2754
    %3187 = vmatpush.bf16.msra.mxu0 %v2746
    %3188 = vmatpush.bf16.msra.mxu0 %v2738
    %3189 = vmatpush.bf16.msra.mxu0 %v2730
    %3190 = vmatpush.bf16.msra.mxu0 %v2722
    %3191 = vmatmul.bf16.gmra.mxu0 %v1549
    %v3192 = vpop.f32.mrf.mxu0
    %v3193 = vadd.f32 %v3180, %v3192
    %v3194 = vpop.f32.mrf.mxu0
    %3195 = vdwg.mxu0
    %3196 = vmatpush.bf16.msra.mxu0 %v2842
    %3197 = vmatpush.bf16.msra.mxu0 %v2834
    %3198 = vmatpush.bf16.msra.mxu0 %v2826
    %3199 = vmatpush.bf16.msra.mxu0 %v2818
    %3200 = vmatpush.bf16.msra.mxu0 %v2810
    %3201 = vmatpush.bf16.msra.mxu0 %v2802
    %3202 = vmatpush.bf16.msra.mxu0 %v2794
    %3203 = vmatpush.bf16.msra.mxu0 %v2786
    %3204 = vmatmul.bf16.gmra.mxu0 %v1550
    %v3205 = vpop.f32.mrf.mxu0
    %v3206 = vadd.f32 %v3193, %v3205
    %v3207 = vpop.f32.mrf.mxu0
    %3208 = vdwg.mxu0
    %3209 = vmatpush.bf16.msra.mxu0 %v2651
    %3210 = vmatpush.bf16.msra.mxu0 %v2643
    %3211 = vmatpush.bf16.msra.mxu0 %v2635
    %3212 = vmatpush.bf16.msra.mxu0 %v2627
    %3213 = vmatpush.bf16.msra.mxu0 %v2619
    %3214 = vmatpush.bf16.msra.mxu0 %v2611
    %3215 = vmatpush.bf16.msra.mxu0 %v2603
    %3216 = vmatpush.bf16.msra.mxu0 %v2595
    %3217 = vmatmul.bf16.gmra.mxu0 %v1547
    %v3218 = vpop.f32.mrf.mxu0
    %v3219 = vadd.f32 %v1811, %v3218
    %v3220 = vpop.f32.mrf.mxu0
    %3221 = vdwg.mxu0
    %3222 = vmatpush.bf16.msra.mxu0 %v2715
    %3223 = vmatpush.bf16.msra.mxu0 %v2707
    %3224 = vmatpush.bf16.msra.mxu0 %v2699
    %3225 = vmatpush.bf16.msra.mxu0 %v2691
    %3226 = vmatpush.bf16.msra.mxu0 %v2683
    %3227 = vmatpush.bf16.msra.mxu0 %v2675
    %3228 = vmatpush.bf16.msra.mxu0 %v2667
    %3229 = vmatpush.bf16.msra.mxu0 %v2659
    %3230 = vmatmul.bf16.gmra.mxu0 %v1548
    %v3231 = vpop.f32.mrf.mxu0
    %v3232 = vadd.f32 %v3219, %v3231
    %v3233 = vpop.f32.mrf.mxu0
    %3234 = vdwg.mxu0
    %3235 = vmatpush.bf16.msra.mxu0 %v2779
    %3236 = vmatpush.bf16.msra.mxu0 %v2771
    %3237 = vmatpush.bf16.msra.mxu0 %v2763
    %3238 = vmatpush.bf16.msra.mxu0 %v2755
    %3239 = vmatpush.bf16.msra.mxu0 %v2747
    %3240 = vmatpush.bf16.msra.mxu0 %v2739
    %3241 = vmatpush.bf16.msra.mxu0 %v2731
    %3242 = vmatpush.bf16.msra.mxu0 %v2723
    %3243 = vmatmul.bf16.gmra.mxu0 %v1549
    %v3244 = vpop.f32.mrf.mxu0
    %v3245 = vadd.f32 %v3232, %v3244
    %v3246 = vpop.f32.mrf.mxu0
    %3247 = vdwg.mxu0
    %3248 = vmatpush.bf16.msra.mxu0 %v2843
    %3249 = vmatpush.bf16.msra.mxu0 %v2835
    %3250 = vmatpush.bf16.msra.mxu0 %v2827
    %3251 = vmatpush.bf16.msra.mxu0 %v2819
    %3252 = vmatpush.bf16.msra.mxu0 %v2811
    %3253 = vmatpush.bf16.msra.mxu0 %v2803
    %3254 = vmatpush.bf16.msra.mxu0 %v2795
    %3255 = vmatpush.bf16.msra.mxu0 %v2787
    %3256 = vmatmul.bf16.gmra.mxu0 %v1550
    %v3257 = vpop.f32.mrf.mxu0
    %v3258 = vadd.f32 %v3245, %v3257
    %v3259 = vpop.f32.mrf.mxu0
    %3260 = vdwg.mxu0
    %3261 = vmatpush.bf16.msra.mxu0 %v2652
    %3262 = vmatpush.bf16.msra.mxu0 %v2644
    %3263 = vmatpush.bf16.msra.mxu0 %v2636
    %3264 = vmatpush.bf16.msra.mxu0 %v2628
    %3265 = vmatpush.bf16.msra.mxu0 %v2620
    %3266 = vmatpush.bf16.msra.mxu0 %v2612
    %3267 = vmatpush.bf16.msra.mxu0 %v2604
    %3268 = vmatpush.bf16.msra.mxu0 %v2596
    %3269 = vmatmul.bf16.gmra.mxu0 %v1547
    %v3270 = vpop.f32.mrf.mxu0
    %v3271 = vadd.f32 %v1812, %v3270
    %v3272 = vpop.f32.mrf.mxu0
    %3273 = vdwg.mxu0
    %3274 = vmatpush.bf16.msra.mxu0 %v2716
    %3275 = vmatpush.bf16.msra.mxu0 %v2708
    %3276 = vmatpush.bf16.msra.mxu0 %v2700
    %3277 = vmatpush.bf16.msra.mxu0 %v2692
    %3278 = vmatpush.bf16.msra.mxu0 %v2684
    %3279 = vmatpush.bf16.msra.mxu0 %v2676
    %3280 = vmatpush.bf16.msra.mxu0 %v2668
    %3281 = vmatpush.bf16.msra.mxu0 %v2660
    %3282 = vmatmul.bf16.gmra.mxu0 %v1548
    %v3283 = vpop.f32.mrf.mxu0
    %v3284 = vadd.f32 %v3271, %v3283
    %v3285 = vpop.f32.mrf.mxu0
    %3286 = vdwg.mxu0
    %3287 = vmatpush.bf16.msra.mxu0 %v2780
    %3288 = vmatpush.bf16.msra.mxu0 %v2772
    %3289 = vmatpush.bf16.msra.mxu0 %v2764
    %3290 = vmatpush.bf16.msra.mxu0 %v2756
    %3291 = vmatpush.bf16.msra.mxu0 %v2748
    %3292 = vmatpush.bf16.msra.mxu0 %v2740
    %3293 = vmatpush.bf16.msra.mxu0 %v2732
    %3294 = vmatpush.bf16.msra.mxu0 %v2724
    %3295 = vmatmul.bf16.gmra.mxu0 %v1549
    %v3296 = vpop.f32.mrf.mxu0
    %v3297 = vadd.f32 %v3284, %v3296
    %v3298 = vpop.f32.mrf.mxu0
    %3299 = vdwg.mxu0
    %3300 = vmatpush.bf16.msra.mxu0 %v2844
    %3301 = vmatpush.bf16.msra.mxu0 %v2836
    %3302 = vmatpush.bf16.msra.mxu0 %v2828
    %3303 = vmatpush.bf16.msra.mxu0 %v2820
    %3304 = vmatpush.bf16.msra.mxu0 %v2812
    %3305 = vmatpush.bf16.msra.mxu0 %v2804
    %3306 = vmatpush.bf16.msra.mxu0 %v2796
    %3307 = vmatpush.bf16.msra.mxu0 %v2788
    %3308 = vmatmul.bf16.gmra.mxu0 %v1550
    %v3309 = vpop.f32.mrf.mxu0
    %v3310 = vadd.f32 %v3297, %v3309
    %v3311 = vpop.f32.mrf.mxu0
    %3312 = vdwg.mxu0
    %3313 = vmatpush.bf16.msra.mxu0 %v2653
    %3314 = vmatpush.bf16.msra.mxu0 %v2645
    %3315 = vmatpush.bf16.msra.mxu0 %v2637
    %3316 = vmatpush.bf16.msra.mxu0 %v2629
    %3317 = vmatpush.bf16.msra.mxu0 %v2621
    %3318 = vmatpush.bf16.msra.mxu0 %v2613
    %3319 = vmatpush.bf16.msra.mxu0 %v2605
    %3320 = vmatpush.bf16.msra.mxu0 %v2597
    %3321 = vmatmul.bf16.gmra.mxu0 %v1547
    %v3322 = vpop.f32.mrf.mxu0
    %v3323 = vadd.f32 %v1813, %v3322
    %v3324 = vpop.f32.mrf.mxu0
    %3325 = vdwg.mxu0
    %3326 = vmatpush.bf16.msra.mxu0 %v2717
    %3327 = vmatpush.bf16.msra.mxu0 %v2709
    %3328 = vmatpush.bf16.msra.mxu0 %v2701
    %3329 = vmatpush.bf16.msra.mxu0 %v2693
    %3330 = vmatpush.bf16.msra.mxu0 %v2685
    %3331 = vmatpush.bf16.msra.mxu0 %v2677
    %3332 = vmatpush.bf16.msra.mxu0 %v2669
    %3333 = vmatpush.bf16.msra.mxu0 %v2661
    %3334 = vmatmul.bf16.gmra.mxu0 %v1548
    %v3335 = vpop.f32.mrf.mxu0
    %v3336 = vadd.f32 %v3323, %v3335
    %v3337 = vpop.f32.mrf.mxu0
    %3338 = vdwg.mxu0
    %3339 = vmatpush.bf16.msra.mxu0 %v2781
    %3340 = vmatpush.bf16.msra.mxu0 %v2773
    %3341 = vmatpush.bf16.msra.mxu0 %v2765
    %3342 = vmatpush.bf16.msra.mxu0 %v2757
    %3343 = vmatpush.bf16.msra.mxu0 %v2749
    %3344 = vmatpush.bf16.msra.mxu0 %v2741
    %3345 = vmatpush.bf16.msra.mxu0 %v2733
    %3346 = vmatpush.bf16.msra.mxu0 %v2725
    %3347 = vmatmul.bf16.gmra.mxu0 %v1549
    %v3348 = vpop.f32.mrf.mxu0
    %v3349 = vadd.f32 %v3336, %v3348
    %v3350 = vpop.f32.mrf.mxu0
    %3351 = vdwg.mxu0
    %3352 = vmatpush.bf16.msra.mxu0 %v2845
    %3353 = vmatpush.bf16.msra.mxu0 %v2837
    %3354 = vmatpush.bf16.msra.mxu0 %v2829
    %3355 = vmatpush.bf16.msra.mxu0 %v2821
    %3356 = vmatpush.bf16.msra.mxu0 %v2813
    %3357 = vmatpush.bf16.msra.mxu0 %v2805
    %3358 = vmatpush.bf16.msra.mxu0 %v2797
    %3359 = vmatpush.bf16.msra.mxu0 %v2789
    %3360 = vmatmul.bf16.gmra.mxu0 %v1550
    %v3361 = vpop.f32.mrf.mxu0
    %v3362 = vadd.f32 %v3349, %v3361
    %v3363 = vpop.f32.mrf.mxu0
    %3364 = vdwg.mxu0
    %3365 = vmatpush.bf16.msra.mxu0 %v2654
    %3366 = vmatpush.bf16.msra.mxu0 %v2646
    %3367 = vmatpush.bf16.msra.mxu0 %v2638
    %3368 = vmatpush.bf16.msra.mxu0 %v2630
    %3369 = vmatpush.bf16.msra.mxu0 %v2622
    %3370 = vmatpush.bf16.msra.mxu0 %v2614
    %3371 = vmatpush.bf16.msra.mxu0 %v2606
    %3372 = vmatpush.bf16.msra.mxu0 %v2598
    %3373 = vmatmul.bf16.gmra.mxu0 %v1547
    %v3374 = vpop.f32.mrf.mxu0
    %v3375 = vadd.f32 %v1814, %v3374
    %v3376 = vpop.f32.mrf.mxu0
    %3377 = vdwg.mxu0
    %3378 = vmatpush.bf16.msra.mxu0 %v2718
    %3379 = vmatpush.bf16.msra.mxu0 %v2710
    %3380 = vmatpush.bf16.msra.mxu0 %v2702
    %3381 = vmatpush.bf16.msra.mxu0 %v2694
    %3382 = vmatpush.bf16.msra.mxu0 %v2686
    %3383 = vmatpush.bf16.msra.mxu0 %v2678
    %3384 = vmatpush.bf16.msra.mxu0 %v2670
    %3385 = vmatpush.bf16.msra.mxu0 %v2662
    %3386 = vmatmul.bf16.gmra.mxu0 %v1548
    %v3387 = vpop.f32.mrf.mxu0
    %v3388 = vadd.f32 %v3375, %v3387
    %v3389 = vpop.f32.mrf.mxu0
    %3390 = vdwg.mxu0
    %3391 = vmatpush.bf16.msra.mxu0 %v2782
    %3392 = vmatpush.bf16.msra.mxu0 %v2774
    %3393 = vmatpush.bf16.msra.mxu0 %v2766
    %3394 = vmatpush.bf16.msra.mxu0 %v2758
    %3395 = vmatpush.bf16.msra.mxu0 %v2750
    %3396 = vmatpush.bf16.msra.mxu0 %v2742
    %3397 = vmatpush.bf16.msra.mxu0 %v2734
    %3398 = vmatpush.bf16.msra.mxu0 %v2726
    %3399 = vmatmul.bf16.gmra.mxu0 %v1549
    %v3400 = vpop.f32.mrf.mxu0
    %v3401 = vadd.f32 %v3388, %v3400
    %v3402 = vpop.f32.mrf.mxu0
    %3403 = vdwg.mxu0
    %3404 = vmatpush.bf16.msra.mxu0 %v2846
    %3405 = vmatpush.bf16.msra.mxu0 %v2838
    %3406 = vmatpush.bf16.msra.mxu0 %v2830
    %3407 = vmatpush.bf16.msra.mxu0 %v2822
    %3408 = vmatpush.bf16.msra.mxu0 %v2814
    %3409 = vmatpush.bf16.msra.mxu0 %v2806
    %3410 = vmatpush.bf16.msra.mxu0 %v2798
    %3411 = vmatpush.bf16.msra.mxu0 %v2790
    %3412 = vmatmul.bf16.gmra.mxu0 %v1550
    %v3413 = vpop.f32.mrf.mxu0
    %v3414 = vadd.f32 %v3401, %v3413
    %v3415 = vpop.f32.mrf.mxu0
    %3416 = vdwg.mxu0
    %3417 = vmatpush.bf16.msra.mxu0 %v2655
    %3418 = vmatpush.bf16.msra.mxu0 %v2647
    %3419 = vmatpush.bf16.msra.mxu0 %v2639
    %3420 = vmatpush.bf16.msra.mxu0 %v2631
    %3421 = vmatpush.bf16.msra.mxu0 %v2623
    %3422 = vmatpush.bf16.msra.mxu0 %v2615
    %3423 = vmatpush.bf16.msra.mxu0 %v2607
    %3424 = vmatpush.bf16.msra.mxu0 %v2599
    %3425 = vmatmul.bf16.gmra.mxu0 %v1547
    %v3426 = vpop.f32.mrf.mxu0
    %v3427 = vadd.f32 %v1815, %v3426
    %v3428 = vpop.f32.mrf.mxu0
    %3429 = vdwg.mxu0
    %3430 = vmatpush.bf16.msra.mxu0 %v2719
    %3431 = vmatpush.bf16.msra.mxu0 %v2711
    %3432 = vmatpush.bf16.msra.mxu0 %v2703
    %3433 = vmatpush.bf16.msra.mxu0 %v2695
    %3434 = vmatpush.bf16.msra.mxu0 %v2687
    %3435 = vmatpush.bf16.msra.mxu0 %v2679
    %3436 = vmatpush.bf16.msra.mxu0 %v2671
    %3437 = vmatpush.bf16.msra.mxu0 %v2663
    %3438 = vmatmul.bf16.gmra.mxu0 %v1548
    %v3439 = vpop.f32.mrf.mxu0
    %v3440 = vadd.f32 %v3427, %v3439
    %v3441 = vpop.f32.mrf.mxu0
    %3442 = vdwg.mxu0
    %3443 = vmatpush.bf16.msra.mxu0 %v2783
    %3444 = vmatpush.bf16.msra.mxu0 %v2775
    %3445 = vmatpush.bf16.msra.mxu0 %v2767
    %3446 = vmatpush.bf16.msra.mxu0 %v2759
    %3447 = vmatpush.bf16.msra.mxu0 %v2751
    %3448 = vmatpush.bf16.msra.mxu0 %v2743
    %3449 = vmatpush.bf16.msra.mxu0 %v2735
    %3450 = vmatpush.bf16.msra.mxu0 %v2727
    %3451 = vmatmul.bf16.gmra.mxu0 %v1549
    %v3452 = vpop.f32.mrf.mxu0
    %v3453 = vadd.f32 %v3440, %v3452
    %v3454 = vpop.f32.mrf.mxu0
    %3455 = vdwg.mxu0
    %3456 = vmatpush.bf16.msra.mxu0 %v2847
    %3457 = vmatpush.bf16.msra.mxu0 %v2839
    %3458 = vmatpush.bf16.msra.mxu0 %v2831
    %3459 = vmatpush.bf16.msra.mxu0 %v2823
    %3460 = vmatpush.bf16.msra.mxu0 %v2815
    %3461 = vmatpush.bf16.msra.mxu0 %v2807
    %3462 = vmatpush.bf16.msra.mxu0 %v2799
    %3463 = vmatpush.bf16.msra.mxu0 %v2791
    %3464 = vmatmul.bf16.gmra.mxu0 %v1550
    %v3465 = vpop.f32.mrf.mxu0
    %v3466 = vadd.f32 %v3453, %v3465
    %v3467 = vpop.f32.mrf.mxu0
    %3468 = vdwg.mxu0
    %3469 = vmatpush.bf16.msra.mxu0 %v2656
    %3470 = vmatpush.bf16.msra.mxu0 %v2648
    %3471 = vmatpush.bf16.msra.mxu0 %v2640
    %3472 = vmatpush.bf16.msra.mxu0 %v2632
    %3473 = vmatpush.bf16.msra.mxu0 %v2624
    %3474 = vmatpush.bf16.msra.mxu0 %v2616
    %3475 = vmatpush.bf16.msra.mxu0 %v2608
    %3476 = vmatpush.bf16.msra.mxu0 %v2600
    %3477 = vmatmul.bf16.gmra.mxu0 %v1547
    %v3478 = vpop.f32.mrf.mxu0
    %v3479 = vadd.f32 %v1816, %v3478
    %v3480 = vpop.f32.mrf.mxu0
    %3481 = vdwg.mxu0
    %3482 = vmatpush.bf16.msra.mxu0 %v2720
    %3483 = vmatpush.bf16.msra.mxu0 %v2712
    %3484 = vmatpush.bf16.msra.mxu0 %v2704
    %3485 = vmatpush.bf16.msra.mxu0 %v2696
    %3486 = vmatpush.bf16.msra.mxu0 %v2688
    %3487 = vmatpush.bf16.msra.mxu0 %v2680
    %3488 = vmatpush.bf16.msra.mxu0 %v2672
    %3489 = vmatpush.bf16.msra.mxu0 %v2664
    %3490 = vmatmul.bf16.gmra.mxu0 %v1548
    %v3491 = vpop.f32.mrf.mxu0
    %v3492 = vadd.f32 %v3479, %v3491
    %v3493 = vpop.f32.mrf.mxu0
    %3494 = vdwg.mxu0
    %3495 = vmatpush.bf16.msra.mxu0 %v2784
    %3496 = vmatpush.bf16.msra.mxu0 %v2776
    %3497 = vmatpush.bf16.msra.mxu0 %v2768
    %3498 = vmatpush.bf16.msra.mxu0 %v2760
    %3499 = vmatpush.bf16.msra.mxu0 %v2752
    %3500 = vmatpush.bf16.msra.mxu0 %v2744
    %3501 = vmatpush.bf16.msra.mxu0 %v2736
    %3502 = vmatpush.bf16.msra.mxu0 %v2728
    %3503 = vmatmul.bf16.gmra.mxu0 %v1549
    %v3504 = vpop.f32.mrf.mxu0
    %v3505 = vadd.f32 %v3492, %v3504
    %v3506 = vpop.f32.mrf.mxu0
    %3507 = vdwg.mxu0
    %3508 = vmatpush.bf16.msra.mxu0 %v2848
    %3509 = vmatpush.bf16.msra.mxu0 %v2840
    %3510 = vmatpush.bf16.msra.mxu0 %v2832
    %3511 = vmatpush.bf16.msra.mxu0 %v2824
    %3512 = vmatpush.bf16.msra.mxu0 %v2816
    %3513 = vmatpush.bf16.msra.mxu0 %v2808
    %3514 = vmatpush.bf16.msra.mxu0 %v2800
    %3515 = vmatpush.bf16.msra.mxu0 %v2792
    %3516 = vmatmul.bf16.gmra.mxu0 %v1550
    %v3517 = vpop.f32.mrf.mxu0
    %v3518 = vadd.f32 %v3505, %v3517
    %v3519 = vpop.f32.mrf.mxu0
    %3520 = vdwg.mxu0
    %v3521 = vtanh.pop %v3154
    %v3522 = vtanh.pop %v3206
    %v3523 = vtanh.pop %v3258
    %v3524 = vtanh.pop %v3310
    %v3525 = vtanh.pop %v3362
    %v3526 = vtanh.pop %v3414
    %v3527 = vtanh.pop %v3466
    %v3528 = vtanh.pop %v3518
    %3529 = vst [vmem:[#allocation19] sm:$0xff] %v3521
    %3530 = vst [vmem:[#allocation19 + $0x8] sm:$0xff] %v3522
    %3531 = vst [vmem:[#allocation19 + $0x10] sm:$0xff] %v3523
    %3532 = vst [vmem:[#allocation19 + $0x18] sm:$0xff] %v3524
    %3533 = vst [vmem:[#allocation19 + $0x20] sm:$0xff] %v3525
    %3534 = vst [vmem:[#allocation19 + $0x28] sm:$0xff] %v3526
    %3535 = vst [vmem:[#allocation19 + $0x30] sm:$0xff] %v3527
    %3536 = vst [vmem:[#allocation19 + $0x38] sm:$0xff] %v3528
    %v3537 = vpack.c.bf16 %v1545, %v1545
    %v3538 = vpack.c.bf16 %v1546, %v1546
    %v3539 = vld [vmem:[#allocation16] sm:$0xf]
    %v3540 = vld [vmem:[#allocation16 + $0x4] sm:$0xf]
    %v3541 = vld [vmem:[#allocation16 + $0x8] sm:$0xf]
    %v3542 = vld [vmem:[#allocation16 + $0xc] sm:$0xf]
    %v3543 = vld [vmem:[#allocation16 + $0x10] sm:$0xf]
    %v3544 = vld [vmem:[#allocation16 + $0x14] sm:$0xf]
    %v3545 = vld [vmem:[#allocation16 + $0x18] sm:$0xf]
    %v3546 = vld [vmem:[#allocation16 + $0x1c] sm:$0xf]
    %v3547 = vld [vmem:[#allocation16 + $0x20] sm:$0xf]
    %v3548 = vld [vmem:[#allocation16 + $0x24] sm:$0xf]
    %v3549 = vld [vmem:[#allocation16 + $0x28] sm:$0xf]
    %v3550 = vld [vmem:[#allocation16 + $0x2c] sm:$0xf]
    %v3551 = vld [vmem:[#allocation16 + $0x30] sm:$0xf]
    %v3552 = vld [vmem:[#allocation16 + $0x34] sm:$0xf]
    %v3553 = vld [vmem:[#allocation16 + $0x38] sm:$0xf]
    %v3554 = vld [vmem:[#allocation16 + $0x3c] sm:$0xf]
    %v3555 = vld [vmem:[#allocation16 + $0x40] sm:$0xf]
    %v3556 = vld [vmem:[#allocation16 + $0x44] sm:$0xf]
    %v3557 = vld [vmem:[#allocation16 + $0x48] sm:$0xf]
    %v3558 = vld [vmem:[#allocation16 + $0x4c] sm:$0xf]
    %v3559 = vld [vmem:[#allocation16 + $0x50] sm:$0xf]
    %v3560 = vld [vmem:[#allocation16 + $0x54] sm:$0xf]
    %v3561 = vld [vmem:[#allocation16 + $0x58] sm:$0xf]
    %v3562 = vld [vmem:[#allocation16 + $0x5c] sm:$0xf]
    %v3563 = vld [vmem:[#allocation16 + $0x60] sm:$0xf]
    %v3564 = vld [vmem:[#allocation16 + $0x64] sm:$0xf]
    %v3565 = vld [vmem:[#allocation16 + $0x68] sm:$0xf]
    %v3566 = vld [vmem:[#allocation16 + $0x6c] sm:$0xf]
    %v3567 = vld [vmem:[#allocation16 + $0x70] sm:$0xf]
    %v3568 = vld [vmem:[#allocation16 + $0x74] sm:$0xf]
    %v3569 = vld [vmem:[#allocation16 + $0x78] sm:$0xf]
    %v3570 = vld [vmem:[#allocation16 + $0x7c] sm:$0xf]
    %v3571 = vld [vmem:[%s10] sm:$0x1]
    %v3573 = vperm.slane %v3571, 0
    %v3607 = vunpack.c.l.b16 %v3539
    %v3608 = vunpack.c.l.b16 %v3540
    %v3609 = vunpack.c.l.b16 %v3541
    %v3610 = vunpack.c.l.b16 %v3542
    %v3611 = vunpack.c.l.b16 %v3543
    %v3612 = vunpack.c.l.b16 %v3544
    %v3613 = vunpack.c.l.b16 %v3545
    %v3614 = vunpack.c.l.b16 %v3546
    %v3615 = vunpack.c.l.b16 %v3547
    %v3616 = vunpack.c.l.b16 %v3548
    %v3617 = vunpack.c.l.b16 %v3549
    %v3618 = vunpack.c.l.b16 %v3550
    %v3619 = vunpack.c.l.b16 %v3551
    %v3620 = vunpack.c.l.b16 %v3552
    %v3621 = vunpack.c.l.b16 %v3553
    %v3622 = vunpack.c.l.b16 %v3554
    %v3623 = vunpack.c.l.b16 %v3555
    %v3624 = vunpack.c.l.b16 %v3556
    %v3625 = vunpack.c.l.b16 %v3557
    %v3626 = vunpack.c.l.b16 %v3558
    %v3627 = vunpack.c.l.b16 %v3559
    %v3628 = vunpack.c.l.b16 %v3560
    %v3629 = vunpack.c.l.b16 %v3561
    %v3630 = vunpack.c.l.b16 %v3562
    %v3631 = vunpack.c.l.b16 %v3563
    %v3632 = vunpack.c.l.b16 %v3564
    %v3633 = vunpack.c.l.b16 %v3565
    %v3634 = vunpack.c.l.b16 %v3566
    %v3635 = vunpack.c.l.b16 %v3567
    %v3636 = vunpack.c.l.b16 %v3568
    %v3637 = vunpack.c.l.b16 %v3569
    %v3638 = vunpack.c.l.b16 %v3570
    %v3639 = vpack.c.b16 %v3608, %v3607
    %v3640 = vpack.c.b16 %v3610, %v3609
    %v3641 = vpack.c.b16 %v3612, %v3611
    %v3642 = vpack.c.b16 %v3614, %v3613
    %v3643 = vpack.c.b16 %v3616, %v3615
    %v3644 = vpack.c.b16 %v3618, %v3617
    %v3645 = vpack.c.b16 %v3620, %v3619
    %v3646 = vpack.c.b16 %v3622, %v3621
    %v3647 = vpack.c.b16 %v3624, %v3623
    %v3648 = vpack.c.b16 %v3626, %v3625
    %v3649 = vpack.c.b16 %v3628, %v3627
    %v3650 = vpack.c.b16 %v3630, %v3629
    %v3651 = vpack.c.b16 %v3632, %v3631
    %v3652 = vpack.c.b16 %v3634, %v3633
    %v3653 = vpack.c.b16 %v3636, %v3635
    %v3654 = vpack.c.b16 %v3638, %v3637
    %3671 = vmatpush.bf16.msra.mxu0 %v3646
    %3672 = vmatpush.bf16.msra.mxu0 %v3645
    %3673 = vmatpush.bf16.msra.mxu0 %v3644
    %3674 = vmatpush.bf16.msra.mxu0 %v3643
    %3675 = vmatpush.bf16.msra.mxu0 %v3642
    %3676 = vmatpush.bf16.msra.mxu0 %v3641
    %3677 = vmatpush.bf16.msra.mxu0 %v3640
    %3678 = vmatpush.bf16.msra.mxu0 %v3639
    %3679 = vmatmul.bf16.gmra.mxu0 %v3537
    %v3680 = vpop.f32.mrf.mxu0
    %v3681 = vadd.f32 %v3573, %v3680
    %v3682 = vpop.f32.mrf.mxu0
    %3683 = vdwg.mxu0
    %3684 = vmatpush.bf16.msra.mxu0 %v3654
    %3685 = vmatpush.bf16.msra.mxu0 %v3653
    %3686 = vmatpush.bf16.msra.mxu0 %v3652
    %3687 = vmatpush.bf16.msra.mxu0 %v3651
    %3688 = vmatpush.bf16.msra.mxu0 %v3650
    %3689 = vmatpush.bf16.msra.mxu0 %v3649
    %3690 = vmatpush.bf16.msra.mxu0 %v3648
    %3691 = vmatpush.bf16.msra.mxu0 %v3647
    %3692 = vmatmul.bf16.gmra.mxu0 %v3538
    %v3693 = vpop.f32.mrf.mxu0
    %v3694 = vadd.f32 %v3681, %v3693
    %v3695 = vpop.f32.mrf.mxu0
    %3696 = vdwg.mxu0
    %v3697 = vmax.f32 %v3694, 0.0
    %v3698 = vpack.c.bf16 %v3697, %v3697
    %v3699 = vld [vmem:[#allocation17] sm:$0xf]
    %v3700 = vld [vmem:[#allocation17 + $0x4] sm:$0xf]
    %v3701 = vld [vmem:[#allocation17 + $0x8] sm:$0xf]
    %v3702 = vld [vmem:[#allocation17 + $0xc] sm:$0xf]
    %v3703 = vld [vmem:[#allocation17 + $0x10] sm:$0xf]
    %v3704 = vld [vmem:[#allocation17 + $0x14] sm:$0xf]
    %v3705 = vld [vmem:[#allocation17 + $0x18] sm:$0xf]
    %v3706 = vld [vmem:[#allocation17 + $0x1c] sm:$0xf]
    %v3707 = vld [vmem:[#allocation17 + $0x20] sm:$0xf]
    %v3708 = vld [vmem:[#allocation17 + $0x24] sm:$0xf]
    %v3709 = vld [vmem:[#allocation17 + $0x28] sm:$0xf]
    %v3710 = vld [vmem:[#allocation17 + $0x2c] sm:$0xf]
    %v3711 = vld [vmem:[#allocation17 + $0x30] sm:$0xf]
    %v3712 = vld [vmem:[#allocation17 + $0x34] sm:$0xf]
    %v3713 = vld [vmem:[#allocation17 + $0x38] sm:$0xf]
    %v3714 = vld [vmem:[#allocation17 + $0x3c] sm:$0xf]
    %v3715 = vld [vmem:[%s12] sm:$0x1]
    %v3717 = vperm.slane %v3715, 0
    %v3735 = vunpack.c.l.b16 %v3699
    %v3736 = vunpack.c.l.b16 %v3700
    %v3737 = vunpack.c.l.b16 %v3701
    %v3738 = vunpack.c.l.b16 %v3702
    %v3739 = vunpack.c.l.b16 %v3703
    %v3740 = vunpack.c.l.b16 %v3704
    %v3741 = vunpack.c.l.b16 %v3705
    %v3742 = vunpack.c.l.b16 %v3706
    %v3743 = vunpack.c.l.b16 %v3707
    %v3744 = vunpack.c.l.b16 %v3708
    %v3745 = vunpack.c.l.b16 %v3709
    %v3746 = vunpack.c.l.b16 %v3710
    %v3747 = vunpack.c.l.b16 %v3711
    %v3748 = vunpack.c.l.b16 %v3712
    %v3749 = vunpack.c.l.b16 %v3713
    %v3750 = vunpack.c.l.b16 %v3714
    %v3751 = vpack.c.b16 %v3736, %v3735
    %v3752 = vpack.c.b16 %v3738, %v3737
    %v3753 = vpack.c.b16 %v3740, %v3739
    %v3754 = vpack.c.b16 %v3742, %v3741
    %v3755 = vpack.c.b16 %v3744, %v3743
    %v3756 = vpack.c.b16 %v3746, %v3745
    %v3757 = vpack.c.b16 %v3748, %v3747
    %v3758 = vpack.c.b16 %v3750, %v3749
    %3767 = vmatpush.bf16.msra.mxu0 %v3758
    %3768 = vmatpush.bf16.msra.mxu0 %v3757
    %3769 = vmatpush.bf16.msra.mxu0 %v3756
    %3770 = vmatpush.bf16.msra.mxu0 %v3755
    %3771 = vmatpush.bf16.msra.mxu0 %v3754
    %3772 = vmatpush.bf16.msra.mxu0 %v3753
    %3773 = vmatpush.bf16.msra.mxu0 %v3752
    %3774 = vmatpush.bf16.msra.mxu0 %v3751
    %3775 = vmatmul.bf16.gmra.mxu0 %v3698
    %v3776 = vpop.f32.mrf.mxu0
    %v3777 = vadd.f32 %v3717, %v3776
    %v3778 = vpop.f32.mrf.mxu0
    %3779 = vdwg.mxu0
    %3780 = vst [vmem:[#allocation20] sm:$0xff] %v3777
    // Predicated region
    $region94: #{tpu_custom_call.1} parent=1 // pred_check
      _
    $region95: #{tpu_custom_call.1} parent=1 // pred_check_branch
      %3782 = sbr.rel (0) target = $region97
    $region96: #{tpu_custom_call.1} parent=1 // pred_region
      %3784 = vsyncadd [#allocation4], 0
      %s3786 = sshll.u32 [#allocation19], 4
      %s3787 = int_to_ptr.vmem [resolvable:$true] %s3786
      %s3788 = sshll.u32 %s13, 4
      %s3789 = int_to_ptr.hbm [resolvable:$true] %s3788
      %3791 = dma.vmem_to_hbm [thread:$0]  %s3787, 1024, %s3789, [#allocation4]
    $region97: #{tpu_custom_call.1} parent=1 // pred_fallthru
      _
    // Predicated region
    $region98: #{tpu_custom_call.1} parent=1 // pred_check
      _
    $region99: #{tpu_custom_call.1} parent=1 // pred_check_branch
      %3793 = sbr.rel (0) target = $region101
    $region100: #{tpu_custom_call.1} parent=1 // pred_region
      %3795 = vsyncadd [#allocation21], 0
      %s3797 = sshll.u32 [#allocation20], 4
      %s3798 = int_to_ptr.vmem [resolvable:$true] %s3797
      %s3799 = sshll.u32 %s14, 4
      %s3800 = int_to_ptr.hbm [resolvable:$true] %s3799
      %3802 = dma.vmem_to_hbm [thread:$0]  %s3798, 128, %s3800, [#allocation21]
    $region101: #{tpu_custom_call.1} parent=1 // pred_fallthru
      _
    // Predicated region
    $region102: #{tpu_custom_call.1} parent=1 // pred_check
      _
    $region103: #{tpu_custom_call.1} parent=1 // pred_check_branch
      %3804 = sbr.rel (0) target = $region105
    $region104: #{tpu_custom_call.1} parent=1 // pred_region
      %3806 = dma.done [#allocation4], 1024
    $region105: #{tpu_custom_call.1} parent=1 // pred_fallthru
      _
    // Predicated region
    $region106: #{tpu_custom_call.1} parent=1 // pred_check
      _
    $region107: #{tpu_custom_call.1} parent=1 // pred_check_branch
      %3808 = sbr.rel (0) target = $region109
    $region108: #{tpu_custom_call.1} parent=1 // pred_region
      %3810 = dma.done [#allocation21], 128
    $region109: #{tpu_custom_call.1} parent=1 // pred_fallthru
      _
    %3811 = vsyncpa [#allocation3], 1
    %3812 = vsyncpa [#allocation6], 1
    %3813 = vsyncpa [#allocation9], 1
    %3814 = vsyncpa [#allocation12], 1
    %3815 = vsyncpa [#allocation15], 1
    %3816 = vsyncpa [#allocation18], 1
    %3817 = vsyncpa [#allocation4], 1
    %3818 = vsyncpa [#allocation21], 1

// kernel: tpu_custom_call.1
$region0: #{tpu_custom_call.1}
  #allocation0 [shape = 'u32[]', space=smem, size = 0x4, offset = 0x4, fixed_abs, tag = 'smem constant byte address 0x4 - core index']
  #allocation1 [shape = 'u32[72,128]{1,0:T(1,128)}', space=vmem, size = 0x9000, scoped, tag = 'internal scratch']
  %s0 = inlined_call_operand.hbm [shape: f32[8,16], index: 0, kind: input, shape index: {}]
  %s1 = inlined_call_operand.hbm [shape: bf16[16,512], index: 1, kind: input, shape index: {}]
  %s2 = inlined_call_operand.hbm [shape: f32[1,512], index: 2, kind: input, shape index: {}]
  %s3 = inlined_call_operand.hbm [shape: bf16[512,256], index: 3, kind: input, shape index: {}]
  %s4 = inlined_call_operand.vmem [shape: f32[1,256], index: 4, kind: input, shape index: {}]
  %s5 = inlined_call_operand.hbm [shape: bf16[256,768], index: 5, kind: input, shape index: {}]
  %s6 = inlined_call_operand.hbm [shape: f32[1,768], index: 6, kind: input, shape index: {}]
  %s7 = inlined_call_operand.hbm [shape: bf16[512,1024], index: 7, kind: input, shape index: {}]
  %s8 = inlined_call_operand.hbm [shape: f32[1,1024], index: 8, kind: input, shape index: {}]
  %s9 = inlined_call_operand.hbm [shape: bf16[256,128], index: 9, kind: input, shape index: {}]
  %s10 = inlined_call_operand.vmem [shape: f32[1,128], index: 10, kind: input, shape index: {}]
  %s11 = inlined_call_operand.hbm [shape: bf16[128,128], index: 11, kind: input, shape index: {}]
  %s12 = inlined_call_operand.vmem [shape: f32[1,128], index: 12, kind: input, shape index: {}]
  %s13 = inlined_call_operand.hbm [shape: f32[8,1024], index: 13, kind: output, shape index: {0}]
  %s14 = inlined_call_operand.hbm [shape: f32[8,128], index: 14, kind: output, shape index: {1}]
  %15 = xla_tuple %s13, %s14
  %s16 = sld [smem:[#allocation0]]
  $region110: #{tpu_custom_call.1} parent=0
    _
  %s18 = ssub.s32 1, %s16
  %s19 = scalar_select 0, %s18, %s16
  $region1: #{tpu_custom_call.1} parent=0
    #allocation2 [shape = 'u8[4096]{0}', space=vmem, size = 0x1000, scoped, tag = 'input window, operand 0, single buffered']
    #allocation3 [shape = 's32[1]{0}', space=sflag, size = 0x4, scoped, tag = 'scoped memory for tpu_custom_call.1']
    #allocation4 [shape = 's32[1]{0}', space=sflag, size = 0x4, scoped, tag = 'scoped memory for tpu_custom_call.1']
    #allocation5 [shape = 'u8[16384]{0}', space=vmem, size = 0x4000, scoped, tag = 'input window, operand 1, single buffered']
    #allocation6 [shape = 's32[1]{0}', space=sflag, size = 0x4, scoped, tag = 'scoped memory for tpu_custom_call.1']
    #allocation7 [shape = 'u8[2048]{0}', space=vmem, size = 0x800, scoped, tag = 'input window, operand 2, single buffered']
    #allocation8 [shape = 'u8[262144]{0}', space=vmem, size = 0x40000, scoped, tag = 'input window, operand 3, single buffered']
    #allocation9 [shape = 's32[1]{0}', space=sflag, size = 0x4, scoped, tag = 'scoped memory for tpu_custom_call.1']
    #allocation10 [shape = 'u8[393216]{0}', space=vmem, size = 0x60000, scoped, tag = 'input window, operand 5, single buffered']
    #allocation11 [shape = 'u8[3072]{0}', space=vmem, size = 0xc00, scoped, tag = 'input window, operand 6, single buffered']
    #allocation12 [shape = 's32[1]{0}', space=sflag, size = 0x4, scoped, tag = 'scoped memory for tpu_custom_call.1']
    #allocation13 [shape = 'u8[1048576]{0}', space=vmem, size = 0x100000, scoped, tag = 'input window, operand 7, single buffered']
    #allocation14 [shape = 'u8[4096]{0}', space=vmem, size = 0x1000, scoped, tag = 'input window, operand 8, single buffered']
    #allocation15 [shape = 's32[1]{0}', space=sflag, size = 0x4, scoped, tag = 'scoped memory for tpu_custom_call.1']
    #allocation16 [shape = 'u8[65536]{0}', space=vmem, size = 0x10000, scoped, tag = 'input window, operand 9, single buffered']
    #allocation17 [shape = 'u8[32768]{0}', space=vmem, size = 0x8000, scoped, tag = 'input window, operand 11, single buffered']
    #allocation18 [shape = 's32[1]{0}', space=sflag, size = 0x4, scoped, tag = 'scoped memory for tpu_custom_call.1']
    #allocation19 [shape = 'u8[32768]{0}', space=vmem, size = 0x8000, scoped, tag = 'output window, operand 0, single buffered']
    #allocation20 [shape = 'u8[4096]{0}', space=vmem, size = 0x1000, scoped, tag = 'output window, operand 1, single buffered']
    #allocation21 [shape = 's32[1]{0}', space=sflag, size = 0x4, scoped, tag = 'scoped memory for tpu_custom_call.1']
    %20 = vsyncpa [#allocation3], 0
    %21 = vsyncpa [#allocation6], 0
    %22 = vsyncpa [#allocation9], 0
    %23 = vsyncpa [#allocation12], 0
    %24 = vsyncpa [#allocation15], 0
    %25 = vsyncpa [#allocation18], 0
    %26 = vsyncpa [#allocation4], 0
    %27 = vsyncpa [#allocation21], 0
    // Predicated region
    $region2: #{tpu_custom_call.1} parent=1 // pred_check
      _
    $region3: #{tpu_custom_call.1} parent=1 // pred_check_branch
      %29 = sbr.rel (0) target = $region5
    $region4: #{tpu_custom_call.1} parent=1 // pred_region
      %31 = vsyncadd [#allocation3], 0
      %s33 = sshll.u32 %s0, 4
      %s34 = int_to_ptr.hbm [resolvable:$true] %s33
      %s35 = sshll.u32 [#allocation2], 4
      %s36 = int_to_ptr.vmem [resolvable:$true] %s35
      %38 = dma.hbm_to_vmem [thread:$0]  %s34, 128, %s36, [#allocation3]
    $region5: #{tpu_custom_call.1} parent=1 // pred_fallthru
      _
    // Predicated region
    $region6: #{tpu_custom_call.1} parent=1 // pred_check
      _
    $region7: #{tpu_custom_call.1} parent=1 // pred_check_branch
      %40 = sbr.rel (0) target = $region9
    $region8: #{tpu_custom_call.1} parent=1 // pred_region
      %42 = vsyncadd [#allocation6], 0
      %s43 = sshll.u32 %s1, 4
      %s44 = int_to_ptr.hbm [resolvable:$true] %s43
      %s45 = sshll.u32 [#allocation5], 4
      %s46 = int_to_ptr.vmem [resolvable:$true] %s45
      %51 = dma.hbm_to_vmem [thread:$0]  %s44, 512, %s46, [#allocation6], 256, 256, 16
    $region9: #{tpu_custom_call.1} parent=1 // pred_fallthru
      _
    // Predicated region
    $region10: #{tpu_custom_call.1} parent=1 // pred_check
      _
    $region11: #{tpu_custom_call.1} parent=1 // pred_check_branch
      %53 = sbr.rel (0) target = $region13
    $region12: #{tpu_custom_call.1} parent=1 // pred_region
      %55 = vsyncadd [#allocation6], 0
      %s57 = sshll.u32 %s2, 4
      %s58 = int_to_ptr.hbm [resolvable:$true] %s57
      %s59 = sshll.u32 [#allocation7], 4
      %s60 = int_to_ptr.vmem [resolvable:$true] %s59
      %62 = dma.hbm_to_vmem [thread:$0]  %s58, 64, %s60, [#allocation6]
    $region13: #{tpu_custom_call.1} parent=1 // pred_fallthru
      _
    // Predicated region
    $region14: #{tpu_custom_call.1} parent=1 // pred_check
      _
    $region15: #{tpu_custom_call.1} parent=1 // pred_check_branch
      %64 = sbr.rel (0) target = $region17
    $region16: #{tpu_custom_call.1} parent=1 // pred_region
      %66 = vsyncadd [#allocation9], 0
      %s67 = sshll.u32 %s3, 4
      %s68 = int_to_ptr.hbm [resolvable:$true] %s67
      %s69 = sshll.u32 [#allocation8], 4
      %s70 = int_to_ptr.vmem [resolvable:$true] %s69
      %75 = dma.hbm_to_vmem [thread:$0]  %s68, 8192, %s70, [#allocation9], 128, 128, 8
    $region17: #{tpu_custom_call.1} parent=1 // pred_fallthru
      _
    // Predicated region
    $region18: #{tpu_custom_call.1} parent=1 // pred_check
      _
    $region19: #{tpu_custom_call.1} parent=1 // pred_check_branch
      %77 = sbr.rel (0) target = $region21
    $region20: #{tpu_custom_call.1} parent=1 // pred_region
      _
    $region21: #{tpu_custom_call.1} parent=1 // pred_fallthru
      _
    // Predicated region
    $region22: #{tpu_custom_call.1} parent=1 // pred_check
      _
    $region23: #{tpu_custom_call.1} parent=1 // pred_check_branch
      %79 = sbr.rel (0) target = $region25
    $region24: #{tpu_custom_call.1} parent=1 // pred_region
      %81 = vsyncadd [#allocation9], 0
      %s82 = sshll.u32 %s5, 4
      %s83 = int_to_ptr.hbm [resolvable:$true] %s82
      %s84 = sshll.u32 [#allocation10], 4
      %s85 = int_to_ptr.vmem [resolvable:$true] %s84
      %90 = dma.hbm_to_vmem [thread:$0]  %s83, 12288, %s85, [#allocation9], 384, 384, 24
    $region25: #{tpu_custom_call.1} parent=1 // pred_fallthru
      _
    // Predicated region
    $region26: #{tpu_custom_call.1} parent=1 // pred_check
      _
    $region27: #{tpu_custom_call.1} parent=1 // pred_check_branch
      %92 = sbr.rel (0) target = $region29
    $region28: #{tpu_custom_call.1} parent=1 // pred_region
      %94 = vsyncadd [#allocation12], 0
      %s96 = sshll.u32 %s6, 4
      %s97 = int_to_ptr.hbm [resolvable:$true] %s96
      %s98 = sshll.u32 [#allocation11], 4
      %s99 = int_to_ptr.vmem [resolvable:$true] %s98
      %101 = dma.hbm_to_vmem [thread:$0]  %s97, 96, %s99, [#allocation12]
    $region29: #{tpu_custom_call.1} parent=1 // pred_fallthru
      _
    // Predicated region
    $region30: #{tpu_custom_call.1} parent=1 // pred_check
      _
    $region31: #{tpu_custom_call.1} parent=1 // pred_check_branch
      %103 = sbr.rel (0) target = $region33
    $region32: #{tpu_custom_call.1} parent=1 // pred_region
      %105 = vsyncadd [#allocation12], 0
      %s106 = sshll.u32 %s7, 4
      %s107 = int_to_ptr.hbm [resolvable:$true] %s106
      %s108 = sshll.u32 [#allocation13], 4
      %s109 = int_to_ptr.vmem [resolvable:$true] %s108
      %114 = dma.hbm_to_vmem [thread:$0]  %s107, 32768, %s109, [#allocation12], 512, 512, 32
    $region33: #{tpu_custom_call.1} parent=1 // pred_fallthru
      _
    // Predicated region
    $region34: #{tpu_custom_call.1} parent=1 // pred_check
      _
    $region35: #{tpu_custom_call.1} parent=1 // pred_check_branch
      %116 = sbr.rel (0) target = $region37
    $region36: #{tpu_custom_call.1} parent=1 // pred_region
      %118 = vsyncadd [#allocation15], 0
      %s120 = sshll.u32 %s8, 4
      %s121 = int_to_ptr.hbm [resolvable:$true] %s120
      %s122 = sshll.u32 [#allocation14], 4
      %s123 = int_to_ptr.vmem [resolvable:$true] %s122
      %125 = dma.hbm_to_vmem [thread:$0]  %s121, 128, %s123, [#allocation15]
    $region37: #{tpu_custom_call.1} parent=1 // pred_fallthru
      _
    // Predicated region
    $region38: #{tpu_custom_call.1} parent=1 // pred_check
      _
    $region39: #{tpu_custom_call.1} parent=1 // pred_check_branch
      %127 = sbr.rel (0) target = $region41
    $region40: #{tpu_custom_call.1} parent=1 // pred_region
      %129 = vsyncadd [#allocation15], 0
      %s130 = sshll.u32 %s9, 4
      %s131 = int_to_ptr.hbm [resolvable:$true] %s130
      %s132 = sshll.u32 [#allocation16], 4
      %s133 = int_to_ptr.vmem [resolvable:$true] %s132
      %138 = dma.hbm_to_vmem [thread:$0]  %s131, 2048, %s133, [#allocation15], 64, 64, 4
    $region41: #{tpu_custom_call.1} parent=1 // pred_fallthru
      _
    // Predicated region
    $region42: #{tpu_custom_call.1} parent=1 // pred_check
      _
    $region43: #{tpu_custom_call.1} parent=1 // pred_check_branch
      %140 = sbr.rel (0) target = $region45
    $region44: #{tpu_custom_call.1} parent=1 // pred_region
      _
    $region45: #{tpu_custom_call.1} parent=1 // pred_fallthru
      _
    // Predicated region
    $region46: #{tpu_custom_call.1} parent=1 // pred_check
      _
    $region47: #{tpu_custom_call.1} parent=1 // pred_check_branch
      %142 = sbr.rel (0) target = $region49
    $region48: #{tpu_custom_call.1} parent=1 // pred_region
      %144 = vsyncadd [#allocation18], 0
      %s145 = sshll.u32 %s11, 4
      %s146 = int_to_ptr.hbm [resolvable:$true] %s145
      %s147 = sshll.u32 [#allocation17], 4
      %s148 = int_to_ptr.vmem [resolvable:$true] %s147
      %153 = dma.hbm_to_vmem [thread:$0]  %s146, 1024, %s148, [#allocation18], 64, 64, 4
    $region49: #{tpu_custom_call.1} parent=1 // pred_fallthru
      _
    // Predicated region
    $region50: #{tpu_custom_call.1} parent=1 // pred_check
      _
    $region51: #{tpu_custom_call.1} parent=1 // pred_check_branch
      %155 = sbr.rel (0) target = $region53
    $region52: #{tpu_custom_call.1} parent=1 // pred_region
      _
    $region53: #{tpu_custom_call.1} parent=1 // pred_fallthru
      _
    // Predicated region
    $region54: #{tpu_custom_call.1} parent=1 // pred_check
      _
    $region55: #{tpu_custom_call.1} parent=1 // pred_check_branch
      %157 = sbr.rel (0) target = $region57
    $region56: #{tpu_custom_call.1} parent=1 // pred_region
      %159 = dma.done [#allocation3], 128
    $region57: #{tpu_custom_call.1} parent=1 // pred_fallthru
      _
    // Predicated region
    $region58: #{tpu_custom_call.1} parent=1 // pred_check
      _
    $region59: #{tpu_custom_call.1} parent=1 // pred_check_branch
      %161 = sbr.rel (0) target = $region61
    $region60: #{tpu_custom_call.1} parent=1 // pred_region
      %163 = dma.done [#allocation6], 512
    $region61: #{tpu_custom_call.1} parent=1 // pred_fallthru
      _
    // Predicated region
    $region62: #{tpu_custom_call.1} parent=1 // pred_check
      _
    $region63: #{tpu_custom_call.1} parent=1 // pred_check_branch
      %165 = sbr.rel (0) target = $region65
    $region64: #{tpu_custom_call.1} parent=1 // pred_region
      %167 = dma.done [#allocation6], 64
    $region65: #{tpu_custom_call.1} parent=1 // pred_fallthru
      _
    // Predicated region
    $region66: #{tpu_custom_call.1} parent=1 // pred_check
      _
    $region67: #{tpu_custom_call.1} parent=1 // pred_check_branch
      %169 = sbr.rel (0) target = $region69
    $region68: #{tpu_custom_call.1} parent=1 // pred_region
      %171 = dma.done [#allocation9], 8192
    $region69: #{tpu_custom_call.1} parent=1 // pred_fallthru
      _
    // Predicated region
    $region70: #{tpu_custom_call.1} parent=1 // pred_check
      _
    $region71: #{tpu_custom_call.1} parent=1 // pred_check_branch
      %173 = sbr.rel (0) target = $region73
    $region72: #{tpu_custom_call.1} parent=1 // pred_region
      %175 = dma.done [#allocation9], 12288
    $region73: #{tpu_custom_call.1} parent=1 // pred_fallthru
      _
    // Predicated region
    $region74: #{tpu_custom_call.1} parent=1 // pred_check
      _
    $region75: #{tpu_custom_call.1} parent=1 // pred_check_branch
      %177 = sbr.rel (0) target = $region77
    $region76: #{tpu_custom_call.1} parent=1 // pred_region
      %179 = dma.done [#allocation12], 96
    $region77: #{tpu_custom_call.1} parent=1 // pred_fallthru
      _
    // Predicated region
    $region78: #{tpu_custom_call.1} parent=1 // pred_check
      _
    $region79: #{tpu_custom_call.1} parent=1 // pred_check_branch
      %181 = sbr.rel (0) target = $region81
    $region80: #{tpu_custom_call.1} parent=1 // pred_region
      %183 = dma.done [#allocation12], 32768
    $region81: #{tpu_custom_call.1} parent=1 // pred_fallthru
      _
    // Predicated region
    $region82: #{tpu_custom_call.1} parent=1 // pred_check
      _
    $region83: #{tpu_custom_call.1} parent=1 // pred_check_branch
      %185 = sbr.rel (0) target = $region85
    $region84: #{tpu_custom_call.1} parent=1 // pred_region
      %187 = dma.done [#allocation15], 128
    $region85: #{tpu_custom_call.1} parent=1 // pred_fallthru
      _
    // Predicated region
    $region86: #{tpu_custom_call.1} parent=1 // pred_check
      _
    $region87: #{tpu_custom_call.1} parent=1 // pred_check_branch
      %189 = sbr.rel (0) target = $region89
    $region88: #{tpu_custom_call.1} parent=1 // pred_region
      %191 = dma.done [#allocation15], 2048
    $region89: #{tpu_custom_call.1} parent=1 // pred_fallthru
      _
    // Predicated region
    $region90: #{tpu_custom_call.1} parent=1 // pred_check
      _
    $region91: #{tpu_custom_call.1} parent=1 // pred_check_branch
      %193 = sbr.rel (0) target = $region93
    $region92: #{tpu_custom_call.1} parent=1 // pred_region
      %195 = dma.done [#allocation18], 1024
    $region93: #{tpu_custom_call.1} parent=1 // pred_fallthru
      _
    %v197 = vld [vmem:[#allocation2] sm:$0xff]
    %v198 = vpack.c.bf16 %v197, %v197
    %v199 = vld [vmem:[#allocation5] sm:$0xff]
    %v200 = vld [vmem:[#allocation5 + $0x8] sm:$0xff]
    %v201 = vld [vmem:[#allocation5 + $0x10] sm:$0xff]
    %v202 = vld [vmem:[#allocation5 + $0x18] sm:$0xff]
    %v203 = vld [vmem:[#allocation7] sm:$0xf]
    %v205 = vperm.slane %v203, 0
    %v206 = vperm.slane %v203, 1
    %v207 = vperm.slane %v203, 2
    %v208 = vperm.slane %v203, 3
    %v217 = vunpack.c.l.b16 %v199
    %v218 = vunpack.c.h.b16 %v199
    %v219 = vunpack.c.l.b16 %v200
    %v220 = vunpack.c.h.b16 %v200
    %v221 = vunpack.c.l.b16 %v201
    %v222 = vunpack.c.h.b16 %v201
    %v223 = vunpack.c.l.b16 %v202
    %v224 = vunpack.c.h.b16 %v202
    %v225 = vpack.c.b16 %v221, %v217
    %v226 = vpack.c.b16 %v222, %v218
    %v227 = vpack.c.b16 %v223, %v219
    %v228 = vpack.c.b16 %v224, %v220
    %vm233 = vcmask 130048
    %v235 = vsel %vm233, %v198, 0
    %237 = vmatpush.bf16.msra.mxu0 0
    %238 = vmatpush.bf16.msra.mxu0 0
    %239 = vmatpush.bf16.msra.mxu0 0
    %240 = vmatpush.bf16.msra.mxu0 0
    %241 = vmatpush.bf16.msra.mxu0 0
    %242 = vmatpush.bf16.msra.mxu0 0
    %243 = vmatpush.bf16.msra.mxu0 0
    %244 = vmatpush.bf16.msra.mxu0 %v225
    %245 = vmatmul.bf16.gmra.mxu0 %v235
    %v246 = vpop.f32.mrf.mxu0
    %v247 = vadd.f32 %v205, %v246
    %v248 = vpop.f32.mrf.mxu0
    %249 = vdwg.mxu0
    %250 = vmatpush.bf16.msra.mxu0 0
    %251 = vmatpush.bf16.msra.mxu0 0
    %252 = vmatpush.bf16.msra.mxu0 0
    %253 = vmatpush.bf16.msra.mxu0 0
    %254 = vmatpush.bf16.msra.mxu0 0
    %255 = vmatpush.bf16.msra.mxu0 0
    %256 = vmatpush.bf16.msra.mxu0 0
    %257 = vmatpush.bf16.msra.mxu0 %v226
    %258 = vmatmul.bf16.gmra.mxu0 %v235
    %v259 = vpop.f32.mrf.mxu0
    %v260 = vadd.f32 %v206, %v259
    %v261 = vpop.f32.mrf.mxu0
    %262 = vdwg.mxu0
    %263 = vmatpush.bf16.msra.mxu0 0
    %264 = vmatpush.bf16.msra.mxu0 0
    %265 = vmatpush.bf16.msra.mxu0 0
    %266 = vmatpush.bf16.msra.mxu0 0
    %267 = vmatpush.bf16.msra.mxu0 0
    %268 = vmatpush.bf16.msra.mxu0 0
    %269 = vmatpush.bf16.msra.mxu0 0
    %270 = vmatpush.bf16.msra.mxu0 %v227
    %271 = vmatmul.bf16.gmra.mxu0 %v235
    %v272 = vpop.f32.mrf.mxu0
    %v273 = vadd.f32 %v207, %v272
    %v274 = vpop.f32.mrf.mxu0
    %275 = vdwg.mxu0
    %276 = vmatpush.bf16.msra.mxu0 0
    %277 = vmatpush.bf16.msra.mxu0 0
    %278 = vmatpush.bf16.msra.mxu0 0
    %279 = vmatpush.bf16.msra.mxu0 0
    %280 = vmatpush.bf16.msra.mxu0 0
    %281 = vmatpush.bf16.msra.mxu0 0
    %282 = vmatpush.bf16.msra.mxu0 0
    %283 = vmatpush.bf16.msra.mxu0 %v228
    %284 = vmatmul.bf16.gmra.mxu0 %v235
    %v285 = vpop.f32.mrf.mxu0
    %v286 = vadd.f32 %v208, %v285
    %v287 = vpop.f32.mrf.mxu0
    %288 = vdwg.mxu0
    %v289 = vmax.f32 %v247, 0.0
    %v290 = vmax.f32 %v260, 0.0
    %v291 = vmax.f32 %v273, 0.0
    %v292 = vmax.f32 %v286, 0.0
    %v293 = vpack.c.bf16 %v289, %v289
    %v294 = vpack.c.bf16 %v290, %v290
    %v295 = vpack.c.bf16 %v291, %v291
    %v296 = vpack.c.bf16 %v292, %v292
    %v297 = vld [vmem:[#allocation8] sm:$0xff]
    %v298 = vld [vmem:[#allocation8 + $0x8] sm:$0xff]
    %v299 = vld [vmem:[#allocation8 + $0x10] sm:$0xff]
    %v300 = vld [vmem:[#allocation8 + $0x18] sm:$0xff]
    %v301 = vld [vmem:[#allocation8 + $0x20] sm:$0xff]
    %v302 = vld [vmem:[#allocation8 + $0x28] sm:$0xff]
    %v303 = vld [vmem:[#allocation8 + $0x30] sm:$0xff]
    %v304 = vld [vmem:[#allocation8 + $0x38] sm:$0xff]
    %v305 = vld [vmem:[#allocation8 + $0x40] sm:$0xff]
    %v306 = vld [vmem:[#allocation8 + $0x48] sm:$0xff]
    %v307 = vld [vmem:[#allocation8 + $0x50] sm:$0xff]
    %v308 = vld [vmem:[#allocation8 + $0x58] sm:$0xff]
    %v309 = vld [vmem:[#allocation8 + $0x60] sm:$0xff]
    %v310 = vld [vmem:[#allocation8 + $0x68] sm:$0xff]
    %v311 = vld [vmem:[#allocation8 + $0x70] sm:$0xff]
    %v312 = vld [vmem:[#allocation8 + $0x78] sm:$0xff]
    %v313 = vld [vmem:[#allocation8 + $0x80] sm:$0xff]
    %v314 = vld [vmem:[#allocation8 + $0x88] sm:$0xff]
    %v315 = vld [vmem:[#allocation8 + $0x90] sm:$0xff]
    %v316 = vld [vmem:[#allocation8 + $0x98] sm:$0xff]
    %v317 = vld [vmem:[#allocation8 + $0xa0] sm:$0xff]
    %v318 = vld [vmem:[#allocation8 + $0xa8] sm:$0xff]
    %v319 = vld [vmem:[#allocation8 + $0xb0] sm:$0xff]
    %v320 = vld [vmem:[#allocation8 + $0xb8] sm:$0xff]
    %v321 = vld [vmem:[#allocation8 + $0xc0] sm:$0xff]
    %v322 = vld [vmem:[#allocation8 + $0xc8] sm:$0xff]
    %v323 = vld [vmem:[#allocation8 + $0xd0] sm:$0xff]
    %v324 = vld [vmem:[#allocation8 + $0xd8] sm:$0xff]
    %v325 = vld [vmem:[#allocation8 + $0xe0] sm:$0xff]
    %v326 = vld [vmem:[#allocation8 + $0xe8] sm:$0xff]
    %v327 = vld [vmem:[#allocation8 + $0xf0] sm:$0xff]
    %v328 = vld [vmem:[#allocation8 + $0xf8] sm:$0xff]
    %v329 = vld [vmem:[#allocation8 + $0x100] sm:$0xff]
    %v330 = vld [vmem:[#allocation8 + $0x108] sm:$0xff]
    %v331 = vld [vmem:[#allocation8 + $0x110] sm:$0xff]
    %v332 = vld [vmem:[#allocation8 + $0x118] sm:$0xff]
    %v333 = vld [vmem:[#allocation8 + $0x120] sm:$0xff]
    %v334 = vld [vmem:[#allocation8 + $0x128] sm:$0xff]
    %v335 = vld [vmem:[#allocation8 + $0x130] sm:$0xff]
    %v336 = vld [vmem:[#allocation8 + $0x138] sm:$0xff]
    %v337 = vld [vmem:[#allocation8 + $0x140] sm:$0xff]
    %v338 = vld [vmem:[#allocation8 + $0x148] sm:$0xff]
    %v339 = vld [vmem:[#allocation8 + $0x150] sm:$0xff]
    %v340 = vld [vmem:[#allocation8 + $0x158] sm:$0xff]
    %v341 = vld [vmem:[#allocation8 + $0x160] sm:$0xff]
    %v342 = vld [vmem:[#allocation8 + $0x168] sm:$0xff]
    %v343 = vld [vmem:[#allocation8 + $0x170] sm:$0xff]
    %v344 = vld [vmem:[#allocation8 + $0x178] sm:$0xff]
    %v345 = vld [vmem:[#allocation8 + $0x180] sm:$0xff]
    %v346 = vld [vmem:[#allocation8 + $0x188] sm:$0xff]
    %v347 = vld [vmem:[#allocation8 + $0x190] sm:$0xff]
    %v348 = vld [vmem:[#allocation8 + $0x198] sm:$0xff]
    %v349 = vld [vmem:[#allocation8 + $0x1a0] sm:$0xff]
    %v350 = vld [vmem:[#allocation8 + $0x1a8] sm:$0xff]
    %v351 = vld [vmem:[#allocation8 + $0x1b0] sm:$0xff]
    %v352 = vld [vmem:[#allocation8 + $0x1b8] sm:$0xff]
    %v353 = vld [vmem:[#allocation8 + $0x1c0] sm:$0xff]
    %v354 = vld [vmem:[#allocation8 + $0x1c8] sm:$0xff]
    %v355 = vld [vmem:[#allocation8 + $0x1d0] sm:$0xff]
    %v356 = vld [vmem:[#allocation8 + $0x1d8] sm:$0xff]
    %v357 = vld [vmem:[#allocation8 + $0x1e0] sm:$0xff]
    %v358 = vld [vmem:[#allocation8 + $0x1e8] sm:$0xff]
    %v359 = vld [vmem:[#allocation8 + $0x1f0] sm:$0xff]
    %v360 = vld [vmem:[#allocation8 + $0x1f8] sm:$0xff]
    %v361 = vld [vmem:[%s4] sm:$0x3]
    %v363 = vperm.slane %v361, 0
    %v364 = vperm.slane %v361, 1
    %v431 = vunpack.c.l.b16 %v297
    %v432 = vunpack.c.h.b16 %v297
    %v433 = vunpack.c.l.b16 %v298
    %v434 = vunpack.c.h.b16 %v298
    %v435 = vunpack.c.l.b16 %v299
    %v436 = vunpack.c.h.b16 %v299
    %v437 = vunpack.c.l.b16 %v300
    %v438 = vunpack.c.h.b16 %v300
    %v439 = vunpack.c.l.b16 %v301
    %v440 = vunpack.c.h.b16 %v301
    %v441 = vunpack.c.l.b16 %v302
    %v442 = vunpack.c.h.b16 %v302
    %v443 = vunpack.c.l.b16 %v303
    %v444 = vunpack.c.h.b16 %v303
    %v445 = vunpack.c.l.b16 %v304
    %v446 = vunpack.c.h.b16 %v304
    %v447 = vunpack.c.l.b16 %v305
    %v448 = vunpack.c.h.b16 %v305
    %v449 = vunpack.c.l.b16 %v306
    %v450 = vunpack.c.h.b16 %v306
    %v451 = vunpack.c.l.b16 %v307
    %v452 = vunpack.c.h.b16 %v307
    %v453 = vunpack.c.l.b16 %v308
    %v454 = vunpack.c.h.b16 %v308
    %v455 = vunpack.c.l.b16 %v309
    %v456 = vunpack.c.h.b16 %v309
    %v457 = vunpack.c.l.b16 %v310
    %v458 = vunpack.c.h.b16 %v310
    %v459 = vunpack.c.l.b16 %v311
    %v460 = vunpack.c.h.b16 %v311
    %v461 = vunpack.c.l.b16 %v312
    %v462 = vunpack.c.h.b16 %v312
    %v463 = vunpack.c.l.b16 %v313
    %v464 = vunpack.c.h.b16 %v313
    %v465 = vunpack.c.l.b16 %v314
    %v466 = vunpack.c.h.b16 %v314
    %v467 = vunpack.c.l.b16 %v315
    %v468 = vunpack.c.h.b16 %v315
    %v469 = vunpack.c.l.b16 %v316
    %v470 = vunpack.c.h.b16 %v316
    %v471 = vunpack.c.l.b16 %v317
    %v472 = vunpack.c.h.b16 %v317
    %v473 = vunpack.c.l.b16 %v318
    %v474 = vunpack.c.h.b16 %v318
    %v475 = vunpack.c.l.b16 %v319
    %v476 = vunpack.c.h.b16 %v319
    %v477 = vunpack.c.l.b16 %v320
    %v478 = vunpack.c.h.b16 %v320
    %v479 = vunpack.c.l.b16 %v321
    %v480 = vunpack.c.h.b16 %v321
    %v481 = vunpack.c.l.b16 %v322
    %v482 = vunpack.c.h.b16 %v322
    %v483 = vunpack.c.l.b16 %v323
    %v484 = vunpack.c.h.b16 %v323
    %v485 = vunpack.c.l.b16 %v324
    %v486 = vunpack.c.h.b16 %v324
    %v487 = vunpack.c.l.b16 %v325
    %v488 = vunpack.c.h.b16 %v325
    %v489 = vunpack.c.l.b16 %v326
    %v490 = vunpack.c.h.b16 %v326
    %v491 = vunpack.c.l.b16 %v327
    %v492 = vunpack.c.h.b16 %v327
    %v493 = vunpack.c.l.b16 %v328
    %v494 = vunpack.c.h.b16 %v328
    %v495 = vunpack.c.l.b16 %v329
    %v496 = vunpack.c.h.b16 %v329
    %v497 = vunpack.c.l.b16 %v330
    %v498 = vunpack.c.h.b16 %v330
    %v499 = vunpack.c.l.b16 %v331
    %v500 = vunpack.c.h.b16 %v331
    %v501 = vunpack.c.l.b16 %v332
    %v502 = vunpack.c.h.b16 %v332
    %v503 = vunpack.c.l.b16 %v333
    %v504 = vunpack.c.h.b16 %v333
    %v505 = vunpack.c.l.b16 %v334
    %v506 = vunpack.c.h.b16 %v334
    %v507 = vunpack.c.l.b16 %v335
    %v508 = vunpack.c.h.b16 %v335
    %v509 = vunpack.c.l.b16 %v336
    %v510 = vunpack.c.h.b16 %v336
    %v511 = vunpack.c.l.b16 %v337
    %v512 = vunpack.c.h.b16 %v337
    %v513 = vunpack.c.l.b16 %v338
    %v514 = vunpack.c.h.b16 %v338
    %v515 = vunpack.c.l.b16 %v339
    %v516 = vunpack.c.h.b16 %v339
    %v517 = vunpack.c.l.b16 %v340
    %v518 = vunpack.c.h.b16 %v340
    %v519 = vunpack.c.l.b16 %v341
    %v520 = vunpack.c.h.b16 %v341
    %v521 = vunpack.c.l.b16 %v342
    %v522 = vunpack.c.h.b16 %v342
    %v523 = vunpack.c.l.b16 %v343
    %v524 = vunpack.c.h.b16 %v343
    %v525 = vunpack.c.l.b16 %v344
    %v526 = vunpack.c.h.b16 %v344
    %v527 = vunpack.c.l.b16 %v345
    %v528 = vunpack.c.h.b16 %v345
    %v529 = vunpack.c.l.b16 %v346
    %v530 = vunpack.c.h.b16 %v346
    %v531 = vunpack.c.l.b16 %v347
    %v532 = vunpack.c.h.b16 %v347
    %v533 = vunpack.c.l.b16 %v348
    %v534 = vunpack.c.h.b16 %v348
    %v535 = vunpack.c.l.b16 %v349
    %v536 = vunpack.c.h.b16 %v349
    %v537 = vunpack.c.l.b16 %v350
    %v538 = vunpack.c.h.b16 %v350
    %v539 = vunpack.c.l.b16 %v351
    %v540 = vunpack.c.h.b16 %v351
    %v541 = vunpack.c.l.b16 %v352
    %v542 = vunpack.c.h.b16 %v352
    %v543 = vunpack.c.l.b16 %v353
    %v544 = vunpack.c.h.b16 %v353
    %v545 = vunpack.c.l.b16 %v354
    %v546 = vunpack.c.h.b16 %v354
    %v547 = vunpack.c.l.b16 %v355
    %v548 = vunpack.c.h.b16 %v355
    %v549 = vunpack.c.l.b16 %v356
    %v550 = vunpack.c.h.b16 %v356
    %v551 = vunpack.c.l.b16 %v357
    %v552 = vunpack.c.h.b16 %v357
    %v553 = vunpack.c.l.b16 %v358
    %v554 = vunpack.c.h.b16 %v358
    %v555 = vunpack.c.l.b16 %v359
    %v556 = vunpack.c.h.b16 %v359
    %v557 = vunpack.c.l.b16 %v360
    %v558 = vunpack.c.h.b16 %v360
    %v559 = vpack.c.b16 %v433, %v431
    %v560 = vpack.c.b16 %v434, %v432
    %v561 = vpack.c.b16 %v437, %v435
    %v562 = vpack.c.b16 %v438, %v436
    %v563 = vpack.c.b16 %v441, %v439
    %v564 = vpack.c.b16 %v442, %v440
    %v565 = vpack.c.b16 %v445, %v443
    %v566 = vpack.c.b16 %v446, %v444
    %v567 = vpack.c.b16 %v449, %v447
    %v568 = vpack.c.b16 %v450, %v448
    %v569 = vpack.c.b16 %v453, %v451
    %v570 = vpack.c.b16 %v454, %v452
    %v571 = vpack.c.b16 %v457, %v455
    %v572 = vpack.c.b16 %v458, %v456
    %v573 = vpack.c.b16 %v461, %v459
    %v574 = vpack.c.b16 %v462, %v460
    %v575 = vpack.c.b16 %v465, %v463
    %v576 = vpack.c.b16 %v466, %v464
    %v577 = vpack.c.b16 %v469, %v467
    %v578 = vpack.c.b16 %v470, %v468
    %v579 = vpack.c.b16 %v473, %v471
    %v580 = vpack.c.b16 %v474, %v472
    %v581 = vpack.c.b16 %v477, %v475
    %v582 = vpack.c.b16 %v478, %v476
    %v583 = vpack.c.b16 %v481, %v479
    %v584 = vpack.c.b16 %v482, %v480
    %v585 = vpack.c.b16 %v485, %v483
    %v586 = vpack.c.b16 %v486, %v484
    %v587 = vpack.c.b16 %v489, %v487
    %v588 = vpack.c.b16 %v490, %v488
    %v589 = vpack.c.b16 %v493, %v491
    %v590 = vpack.c.b16 %v494, %v492
    %v591 = vpack.c.b16 %v497, %v495
    %v592 = vpack.c.b16 %v498, %v496
    %v593 = vpack.c.b16 %v501, %v499
    %v594 = vpack.c.b16 %v502, %v500
    %v595 = vpack.c.b16 %v505, %v503
    %v596 = vpack.c.b16 %v506, %v504
    %v597 = vpack.c.b16 %v509, %v507
    %v598 = vpack.c.b16 %v510, %v508
    %v599 = vpack.c.b16 %v513, %v511
    %v600 = vpack.c.b16 %v514, %v512
    %v601 = vpack.c.b16 %v517, %v515
    %v602 = vpack.c.b16 %v518, %v516
    %v603 = vpack.c.b16 %v521, %v519
    %v604 = vpack.c.b16 %v522, %v520
    %v605 = vpack.c.b16 %v525, %v523
    %v606 = vpack.c.b16 %v526, %v524
    %v607 = vpack.c.b16 %v529, %v527
    %v608 = vpack.c.b16 %v530, %v528
    %v609 = vpack.c.b16 %v533, %v531
    %v610 = vpack.c.b16 %v534, %v532
    %v611 = vpack.c.b16 %v537, %v535
    %v612 = vpack.c.b16 %v538, %v536
    %v613 = vpack.c.b16 %v541, %v539
    %v614 = vpack.c.b16 %v542, %v540
    %v615 = vpack.c.b16 %v545, %v543
    %v616 = vpack.c.b16 %v546, %v544
    %v617 = vpack.c.b16 %v549, %v547
    %v618 = vpack.c.b16 %v550, %v548
    %v619 = vpack.c.b16 %v553, %v551
    %v620 = vpack.c.b16 %v554, %v552
    %v621 = vpack.c.b16 %v557, %v555
    %v622 = vpack.c.b16 %v558, %v556
    %687 = vmatpush.bf16.msra.mxu0 %v573
    %688 = vmatpush.bf16.msra.mxu0 %v571
    %689 = vmatpush.bf16.msra.mxu0 %v569
    %690 = vmatpush.bf16.msra.mxu0 %v567
    %691 = vmatpush.bf16.msra.mxu0 %v565
    %692 = vmatpush.bf16.msra.mxu0 %v563
    %693 = vmatpush.bf16.msra.mxu0 %v561
    %694 = vmatpush.bf16.msra.mxu0 %v559
    %695 = vmatmul.bf16.gmra.mxu0 %v293
    %v696 = vpop.f32.mrf.mxu0
    %v697 = vadd.f32 %v363, %v696
    %v698 = vpop.f32.mrf.mxu0
    %699 = vdwg.mxu0
    %700 = vmatpush.bf16.msra.mxu0 %v589
    %701 = vmatpush.bf16.msra.mxu0 %v587
    %702 = vmatpush.bf16.msra.mxu0 %v585
    %703 = vmatpush.bf16.msra.mxu0 %v583
    %704 = vmatpush.bf16.msra.mxu0 %v581
    %705 = vmatpush.bf16.msra.mxu0 %v579
    %706 = vmatpush.bf16.msra.mxu0 %v577
    %707 = vmatpush.bf16.msra.mxu0 %v575
    %708 = vmatmul.bf16.gmra.mxu0 %v294
    %v709 = vpop.f32.mrf.mxu0
    %v710 = vadd.f32 %v697, %v709
    %v711 = vpop.f32.mrf.mxu0
    %712 = vdwg.mxu0
    %713 = vmatpush.bf16.msra.mxu0 %v605
    %714 = vmatpush.bf16.msra.mxu0 %v603
    %715 = vmatpush.bf16.msra.mxu0 %v601
    %716 = vmatpush.bf16.msra.mxu0 %v599
    %717 = vmatpush.bf16.msra.mxu0 %v597
    %718 = vmatpush.bf16.msra.mxu0 %v595
    %719 = vmatpush.bf16.msra.mxu0 %v593
    %720 = vmatpush.bf16.msra.mxu0 %v591
    %721 = vmatmul.bf16.gmra.mxu0 %v295
    %v722 = vpop.f32.mrf.mxu0
    %v723 = vadd.f32 %v710, %v722
    %v724 = vpop.f32.mrf.mxu0
    %725 = vdwg.mxu0
    %726 = vmatpush.bf16.msra.mxu0 %v621
    %727 = vmatpush.bf16.msra.mxu0 %v619
    %728 = vmatpush.bf16.msra.mxu0 %v617
    %729 = vmatpush.bf16.msra.mxu0 %v615
    %730 = vmatpush.bf16.msra.mxu0 %v613
    %731 = vmatpush.bf16.msra.mxu0 %v611
    %732 = vmatpush.bf16.msra.mxu0 %v609
    %733 = vmatpush.bf16.msra.mxu0 %v607
    %734 = vmatmul.bf16.gmra.mxu0 %v296
    %v735 = vpop.f32.mrf.mxu0
    %v736 = vadd.f32 %v723, %v735
    %v737 = vpop.f32.mrf.mxu0
    %738 = vdwg.mxu0
    %739 = vmatpush.bf16.msra.mxu0 %v574
    %740 = vmatpush.bf16.msra.mxu0 %v572
    %741 = vmatpush.bf16.msra.mxu0 %v570
    %742 = vmatpush.bf16.msra.mxu0 %v568
    %743 = vmatpush.bf16.msra.mxu0 %v566
    %744 = vmatpush.bf16.msra.mxu0 %v564
    %745 = vmatpush.bf16.msra.mxu0 %v562
    %746 = vmatpush.bf16.msra.mxu0 %v560
    %747 = vmatmul.bf16.gmra.mxu0 %v293
    %v748 = vpop.f32.mrf.mxu0
    %v749 = vadd.f32 %v364, %v748
    %v750 = vpop.f32.mrf.mxu0
    %751 = vdwg.mxu0
    %752 = vmatpush.bf16.msra.mxu0 %v590
    %753 = vmatpush.bf16.msra.mxu0 %v588
    %754 = vmatpush.bf16.msra.mxu0 %v586
    %755 = vmatpush.bf16.msra.mxu0 %v584
    %756 = vmatpush.bf16.msra.mxu0 %v582
    %757 = vmatpush.bf16.msra.mxu0 %v580
    %758 = vmatpush.bf16.msra.mxu0 %v578
    %759 = vmatpush.bf16.msra.mxu0 %v576
    %760 = vmatmul.bf16.gmra.mxu0 %v294
    %v761 = vpop.f32.mrf.mxu0
    %v762 = vadd.f32 %v749, %v761
    %v763 = vpop.f32.mrf.mxu0
    %764 = vdwg.mxu0
    %765 = vmatpush.bf16.msra.mxu0 %v606
    %766 = vmatpush.bf16.msra.mxu0 %v604
    %767 = vmatpush.bf16.msra.mxu0 %v602
    %768 = vmatpush.bf16.msra.mxu0 %v600
    %769 = vmatpush.bf16.msra.mxu0 %v598
    %770 = vmatpush.bf16.msra.mxu0 %v596
    %771 = vmatpush.bf16.msra.mxu0 %v594
    %772 = vmatpush.bf16.msra.mxu0 %v592
    %773 = vmatmul.bf16.gmra.mxu0 %v295
    %v774 = vpop.f32.mrf.mxu0
    %v775 = vadd.f32 %v762, %v774
    %v776 = vpop.f32.mrf.mxu0
    %777 = vdwg.mxu0
    %778 = vmatpush.bf16.msra.mxu0 %v622
    %779 = vmatpush.bf16.msra.mxu0 %v620
    %780 = vmatpush.bf16.msra.mxu0 %v618
    %781 = vmatpush.bf16.msra.mxu0 %v616
    %782 = vmatpush.bf16.msra.mxu0 %v614
    %783 = vmatpush.bf16.msra.mxu0 %v612
    %784 = vmatpush.bf16.msra.mxu0 %v610
    %785 = vmatpush.bf16.msra.mxu0 %v608
    %786 = vmatmul.bf16.gmra.mxu0 %v296
    %v787 = vpop.f32.mrf.mxu0
    %v788 = vadd.f32 %v775, %v787
    %v789 = vpop.f32.mrf.mxu0
    %790 = vdwg.mxu0
    %v791 = vmax.f32 %v736, 0.0
    %v792 = vmax.f32 %v788, 0.0
    %v793 = vpack.c.bf16 %v791, %v791
    %v794 = vpack.c.bf16 %v792, %v792
    %v795 = vld [vmem:[#allocation10] sm:$0xff]
    %v796 = vld [vmem:[#allocation10 + $0x8] sm:$0xff]
    %v797 = vld [vmem:[#allocation10 + $0x10] sm:$0xff]
    %v798 = vld [vmem:[#allocation10 + $0x18] sm:$0xff]
    %v799 = vld [vmem:[#allocation10 + $0x20] sm:$0xff]
    %v800 = vld [vmem:[#allocation10 + $0x28] sm:$0xff]
    %v801 = vld [vmem:[#allocation10 + $0x30] sm:$0xff]
    %v802 = vld [vmem:[#allocation10 + $0x38] sm:$0xff]
    %v803 = vld [vmem:[#allocation10 + $0x40] sm:$0xff]
    %v804 = vld [vmem:[#allocation10 + $0x48] sm:$0xff]
    %v805 = vld [vmem:[#allocation10 + $0x50] sm:$0xff]
    %v806 = vld [vmem:[#allocation10 + $0x58] sm:$0xff]
    %v807 = vld [vmem:[#allocation10 + $0x60] sm:$0xff]
    %v808 = vld [vmem:[#allocation10 + $0x68] sm:$0xff]
    %v809 = vld [vmem:[#allocation10 + $0x70] sm:$0xff]
    %v810 = vld [vmem:[#allocation10 + $0x78] sm:$0xff]
    %v811 = vld [vmem:[#allocation10 + $0x80] sm:$0xff]
    %v812 = vld [vmem:[#allocation10 + $0x88] sm:$0xff]
    %v813 = vld [vmem:[#allocation10 + $0x90] sm:$0xff]
    %v814 = vld [vmem:[#allocation10 + $0x98] sm:$0xff]
    %v815 = vld [vmem:[#allocation10 + $0xa0] sm:$0xff]
    %v816 = vld [vmem:[#allocation10 + $0xa8] sm:$0xff]
    %v817 = vld [vmem:[#allocation10 + $0xb0] sm:$0xff]
    %v818 = vld [vmem:[#allocation10 + $0xb8] sm:$0xff]
    %v819 = vld [vmem:[#allocation10 + $0xc0] sm:$0xff]
    %v820 = vld [vmem:[#allocation10 + $0xc8] sm:$0xff]
    %v821 = vld [vmem:[#allocation10 + $0xd0] sm:$0xff]
    %v822 = vld [vmem:[#allocation10 + $0xd8] sm:$0xff]
    %v823 = vld [vmem:[#allocation10 + $0xe0] sm:$0xff]
    %v824 = vld [vmem:[#allocation10 + $0xe8] sm:$0xff]
    %v825 = vld [vmem:[#allocation10 + $0xf0] sm:$0xff]
    %v826 = vld [vmem:[#allocation10 + $0xf8] sm:$0xff]
    %v827 = vld [vmem:[#allocation10 + $0x100] sm:$0xff]
    %v828 = vld [vmem:[#allocation10 + $0x108] sm:$0xff]
    %v829 = vld [vmem:[#allocation10 + $0x110] sm:$0xff]
    %v830 = vld [vmem:[#allocation10 + $0x118] sm:$0xff]
    %v831 = vld [vmem:[#allocation10 + $0x120] sm:$0xff]
    %v832 = vld [vmem:[#allocation10 + $0x128] sm:$0xff]
    %v833 = vld [vmem:[#allocation10 + $0x130] sm:$0xff]
    %v834 = vld [vmem:[#allocation10 + $0x138] sm:$0xff]
    %v835 = vld [vmem:[#allocation10 + $0x140] sm:$0xff]
    %v836 = vld [vmem:[#allocation10 + $0x148] sm:$0xff]
    %v837 = vld [vmem:[#allocation10 + $0x150] sm:$0xff]
    %v838 = vld [vmem:[#allocation10 + $0x158] sm:$0xff]
    %v839 = vld [vmem:[#allocation10 + $0x160] sm:$0xff]
    %v840 = vld [vmem:[#allocation10 + $0x168] sm:$0xff]
    %v841 = vld [vmem:[#allocation10 + $0x170] sm:$0xff]
    %v842 = vld [vmem:[#allocation10 + $0x178] sm:$0xff]
    %v843 = vld [vmem:[#allocation10 + $0x180] sm:$0xff]
    %v844 = vld [vmem:[#allocation10 + $0x188] sm:$0xff]
    %v845 = vld [vmem:[#allocation10 + $0x190] sm:$0xff]
    %v846 = vld [vmem:[#allocation10 + $0x198] sm:$0xff]
    %v847 = vld [vmem:[#allocation10 + $0x1a0] sm:$0xff]
    %v848 = vld [vmem:[#allocation10 + $0x1a8] sm:$0xff]
    %v849 = vld [vmem:[#allocation10 + $0x1b0] sm:$0xff]
    %v850 = vld [vmem:[#allocation10 + $0x1b8] sm:$0xff]
    %v851 = vld [vmem:[#allocation10 + $0x1c0] sm:$0xff]
    %v852 = vld [vmem:[#allocation10 + $0x1c8] sm:$0xff]
    %v853 = vld [vmem:[#allocation10 + $0x1d0] sm:$0xff]
    %v854 = vld [vmem:[#allocation10 + $0x1d8] sm:$0xff]
    %v855 = vld [vmem:[#allocation10 + $0x1e0] sm:$0xff]
    %v856 = vld [vmem:[#allocation10 + $0x1e8] sm:$0xff]
    %v857 = vld [vmem:[#allocation10 + $0x1f0] sm:$0xff]
    %v858 = vld [vmem:[#allocation10 + $0x1f8] sm:$0xff]
    %v859 = vld [vmem:[#allocation10 + $0x200] sm:$0xff]
    %v860 = vld [vmem:[#allocation10 + $0x208] sm:$0xff]
    %v861 = vld [vmem:[#allocation10 + $0x210] sm:$0xff]
    %v862 = vld [vmem:[#allocation10 + $0x218] sm:$0xff]
    %v863 = vld [vmem:[#allocation10 + $0x220] sm:$0xff]
    %v864 = vld [vmem:[#allocation10 + $0x228] sm:$0xff]
    %v865 = vld [vmem:[#allocation10 + $0x230] sm:$0xff]
    %v866 = vld [vmem:[#allocation10 + $0x238] sm:$0xff]
    %v867 = vld [vmem:[#allocation10 + $0x240] sm:$0xff]
    %v868 = vld [vmem:[#allocation10 + $0x248] sm:$0xff]
    %v869 = vld [vmem:[#allocation10 + $0x250] sm:$0xff]
    %v870 = vld [vmem:[#allocation10 + $0x258] sm:$0xff]
    %v871 = vld [vmem:[#allocation10 + $0x260] sm:$0xff]
    %v872 = vld [vmem:[#allocation10 + $0x268] sm:$0xff]
    %v873 = vld [vmem:[#allocation10 + $0x270] sm:$0xff]
    %v874 = vld [vmem:[#allocation10 + $0x278] sm:$0xff]
    %v875 = vld [vmem:[#allocation10 + $0x280] sm:$0xff]
    %v876 = vld [vmem:[#allocation10 + $0x288] sm:$0xff]
    %v877 = vld [vmem:[#allocation10 + $0x290] sm:$0xff]
    %v878 = vld [vmem:[#allocation10 + $0x298] sm:$0xff]
    %v879 = vld [vmem:[#allocation10 + $0x2a0] sm:$0xff]
    %v880 = vld [vmem:[#allocation10 + $0x2a8] sm:$0xff]
    %v881 = vld [vmem:[#allocation10 + $0x2b0] sm:$0xff]
    %v882 = vld [vmem:[#allocation10 + $0x2b8] sm:$0xff]
    %v883 = vld [vmem:[#allocation10 + $0x2c0] sm:$0xff]
    %v884 = vld [vmem:[#allocation10 + $0x2c8] sm:$0xff]
    %v885 = vld [vmem:[#allocation10 + $0x2d0] sm:$0xff]
    %v886 = vld [vmem:[#allocation10 + $0x2d8] sm:$0xff]
    %v887 = vld [vmem:[#allocation10 + $0x2e0] sm:$0xff]
    %v888 = vld [vmem:[#allocation10 + $0x2e8] sm:$0xff]
    %v889 = vld [vmem:[#allocation10 + $0x2f0] sm:$0xff]
    %v890 = vld [vmem:[#allocation10 + $0x2f8] sm:$0xff]
    %v891 = vld [vmem:[#allocation11] sm:$0x3f]
    %v893 = vperm.slane %v891, 0
    %v894 = vperm.slane %v891, 1
    %v895 = vperm.slane %v891, 2
    %v896 = vperm.slane %v891, 3
    %v897 = vperm.slane %v891, 4
    %v898 = vperm.slane %v891, 5
    %v1001 = vunpack.c.l.b16 %v795
    %v1002 = vunpack.c.h.b16 %v795
    %v1003 = vunpack.c.l.b16 %v796
    %v1004 = vunpack.c.h.b16 %v796
    %v1005 = vunpack.c.l.b16 %v797
    %v1006 = vunpack.c.h.b16 %v797
    %v1007 = vunpack.c.l.b16 %v798
    %v1008 = vunpack.c.h.b16 %v798
    %v1009 = vunpack.c.l.b16 %v799
    %v1010 = vunpack.c.h.b16 %v799
    %v1011 = vunpack.c.l.b16 %v800
    %v1012 = vunpack.c.h.b16 %v800
    %v1013 = vunpack.c.l.b16 %v801
    %v1014 = vunpack.c.h.b16 %v801
    %v1015 = vunpack.c.l.b16 %v802
    %v1016 = vunpack.c.h.b16 %v802
    %v1017 = vunpack.c.l.b16 %v803
    %v1018 = vunpack.c.h.b16 %v803
    %v1019 = vunpack.c.l.b16 %v804
    %v1020 = vunpack.c.h.b16 %v804
    %v1021 = vunpack.c.l.b16 %v805
    %v1022 = vunpack.c.h.b16 %v805
    %v1023 = vunpack.c.l.b16 %v806
    %v1024 = vunpack.c.h.b16 %v806
    %v1025 = vunpack.c.l.b16 %v807
    %v1026 = vunpack.c.h.b16 %v807
    %v1027 = vunpack.c.l.b16 %v808
    %v1028 = vunpack.c.h.b16 %v808
    %v1029 = vunpack.c.l.b16 %v809
    %v1030 = vunpack.c.h.b16 %v809
    %v1031 = vunpack.c.l.b16 %v810
    %v1032 = vunpack.c.h.b16 %v810
    %v1033 = vunpack.c.l.b16 %v811
    %v1034 = vunpack.c.h.b16 %v811
    %v1035 = vunpack.c.l.b16 %v812
    %v1036 = vunpack.c.h.b16 %v812
    %v1037 = vunpack.c.l.b16 %v813
    %v1038 = vunpack.c.h.b16 %v813
    %v1039 = vunpack.c.l.b16 %v814
    %v1040 = vunpack.c.h.b16 %v814
    %v1041 = vunpack.c.l.b16 %v815
    %v1042 = vunpack.c.h.b16 %v815
    %v1043 = vunpack.c.l.b16 %v816
    %v1044 = vunpack.c.h.b16 %v816
    %v1045 = vunpack.c.l.b16 %v817
    %v1046 = vunpack.c.h.b16 %v817
    %v1047 = vunpack.c.l.b16 %v818
    %v1048 = vunpack.c.h.b16 %v818
    %v1049 = vunpack.c.l.b16 %v819
    %v1050 = vunpack.c.h.b16 %v819
    %v1051 = vunpack.c.l.b16 %v820
    %v1052 = vunpack.c.h.b16 %v820
    %v1053 = vunpack.c.l.b16 %v821
    %v1054 = vunpack.c.h.b16 %v821
    %v1055 = vunpack.c.l.b16 %v822
    %v1056 = vunpack.c.h.b16 %v822
    %v1057 = vunpack.c.l.b16 %v823
    %v1058 = vunpack.c.h.b16 %v823
    %v1059 = vunpack.c.l.b16 %v824
    %v1060 = vunpack.c.h.b16 %v824
    %v1061 = vunpack.c.l.b16 %v825
    %v1062 = vunpack.c.h.b16 %v825
    %v1063 = vunpack.c.l.b16 %v826
    %v1064 = vunpack.c.h.b16 %v826
    %v1065 = vunpack.c.l.b16 %v827
    %v1066 = vunpack.c.h.b16 %v827
    %v1067 = vunpack.c.l.b16 %v828
    %v1068 = vunpack.c.h.b16 %v828
    %v1069 = vunpack.c.l.b16 %v829
    %v1070 = vunpack.c.h.b16 %v829
    %v1071 = vunpack.c.l.b16 %v830
    %v1072 = vunpack.c.h.b16 %v830
    %v1073 = vunpack.c.l.b16 %v831
    %v1074 = vunpack.c.h.b16 %v831
    %v1075 = vunpack.c.l.b16 %v832
    %v1076 = vunpack.c.h.b16 %v832
    %v1077 = vunpack.c.l.b16 %v833
    %v1078 = vunpack.c.h.b16 %v833
    %v1079 = vunpack.c.l.b16 %v834
    %v1080 = vunpack.c.h.b16 %v834
    %v1081 = vunpack.c.l.b16 %v835
    %v1082 = vunpack.c.h.b16 %v835
    %v1083 = vunpack.c.l.b16 %v836
    %v1084 = vunpack.c.h.b16 %v836
    %v1085 = vunpack.c.l.b16 %v837
    %v1086 = vunpack.c.h.b16 %v837
    %v1087 = vunpack.c.l.b16 %v838
    %v1088 = vunpack.c.h.b16 %v838
    %v1089 = vunpack.c.l.b16 %v839
    %v1090 = vunpack.c.h.b16 %v839
    %v1091 = vunpack.c.l.b16 %v840
    %v1092 = vunpack.c.h.b16 %v840
    %v1093 = vunpack.c.l.b16 %v841
    %v1094 = vunpack.c.h.b16 %v841
    %v1095 = vunpack.c.l.b16 %v842
    %v1096 = vunpack.c.h.b16 %v842
    %v1097 = vunpack.c.l.b16 %v843
    %v1098 = vunpack.c.h.b16 %v843
    %v1099 = vunpack.c.l.b16 %v844
    %v1100 = vunpack.c.h.b16 %v844
    %v1101 = vunpack.c.l.b16 %v845
    %v1102 = vunpack.c.h.b16 %v845
    %v1103 = vunpack.c.l.b16 %v846
    %v1104 = vunpack.c.h.b16 %v846
    %v1105 = vunpack.c.l.b16 %v847
    %v1106 = vunpack.c.h.b16 %v847
    %v1107 = vunpack.c.l.b16 %v848
    %v1108 = vunpack.c.h.b16 %v848
    %v1109 = vunpack.c.l.b16 %v849
    %v1110 = vunpack.c.h.b16 %v849
    %v1111 = vunpack.c.l.b16 %v850
    %v1112 = vunpack.c.h.b16 %v850
    %v1113 = vunpack.c.l.b16 %v851
    %v1114 = vunpack.c.h.b16 %v851
    %v1115 = vunpack.c.l.b16 %v852
    %v1116 = vunpack.c.h.b16 %v852
    %v1117 = vunpack.c.l.b16 %v853
    %v1118 = vunpack.c.h.b16 %v853
    %v1119 = vunpack.c.l.b16 %v854
    %v1120 = vunpack.c.h.b16 %v854
    %v1121 = vunpack.c.l.b16 %v855
    %v1122 = vunpack.c.h.b16 %v855
    %v1123 = vunpack.c.l.b16 %v856
    %v1124 = vunpack.c.h.b16 %v856
    %v1125 = vunpack.c.l.b16 %v857
    %v1126 = vunpack.c.h.b16 %v857
    %v1127 = vunpack.c.l.b16 %v858
    %v1128 = vunpack.c.h.b16 %v858
    %v1129 = vunpack.c.l.b16 %v859
    %v1130 = vunpack.c.h.b16 %v859
    %v1131 = vunpack.c.l.b16 %v860
    %v1132 = vunpack.c.h.b16 %v860
    %v1133 = vunpack.c.l.b16 %v861
    %v1134 = vunpack.c.h.b16 %v861
    %v1135 = vunpack.c.l.b16 %v862
    %v1136 = vunpack.c.h.b16 %v862
    %v1137 = vunpack.c.l.b16 %v863
    %v1138 = vunpack.c.h.b16 %v863
    %v1139 = vunpack.c.l.b16 %v864
    %v1140 = vunpack.c.h.b16 %v864
    %v1141 = vunpack.c.l.b16 %v865
    %v1142 = vunpack.c.h.b16 %v865
    %v1143 = vunpack.c.l.b16 %v866
    %v1144 = vunpack.c.h.b16 %v866
    %v1145 = vunpack.c.l.b16 %v867
    %v1146 = vunpack.c.h.b16 %v867
    %v1147 = vunpack.c.l.b16 %v868
    %v1148 = vunpack.c.h.b16 %v868
    %v1149 = vunpack.c.l.b16 %v869
    %v1150 = vunpack.c.h.b16 %v869
    %v1151 = vunpack.c.l.b16 %v870
    %v1152 = vunpack.c.h.b16 %v870
    %v1153 = vunpack.c.l.b16 %v871
    %v1154 = vunpack.c.h.b16 %v871
    %v1155 = vunpack.c.l.b16 %v872
    %v1156 = vunpack.c.h.b16 %v872
    %v1157 = vunpack.c.l.b16 %v873
    %v1158 = vunpack.c.h.b16 %v873
    %v1159 = vunpack.c.l.b16 %v874
    %v1160 = vunpack.c.h.b16 %v874
    %v1161 = vunpack.c.l.b16 %v875
    %v1162 = vunpack.c.h.b16 %v875
    %v1163 = vunpack.c.l.b16 %v876
    %v1164 = vunpack.c.h.b16 %v876
    %v1165 = vunpack.c.l.b16 %v877
    %v1166 = vunpack.c.h.b16 %v877
    %v1167 = vunpack.c.l.b16 %v878
    %v1168 = vunpack.c.h.b16 %v878
    %v1169 = vunpack.c.l.b16 %v879
    %v1170 = vunpack.c.h.b16 %v879
    %v1171 = vunpack.c.l.b16 %v880
    %v1172 = vunpack.c.h.b16 %v880
    %v1173 = vunpack.c.l.b16 %v881
    %v1174 = vunpack.c.h.b16 %v881
    %v1175 = vunpack.c.l.b16 %v882
    %v1176 = vunpack.c.h.b16 %v882
    %v1177 = vunpack.c.l.b16 %v883
    %v1178 = vunpack.c.h.b16 %v883
    %v1179 = vunpack.c.l.b16 %v884
    %v1180 = vunpack.c.h.b16 %v884
    %v1181 = vunpack.c.l.b16 %v885
    %v1182 = vunpack.c.h.b16 %v885
    %v1183 = vunpack.c.l.b16 %v886
    %v1184 = vunpack.c.h.b16 %v886
    %v1185 = vunpack.c.l.b16 %v887
    %v1186 = vunpack.c.h.b16 %v887
    %v1187 = vunpack.c.l.b16 %v888
    %v1188 = vunpack.c.h.b16 %v888
    %v1189 = vunpack.c.l.b16 %v889
    %v1190 = vunpack.c.h.b16 %v889
    %v1191 = vunpack.c.l.b16 %v890
    %v1192 = vunpack.c.h.b16 %v890
    %v1193 = vpack.c.b16 %v1007, %v1001
    %v1194 = vpack.c.b16 %v1008, %v1002
    %v1195 = vpack.c.b16 %v1009, %v1003
    %v1196 = vpack.c.b16 %v1010, %v1004
    %v1197 = vpack.c.b16 %v1011, %v1005
    %v1198 = vpack.c.b16 %v1012, %v1006
    %v1199 = vpack.c.b16 %v1019, %v1013
    %v1200 = vpack.c.b16 %v1020, %v1014
    %v1201 = vpack.c.b16 %v1021, %v1015
    %v1202 = vpack.c.b16 %v1022, %v1016
    %v1203 = vpack.c.b16 %v1023, %v1017
    %v1204 = vpack.c.b16 %v1024, %v1018
    %v1205 = vpack.c.b16 %v1031, %v1025
    %v1206 = vpack.c.b16 %v1032, %v1026
    %v1207 = vpack.c.b16 %v1033, %v1027
    %v1208 = vpack.c.b16 %v1034, %v1028
    %v1209 = vpack.c.b16 %v1035, %v1029
    %v1210 = vpack.c.b16 %v1036, %v1030
    %v1211 = vpack.c.b16 %v1043, %v1037
    %v1212 = vpack.c.b16 %v1044, %v1038
    %v1213 = vpack.c.b16 %v1045, %v1039
    %v1214 = vpack.c.b16 %v1046, %v1040
    %v1215 = vpack.c.b16 %v1047, %v1041
    %v1216 = vpack.c.b16 %v1048, %v1042
    %v1217 = vpack.c.b16 %v1055, %v1049
    %v1218 = vpack.c.b16 %v1056, %v1050
    %v1219 = vpack.c.b16 %v1057, %v1051
    %v1220 = vpack.c.b16 %v1058, %v1052
    %v1221 = vpack.c.b16 %v1059, %v1053
    %v1222 = vpack.c.b16 %v1060, %v1054
    %v1223 = vpack.c.b16 %v1067, %v1061
    %v1224 = vpack.c.b16 %v1068, %v1062
    %v1225 = vpack.c.b16 %v1069, %v1063
    %v1226 = vpack.c.b16 %v1070, %v1064
    %v1227 = vpack.c.b16 %v1071, %v1065
    %v1228 = vpack.c.b16 %v1072, %v1066
    %v1229 = vpack.c.b16 %v1079, %v1073
    %v1230 = vpack.c.b16 %v1080, %v1074
    %v1231 = vpack.c.b16 %v1081, %v1075
    %v1232 = vpack.c.b16 %v1082, %v1076
    %v1233 = vpack.c.b16 %v1083, %v1077
    %v1234 = vpack.c.b16 %v1084, %v1078
    %v1235 = vpack.c.b16 %v1091, %v1085
    %v1236 = vpack.c.b16 %v1092, %v1086
    %v1237 = vpack.c.b16 %v1093, %v1087
    %v1238 = vpack.c.b16 %v1094, %v1088
    %v1239 = vpack.c.b16 %v1095, %v1089
    %v1240 = vpack.c.b16 %v1096, %v1090
    %v1241 = vpack.c.b16 %v1103, %v1097
    %v1242 = vpack.c.b16 %v1104, %v1098
    %v1243 = vpack.c.b16 %v1105, %v1099
    %v1244 = vpack.c.b16 %v1106, %v1100
    %v1245 = vpack.c.b16 %v1107, %v1101
    %v1246 = vpack.c.b16 %v1108, %v1102
    %v1247 = vpack.c.b16 %v1115, %v1109
    %v1248 = vpack.c.b16 %v1116, %v1110
    %v1249 = vpack.c.b16 %v1117, %v1111
    %v1250 = vpack.c.b16 %v1118, %v1112
    %v1251 = vpack.c.b16 %v1119, %v1113
    %v1252 = vpack.c.b16 %v1120, %v1114
    %v1253 = vpack.c.b16 %v1127, %v1121
    %v1254 = vpack.c.b16 %v1128, %v1122
    %v1255 = vpack.c.b16 %v1129, %v1123
    %v1256 = vpack.c.b16 %v1130, %v1124
    %v1257 = vpack.c.b16 %v1131, %v1125
    %v1258 = vpack.c.b16 %v1132, %v1126
    %v1259 = vpack.c.b16 %v1139, %v1133
    %v1260 = vpack.c.b16 %v1140, %v1134
    %v1261 = vpack.c.b16 %v1141, %v1135
    %v1262 = vpack.c.b16 %v1142, %v1136
    %v1263 = vpack.c.b16 %v1143, %v1137
    %v1264 = vpack.c.b16 %v1144, %v1138
    %v1265 = vpack.c.b16 %v1151, %v1145
    %v1266 = vpack.c.b16 %v1152, %v1146
    %v1267 = vpack.c.b16 %v1153, %v1147
    %v1268 = vpack.c.b16 %v1154, %v1148
    %v1269 = vpack.c.b16 %v1155, %v1149
    %v1270 = vpack.c.b16 %v1156, %v1150
    %v1271 = vpack.c.b16 %v1163, %v1157
    %v1272 = vpack.c.b16 %v1164, %v1158
    %v1273 = vpack.c.b16 %v1165, %v1159
    %v1274 = vpack.c.b16 %v1166, %v1160
    %v1275 = vpack.c.b16 %v1167, %v1161
    %v1276 = vpack.c.b16 %v1168, %v1162
    %v1277 = vpack.c.b16 %v1175, %v1169
    %v1278 = vpack.c.b16 %v1176, %v1170
    %v1279 = vpack.c.b16 %v1177, %v1171
    %v1280 = vpack.c.b16 %v1178, %v1172
    %v1281 = vpack.c.b16 %v1179, %v1173
    %v1282 = vpack.c.b16 %v1180, %v1174
    %v1283 = vpack.c.b16 %v1187, %v1181
    %v1284 = vpack.c.b16 %v1188, %v1182
    %v1285 = vpack.c.b16 %v1189, %v1183
    %v1286 = vpack.c.b16 %v1190, %v1184
    %v1287 = vpack.c.b16 %v1191, %v1185
    %v1288 = vpack.c.b16 %v1192, %v1186
    %1385 = vmatpush.bf16.msra.mxu0 %v1235
    %1386 = vmatpush.bf16.msra.mxu0 %v1229
    %1387 = vmatpush.bf16.msra.mxu0 %v1223
    %1388 = vmatpush.bf16.msra.mxu0 %v1217
    %1389 = vmatpush.bf16.msra.mxu0 %v1211
    %1390 = vmatpush.bf16.msra.mxu0 %v1205
    %1391 = vmatpush.bf16.msra.mxu0 %v1199
    %1392 = vmatpush.bf16.msra.mxu0 %v1193
    %1393 = vmatmul.bf16.gmra.mxu0 %v793
    %v1394 = vpop.f32.mrf.mxu0
    %v1395 = vadd.f32 %v893, %v1394
    %v1396 = vpop.f32.mrf.mxu0
    %1397 = vdwg.mxu0
    %1398 = vmatpush.bf16.msra.mxu0 %v1283
    %1399 = vmatpush.bf16.msra.mxu0 %v1277
    %1400 = vmatpush.bf16.msra.mxu0 %v1271
    %1401 = vmatpush.bf16.msra.mxu0 %v1265
    %1402 = vmatpush.bf16.msra.mxu0 %v1259
    %1403 = vmatpush.bf16.msra.mxu0 %v1253
    %1404 = vmatpush.bf16.msra.mxu0 %v1247
    %1405 = vmatpush.bf16.msra.mxu0 %v1241
    %1406 = vmatmul.bf16.gmra.mxu0 %v794
    %v1407 = vpop.f32.mrf.mxu0
    %v1408 = vadd.f32 %v1395, %v1407
    %v1409 = vpop.f32.mrf.mxu0
    %1410 = vdwg.mxu0
    %1411 = vmatpush.bf16.msra.mxu0 %v1236
    %1412 = vmatpush.bf16.msra.mxu0 %v1230
    %1413 = vmatpush.bf16.msra.mxu0 %v1224
    %1414 = vmatpush.bf16.msra.mxu0 %v1218
    %1415 = vmatpush.bf16.msra.mxu0 %v1212
    %1416 = vmatpush.bf16.msra.mxu0 %v1206
    %1417 = vmatpush.bf16.msra.mxu0 %v1200
    %1418 = vmatpush.bf16.msra.mxu0 %v1194
    %1419 = vmatmul.bf16.gmra.mxu0 %v793
    %v1420 = vpop.f32.mrf.mxu0
    %v1421 = vadd.f32 %v894, %v1420
    %v1422 = vpop.f32.mrf.mxu0
    %1423 = vdwg.mxu0
    %1424 = vmatpush.bf16.msra.mxu0 %v1284
    %1425 = vmatpush.bf16.msra.mxu0 %v1278
    %1426 = vmatpush.bf16.msra.mxu0 %v1272
    %1427 = vmatpush.bf16.msra.mxu0 %v1266
    %1428 = vmatpush.bf16.msra.mxu0 %v1260
    %1429 = vmatpush.bf16.msra.mxu0 %v1254
    %1430 = vmatpush.bf16.msra.mxu0 %v1248
    %1431 = vmatpush.bf16.msra.mxu0 %v1242
    %1432 = vmatmul.bf16.gmra.mxu0 %v794
    %v1433 = vpop.f32.mrf.mxu0
    %v1434 = vadd.f32 %v1421, %v1433
    %v1435 = vpop.f32.mrf.mxu0
    %1436 = vdwg.mxu0
    %1437 = vmatpush.bf16.msra.mxu0 %v1237
    %1438 = vmatpush.bf16.msra.mxu0 %v1231
    %1439 = vmatpush.bf16.msra.mxu0 %v1225
    %1440 = vmatpush.bf16.msra.mxu0 %v1219
    %1441 = vmatpush.bf16.msra.mxu0 %v1213
    %1442 = vmatpush.bf16.msra.mxu0 %v1207
    %1443 = vmatpush.bf16.msra.mxu0 %v1201
    %1444 = vmatpush.bf16.msra.mxu0 %v1195
    %1445 = vmatmul.bf16.gmra.mxu0 %v793
    %v1446 = vpop.f32.mrf.mxu0
    %v1447 = vadd.f32 %v895, %v1446
    %v1448 = vpop.f32.mrf.mxu0
    %1449 = vdwg.mxu0
    %1450 = vmatpush.bf16.msra.mxu0 %v1285
    %1451 = vmatpush.bf16.msra.mxu0 %v1279
    %1452 = vmatpush.bf16.msra.mxu0 %v1273
    %1453 = vmatpush.bf16.msra.mxu0 %v1267
    %1454 = vmatpush.bf16.msra.mxu0 %v1261
    %1455 = vmatpush.bf16.msra.mxu0 %v1255
    %1456 = vmatpush.bf16.msra.mxu0 %v1249
    %1457 = vmatpush.bf16.msra.mxu0 %v1243
    %1458 = vmatmul.bf16.gmra.mxu0 %v794
    %v1459 = vpop.f32.mrf.mxu0
    %v1460 = vadd.f32 %v1447, %v1459
    %v1461 = vpop.f32.mrf.mxu0
    %1462 = vdwg.mxu0
    %1463 = vmatpush.bf16.msra.mxu0 %v1238
    %1464 = vmatpush.bf16.msra.mxu0 %v1232
    %1465 = vmatpush.bf16.msra.mxu0 %v1226
    %1466 = vmatpush.bf16.msra.mxu0 %v1220
    %1467 = vmatpush.bf16.msra.mxu0 %v1214
    %1468 = vmatpush.bf16.msra.mxu0 %v1208
    %1469 = vmatpush.bf16.msra.mxu0 %v1202
    %1470 = vmatpush.bf16.msra.mxu0 %v1196
    %1471 = vmatmul.bf16.gmra.mxu0 %v793
    %v1472 = vpop.f32.mrf.mxu0
    %v1473 = vadd.f32 %v896, %v1472
    %v1474 = vpop.f32.mrf.mxu0
    %1475 = vdwg.mxu0
    %1476 = vmatpush.bf16.msra.mxu0 %v1286
    %1477 = vmatpush.bf16.msra.mxu0 %v1280
    %1478 = vmatpush.bf16.msra.mxu0 %v1274
    %1479 = vmatpush.bf16.msra.mxu0 %v1268
    %1480 = vmatpush.bf16.msra.mxu0 %v1262
    %1481 = vmatpush.bf16.msra.mxu0 %v1256
    %1482 = vmatpush.bf16.msra.mxu0 %v1250
    %1483 = vmatpush.bf16.msra.mxu0 %v1244
    %1484 = vmatmul.bf16.gmra.mxu0 %v794
    %v1485 = vpop.f32.mrf.mxu0
    %v1486 = vadd.f32 %v1473, %v1485
    %v1487 = vpop.f32.mrf.mxu0
    %1488 = vdwg.mxu0
    %1489 = vmatpush.bf16.msra.mxu0 %v1239
    %1490 = vmatpush.bf16.msra.mxu0 %v1233
    %1491 = vmatpush.bf16.msra.mxu0 %v1227
    %1492 = vmatpush.bf16.msra.mxu0 %v1221
    %1493 = vmatpush.bf16.msra.mxu0 %v1215
    %1494 = vmatpush.bf16.msra.mxu0 %v1209
    %1495 = vmatpush.bf16.msra.mxu0 %v1203
    %1496 = vmatpush.bf16.msra.mxu0 %v1197
    %1497 = vmatmul.bf16.gmra.mxu0 %v793
    %v1498 = vpop.f32.mrf.mxu0
    %v1499 = vadd.f32 %v897, %v1498
    %v1500 = vpop.f32.mrf.mxu0
    %1501 = vdwg.mxu0
    %1502 = vmatpush.bf16.msra.mxu0 %v1287
    %1503 = vmatpush.bf16.msra.mxu0 %v1281
    %1504 = vmatpush.bf16.msra.mxu0 %v1275
    %1505 = vmatpush.bf16.msra.mxu0 %v1269
    %1506 = vmatpush.bf16.msra.mxu0 %v1263
    %1507 = vmatpush.bf16.msra.mxu0 %v1257
    %1508 = vmatpush.bf16.msra.mxu0 %v1251
    %1509 = vmatpush.bf16.msra.mxu0 %v1245
    %1510 = vmatmul.bf16.gmra.mxu0 %v794
    %v1511 = vpop.f32.mrf.mxu0
    %v1512 = vadd.f32 %v1499, %v1511
    %v1513 = vpop.f32.mrf.mxu0
    %1514 = vdwg.mxu0
    %1515 = vmatpush.bf16.msra.mxu0 %v1240
    %1516 = vmatpush.bf16.msra.mxu0 %v1234
    %1517 = vmatpush.bf16.msra.mxu0 %v1228
    %1518 = vmatpush.bf16.msra.mxu0 %v1222
    %1519 = vmatpush.bf16.msra.mxu0 %v1216
    %1520 = vmatpush.bf16.msra.mxu0 %v1210
    %1521 = vmatpush.bf16.msra.mxu0 %v1204
    %1522 = vmatpush.bf16.msra.mxu0 %v1198
    %1523 = vmatmul.bf16.gmra.mxu0 %v793
    %v1524 = vpop.f32.mrf.mxu0
    %v1525 = vadd.f32 %v898, %v1524
    %v1526 = vpop.f32.mrf.mxu0
    %1527 = vdwg.mxu0
    %1528 = vmatpush.bf16.msra.mxu0 %v1288
    %1529 = vmatpush.bf16.msra.mxu0 %v1282
    %1530 = vmatpush.bf16.msra.mxu0 %v1276
    %1531 = vmatpush.bf16.msra.mxu0 %v1270
    %1532 = vmatpush.bf16.msra.mxu0 %v1264
    %1533 = vmatpush.bf16.msra.mxu0 %v1258
    %1534 = vmatpush.bf16.msra.mxu0 %v1252
    %1535 = vmatpush.bf16.msra.mxu0 %v1246
    %1536 = vmatmul.bf16.gmra.mxu0 %v794
    %v1537 = vpop.f32.mrf.mxu0
    %v1538 = vadd.f32 %v1525, %v1537
    %v1539 = vpop.f32.mrf.mxu0
    %1540 = vdwg.mxu0
    %v1541 = vmax.f32 %v1408, 0.0
    %v1542 = vmax.f32 %v1434, 0.0
    %v1543 = vmax.f32 %v1460, 0.0
    %v1544 = vmax.f32 %v1486, 0.0
    %v1545 = vmax.f32 %v1512, 0.0
    %v1546 = vmax.f32 %v1538, 0.0
    %v1547 = vpack.c.bf16 %v1541, %v1541
    %v1548 = vpack.c.bf16 %v1542, %v1542
    %v1549 = vpack.c.bf16 %v1543, %v1543
    %v1550 = vpack.c.bf16 %v1544, %v1544
    %v1551 = vld [vmem:[#allocation13] sm:$0xff]
    %v1552 = vld [vmem:[#allocation13 + $0x8] sm:$0xff]
    %v1553 = vld [vmem:[#allocation13 + $0x10] sm:$0xff]
    %v1554 = vld [vmem:[#allocation13 + $0x18] sm:$0xff]
    %v1555 = vld [vmem:[#allocation13 + $0x20] sm:$0xff]
    %v1556 = vld [vmem:[#allocation13 + $0x28] sm:$0xff]
    %v1557 = vld [vmem:[#allocation13 + $0x30] sm:$0xff]
    %v1558 = vld [vmem:[#allocation13 + $0x38] sm:$0xff]
    %v1559 = vld [vmem:[#allocation13 + $0x40] sm:$0xff]
    %v1560 = vld [vmem:[#allocation13 + $0x48] sm:$0xff]
    %v1561 = vld [vmem:[#allocation13 + $0x50] sm:$0xff]
    %v1562 = vld [vmem:[#allocation13 + $0x58] sm:$0xff]
    %v1563 = vld [vmem:[#allocation13 + $0x60] sm:$0xff]
    %v1564 = vld [vmem:[#allocation13 + $0x68] sm:$0xff]
    %v1565 = vld [vmem:[#allocation13 + $0x70] sm:$0xff]
    %v1566 = vld [vmem:[#allocation13 + $0x78] sm:$0xff]
    %v1567 = vld [vmem:[#allocation13 + $0x80] sm:$0xff]
    %v1568 = vld [vmem:[#allocation13 + $0x88] sm:$0xff]
    %v1569 = vld [vmem:[#allocation13 + $0x90] sm:$0xff]
    %v1570 = vld [vmem:[#allocation13 + $0x98] sm:$0xff]
    %v1571 = vld [vmem:[#allocation13 + $0xa0] sm:$0xff]
    %v1572 = vld [vmem:[#allocation13 + $0xa8] sm:$0xff]
    %v1573 = vld [vmem:[#allocation13 + $0xb0] sm:$0xff]
    %v1574 = vld [vmem:[#allocation13 + $0xb8] sm:$0xff]
    %v1575 = vld [vmem:[#allocation13 + $0xc0] sm:$0xff]
    %v1576 = vld [vmem:[#allocation13 + $0xc8] sm:$0xff]
    %v1577 = vld [vmem:[#allocation13 + $0xd0] sm:$0xff]
    %v1578 = vld [vmem:[#allocation13 + $0xd8] sm:$0xff]
    %v1579 = vld [vmem:[#allocation13 + $0xe0] sm:$0xff]
    %v1580 = vld [vmem:[#allocation13 + $0xe8] sm:$0xff]
    %v1581 = vld [vmem:[#allocation13 + $0xf0] sm:$0xff]
    %v1582 = vld [vmem:[#allocation13 + $0xf8] sm:$0xff]
    %v1583 = vld [vmem:[#allocation13 + $0x100] sm:$0xff]
    %v1584 = vld [vmem:[#allocation13 + $0x108] sm:$0xff]
    %v1585 = vld [vmem:[#allocation13 + $0x110] sm:$0xff]
    %v1586 = vld [vmem:[#allocation13 + $0x118] sm:$0xff]
    %v1587 = vld [vmem:[#allocation13 + $0x120] sm:$0xff]
    %v1588 = vld [vmem:[#allocation13 + $0x128] sm:$0xff]
    %v1589 = vld [vmem:[#allocation13 + $0x130] sm:$0xff]
    %v1590 = vld [vmem:[#allocation13 + $0x138] sm:$0xff]
    %v1591 = vld [vmem:[#allocation13 + $0x140] sm:$0xff]
    %v1592 = vld [vmem:[#allocation13 + $0x148] sm:$0xff]
    %v1593 = vld [vmem:[#allocation13 + $0x150] sm:$0xff]
    %v1594 = vld [vmem:[#allocation13 + $0x158] sm:$0xff]
    %v1595 = vld [vmem:[#allocation13 + $0x160] sm:$0xff]
    %v1596 = vld [vmem:[#allocation13 + $0x168] sm:$0xff]
    %v1597 = vld [vmem:[#allocation13 + $0x170] sm:$0xff]
    %v1598 = vld [vmem:[#allocation13 + $0x178] sm:$0xff]
    %v1599 = vld [vmem:[#allocation13 + $0x180] sm:$0xff]
    %v1600 = vld [vmem:[#allocation13 + $0x188] sm:$0xff]
    %v1601 = vld [vmem:[#allocation13 + $0x190] sm:$0xff]
    %v1602 = vld [vmem:[#allocation13 + $0x198] sm:$0xff]
    %v1603 = vld [vmem:[#allocation13 + $0x1a0] sm:$0xff]
    %v1604 = vld [vmem:[#allocation13 + $0x1a8] sm:$0xff]
    %v1605 = vld [vmem:[#allocation13 + $0x1b0] sm:$0xff]
    %v1606 = vld [vmem:[#allocation13 + $0x1b8] sm:$0xff]
    %v1607 = vld [vmem:[#allocation13 + $0x1c0] sm:$0xff]
    %v1608 = vld [vmem:[#allocation13 + $0x1c8] sm:$0xff]
    %v1609 = vld [vmem:[#allocation13 + $0x1d0] sm:$0xff]
    %v1610 = vld [vmem:[#allocation13 + $0x1d8] sm:$0xff]
    %v1611 = vld [vmem:[#allocation13 + $0x1e0] sm:$0xff]
    %v1612 = vld [vmem:[#allocation13 + $0x1e8] sm:$0xff]
    %v1613 = vld [vmem:[#allocation13 + $0x1f0] sm:$0xff]
    %v1614 = vld [vmem:[#allocation13 + $0x1f8] sm:$0xff]
    %v1615 = vld [vmem:[#allocation13 + $0x200] sm:$0xff]
    %v1616 = vld [vmem:[#allocation13 + $0x208] sm:$0xff]
    %v1617 = vld [vmem:[#allocation13 + $0x210] sm:$0xff]
    %v1618 = vld [vmem:[#allocation13 + $0x218] sm:$0xff]
    %v1619 = vld [vmem:[#allocation13 + $0x220] sm:$0xff]
    %v1620 = vld [vmem:[#allocation13 + $0x228] sm:$0xff]
    %v1621 = vld [vmem:[#allocation13 + $0x230] sm:$0xff]
    %v1622 = vld [vmem:[#allocation13 + $0x238] sm:$0xff]
    %v1623 = vld [vmem:[#allocation13 + $0x240] sm:$0xff]
    %v1624 = vld [vmem:[#allocation13 + $0x248] sm:$0xff]
    %v1625 = vld [vmem:[#allocation13 + $0x250] sm:$0xff]
    %v1626 = vld [vmem:[#allocation13 + $0x258] sm:$0xff]
    %v1627 = vld [vmem:[#allocation13 + $0x260] sm:$0xff]
    %v1628 = vld [vmem:[#allocation13 + $0x268] sm:$0xff]
    %v1629 = vld [vmem:[#allocation13 + $0x270] sm:$0xff]
    %v1630 = vld [vmem:[#allocation13 + $0x278] sm:$0xff]
    %v1631 = vld [vmem:[#allocation13 + $0x280] sm:$0xff]
    %v1632 = vld [vmem:[#allocation13 + $0x288] sm:$0xff]
    %v1633 = vld [vmem:[#allocation13 + $0x290] sm:$0xff]
    %v1634 = vld [vmem:[#allocation13 + $0x298] sm:$0xff]
    %v1635 = vld [vmem:[#allocation13 + $0x2a0] sm:$0xff]
    %v1636 = vld [vmem:[#allocation13 + $0x2a8] sm:$0xff]
    %v1637 = vld [vmem:[#allocation13 + $0x2b0] sm:$0xff]
    %v1638 = vld [vmem:[#allocation13 + $0x2b8] sm:$0xff]
    %v1639 = vld [vmem:[#allocation13 + $0x2c0] sm:$0xff]
    %v1640 = vld [vmem:[#allocation13 + $0x2c8] sm:$0xff]
    %v1641 = vld [vmem:[#allocation13 + $0x2d0] sm:$0xff]
    %v1642 = vld [vmem:[#allocation13 + $0x2d8] sm:$0xff]
    %v1643 = vld [vmem:[#allocation13 + $0x2e0] sm:$0xff]
    %v1644 = vld [vmem:[#allocation13 + $0x2e8] sm:$0xff]
    %v1645 = vld [vmem:[#allocation13 + $0x2f0] sm:$0xff]
    %v1646 = vld [vmem:[#allocation13 + $0x2f8] sm:$0xff]
    %v1647 = vld [vmem:[#allocation13 + $0x300] sm:$0xff]
    %v1648 = vld [vmem:[#allocation13 + $0x308] sm:$0xff]
    %v1649 = vld [vmem:[#allocation13 + $0x310] sm:$0xff]
    %v1650 = vld [vmem:[#allocation13 + $0x318] sm:$0xff]
    %v1651 = vld [vmem:[#allocation13 + $0x320] sm:$0xff]
    %v1652 = vld [vmem:[#allocation13 + $0x328] sm:$0xff]
    %v1653 = vld [vmem:[#allocation13 + $0x330] sm:$0xff]
    %v1654 = vld [vmem:[#allocation13 + $0x338] sm:$0xff]
    %v1655 = vld [vmem:[#allocation13 + $0x340] sm:$0xff]
    %v1656 = vld [vmem:[#allocation13 + $0x348] sm:$0xff]
    %v1657 = vld [vmem:[#allocation13 + $0x350] sm:$0xff]
    %v1658 = vld [vmem:[#allocation13 + $0x358] sm:$0xff]
    %v1659 = vld [vmem:[#allocation13 + $0x360] sm:$0xff]
    %v1660 = vld [vmem:[#allocation13 + $0x368] sm:$0xff]
    %v1661 = vld [vmem:[#allocation13 + $0x370] sm:$0xff]
    %v1662 = vld [vmem:[#allocation13 + $0x378] sm:$0xff]
    %v1663 = vld [vmem:[#allocation13 + $0x380] sm:$0xff]
    %v1664 = vld [vmem:[#allocation13 + $0x388] sm:$0xff]
    %v1665 = vld [vmem:[#allocation13 + $0x390] sm:$0xff]
    %v1666 = vld [vmem:[#allocation13 + $0x398] sm:$0xff]
    %v1667 = vld [vmem:[#allocation13 + $0x3a0] sm:$0xff]
    %v1668 = vld [vmem:[#allocation13 + $0x3a8] sm:$0xff]
    %v1669 = vld [vmem:[#allocation13 + $0x3b0] sm:$0xff]
    %v1670 = vld [vmem:[#allocation13 + $0x3b8] sm:$0xff]
    %v1671 = vld [vmem:[#allocation13 + $0x3c0] sm:$0xff]
    %v1672 = vld [vmem:[#allocation13 + $0x3c8] sm:$0xff]
    %v1673 = vld [vmem:[#allocation13 + $0x3d0] sm:$0xff]
    %v1674 = vld [vmem:[#allocation13 + $0x3d8] sm:$0xff]
    %v1675 = vld [vmem:[#allocation13 + $0x3e0] sm:$0xff]
    %v1676 = vld [vmem:[#allocation13 + $0x3e8] sm:$0xff]
    %v1677 = vld [vmem:[#allocation13 + $0x3f0] sm:$0xff]
    %v1678 = vld [vmem:[#allocation13 + $0x3f8] sm:$0xff]
    %v1679 = vld [vmem:[#allocation13 + $0x400] sm:$0xff]
    %v1680 = vld [vmem:[#allocation13 + $0x408] sm:$0xff]
    %v1681 = vld [vmem:[#allocation13 + $0x410] sm:$0xff]
    %v1682 = vld [vmem:[#allocation13 + $0x418] sm:$0xff]
    %v1683 = vld [vmem:[#allocation13 + $0x420] sm:$0xff]
    %v1684 = vld [vmem:[#allocation13 + $0x428] sm:$0xff]
    %v1685 = vld [vmem:[#allocation13 + $0x430] sm:$0xff]
    %v1686 = vld [vmem:[#allocation13 + $0x438] sm:$0xff]
    %v1687 = vld [vmem:[#allocation13 + $0x440] sm:$0xff]
    %v1688 = vld [vmem:[#allocation13 + $0x448] sm:$0xff]
    %v1689 = vld [vmem:[#allocation13 + $0x450] sm:$0xff]
    %v1690 = vld [vmem:[#allocation13 + $0x458] sm:$0xff]
    %v1691 = vld [vmem:[#allocation13 + $0x460] sm:$0xff]
    %v1692 = vld [vmem:[#allocation13 + $0x468] sm:$0xff]
    %v1693 = vld [vmem:[#allocation13 + $0x470] sm:$0xff]
    %v1694 = vld [vmem:[#allocation13 + $0x478] sm:$0xff]
    %v1695 = vld [vmem:[#allocation13 + $0x480] sm:$0xff]
    %v1696 = vld [vmem:[#allocation13 + $0x488] sm:$0xff]
    %v1697 = vld [vmem:[#allocation13 + $0x490] sm:$0xff]
    %v1698 = vld [vmem:[#allocation13 + $0x498] sm:$0xff]
    %v1699 = vld [vmem:[#allocation13 + $0x4a0] sm:$0xff]
    %v1700 = vld [vmem:[#allocation13 + $0x4a8] sm:$0xff]
    %v1701 = vld [vmem:[#allocation13 + $0x4b0] sm:$0xff]
    %v1702 = vld [vmem:[#allocation13 + $0x4b8] sm:$0xff]
    %v1703 = vld [vmem:[#allocation13 + $0x4c0] sm:$0xff]
    %v1704 = vld [vmem:[#allocation13 + $0x4c8] sm:$0xff]
    %v1705 = vld [vmem:[#allocation13 + $0x4d0] sm:$0xff]
    %v1706 = vld [vmem:[#allocation13 + $0x4d8] sm:$0xff]
    %v1707 = vld [vmem:[#allocation13 + $0x4e0] sm:$0xff]
    %v1708 = vld [vmem:[#allocation13 + $0x4e8] sm:$0xff]
    %v1709 = vld [vmem:[#allocation13 + $0x4f0] sm:$0xff]
    %v1710 = vld [vmem:[#allocation13 + $0x4f8] sm:$0xff]
    %v1711 = vld [vmem:[#allocation13 + $0x500] sm:$0xff]
    %v1712 = vld [vmem:[#allocation13 + $0x508] sm:$0xff]
    %v1713 = vld [vmem:[#allocation13 + $0x510] sm:$0xff]
    %v1714 = vld [vmem:[#allocation13 + $0x518] sm:$0xff]
    %v1715 = vld [vmem:[#allocation13 + $0x520] sm:$0xff]
    %v1716 = vld [vmem:[#allocation13 + $0x528] sm:$0xff]
    %v1717 = vld [vmem:[#allocation13 + $0x530] sm:$0xff]
    %v1718 = vld [vmem:[#allocation13 + $0x538] sm:$0xff]
    %v1719 = vld [vmem:[#allocation13 + $0x540] sm:$0xff]
    %v1720 = vld [vmem:[#allocation13 + $0x548] sm:$0xff]
    %v1721 = vld [vmem:[#allocation13 + $0x550] sm:$0xff]
    %v1722 = vld [vmem:[#allocation13 + $0x558] sm:$0xff]
    %v1723 = vld [vmem:[#allocation13 + $0x560] sm:$0xff]
    %v1724 = vld [vmem:[#allocation13 + $0x568] sm:$0xff]
    %v1725 = vld [vmem:[#allocation13 + $0x570] sm:$0xff]
    %v1726 = vld [vmem:[#allocation13 + $0x578] sm:$0xff]
    %v1727 = vld [vmem:[#allocation13 + $0x580] sm:$0xff]
    %v1728 = vld [vmem:[#allocation13 + $0x588] sm:$0xff]
    %v1729 = vld [vmem:[#allocation13 + $0x590] sm:$0xff]
    %v1730 = vld [vmem:[#allocation13 + $0x598] sm:$0xff]
    %v1731 = vld [vmem:[#allocation13 + $0x5a0] sm:$0xff]
    %v1732 = vld [vmem:[#allocation13 + $0x5a8] sm:$0xff]
    %v1733 = vld [vmem:[#allocation13 + $0x5b0] sm:$0xff]
    %v1734 = vld [vmem:[#allocation13 + $0x5b8] sm:$0xff]
    %v1735 = vld [vmem:[#allocation13 + $0x5c0] sm:$0xff]
    %v1736 = vld [vmem:[#allocation13 + $0x5c8] sm:$0xff]
    %v1737 = vld [vmem:[#allocation13 + $0x5d0] sm:$0xff]
    %v1738 = vld [vmem:[#allocation13 + $0x5d8] sm:$0xff]
    %v1739 = vld [vmem:[#allocation13 + $0x5e0] sm:$0xff]
    %v1740 = vld [vmem:[#allocation13 + $0x5e8] sm:$0xff]
    %v1741 = vld [vmem:[#allocation13 + $0x5f0] sm:$0xff]
    %v1742 = vld [vmem:[#allocation13 + $0x5f8] sm:$0xff]
    %v1743 = vld [vmem:[#allocation13 + $0x600] sm:$0xff]
    %v1744 = vld [vmem:[#allocation13 + $0x608] sm:$0xff]
    %v1745 = vld [vmem:[#allocation13 + $0x610] sm:$0xff]
    %v1746 = vld [vmem:[#allocation13 + $0x618] sm:$0xff]
    %v1747 = vld [vmem:[#allocation13 + $0x620] sm:$0xff]
    %v1748 = vld [vmem:[#allocation13 + $0x628] sm:$0xff]
    %v1749 = vld [vmem:[#allocation13 + $0x630] sm:$0xff]
    %v1750 = vld [vmem:[#allocation13 + $0x638] sm:$0xff]
    %v1751 = vld [vmem:[#allocation13 + $0x640] sm:$0xff]
    %v1752 = vld [vmem:[#allocation13 + $0x648] sm:$0xff]
    %v1753 = vld [vmem:[#allocation13 + $0x650] sm:$0xff]
    %v1754 = vld [vmem:[#allocation13 + $0x658] sm:$0xff]
    %v1755 = vld [vmem:[#allocation13 + $0x660] sm:$0xff]
    %v1756 = vld [vmem:[#allocation13 + $0x668] sm:$0xff]
    %v1757 = vld [vmem:[#allocation13 + $0x670] sm:$0xff]
    %v1758 = vld [vmem:[#allocation13 + $0x678] sm:$0xff]
    %v1759 = vld [vmem:[#allocation13 + $0x680] sm:$0xff]
    %v1760 = vld [vmem:[#allocation13 + $0x688] sm:$0xff]
    %v1761 = vld [vmem:[#allocation13 + $0x690] sm:$0xff]
    %v1762 = vld [vmem:[#allocation13 + $0x698] sm:$0xff]
    %v1763 = vld [vmem:[#allocation13 + $0x6a0] sm:$0xff]
    %v1764 = vld [vmem:[#allocation13 + $0x6a8] sm:$0xff]
    %v1765 = vld [vmem:[#allocation13 + $0x6b0] sm:$0xff]
    %v1766 = vld [vmem:[#allocation13 + $0x6b8] sm:$0xff]
    %v1767 = vld [vmem:[#allocation13 + $0x6c0] sm:$0xff]
    %v1768 = vld [vmem:[#allocation13 + $0x6c8] sm:$0xff]
    %v1769 = vld [vmem:[#allocation13 + $0x6d0] sm:$0xff]
    %v1770 = vld [vmem:[#allocation13 + $0x6d8] sm:$0xff]
    %v1771 = vld [vmem:[#allocation13 + $0x6e0] sm:$0xff]
    %v1772 = vld [vmem:[#allocation13 + $0x6e8] sm:$0xff]
    %v1773 = vld [vmem:[#allocation13 + $0x6f0] sm:$0xff]
    %v1774 = vld [vmem:[#allocation13 + $0x6f8] sm:$0xff]
    %v1775 = vld [vmem:[#allocation13 + $0x700] sm:$0xff]
    %v1776 = vld [vmem:[#allocation13 + $0x708] sm:$0xff]
    %v1777 = vld [vmem:[#allocation13 + $0x710] sm:$0xff]
    %v1778 = vld [vmem:[#allocation13 + $0x718] sm:$0xff]
    %v1779 = vld [vmem:[#allocation13 + $0x720] sm:$0xff]
    %v1780 = vld [vmem:[#allocation13 + $0x728] sm:$0xff]
    %v1781 = vld [vmem:[#allocation13 + $0x730] sm:$0xff]
    %v1782 = vld [vmem:[#allocation13 + $0x738] sm:$0xff]
    %v1783 = vld [vmem:[#allocation13 + $0x740] sm:$0xff]
    %v1784 = vld [vmem:[#allocation13 + $0x748] sm:$0xff]
    %v1785 = vld [vmem:[#allocation13 + $0x750] sm:$0xff]
    %v1786 = vld [vmem:[#allocation13 + $0x758] sm:$0xff]
    %v1787 = vld [vmem:[#allocation13 + $0x760] sm:$0xff]
    %v1788 = vld [vmem:[#allocation13 + $0x768] sm:$0xff]
    %v1789 = vld [vmem:[#allocation13 + $0x770] sm:$0xff]
    %v1790 = vld [vmem:[#allocation13 + $0x778] sm:$0xff]
    %v1791 = vld [vmem:[#allocation13 + $0x780] sm:$0xff]
    %v1792 = vld [vmem:[#allocation13 + $0x788] sm:$0xff]
    %v1793 = vld [vmem:[#allocation13 + $0x790] sm:$0xff]
    %v1794 = vld [vmem:[#allocation13 + $0x798] sm:$0xff]
    %v1795 = vld [vmem:[#allocation13 + $0x7a0] sm:$0xff]
    %v1796 = vld [vmem:[#allocation13 + $0x7a8] sm:$0xff]
    %v1797 = vld [vmem:[#allocation13 + $0x7b0] sm:$0xff]
    %v1798 = vld [vmem:[#allocation13 + $0x7b8] sm:$0xff]
    %v1799 = vld [vmem:[#allocation13 + $0x7c0] sm:$0xff]
    %v1800 = vld [vmem:[#allocation13 + $0x7c8] sm:$0xff]
    %v1801 = vld [vmem:[#allocation13 + $0x7d0] sm:$0xff]
    %v1802 = vld [vmem:[#allocation13 + $0x7d8] sm:$0xff]
    %v1803 = vld [vmem:[#allocation13 + $0x7e0] sm:$0xff]
    %v1804 = vld [vmem:[#allocation13 + $0x7e8] sm:$0xff]
    %v1805 = vld [vmem:[#allocation13 + $0x7f0] sm:$0xff]
    %v1806 = vld [vmem:[#allocation13 + $0x7f8] sm:$0xff]
    %v1807 = vld [vmem:[#allocation14] sm:$0xff]
    %v1809 = vperm.slane %v1807, 0
    %v1810 = vperm.slane %v1807, 1
    %v1811 = vperm.slane %v1807, 2
    %v1812 = vperm.slane %v1807, 3
    %v1813 = vperm.slane %v1807, 4
    %v1814 = vperm.slane %v1807, 5
    %v1815 = vperm.slane %v1807, 6
    %v1816 = vperm.slane %v1807, 7
    %v2081 = vunpack.c.l.b16 %v1551
    %v2082 = vunpack.c.h.b16 %v1551
    %v2083 = vunpack.c.l.b16 %v1552
    %v2084 = vunpack.c.h.b16 %v1552
    %v2085 = vunpack.c.l.b16 %v1553
    %v2086 = vunpack.c.h.b16 %v1553
    %v2087 = vunpack.c.l.b16 %v1554
    %v2088 = vunpack.c.h.b16 %v1554
    %v2089 = vunpack.c.l.b16 %v1555
    %v2090 = vunpack.c.h.b16 %v1555
    %v2091 = vunpack.c.l.b16 %v1556
    %v2092 = vunpack.c.h.b16 %v1556
    %v2093 = vunpack.c.l.b16 %v1557
    %v2094 = vunpack.c.h.b16 %v1557
    %v2095 = vunpack.c.l.b16 %v1558
    %v2096 = vunpack.c.h.b16 %v1558
    %v2097 = vunpack.c.l.b16 %v1559
    %v2098 = vunpack.c.h.b16 %v1559
    %v2099 = vunpack.c.l.b16 %v1560
    %v2100 = vunpack.c.h.b16 %v1560
    %v2101 = vunpack.c.l.b16 %v1561
    %v2102 = vunpack.c.h.b16 %v1561
    %v2103 = vunpack.c.l.b16 %v1562
    %v2104 = vunpack.c.h.b16 %v1562
    %v2105 = vunpack.c.l.b16 %v1563
    %v2106 = vunpack.c.h.b16 %v1563
    %v2107 = vunpack.c.l.b16 %v1564
    %v2108 = vunpack.c.h.b16 %v1564
    %v2109 = vunpack.c.l.b16 %v1565
    %v2110 = vunpack.c.h.b16 %v1565
    %v2111 = vunpack.c.l.b16 %v1566
    %v2112 = vunpack.c.h.b16 %v1566
    %v2113 = vunpack.c.l.b16 %v1567
    %v2114 = vunpack.c.h.b16 %v1567
    %v2115 = vunpack.c.l.b16 %v1568
    %v2116 = vunpack.c.h.b16 %v1568
    %v2117 = vunpack.c.l.b16 %v1569
    %v2118 = vunpack.c.h.b16 %v1569
    %v2119 = vunpack.c.l.b16 %v1570
    %v2120 = vunpack.c.h.b16 %v1570
    %v2121 = vunpack.c.l.b16 %v1571
    %v2122 = vunpack.c.h.b16 %v1571
    %v2123 = vunpack.c.l.b16 %v1572
    %v2124 = vunpack.c.h.b16 %v1572
    %v2125 = vunpack.c.l.b16 %v1573
    %v2126 = vunpack.c.h.b16 %v1573
    %v2127 = vunpack.c.l.b16 %v1574
    %v2128 = vunpack.c.h.b16 %v1574
    %v2129 = vunpack.c.l.b16 %v1575
    %v2130 = vunpack.c.h.b16 %v1575
    %v2131 = vunpack.c.l.b16 %v1576
    %v2132 = vunpack.c.h.b16 %v1576
    %v2133 = vunpack.c.l.b16 %v1577
    %v2134 = vunpack.c.h.b16 %v1577
    %v2135 = vunpack.c.l.b16 %v1578
    %v2136 = vunpack.c.h.b16 %v1578
    %v2137 = vunpack.c.l.b16 %v1579
    %v2138 = vunpack.c.h.b16 %v1579
    %v2139 = vunpack.c.l.b16 %v1580
    %v2140 = vunpack.c.h.b16 %v1580
    %v2141 = vunpack.c.l.b16 %v1581
    %v2142 = vunpack.c.h.b16 %v1581
    %v2143 = vunpack.c.l.b16 %v1582
    %v2144 = vunpack.c.h.b16 %v1582
    %v2145 = vunpack.c.l.b16 %v1583
    %v2146 = vunpack.c.h.b16 %v1583
    %v2147 = vunpack.c.l.b16 %v1584
    %v2148 = vunpack.c.h.b16 %v1584
    %v2149 = vunpack.c.l.b16 %v1585
    %v2150 = vunpack.c.h.b16 %v1585
    %v2151 = vunpack.c.l.b16 %v1586
    %v2152 = vunpack.c.h.b16 %v1586
    %v2153 = vunpack.c.l.b16 %v1587
    %v2154 = vunpack.c.h.b16 %v1587
    %v2155 = vunpack.c.l.b16 %v1588
    %v2156 = vunpack.c.h.b16 %v1588
    %v2157 = vunpack.c.l.b16 %v1589
    %v2158 = vunpack.c.h.b16 %v1589
    %v2159 = vunpack.c.l.b16 %v1590
    %v2160 = vunpack.c.h.b16 %v1590
    %v2161 = vunpack.c.l.b16 %v1591
    %v2162 = vunpack.c.h.b16 %v1591
    %v2163 = vunpack.c.l.b16 %v1592
    %v2164 = vunpack.c.h.b16 %v1592
    %v2165 = vunpack.c.l.b16 %v1593
    %v2166 = vunpack.c.h.b16 %v1593
    %v2167 = vunpack.c.l.b16 %v1594
    %v2168 = vunpack.c.h.b16 %v1594
    %v2169 = vunpack.c.l.b16 %v1595
    %v2170 = vunpack.c.h.b16 %v1595
    %v2171 = vunpack.c.l.b16 %v1596
    %v2172 = vunpack.c.h.b16 %v1596
    %v2173 = vunpack.c.l.b16 %v1597
    %v2174 = vunpack.c.h.b16 %v1597
    %v2175 = vunpack.c.l.b16 %v1598
    %v2176 = vunpack.c.h.b16 %v1598
    %v2177 = vunpack.c.l.b16 %v1599
    %v2178 = vunpack.c.h.b16 %v1599
    %v2179 = vunpack.c.l.b16 %v1600
    %v2180 = vunpack.c.h.b16 %v1600
    %v2181 = vunpack.c.l.b16 %v1601
    %v2182 = vunpack.c.h.b16 %v1601
    %v2183 = vunpack.c.l.b16 %v1602
    %v2184 = vunpack.c.h.b16 %v1602
    %v2185 = vunpack.c.l.b16 %v1603
    %v2186 = vunpack.c.h.b16 %v1603
    %v2187 = vunpack.c.l.b16 %v1604
    %v2188 = vunpack.c.h.b16 %v1604
    %v2189 = vunpack.c.l.b16 %v1605
    %v2190 = vunpack.c.h.b16 %v1605
    %v2191 = vunpack.c.l.b16 %v1606
    %v2192 = vunpack.c.h.b16 %v1606
    %v2193 = vunpack.c.l.b16 %v1607
    %v2194 = vunpack.c.h.b16 %v1607
    %v2195 = vunpack.c.l.b16 %v1608
    %v2196 = vunpack.c.h.b16 %v1608
    %v2197 = vunpack.c.l.b16 %v1609
    %v2198 = vunpack.c.h.b16 %v1609
    %v2199 = vunpack.c.l.b16 %v1610
    %v2200 = vunpack.c.h.b16 %v1610
    %v2201 = vunpack.c.l.b16 %v1611
    %v2202 = vunpack.c.h.b16 %v1611
    %v2203 = vunpack.c.l.b16 %v1612
    %v2204 = vunpack.c.h.b16 %v1612
    %v2205 = vunpack.c.l.b16 %v1613
    %v2206 = vunpack.c.h.b16 %v1613
    %v2207 = vunpack.c.l.b16 %v1614
    %v2208 = vunpack.c.h.b16 %v1614
    %v2209 = vunpack.c.l.b16 %v1615
    %v2210 = vunpack.c.h.b16 %v1615
    %v2211 = vunpack.c.l.b16 %v1616
    %v2212 = vunpack.c.h.b16 %v1616
    %v2213 = vunpack.c.l.b16 %v1617
    %v2214 = vunpack.c.h.b16 %v1617
    %v2215 = vunpack.c.l.b16 %v1618
    %v2216 = vunpack.c.h.b16 %v1618
    %v2217 = vunpack.c.l.b16 %v1619
    %v2218 = vunpack.c.h.b16 %v1619
    %v2219 = vunpack.c.l.b16 %v1620
    %v2220 = vunpack.c.h.b16 %v1620
    %v2221 = vunpack.c.l.b16 %v1621
    %v2222 = vunpack.c.h.b16 %v1621
    %v2223 = vunpack.c.l.b16 %v1622
    %v2224 = vunpack.c.h.b16 %v1622
    %v2225 = vunpack.c.l.b16 %v1623
    %v2226 = vunpack.c.h.b16 %v1623
    %v2227 = vunpack.c.l.b16 %v1624
    %v2228 = vunpack.c.h.b16 %v1624
    %v2229 = vunpack.c.l.b16 %v1625
    %v2230 = vunpack.c.h.b16 %v1625
    %v2231 = vunpack.c.l.b16 %v1626
    %v2232 = vunpack.c.h.b16 %v1626
    %v2233 = vunpack.c.l.b16 %v1627
    %v2234 = vunpack.c.h.b16 %v1627
    %v2235 = vunpack.c.l.b16 %v1628
    %v2236 = vunpack.c.h.b16 %v1628
    %v2237 = vunpack.c.l.b16 %v1629
    %v2238 = vunpack.c.h.b16 %v1629
    %v2239 = vunpack.c.l.b16 %v1630
    %v2240 = vunpack.c.h.b16 %v1630
    %v2241 = vunpack.c.l.b16 %v1631
    %v2242 = vunpack.c.h.b16 %v1631
    %v2243 = vunpack.c.l.b16 %v1632
    %v2244 = vunpack.c.h.b16 %v1632
    %v2245 = vunpack.c.l.b16 %v1633
    %v2246 = vunpack.c.h.b16 %v1633
    %v2247 = vunpack.c.l.b16 %v1634
    %v2248 = vunpack.c.h.b16 %v1634
    %v2249 = vunpack.c.l.b16 %v1635
    %v2250 = vunpack.c.h.b16 %v1635
    %v2251 = vunpack.c.l.b16 %v1636
    %v2252 = vunpack.c.h.b16 %v1636
    %v2253 = vunpack.c.l.b16 %v1637
    %v2254 = vunpack.c.h.b16 %v1637
    %v2255 = vunpack.c.l.b16 %v1638
    %v2256 = vunpack.c.h.b16 %v1638
    %v2257 = vunpack.c.l.b16 %v1639
    %v2258 = vunpack.c.h.b16 %v1639
    %v2259 = vunpack.c.l.b16 %v1640
    %v2260 = vunpack.c.h.b16 %v1640
    %v2261 = vunpack.c.l.b16 %v1641
    %v2262 = vunpack.c.h.b16 %v1641
    %v2263 = vunpack.c.l.b16 %v1642
    %v2264 = vunpack.c.h.b16 %v1642
    %v2265 = vunpack.c.l.b16 %v1643
    %v2266 = vunpack.c.h.b16 %v1643
    %v2267 = vunpack.c.l.b16 %v1644
    %v2268 = vunpack.c.h.b16 %v1644
    %v2269 = vunpack.c.l.b16 %v1645
    %v2270 = vunpack.c.h.b16 %v1645
    %v2271 = vunpack.c.l.b16 %v1646
    %v2272 = vunpack.c.h.b16 %v1646
    %v2273 = vunpack.c.l.b16 %v1647
    %v2274 = vunpack.c.h.b16 %v1647
    %v2275 = vunpack.c.l.b16 %v1648
    %v2276 = vunpack.c.h.b16 %v1648
    %v2277 = vunpack.c.l.b16 %v1649
    %v2278 = vunpack.c.h.b16 %v1649
    %v2279 = vunpack.c.l.b16 %v1650
    %v2280 = vunpack.c.h.b16 %v1650
    %v2281 = vunpack.c.l.b16 %v1651
    %v2282 = vunpack.c.h.b16 %v1651
    %v2283 = vunpack.c.l.b16 %v1652
    %v2284 = vunpack.c.h.b16 %v1652
    %v2285 = vunpack.c.l.b16 %v1653
    %v2286 = vunpack.c.h.b16 %v1653
    %v2287 = vunpack.c.l.b16 %v1654
    %v2288 = vunpack.c.h.b16 %v1654
    %v2289 = vunpack.c.l.b16 %v1655
    %v2290 = vunpack.c.h.b16 %v1655
    %v2291 = vunpack.c.l.b16 %v1656
    %v2292 = vunpack.c.h.b16 %v1656
    %v2293 = vunpack.c.l.b16 %v1657
    %v2294 = vunpack.c.h.b16 %v1657
    %v2295 = vunpack.c.l.b16 %v1658
    %v2296 = vunpack.c.h.b16 %v1658
    %v2297 = vunpack.c.l.b16 %v1659
    %v2298 = vunpack.c.h.b16 %v1659
    %v2299 = vunpack.c.l.b16 %v1660
    %v2300 = vunpack.c.h.b16 %v1660
    %v2301 = vunpack.c.l.b16 %v1661
    %v2302 = vunpack.c.h.b16 %v1661
    %v2303 = vunpack.c.l.b16 %v1662
    %v2304 = vunpack.c.h.b16 %v1662
    %v2305 = vunpack.c.l.b16 %v1663
    %v2306 = vunpack.c.h.b16 %v1663
    %v2307 = vunpack.c.l.b16 %v1664
    %v2308 = vunpack.c.h.b16 %v1664
    %v2309 = vunpack.c.l.b16 %v1665
    %v2310 = vunpack.c.h.b16 %v1665
    %v2311 = vunpack.c.l.b16 %v1666
    %v2312 = vunpack.c.h.b16 %v1666
    %v2313 = vunpack.c.l.b16 %v1667
    %v2314 = vunpack.c.h.b16 %v1667
    %v2315 = vunpack.c.l.b16 %v1668
    %v2316 = vunpack.c.h.b16 %v1668
    %v2317 = vunpack.c.l.b16 %v1669
    %v2318 = vunpack.c.h.b16 %v1669
    %v2319 = vunpack.c.l.b16 %v1670
    %v2320 = vunpack.c.h.b16 %v1670
    %v2321 = vunpack.c.l.b16 %v1671
    %v2322 = vunpack.c.h.b16 %v1671
    %v2323 = vunpack.c.l.b16 %v1672
    %v2324 = vunpack.c.h.b16 %v1672
    %v2325 = vunpack.c.l.b16 %v1673
    %v2326 = vunpack.c.h.b16 %v1673
    %v2327 = vunpack.c.l.b16 %v1674
    %v2328 = vunpack.c.h.b16 %v1674
    %v2329 = vunpack.c.l.b16 %v1675
    %v2330 = vunpack.c.h.b16 %v1675
    %v2331 = vunpack.c.l.b16 %v1676
    %v2332 = vunpack.c.h.b16 %v1676
    %v2333 = vunpack.c.l.b16 %v1677
    %v2334 = vunpack.c.h.b16 %v1677
    %v2335 = vunpack.c.l.b16 %v1678
    %v2336 = vunpack.c.h.b16 %v1678
    %v2337 = vunpack.c.l.b16 %v1679
    %v2338 = vunpack.c.h.b16 %v1679
    %v2339 = vunpack.c.l.b16 %v1680
    %v2340 = vunpack.c.h.b16 %v1680
    %v2341 = vunpack.c.l.b16 %v1681
    %v2342 = vunpack.c.h.b16 %v1681
    %v2343 = vunpack.c.l.b16 %v1682
    %v2344 = vunpack.c.h.b16 %v1682
    %v2345 = vunpack.c.l.b16 %v1683
    %v2346 = vunpack.c.h.b16 %v1683
    %v2347 = vunpack.c.l.b16 %v1684
    %v2348 = vunpack.c.h.b16 %v1684
    %v2349 = vunpack.c.l.b16 %v1685
    %v2350 = vunpack.c.h.b16 %v1685
    %v2351 = vunpack.c.l.b16 %v1686
    %v2352 = vunpack.c.h.b16 %v1686
    %v2353 = vunpack.c.l.b16 %v1687
    %v2354 = vunpack.c.h.b16 %v1687
    %v2355 = vunpack.c.l.b16 %v1688
    %v2356 = vunpack.c.h.b16 %v1688
    %v2357 = vunpack.c.l.b16 %v1689
    %v2358 = vunpack.c.h.b16 %v1689
    %v2359 = vunpack.c.l.b16 %v1690
    %v2360 = vunpack.c.h.b16 %v1690
    %v2361 = vunpack.c.l.b16 %v1691
    %v2362 = vunpack.c.h.b16 %v1691
    %v2363 = vunpack.c.l.b16 %v1692
    %v2364 = vunpack.c.h.b16 %v1692
    %v2365 = vunpack.c.l.b16 %v1693
    %v2366 = vunpack.c.h.b16 %v1693
    %v2367 = vunpack.c.l.b16 %v1694
    %v2368 = vunpack.c.h.b16 %v1694
    %v2369 = vunpack.c.l.b16 %v1695
    %v2370 = vunpack.c.h.b16 %v1695
    %v2371 = vunpack.c.l.b16 %v1696
    %v2372 = vunpack.c.h.b16 %v1696
    %v2373 = vunpack.c.l.b16 %v1697
    %v2374 = vunpack.c.h.b16 %v1697
    %v2375 = vunpack.c.l.b16 %v1698
    %v2376 = vunpack.c.h.b16 %v1698
    %v2377 = vunpack.c.l.b16 %v1699
    %v2378 = vunpack.c.h.b16 %v1699
    %v2379 = vunpack.c.l.b16 %v1700
    %v2380 = vunpack.c.h.b16 %v1700
    %v2381 = vunpack.c.l.b16 %v1701
    %v2382 = vunpack.c.h.b16 %v1701
    %v2383 = vunpack.c.l.b16 %v1702
    %v2384 = vunpack.c.h.b16 %v1702
    %v2385 = vunpack.c.l.b16 %v1703
    %v2386 = vunpack.c.h.b16 %v1703
    %v2387 = vunpack.c.l.b16 %v1704
    %v2388 = vunpack.c.h.b16 %v1704
    %v2389 = vunpack.c.l.b16 %v1705
    %v2390 = vunpack.c.h.b16 %v1705
    %v2391 = vunpack.c.l.b16 %v1706
    %v2392 = vunpack.c.h.b16 %v1706
    %v2393 = vunpack.c.l.b16 %v1707
    %v2394 = vunpack.c.h.b16 %v1707
    %v2395 = vunpack.c.l.b16 %v1708
    %v2396 = vunpack.c.h.b16 %v1708
    %v2397 = vunpack.c.l.b16 %v1709
    %v2398 = vunpack.c.h.b16 %v1709
    %v2399 = vunpack.c.l.b16 %v1710
    %v2400 = vunpack.c.h.b16 %v1710
    %v2401 = vunpack.c.l.b16 %v1711
    %v2402 = vunpack.c.h.b16 %v1711
    %v2403 = vunpack.c.l.b16 %v1712
    %v2404 = vunpack.c.h.b16 %v1712
    %v2405 = vunpack.c.l.b16 %v1713
    %v2406 = vunpack.c.h.b16 %v1713
    %v2407 = vunpack.c.l.b16 %v1714
    %v2408 = vunpack.c.h.b16 %v1714
    %v2409 = vunpack.c.l.b16 %v1715
    %v2410 = vunpack.c.h.b16 %v1715
    %v2411 = vunpack.c.l.b16 %v1716
    %v2412 = vunpack.c.h.b16 %v1716
    %v2413 = vunpack.c.l.b16 %v1717
    %v2414 = vunpack.c.h.b16 %v1717
    %v2415 = vunpack.c.l.b16 %v1718
    %v2416 = vunpack.c.h.b16 %v1718
    %v2417 = vunpack.c.l.b16 %v1719
    %v2418 = vunpack.c.h.b16 %v1719
    %v2419 = vunpack.c.l.b16 %v1720
    %v2420 = vunpack.c.h.b16 %v1720
    %v2421 = vunpack.c.l.b16 %v1721
    %v2422 = vunpack.c.h.b16 %v1721
    %v2423 = vunpack.c.l.b16 %v1722
    %v2424 = vunpack.c.h.b16 %v1722
    %v2425 = vunpack.c.l.b16 %v1723
    %v2426 = vunpack.c.h.b16 %v1723
    %v2427 = vunpack.c.l.b16 %v1724
    %v2428 = vunpack.c.h.b16 %v1724
    %v2429 = vunpack.c.l.b16 %v1725
    %v2430 = vunpack.c.h.b16 %v1725
    %v2431 = vunpack.c.l.b16 %v1726
    %v2432 = vunpack.c.h.b16 %v1726
    %v2433 = vunpack.c.l.b16 %v1727
    %v2434 = vunpack.c.h.b16 %v1727
    %v2435 = vunpack.c.l.b16 %v1728
    %v2436 = vunpack.c.h.b16 %v1728
    %v2437 = vunpack.c.l.b16 %v1729
    %v2438 = vunpack.c.h.b16 %v1729
    %v2439 = vunpack.c.l.b16 %v1730
    %v2440 = vunpack.c.h.b16 %v1730
    %v2441 = vunpack.c.l.b16 %v1731
    %v2442 = vunpack.c.h.b16 %v1731
    %v2443 = vunpack.c.l.b16 %v1732
    %v2444 = vunpack.c.h.b16 %v1732
    %v2445 = vunpack.c.l.b16 %v1733
    %v2446 = vunpack.c.h.b16 %v1733
    %v2447 = vunpack.c.l.b16 %v1734
    %v2448 = vunpack.c.h.b16 %v1734
    %v2449 = vunpack.c.l.b16 %v1735
    %v2450 = vunpack.c.h.b16 %v1735
    %v2451 = vunpack.c.l.b16 %v1736
    %v2452 = vunpack.c.h.b16 %v1736
    %v2453 = vunpack.c.l.b16 %v1737
    %v2454 = vunpack.c.h.b16 %v1737
    %v2455 = vunpack.c.l.b16 %v1738
    %v2456 = vunpack.c.h.b16 %v1738
    %v2457 = vunpack.c.l.b16 %v1739
    %v2458 = vunpack.c.h.b16 %v1739
    %v2459 = vunpack.c.l.b16 %v1740
    %v2460 = vunpack.c.h.b16 %v1740
    %v2461 = vunpack.c.l.b16 %v1741
    %v2462 = vunpack.c.h.b16 %v1741
    %v2463 = vunpack.c.l.b16 %v1742
    %v2464 = vunpack.c.h.b16 %v1742
    %v2465 = vunpack.c.l.b16 %v1743
    %v2466 = vunpack.c.h.b16 %v1743
    %v2467 = vunpack.c.l.b16 %v1744
    %v2468 = vunpack.c.h.b16 %v1744
    %v2469 = vunpack.c.l.b16 %v1745
    %v2470 = vunpack.c.h.b16 %v1745
    %v2471 = vunpack.c.l.b16 %v1746
    %v2472 = vunpack.c.h.b16 %v1746
    %v2473 = vunpack.c.l.b16 %v1747
    %v2474 = vunpack.c.h.b16 %v1747
    %v2475 = vunpack.c.l.b16 %v1748
    %v2476 = vunpack.c.h.b16 %v1748
    %v2477 = vunpack.c.l.b16 %v1749
    %v2478 = vunpack.c.h.b16 %v1749
    %v2479 = vunpack.c.l.b16 %v1750
    %v2480 = vunpack.c.h.b16 %v1750
    %v2481 = vunpack.c.l.b16 %v1751
    %v2482 = vunpack.c.h.b16 %v1751
    %v2483 = vunpack.c.l.b16 %v1752
    %v2484 = vunpack.c.h.b16 %v1752
    %v2485 = vunpack.c.l.b16 %v1753
    %v2486 = vunpack.c.h.b16 %v1753
    %v2487 = vunpack.c.l.b16 %v1754
    %v2488 = vunpack.c.h.b16 %v1754
    %v2489 = vunpack.c.l.b16 %v1755
    %v2490 = vunpack.c.h.b16 %v1755
    %v2491 = vunpack.c.l.b16 %v1756
    %v2492 = vunpack.c.h.b16 %v1756
    %v2493 = vunpack.c.l.b16 %v1757
    %v2494 = vunpack.c.h.b16 %v1757
    %v2495 = vunpack.c.l.b16 %v1758
    %v2496 = vunpack.c.h.b16 %v1758
    %v2497 = vunpack.c.l.b16 %v1759
    %v2498 = vunpack.c.h.b16 %v1759
    %v2499 = vunpack.c.l.b16 %v1760
    %v2500 = vunpack.c.h.b16 %v1760
    %v2501 = vunpack.c.l.b16 %v1761
    %v2502 = vunpack.c.h.b16 %v1761
    %v2503 = vunpack.c.l.b16 %v1762
    %v2504 = vunpack.c.h.b16 %v1762
    %v2505 = vunpack.c.l.b16 %v1763
    %v2506 = vunpack.c.h.b16 %v1763
    %v2507 = vunpack.c.l.b16 %v1764
    %v2508 = vunpack.c.h.b16 %v1764
    %v2509 = vunpack.c.l.b16 %v1765
    %v2510 = vunpack.c.h.b16 %v1765
    %v2511 = vunpack.c.l.b16 %v1766
    %v2512 = vunpack.c.h.b16 %v1766
    %v2513 = vunpack.c.l.b16 %v1767
    %v2514 = vunpack.c.h.b16 %v1767
    %v2515 = vunpack.c.l.b16 %v1768
    %v2516 = vunpack.c.h.b16 %v1768
    %v2517 = vunpack.c.l.b16 %v1769
    %v2518 = vunpack.c.h.b16 %v1769
    %v2519 = vunpack.c.l.b16 %v1770
    %v2520 = vunpack.c.h.b16 %v1770
    %v2521 = vunpack.c.l.b16 %v1771
    %v2522 = vunpack.c.h.b16 %v1771
    %v2523 = vunpack.c.l.b16 %v1772
    %v2524 = vunpack.c.h.b16 %v1772
    %v2525 = vunpack.c.l.b16 %v1773
    %v2526 = vunpack.c.h.b16 %v1773
    %v2527 = vunpack.c.l.b16 %v1774
    %v2528 = vunpack.c.h.b16 %v1774
    %v2529 = vunpack.c.l.b16 %v1775
    %v2530 = vunpack.c.h.b16 %v1775
    %v2531 = vunpack.c.l.b16 %v1776
    %v2532 = vunpack.c.h.b16 %v1776
    %v2533 = vunpack.c.l.b16 %v1777
    %v2534 = vunpack.c.h.b16 %v1777
    %v2535 = vunpack.c.l.b16 %v1778
    %v2536 = vunpack.c.h.b16 %v1778
    %v2537 = vunpack.c.l.b16 %v1779
    %v2538 = vunpack.c.h.b16 %v1779
    %v2539 = vunpack.c.l.b16 %v1780
    %v2540 = vunpack.c.h.b16 %v1780
    %v2541 = vunpack.c.l.b16 %v1781
    %v2542 = vunpack.c.h.b16 %v1781
    %v2543 = vunpack.c.l.b16 %v1782
    %v2544 = vunpack.c.h.b16 %v1782
    %v2545 = vunpack.c.l.b16 %v1783
    %v2546 = vunpack.c.h.b16 %v1783
    %v2547 = vunpack.c.l.b16 %v1784
    %v2548 = vunpack.c.h.b16 %v1784
    %v2549 = vunpack.c.l.b16 %v1785
    %v2550 = vunpack.c.h.b16 %v1785
    %v2551 = vunpack.c.l.b16 %v1786
    %v2552 = vunpack.c.h.b16 %v1786
    %v2553 = vunpack.c.l.b16 %v1787
    %v2554 = vunpack.c.h.b16 %v1787
    %v2555 = vunpack.c.l.b16 %v1788
    %v2556 = vunpack.c.h.b16 %v1788
    %v2557 = vunpack.c.l.b16 %v1789
    %v2558 = vunpack.c.h.b16 %v1789
    %v2559 = vunpack.c.l.b16 %v1790
    %v2560 = vunpack.c.h.b16 %v1790
    %v2561 = vunpack.c.l.b16 %v1791
    %v2562 = vunpack.c.h.b16 %v1791
    %v2563 = vunpack.c.l.b16 %v1792
    %v2564 = vunpack.c.h.b16 %v1792
    %v2565 = vunpack.c.l.b16 %v1793
    %v2566 = vunpack.c.h.b16 %v1793
    %v2567 = vunpack.c.l.b16 %v1794
    %v2568 = vunpack.c.h.b16 %v1794
    %v2569 = vunpack.c.l.b16 %v1795
    %v2570 = vunpack.c.h.b16 %v1795
    %v2571 = vunpack.c.l.b16 %v1796
    %v2572 = vunpack.c.h.b16 %v1796
    %v2573 = vunpack.c.l.b16 %v1797
    %v2574 = vunpack.c.h.b16 %v1797
    %v2575 = vunpack.c.l.b16 %v1798
    %v2576 = vunpack.c.h.b16 %v1798
    %v2577 = vunpack.c.l.b16 %v1799
    %v2578 = vunpack.c.h.b16 %v1799
    %v2579 = vunpack.c.l.b16 %v1800
    %v2580 = vunpack.c.h.b16 %v1800
    %v2581 = vunpack.c.l.b16 %v1801
    %v2582 = vunpack.c.h.b16 %v1801
    %v2583 = vunpack.c.l.b16 %v1802
    %v2584 = vunpack.c.h.b16 %v1802
    %v2585 = vunpack.c.l.b16 %v1803
    %v2586 = vunpack.c.h.b16 %v1803
    %v2587 = vunpack.c.l.b16 %v1804
    %v2588 = vunpack.c.h.b16 %v1804
    %v2589 = vunpack.c.l.b16 %v1805
    %v2590 = vunpack.c.h.b16 %v1805
    %v2591 = vunpack.c.l.b16 %v1806
    %v2592 = vunpack.c.h.b16 %v1806
    %v2593 = vpack.c.b16 %v2089, %v2081
    %v2594 = vpack.c.b16 %v2090, %v2082
    %v2595 = vpack.c.b16 %v2091, %v2083
    %v2596 = vpack.c.b16 %v2092, %v2084
    %v2597 = vpack.c.b16 %v2093, %v2085
    %v2598 = vpack.c.b16 %v2094, %v2086
    %v2599 = vpack.c.b16 %v2095, %v2087
    %v2600 = vpack.c.b16 %v2096, %v2088
    %v2601 = vpack.c.b16 %v2105, %v2097
    %v2602 = vpack.c.b16 %v2106, %v2098
    %v2603 = vpack.c.b16 %v2107, %v2099
    %v2604 = vpack.c.b16 %v2108, %v2100
    %v2605 = vpack.c.b16 %v2109, %v2101
    %v2606 = vpack.c.b16 %v2110, %v2102
    %v2607 = vpack.c.b16 %v2111, %v2103
    %v2608 = vpack.c.b16 %v2112, %v2104
    %v2609 = vpack.c.b16 %v2121, %v2113
    %v2610 = vpack.c.b16 %v2122, %v2114
    %v2611 = vpack.c.b16 %v2123, %v2115
    %v2612 = vpack.c.b16 %v2124, %v2116
    %v2613 = vpack.c.b16 %v2125, %v2117
    %v2614 = vpack.c.b16 %v2126, %v2118
    %v2615 = vpack.c.b16 %v2127, %v2119
    %v2616 = vpack.c.b16 %v2128, %v2120
    %v2617 = vpack.c.b16 %v2137, %v2129
    %v2618 = vpack.c.b16 %v2138, %v2130
    %v2619 = vpack.c.b16 %v2139, %v2131
    %v2620 = vpack.c.b16 %v2140, %v2132
    %v2621 = vpack.c.b16 %v2141, %v2133
    %v2622 = vpack.c.b16 %v2142, %v2134
    %v2623 = vpack.c.b16 %v2143, %v2135
    %v2624 = vpack.c.b16 %v2144, %v2136
    %v2625 = vpack.c.b16 %v2153, %v2145
    %v2626 = vpack.c.b16 %v2154, %v2146
    %v2627 = vpack.c.b16 %v2155, %v2147
    %v2628 = vpack.c.b16 %v2156, %v2148
    %v2629 = vpack.c.b16 %v2157, %v2149
    %v2630 = vpack.c.b16 %v2158, %v2150
    %v2631 = vpack.c.b16 %v2159, %v2151
    %v2632 = vpack.c.b16 %v2160, %v2152
    %v2633 = vpack.c.b16 %v2169, %v2161
    %v2634 = vpack.c.b16 %v2170, %v2162
    %v2635 = vpack.c.b16 %v2171, %v2163
    %v2636 = vpack.c.b16 %v2172, %v2164
    %v2637 = vpack.c.b16 %v2173, %v2165
    %v2638 = vpack.c.b16 %v2174, %v2166
    %v2639 = vpack.c.b16 %v2175, %v2167
    %v2640 = vpack.c.b16 %v2176, %v2168
    %v2641 = vpack.c.b16 %v2185, %v2177
    %v2642 = vpack.c.b16 %v2186, %v2178
    %v2643 = vpack.c.b16 %v2187, %v2179
    %v2644 = vpack.c.b16 %v2188, %v2180
    %v2645 = vpack.c.b16 %v2189, %v2181
    %v2646 = vpack.c.b16 %v2190, %v2182
    %v2647 = vpack.c.b16 %v2191, %v2183
    %v2648 = vpack.c.b16 %v2192, %v2184
    %v2649 = vpack.c.b16 %v2201, %v2193
    %v2650 = vpack.c.b16 %v2202, %v2194
    %v2651 = vpack.c.b16 %v2203, %v2195
    %v2652 = vpack.c.b16 %v2204, %v2196
    %v2653 = vpack.c.b16 %v2205, %v2197
    %v2654 = vpack.c.b16 %v2206, %v2198
    %v2655 = vpack.c.b16 %v2207, %v2199
    %v2656 = vpack.c.b16 %v2208, %v2200
    %v2657 = vpack.c.b16 %v2217, %v2209
    %v2658 = vpack.c.b16 %v2218, %v2210
    %v2659 = vpack.c.b16 %v2219, %v2211
    %v2660 = vpack.c.b16 %v2220, %v2212
    %v2661 = vpack.c.b16 %v2221, %v2213
    %v2662 = vpack.c.b16 %v2222, %v2214
    %v2663 = vpack.c.b16 %v2223, %v2215
    %v2664 = vpack.c.b16 %v2224, %v2216
    %v2665 = vpack.c.b16 %v2233, %v2225
    %v2666 = vpack.c.b16 %v2234, %v2226
    %v2667 = vpack.c.b16 %v2235, %v2227
    %v2668 = vpack.c.b16 %v2236, %v2228
    %v2669 = vpack.c.b16 %v2237, %v2229
    %v2670 = vpack.c.b16 %v2238, %v2230
    %v2671 = vpack.c.b16 %v2239, %v2231
    %v2672 = vpack.c.b16 %v2240, %v2232
    %v2673 = vpack.c.b16 %v2249, %v2241
    %v2674 = vpack.c.b16 %v2250, %v2242
    %v2675 = vpack.c.b16 %v2251, %v2243
    %v2676 = vpack.c.b16 %v2252, %v2244
    %v2677 = vpack.c.b16 %v2253, %v2245
    %v2678 = vpack.c.b16 %v2254, %v2246
    %v2679 = vpack.c.b16 %v2255, %v2247
    %v2680 = vpack.c.b16 %v2256, %v2248
    %v2681 = vpack.c.b16 %v2265, %v2257
    %v2682 = vpack.c.b16 %v2266, %v2258
    %v2683 = vpack.c.b16 %v2267, %v2259
    %v2684 = vpack.c.b16 %v2268, %v2260
    %v2685 = vpack.c.b16 %v2269, %v2261
    %v2686 = vpack.c.b16 %v2270, %v2262
    %v2687 = vpack.c.b16 %v2271, %v2263
    %v2688 = vpack.c.b16 %v2272, %v2264
    %v2689 = vpack.c.b16 %v2281, %v2273
    %v2690 = vpack.c.b16 %v2282, %v2274
    %v2691 = vpack.c.b16 %v2283, %v2275
    %v2692 = vpack.c.b16 %v2284, %v2276
    %v2693 = vpack.c.b16 %v2285, %v2277
    %v2694 = vpack.c.b16 %v2286, %v2278
    %v2695 = vpack.c.b16 %v2287, %v2279
    %v2696 = vpack.c.b16 %v2288, %v2280
    %v2697 = vpack.c.b16 %v2297, %v2289
    %v2698 = vpack.c.b16 %v2298, %v2290
    %v2699 = vpack.c.b16 %v2299, %v2291
    %v2700 = vpack.c.b16 %v2300, %v2292
    %v2701 = vpack.c.b16 %v2301, %v2293
    %v2702 = vpack.c.b16 %v2302, %v2294
    %v2703 = vpack.c.b16 %v2303, %v2295
    %v2704 = vpack.c.b16 %v2304, %v2296
    %v2705 = vpack.c.b16 %v2313, %v2305
    %v2706 = vpack.c.b16 %v2314, %v2306
    %v2707 = vpack.c.b16 %v2315, %v2307
    %v2708 = vpack.c.b16 %v2316, %v2308
    %v2709 = vpack.c.b16 %v2317, %v2309
    %v2710 = vpack.c.b16 %v2318, %v2310
    %v2711 = vpack.c.b16 %v2319, %v2311
    %v2712 = vpack.c.b16 %v2320, %v2312
    %v2713 = vpack.c.b16 %v2329, %v2321
    %v2714 = vpack.c.b16 %v2330, %v2322
    %v2715 = vpack.c.b16 %v2331, %v2323
    %v2716 = vpack.c.b16 %v2332, %v2324
    %v2717 = vpack.c.b16 %v2333, %v2325
    %v2718 = vpack.c.b16 %v2334, %v2326
    %v2719 = vpack.c.b16 %v2335, %v2327
    %v2720 = vpack.c.b16 %v2336, %v2328
    %v2721 = vpack.c.b16 %v2345, %v2337
    %v2722 = vpack.c.b16 %v2346, %v2338
    %v2723 = vpack.c.b16 %v2347, %v2339
    %v2724 = vpack.c.b16 %v2348, %v2340
    %v2725 = vpack.c.b16 %v2349, %v2341
    %v2726 = vpack.c.b16 %v2350, %v2342
    %v2727 = vpack.c.b16 %v2351, %v2343
    %v2728 = vpack.c.b16 %v2352, %v2344
    %v2729 = vpack.c.b16 %v2361, %v2353
    %v2730 = vpack.c.b16 %v2362, %v2354
    %v2731 = vpack.c.b16 %v2363, %v2355
    %v2732 = vpack.c.b16 %v2364, %v2356
    %v2733 = vpack.c.b16 %v2365, %v2357
    %v2734 = vpack.c.b16 %v2366, %v2358
    %v2735 = vpack.c.b16 %v2367, %v2359
    %v2736 = vpack.c.b16 %v2368, %v2360
    %v2737 = vpack.c.b16 %v2377, %v2369
    %v2738 = vpack.c.b16 %v2378, %v2370
    %v2739 = vpack.c.b16 %v2379, %v2371
    %v2740 = vpack.c.b16 %v2380, %v2372
    %v2741 = vpack.c.b16 %v2381, %v2373
    %v2742 = vpack.c.b16 %v2382, %v2374
    %v2743 = vpack.c.b16 %v2383, %v2375
    %v2744 = vpack.c.b16 %v2384, %v2376
    %v2745 = vpack.c.b16 %v2393, %v2385
    %v2746 = vpack.c.b16 %v2394, %v2386
    %v2747 = vpack.c.b16 %v2395, %v2387
    %v2748 = vpack.c.b16 %v2396, %v2388
    %v2749 = vpack.c.b16 %v2397, %v2389
    %v2750 = vpack.c.b16 %v2398, %v2390
    %v2751 = vpack.c.b16 %v2399, %v2391
    %v2752 = vpack.c.b16 %v2400, %v2392
    %v2753 = vpack.c.b16 %v2409, %v2401
    %v2754 = vpack.c.b16 %v2410, %v2402
    %v2755 = vpack.c.b16 %v2411, %v2403
    %v2756 = vpack.c.b16 %v2412, %v2404
    %v2757 = vpack.c.b16 %v2413, %v2405
    %v2758 = vpack.c.b16 %v2414, %v2406
    %v2759 = vpack.c.b16 %v2415, %v2407
    %v2760 = vpack.c.b16 %v2416, %v2408
    %v2761 = vpack.c.b16 %v2425, %v2417
    %v2762 = vpack.c.b16 %v2426, %v2418
    %v2763 = vpack.c.b16 %v2427, %v2419
    %v2764 = vpack.c.b16 %v2428, %v2420
    %v2765 = vpack.c.b16 %v2429, %v2421
    %v2766 = vpack.c.b16 %v2430, %v2422
    %v2767 = vpack.c.b16 %v2431, %v2423
    %v2768 = vpack.c.b16 %v2432, %v2424
    %v2769 = vpack.c.b16 %v2441, %v2433
    %v2770 = vpack.c.b16 %v2442, %v2434
    %v2771 = vpack.c.b16 %v2443, %v2435
    %v2772 = vpack.c.b16 %v2444, %v2436
    %v2773 = vpack.c.b16 %v2445, %v2437
    %v2774 = vpack.c.b16 %v2446, %v2438
    %v2775 = vpack.c.b16 %v2447, %v2439
    %v2776 = vpack.c.b16 %v2448, %v2440
    %v2777 = vpack.c.b16 %v2457, %v2449
    %v2778 = vpack.c.b16 %v2458, %v2450
    %v2779 = vpack.c.b16 %v2459, %v2451
    %v2780 = vpack.c.b16 %v2460, %v2452
    %v2781 = vpack.c.b16 %v2461, %v2453
    %v2782 = vpack.c.b16 %v2462, %v2454
    %v2783 = vpack.c.b16 %v2463, %v2455
    %v2784 = vpack.c.b16 %v2464, %v2456
    %v2785 = vpack.c.b16 %v2473, %v2465
    %v2786 = vpack.c.b16 %v2474, %v2466
    %v2787 = vpack.c.b16 %v2475, %v2467
    %v2788 = vpack.c.b16 %v2476, %v2468
    %v2789 = vpack.c.b16 %v2477, %v2469
    %v2790 = vpack.c.b16 %v2478, %v2470
    %v2791 = vpack.c.b16 %v2479, %v2471
    %v2792 = vpack.c.b16 %v2480, %v2472
    %v2793 = vpack.c.b16 %v2489, %v2481
    %v2794 = vpack.c.b16 %v2490, %v2482
    %v2795 = vpack.c.b16 %v2491, %v2483
    %v2796 = vpack.c.b16 %v2492, %v2484
    %v2797 = vpack.c.b16 %v2493, %v2485
    %v2798 = vpack.c.b16 %v2494, %v2486
    %v2799 = vpack.c.b16 %v2495, %v2487
    %v2800 = vpack.c.b16 %v2496, %v2488
    %v2801 = vpack.c.b16 %v2505, %v2497
    %v2802 = vpack.c.b16 %v2506, %v2498
    %v2803 = vpack.c.b16 %v2507, %v2499
    %v2804 = vpack.c.b16 %v2508, %v2500
    %v2805 = vpack.c.b16 %v2509, %v2501
    %v2806 = vpack.c.b16 %v2510, %v2502
    %v2807 = vpack.c.b16 %v2511, %v2503
    %v2808 = vpack.c.b16 %v2512, %v2504
    %v2809 = vpack.c.b16 %v2521, %v2513
    %v2810 = vpack.c.b16 %v2522, %v2514
    %v2811 = vpack.c.b16 %v2523, %v2515
    %v2812 = vpack.c.b16 %v2524, %v2516
    %v2813 = vpack.c.b16 %v2525, %v2517
    %v2814 = vpack.c.b16 %v2526, %v2518
    %v2815 = vpack.c.b16 %v2527, %v2519
    %v2816 = vpack.c.b16 %v2528, %v2520
    %v2817 = vpack.c.b16 %v2537, %v2529
    %v2818 = vpack.c.b16 %v2538, %v2530
    %v2819 = vpack.c.b16 %v2539, %v2531
    %v2820 = vpack.c.b16 %v2540, %v2532
    %v2821 = vpack.c.b16 %v2541, %v2533
    %v2822 = vpack.c.b16 %v2542, %v2534
    %v2823 = vpack.c.b16 %v2543, %v2535
    %v2824 = vpack.c.b16 %v2544, %v2536
    %v2825 = vpack.c.b16 %v2553, %v2545
    %v2826 = vpack.c.b16 %v2554, %v2546
    %v2827 = vpack.c.b16 %v2555, %v2547
    %v2828 = vpack.c.b16 %v2556, %v2548
    %v2829 = vpack.c.b16 %v2557, %v2549
    %v2830 = vpack.c.b16 %v2558, %v2550
    %v2831 = vpack.c.b16 %v2559, %v2551
    %v2832 = vpack.c.b16 %v2560, %v2552
    %v2833 = vpack.c.b16 %v2569, %v2561
    %v2834 = vpack.c.b16 %v2570, %v2562
    %v2835 = vpack.c.b16 %v2571, %v2563
    %v2836 = vpack.c.b16 %v2572, %v2564
    %v2837 = vpack.c.b16 %v2573, %v2565
    %v2838 = vpack.c.b16 %v2574, %v2566
    %v2839 = vpack.c.b16 %v2575, %v2567
    %v2840 = vpack.c.b16 %v2576, %v2568
    %v2841 = vpack.c.b16 %v2585, %v2577
    %v2842 = vpack.c.b16 %v2586, %v2578
    %v2843 = vpack.c.b16 %v2587, %v2579
    %v2844 = vpack.c.b16 %v2588, %v2580
    %v2845 = vpack.c.b16 %v2589, %v2581
    %v2846 = vpack.c.b16 %v2590, %v2582
    %v2847 = vpack.c.b16 %v2591, %v2583
    %v2848 = vpack.c.b16 %v2592, %v2584
    %3105 = vmatpush.bf16.msra.mxu0 %v2649
    %3106 = vmatpush.bf16.msra.mxu0 %v2641
    %3107 = vmatpush.bf16.msra.mxu0 %v2633
    %3108 = vmatpush.bf16.msra.mxu0 %v2625
    %3109 = vmatpush.bf16.msra.mxu0 %v2617
    %3110 = vmatpush.bf16.msra.mxu0 %v2609
    %3111 = vmatpush.bf16.msra.mxu0 %v2601
    %3112 = vmatpush.bf16.msra.mxu0 %v2593
    %3113 = vmatmul.bf16.gmra.mxu0 %v1547
    %v3114 = vpop.f32.mrf.mxu0
    %v3115 = vadd.f32 %v1809, %v3114
    %v3116 = vpop.f32.mrf.mxu0
    %3117 = vdwg.mxu0
    %3118 = vmatpush.bf16.msra.mxu0 %v2713
    %3119 = vmatpush.bf16.msra.mxu0 %v2705
    %3120 = vmatpush.bf16.msra.mxu0 %v2697
    %3121 = vmatpush.bf16.msra.mxu0 %v2689
    %3122 = vmatpush.bf16.msra.mxu0 %v2681
    %3123 = vmatpush.bf16.msra.mxu0 %v2673
    %3124 = vmatpush.bf16.msra.mxu0 %v2665
    %3125 = vmatpush.bf16.msra.mxu0 %v2657
    %3126 = vmatmul.bf16.gmra.mxu0 %v1548
    %v3127 = vpop.f32.mrf.mxu0
    %v3128 = vadd.f32 %v3115, %v3127
    %v3129 = vpop.f32.mrf.mxu0
    %3130 = vdwg.mxu0
    %3131 = vmatpush.bf16.msra.mxu0 %v2777
    %3132 = vmatpush.bf16.msra.mxu0 %v2769
    %3133 = vmatpush.bf16.msra.mxu0 %v2761
    %3134 = vmatpush.bf16.msra.mxu0 %v2753
    %3135 = vmatpush.bf16.msra.mxu0 %v2745
    %3136 = vmatpush.bf16.msra.mxu0 %v2737
    %3137 = vmatpush.bf16.msra.mxu0 %v2729
    %3138 = vmatpush.bf16.msra.mxu0 %v2721
    %3139 = vmatmul.bf16.gmra.mxu0 %v1549
    %v3140 = vpop.f32.mrf.mxu0
    %v3141 = vadd.f32 %v3128, %v3140
    %v3142 = vpop.f32.mrf.mxu0
    %3143 = vdwg.mxu0
    %3144 = vmatpush.bf16.msra.mxu0 %v2841
    %3145 = vmatpush.bf16.msra.mxu0 %v2833
    %3146 = vmatpush.bf16.msra.mxu0 %v2825
    %3147 = vmatpush.bf16.msra.mxu0 %v2817
    %3148 = vmatpush.bf16.msra.mxu0 %v2809
    %3149 = vmatpush.bf16.msra.mxu0 %v2801
    %3150 = vmatpush.bf16.msra.mxu0 %v2793
    %3151 = vmatpush.bf16.msra.mxu0 %v2785
    %3152 = vmatmul.bf16.gmra.mxu0 %v1550
    %v3153 = vpop.f32.mrf.mxu0
    %v3154 = vadd.f32 %v3141, %v3153
    %v3155 = vpop.f32.mrf.mxu0
    %3156 = vdwg.mxu0
    %3157 = vmatpush.bf16.msra.mxu0 %v2650
    %3158 = vmatpush.bf16.msra.mxu0 %v2642
    %3159 = vmatpush.bf16.msra.mxu0 %v2634
    %3160 = vmatpush.bf16.msra.mxu0 %v2626
    %3161 = vmatpush.bf16.msra.mxu0 %v2618
    %3162 = vmatpush.bf16.msra.mxu0 %v2610
    %3163 = vmatpush.bf16.msra.mxu0 %v2602
    %3164 = vmatpush.bf16.msra.mxu0 %v2594
    %3165 = vmatmul.bf16.gmra.mxu0 %v1547
    %v3166 = vpop.f32.mrf.mxu0
    %v3167 = vadd.f32 %v1810, %v3166
    %v3168 = vpop.f32.mrf.mxu0
    %3169 = vdwg.mxu0
    %3170 = vmatpush.bf16.msra.mxu0 %v2714
    %3171 = vmatpush.bf16.msra.mxu0 %v2706
    %3172 = vmatpush.bf16.msra.mxu0 %v2698
    %3173 = vmatpush.bf16.msra.mxu0 %v2690
    %3174 = vmatpush.bf16.msra.mxu0 %v2682
    %3175 = vmatpush.bf16.msra.mxu0 %v2674
    %3176 = vmatpush.bf16.msra.mxu0 %v2666
    %3177 = vmatpush.bf16.msra.mxu0 %v2658
    %3178 = vmatmul.bf16.gmra.mxu0 %v1548
    %v3179 = vpop.f32.mrf.mxu0
    %v3180 = vadd.f32 %v3167, %v3179
    %v3181 = vpop.f32.mrf.mxu0
    %3182 = vdwg.mxu0
    %3183 = vmatpush.bf16.msra.mxu0 %v2778
    %3184 = vmatpush.bf16.msra.mxu0 %v2770
    %3185 = vmatpush.bf16.msra.mxu0 %v2762
    %3186 = vmatpush.bf16.msra.mxu0 %v2754
    %3187 = vmatpush.bf16.msra.mxu0 %v2746
    %3188 = vmatpush.bf16.msra.mxu0 %v2738
    %3189 = vmatpush.bf16.msra.mxu0 %v2730
    %3190 = vmatpush.bf16.msra.mxu0 %v2722
    %3191 = vmatmul.bf16.gmra.mxu0 %v1549
    %v3192 = vpop.f32.mrf.mxu0
    %v3193 = vadd.f32 %v3180, %v3192
    %v3194 = vpop.f32.mrf.mxu0
    %3195 = vdwg.mxu0
    %3196 = vmatpush.bf16.msra.mxu0 %v2842
    %3197 = vmatpush.bf16.msra.mxu0 %v2834
    %3198 = vmatpush.bf16.msra.mxu0 %v2826
    %3199 = vmatpush.bf16.msra.mxu0 %v2818
    %3200 = vmatpush.bf16.msra.mxu0 %v2810
    %3201 = vmatpush.bf16.msra.mxu0 %v2802
    %3202 = vmatpush.bf16.msra.mxu0 %v2794
    %3203 = vmatpush.bf16.msra.mxu0 %v2786
    %3204 = vmatmul.bf16.gmra.mxu0 %v1550
    %v3205 = vpop.f32.mrf.mxu0
    %v3206 = vadd.f32 %v3193, %v3205
    %v3207 = vpop.f32.mrf.mxu0
    %3208 = vdwg.mxu0
    %3209 = vmatpush.bf16.msra.mxu0 %v2651
    %3210 = vmatpush.bf16.msra.mxu0 %v2643
    %3211 = vmatpush.bf16.msra.mxu0 %v2635
    %3212 = vmatpush.bf16.msra.mxu0 %v2627
    %3213 = vmatpush.bf16.msra.mxu0 %v2619
    %3214 = vmatpush.bf16.msra.mxu0 %v2611
    %3215 = vmatpush.bf16.msra.mxu0 %v2603
    %3216 = vmatpush.bf16.msra.mxu0 %v2595
    %3217 = vmatmul.bf16.gmra.mxu0 %v1547
    %v3218 = vpop.f32.mrf.mxu0
    %v3219 = vadd.f32 %v1811, %v3218
    %v3220 = vpop.f32.mrf.mxu0
    %3221 = vdwg.mxu0
    %3222 = vmatpush.bf16.msra.mxu0 %v2715
    %3223 = vmatpush.bf16.msra.mxu0 %v2707
    %3224 = vmatpush.bf16.msra.mxu0 %v2699
    %3225 = vmatpush.bf16.msra.mxu0 %v2691
    %3226 = vmatpush.bf16.msra.mxu0 %v2683
    %3227 = vmatpush.bf16.msra.mxu0 %v2675
    %3228 = vmatpush.bf16.msra.mxu0 %v2667
    %3229 = vmatpush.bf16.msra.mxu0 %v2659
    %3230 = vmatmul.bf16.gmra.mxu0 %v1548
    %v3231 = vpop.f32.mrf.mxu0
    %v3232 = vadd.f32 %v3219, %v3231
    %v3233 = vpop.f32.mrf.mxu0
    %3234 = vdwg.mxu0
    %3235 = vmatpush.bf16.msra.mxu0 %v2779
    %3236 = vmatpush.bf16.msra.mxu0 %v2771
    %3237 = vmatpush.bf16.msra.mxu0 %v2763
    %3238 = vmatpush.bf16.msra.mxu0 %v2755
    %3239 = vmatpush.bf16.msra.mxu0 %v2747
    %3240 = vmatpush.bf16.msra.mxu0 %v2739
    %3241 = vmatpush.bf16.msra.mxu0 %v2731
    %3242 = vmatpush.bf16.msra.mxu0 %v2723
    %3243 = vmatmul.bf16.gmra.mxu0 %v1549
    %v3244 = vpop.f32.mrf.mxu0
    %v3245 = vadd.f32 %v3232, %v3244
    %v3246 = vpop.f32.mrf.mxu0
    %3247 = vdwg.mxu0
    %3248 = vmatpush.bf16.msra.mxu0 %v2843
    %3249 = vmatpush.bf16.msra.mxu0 %v2835
    %3250 = vmatpush.bf16.msra.mxu0 %v2827
    %3251 = vmatpush.bf16.msra.mxu0 %v2819
    %3252 = vmatpush.bf16.msra.mxu0 %v2811
    %3253 = vmatpush.bf16.msra.mxu0 %v2803
    %3254 = vmatpush.bf16.msra.mxu0 %v2795
    %3255 = vmatpush.bf16.msra.mxu0 %v2787
    %3256 = vmatmul.bf16.gmra.mxu0 %v1550
    %v3257 = vpop.f32.mrf.mxu0
    %v3258 = vadd.f32 %v3245, %v3257
    %v3259 = vpop.f32.mrf.mxu0
    %3260 = vdwg.mxu0
    %3261 = vmatpush.bf16.msra.mxu0 %v2652
    %3262 = vmatpush.bf16.msra.mxu0 %v2644
    %3263 = vmatpush.bf16.msra.mxu0 %v2636
    %3264 = vmatpush.bf16.msra.mxu0 %v2628
    %3265 = vmatpush.bf16.msra.mxu0 %v2620
    %3266 = vmatpush.bf16.msra.mxu0 %v2612
    %3267 = vmatpush.bf16.msra.mxu0 %v2604
    %3268 = vmatpush.bf16.msra.mxu0 %v2596
    %3269 = vmatmul.bf16.gmra.mxu0 %v1547
    %v3270 = vpop.f32.mrf.mxu0
    %v3271 = vadd.f32 %v1812, %v3270
    %v3272 = vpop.f32.mrf.mxu0
    %3273 = vdwg.mxu0
    %3274 = vmatpush.bf16.msra.mxu0 %v2716
    %3275 = vmatpush.bf16.msra.mxu0 %v2708
    %3276 = vmatpush.bf16.msra.mxu0 %v2700
    %3277 = vmatpush.bf16.msra.mxu0 %v2692
    %3278 = vmatpush.bf16.msra.mxu0 %v2684
    %3279 = vmatpush.bf16.msra.mxu0 %v2676
    %3280 = vmatpush.bf16.msra.mxu0 %v2668
    %3281 = vmatpush.bf16.msra.mxu0 %v2660
    %3282 = vmatmul.bf16.gmra.mxu0 %v1548
    %v3283 = vpop.f32.mrf.mxu0
    %v3284 = vadd.f32 %v3271, %v3283
    %v3285 = vpop.f32.mrf.mxu0
    %3286 = vdwg.mxu0
    %3287 = vmatpush.bf16.msra.mxu0 %v2780
    %3288 = vmatpush.bf16.msra.mxu0 %v2772
    %3289 = vmatpush.bf16.msra.mxu0 %v2764
    %3290 = vmatpush.bf16.msra.mxu0 %v2756
    %3291 = vmatpush.bf16.msra.mxu0 %v2748
    %3292 = vmatpush.bf16.msra.mxu0 %v2740
    %3293 = vmatpush.bf16.msra.mxu0 %v2732
    %3294 = vmatpush.bf16.msra.mxu0 %v2724
    %3295 = vmatmul.bf16.gmra.mxu0 %v1549
    %v3296 = vpop.f32.mrf.mxu0
    %v3297 = vadd.f32 %v3284, %v3296
    %v3298 = vpop.f32.mrf.mxu0
    %3299 = vdwg.mxu0
    %3300 = vmatpush.bf16.msra.mxu0 %v2844
    %3301 = vmatpush.bf16.msra.mxu0 %v2836
    %3302 = vmatpush.bf16.msra.mxu0 %v2828
    %3303 = vmatpush.bf16.msra.mxu0 %v2820
    %3304 = vmatpush.bf16.msra.mxu0 %v2812
    %3305 = vmatpush.bf16.msra.mxu0 %v2804
    %3306 = vmatpush.bf16.msra.mxu0 %v2796
    %3307 = vmatpush.bf16.msra.mxu0 %v2788
    %3308 = vmatmul.bf16.gmra.mxu0 %v1550
    %v3309 = vpop.f32.mrf.mxu0
    %v3310 = vadd.f32 %v3297, %v3309
    %v3311 = vpop.f32.mrf.mxu0
    %3312 = vdwg.mxu0
    %3313 = vmatpush.bf16.msra.mxu0 %v2653
    %3314 = vmatpush.bf16.msra.mxu0 %v2645
    %3315 = vmatpush.bf16.msra.mxu0 %v2637
    %3316 = vmatpush.bf16.msra.mxu0 %v2629
    %3317 = vmatpush.bf16.msra.mxu0 %v2621
    %3318 = vmatpush.bf16.msra.mxu0 %v2613
    %3319 = vmatpush.bf16.msra.mxu0 %v2605
    %3320 = vmatpush.bf16.msra.mxu0 %v2597
    %3321 = vmatmul.bf16.gmra.mxu0 %v1547
    %v3322 = vpop.f32.mrf.mxu0
    %v3323 = vadd.f32 %v1813, %v3322
    %v3324 = vpop.f32.mrf.mxu0
    %3325 = vdwg.mxu0
    %3326 = vmatpush.bf16.msra.mxu0 %v2717
    %3327 = vmatpush.bf16.msra.mxu0 %v2709
    %3328 = vmatpush.bf16.msra.mxu0 %v2701
    %3329 = vmatpush.bf16.msra.mxu0 %v2693
    %3330 = vmatpush.bf16.msra.mxu0 %v2685
    %3331 = vmatpush.bf16.msra.mxu0 %v2677
    %3332 = vmatpush.bf16.msra.mxu0 %v2669
    %3333 = vmatpush.bf16.msra.mxu0 %v2661
    %3334 = vmatmul.bf16.gmra.mxu0 %v1548
    %v3335 = vpop.f32.mrf.mxu0
    %v3336 = vadd.f32 %v3323, %v3335
    %v3337 = vpop.f32.mrf.mxu0
    %3338 = vdwg.mxu0
    %3339 = vmatpush.bf16.msra.mxu0 %v2781
    %3340 = vmatpush.bf16.msra.mxu0 %v2773
    %3341 = vmatpush.bf16.msra.mxu0 %v2765
    %3342 = vmatpush.bf16.msra.mxu0 %v2757
    %3343 = vmatpush.bf16.msra.mxu0 %v2749
    %3344 = vmatpush.bf16.msra.mxu0 %v2741
    %3345 = vmatpush.bf16.msra.mxu0 %v2733
    %3346 = vmatpush.bf16.msra.mxu0 %v2725
    %3347 = vmatmul.bf16.gmra.mxu0 %v1549
    %v3348 = vpop.f32.mrf.mxu0
    %v3349 = vadd.f32 %v3336, %v3348
    %v3350 = vpop.f32.mrf.mxu0
    %3351 = vdwg.mxu0
    %3352 = vmatpush.bf16.msra.mxu0 %v2845
    %3353 = vmatpush.bf16.msra.mxu0 %v2837
    %3354 = vmatpush.bf16.msra.mxu0 %v2829
    %3355 = vmatpush.bf16.msra.mxu0 %v2821
    %3356 = vmatpush.bf16.msra.mxu0 %v2813
    %3357 = vmatpush.bf16.msra.mxu0 %v2805
    %3358 = vmatpush.bf16.msra.mxu0 %v2797
    %3359 = vmatpush.bf16.msra.mxu0 %v2789
    %3360 = vmatmul.bf16.gmra.mxu0 %v1550
    %v3361 = vpop.f32.mrf.mxu0
    %v3362 = vadd.f32 %v3349, %v3361
    %v3363 = vpop.f32.mrf.mxu0
    %3364 = vdwg.mxu0
    %3365 = vmatpush.bf16.msra.mxu0 %v2654
    %3366 = vmatpush.bf16.msra.mxu0 %v2646
    %3367 = vmatpush.bf16.msra.mxu0 %v2638
    %3368 = vmatpush.bf16.msra.mxu0 %v2630
    %3369 = vmatpush.bf16.msra.mxu0 %v2622
    %3370 = vmatpush.bf16.msra.mxu0 %v2614
    %3371 = vmatpush.bf16.msra.mxu0 %v2606
    %3372 = vmatpush.bf16.msra.mxu0 %v2598
    %3373 = vmatmul.bf16.gmra.mxu0 %v1547
    %v3374 = vpop.f32.mrf.mxu0
    %v3375 = vadd.f32 %v1814, %v3374
    %v3376 = vpop.f32.mrf.mxu0
    %3377 = vdwg.mxu0
    %3378 = vmatpush.bf16.msra.mxu0 %v2718
    %3379 = vmatpush.bf16.msra.mxu0 %v2710
    %3380 = vmatpush.bf16.msra.mxu0 %v2702
    %3381 = vmatpush.bf16.msra.mxu0 %v2694
    %3382 = vmatpush.bf16.msra.mxu0 %v2686
    %3383 = vmatpush.bf16.msra.mxu0 %v2678
    %3384 = vmatpush.bf16.msra.mxu0 %v2670
    %3385 = vmatpush.bf16.msra.mxu0 %v2662
    %3386 = vmatmul.bf16.gmra.mxu0 %v1548
    %v3387 = vpop.f32.mrf.mxu0
    %v3388 = vadd.f32 %v3375, %v3387
    %v3389 = vpop.f32.mrf.mxu0
    %3390 = vdwg.mxu0
    %3391 = vmatpush.bf16.msra.mxu0 %v2782
    %3392 = vmatpush.bf16.msra.mxu0 %v2774
    %3393 = vmatpush.bf16.msra.mxu0 %v2766
    %3394 = vmatpush.bf16.msra.mxu0 %v2758
    %3395 = vmatpush.bf16.msra.mxu0 %v2750
    %3396 = vmatpush.bf16.msra.mxu0 %v2742
    %3397 = vmatpush.bf16.msra.mxu0 %v2734
    %3398 = vmatpush.bf16.msra.mxu0 %v2726
    %3399 = vmatmul.bf16.gmra.mxu0 %v1549
    %v3400 = vpop.f32.mrf.mxu0
    %v3401 = vadd.f32 %v3388, %v3400
    %v3402 = vpop.f32.mrf.mxu0
    %3403 = vdwg.mxu0
    %3404 = vmatpush.bf16.msra.mxu0 %v2846
    %3405 = vmatpush.bf16.msra.mxu0 %v2838
    %3406 = vmatpush.bf16.msra.mxu0 %v2830
    %3407 = vmatpush.bf16.msra.mxu0 %v2822
    %3408 = vmatpush.bf16.msra.mxu0 %v2814
    %3409 = vmatpush.bf16.msra.mxu0 %v2806
    %3410 = vmatpush.bf16.msra.mxu0 %v2798
    %3411 = vmatpush.bf16.msra.mxu0 %v2790
    %3412 = vmatmul.bf16.gmra.mxu0 %v1550
    %v3413 = vpop.f32.mrf.mxu0
    %v3414 = vadd.f32 %v3401, %v3413
    %v3415 = vpop.f32.mrf.mxu0
    %3416 = vdwg.mxu0
    %3417 = vmatpush.bf16.msra.mxu0 %v2655
    %3418 = vmatpush.bf16.msra.mxu0 %v2647
    %3419 = vmatpush.bf16.msra.mxu0 %v2639
    %3420 = vmatpush.bf16.msra.mxu0 %v2631
    %3421 = vmatpush.bf16.msra.mxu0 %v2623
    %3422 = vmatpush.bf16.msra.mxu0 %v2615
    %3423 = vmatpush.bf16.msra.mxu0 %v2607
    %3424 = vmatpush.bf16.msra.mxu0 %v2599
    %3425 = vmatmul.bf16.gmra.mxu0 %v1547
    %v3426 = vpop.f32.mrf.mxu0
    %v3427 = vadd.f32 %v1815, %v3426
    %v3428 = vpop.f32.mrf.mxu0
    %3429 = vdwg.mxu0
    %3430 = vmatpush.bf16.msra.mxu0 %v2719
    %3431 = vmatpush.bf16.msra.mxu0 %v2711
    %3432 = vmatpush.bf16.msra.mxu0 %v2703
    %3433 = vmatpush.bf16.msra.mxu0 %v2695
    %3434 = vmatpush.bf16.msra.mxu0 %v2687
    %3435 = vmatpush.bf16.msra.mxu0 %v2679
    %3436 = vmatpush.bf16.msra.mxu0 %v2671
    %3437 = vmatpush.bf16.msra.mxu0 %v2663
    %3438 = vmatmul.bf16.gmra.mxu0 %v1548
    %v3439 = vpop.f32.mrf.mxu0
    %v3440 = vadd.f32 %v3427, %v3439
    %v3441 = vpop.f32.mrf.mxu0
    %3442 = vdwg.mxu0
    %3443 = vmatpush.bf16.msra.mxu0 %v2783
    %3444 = vmatpush.bf16.msra.mxu0 %v2775
    %3445 = vmatpush.bf16.msra.mxu0 %v2767
    %3446 = vmatpush.bf16.msra.mxu0 %v2759
    %3447 = vmatpush.bf16.msra.mxu0 %v2751
    %3448 = vmatpush.bf16.msra.mxu0 %v2743
    %3449 = vmatpush.bf16.msra.mxu0 %v2735
    %3450 = vmatpush.bf16.msra.mxu0 %v2727
    %3451 = vmatmul.bf16.gmra.mxu0 %v1549
    %v3452 = vpop.f32.mrf.mxu0
    %v3453 = vadd.f32 %v3440, %v3452
    %v3454 = vpop.f32.mrf.mxu0
    %3455 = vdwg.mxu0
    %3456 = vmatpush.bf16.msra.mxu0 %v2847
    %3457 = vmatpush.bf16.msra.mxu0 %v2839
    %3458 = vmatpush.bf16.msra.mxu0 %v2831
    %3459 = vmatpush.bf16.msra.mxu0 %v2823
    %3460 = vmatpush.bf16.msra.mxu0 %v2815
    %3461 = vmatpush.bf16.msra.mxu0 %v2807
    %3462 = vmatpush.bf16.msra.mxu0 %v2799
    %3463 = vmatpush.bf16.msra.mxu0 %v2791
    %3464 = vmatmul.bf16.gmra.mxu0 %v1550
    %v3465 = vpop.f32.mrf.mxu0
    %v3466 = vadd.f32 %v3453, %v3465
    %v3467 = vpop.f32.mrf.mxu0
    %3468 = vdwg.mxu0
    %3469 = vmatpush.bf16.msra.mxu0 %v2656
    %3470 = vmatpush.bf16.msra.mxu0 %v2648
    %3471 = vmatpush.bf16.msra.mxu0 %v2640
    %3472 = vmatpush.bf16.msra.mxu0 %v2632
    %3473 = vmatpush.bf16.msra.mxu0 %v2624
    %3474 = vmatpush.bf16.msra.mxu0 %v2616
    %3475 = vmatpush.bf16.msra.mxu0 %v2608
    %3476 = vmatpush.bf16.msra.mxu0 %v2600
    %3477 = vmatmul.bf16.gmra.mxu0 %v1547
    %v3478 = vpop.f32.mrf.mxu0
    %v3479 = vadd.f32 %v1816, %v3478
    %v3480 = vpop.f32.mrf.mxu0
    %3481 = vdwg.mxu0
    %3482 = vmatpush.bf16.msra.mxu0 %v2720
    %3483 = vmatpush.bf16.msra.mxu0 %v2712
    %3484 = vmatpush.bf16.msra.mxu0 %v2704
    %3485 = vmatpush.bf16.msra.mxu0 %v2696
    %3486 = vmatpush.bf16.msra.mxu0 %v2688
    %3487 = vmatpush.bf16.msra.mxu0 %v2680
    %3488 = vmatpush.bf16.msra.mxu0 %v2672
    %3489 = vmatpush.bf16.msra.mxu0 %v2664
    %3490 = vmatmul.bf16.gmra.mxu0 %v1548
    %v3491 = vpop.f32.mrf.mxu0
    %v3492 = vadd.f32 %v3479, %v3491
    %v3493 = vpop.f32.mrf.mxu0
    %3494 = vdwg.mxu0
    %3495 = vmatpush.bf16.msra.mxu0 %v2784
    %3496 = vmatpush.bf16.msra.mxu0 %v2776
    %3497 = vmatpush.bf16.msra.mxu0 %v2768
    %3498 = vmatpush.bf16.msra.mxu0 %v2760
    %3499 = vmatpush.bf16.msra.mxu0 %v2752
    %3500 = vmatpush.bf16.msra.mxu0 %v2744
    %3501 = vmatpush.bf16.msra.mxu0 %v2736
    %3502 = vmatpush.bf16.msra.mxu0 %v2728
    %3503 = vmatmul.bf16.gmra.mxu0 %v1549
    %v3504 = vpop.f32.mrf.mxu0
    %v3505 = vadd.f32 %v3492, %v3504
    %v3506 = vpop.f32.mrf.mxu0
    %3507 = vdwg.mxu0
    %3508 = vmatpush.bf16.msra.mxu0 %v2848
    %3509 = vmatpush.bf16.msra.mxu0 %v2840
    %3510 = vmatpush.bf16.msra.mxu0 %v2832
    %3511 = vmatpush.bf16.msra.mxu0 %v2824
    %3512 = vmatpush.bf16.msra.mxu0 %v2816
    %3513 = vmatpush.bf16.msra.mxu0 %v2808
    %3514 = vmatpush.bf16.msra.mxu0 %v2800
    %3515 = vmatpush.bf16.msra.mxu0 %v2792
    %3516 = vmatmul.bf16.gmra.mxu0 %v1550
    %v3517 = vpop.f32.mrf.mxu0
    %v3518 = vadd.f32 %v3505, %v3517
    %v3519 = vpop.f32.mrf.mxu0
    %3520 = vdwg.mxu0
    %v3521 = vtanh.pop %v3154
    %v3522 = vtanh.pop %v3206
    %v3523 = vtanh.pop %v3258
    %v3524 = vtanh.pop %v3310
    %v3525 = vtanh.pop %v3362
    %v3526 = vtanh.pop %v3414
    %v3527 = vtanh.pop %v3466
    %v3528 = vtanh.pop %v3518
    %3529 = vst [vmem:[#allocation19] sm:$0xff] %v3521
    %3530 = vst [vmem:[#allocation19 + $0x8] sm:$0xff] %v3522
    %3531 = vst [vmem:[#allocation19 + $0x10] sm:$0xff] %v3523
    %3532 = vst [vmem:[#allocation19 + $0x18] sm:$0xff] %v3524
    %3533 = vst [vmem:[#allocation19 + $0x20] sm:$0xff] %v3525
    %3534 = vst [vmem:[#allocation19 + $0x28] sm:$0xff] %v3526
    %3535 = vst [vmem:[#allocation19 + $0x30] sm:$0xff] %v3527
    %3536 = vst [vmem:[#allocation19 + $0x38] sm:$0xff] %v3528
    %v3537 = vpack.c.bf16 %v1545, %v1545
    %v3538 = vpack.c.bf16 %v1546, %v1546
    %v3539 = vld [vmem:[#allocation16] sm:$0xf]
    %v3540 = vld [vmem:[#allocation16 + $0x4] sm:$0xf]
    %v3541 = vld [vmem:[#allocation16 + $0x8] sm:$0xf]
    %v3542 = vld [vmem:[#allocation16 + $0xc] sm:$0xf]
    %v3543 = vld [vmem:[#allocation16 + $0x10] sm:$0xf]
    %v3544 = vld [vmem:[#allocation16 + $0x14] sm:$0xf]
    %v3545 = vld [vmem:[#allocation16 + $0x18] sm:$0xf]
    %v3546 = vld [vmem:[#allocation16 + $0x1c] sm:$0xf]
    %v3547 = vld [vmem:[#allocation16 + $0x20] sm:$0xf]
    %v3548 = vld [vmem:[#allocation16 + $0x24] sm:$0xf]
    %v3549 = vld [vmem:[#allocation16 + $0x28] sm:$0xf]
    %v3550 = vld [vmem:[#allocation16 + $0x2c] sm:$0xf]
    %v3551 = vld [vmem:[#allocation16 + $0x30] sm:$0xf]
    %v3552 = vld [vmem:[#allocation16 + $0x34] sm:$0xf]
    %v3553 = vld [vmem:[#allocation16 + $0x38] sm:$0xf]
    %v3554 = vld [vmem:[#allocation16 + $0x3c] sm:$0xf]
    %v3555 = vld [vmem:[#allocation16 + $0x40] sm:$0xf]
    %v3556 = vld [vmem:[#allocation16 + $0x44] sm:$0xf]
    %v3557 = vld [vmem:[#allocation16 + $0x48] sm:$0xf]
    %v3558 = vld [vmem:[#allocation16 + $0x4c] sm:$0xf]
    %v3559 = vld [vmem:[#allocation16 + $0x50] sm:$0xf]
    %v3560 = vld [vmem:[#allocation16 + $0x54] sm:$0xf]
    %v3561 = vld [vmem:[#allocation16 + $0x58] sm:$0xf]
    %v3562 = vld [vmem:[#allocation16 + $0x5c] sm:$0xf]
    %v3563 = vld [vmem:[#allocation16 + $0x60] sm:$0xf]
    %v3564 = vld [vmem:[#allocation16 + $0x64] sm:$0xf]
    %v3565 = vld [vmem:[#allocation16 + $0x68] sm:$0xf]
    %v3566 = vld [vmem:[#allocation16 + $0x6c] sm:$0xf]
    %v3567 = vld [vmem:[#allocation16 + $0x70] sm:$0xf]
    %v3568 = vld [vmem:[#allocation16 + $0x74] sm:$0xf]
    %v3569 = vld [vmem:[#allocation16 + $0x78] sm:$0xf]
    %v3570 = vld [vmem:[#allocation16 + $0x7c] sm:$0xf]
    %v3571 = vld [vmem:[%s10] sm:$0x1]
    %v3573 = vperm.slane %v3571, 0
    %v3607 = vunpack.c.l.b16 %v3539
    %v3608 = vunpack.c.l.b16 %v3540
    %v3609 = vunpack.c.l.b16 %v3541
    %v3610 = vunpack.c.l.b16 %v3542
    %v3611 = vunpack.c.l.b16 %v3543
    %v3612 = vunpack.c.l.b16 %v3544
    %v3613 = vunpack.c.l.b16 %v3545
    %v3614 = vunpack.c.l.b16 %v3546
    %v3615 = vunpack.c.l.b16 %v3547
    %v3616 = vunpack.c.l.b16 %v3548
    %v3617 = vunpack.c.l.b16 %v3549
    %v3618 = vunpack.c.l.b16 %v3550
    %v3619 = vunpack.c.l.b16 %v3551
    %v3620 = vunpack.c.l.b16 %v3552
    %v3621 = vunpack.c.l.b16 %v3553
    %v3622 = vunpack.c.l.b16 %v3554
    %v3623 = vunpack.c.l.b16 %v3555
    %v3624 = vunpack.c.l.b16 %v3556
    %v3625 = vunpack.c.l.b16 %v3557
    %v3626 = vunpack.c.l.b16 %v3558
    %v3627 = vunpack.c.l.b16 %v3559
    %v3628 = vunpack.c.l.b16 %v3560
    %v3629 = vunpack.c.l.b16 %v3561
    %v3630 = vunpack.c.l.b16 %v3562
    %v3631 = vunpack.c.l.b16 %v3563
    %v3632 = vunpack.c.l.b16 %v3564
    %v3633 = vunpack.c.l.b16 %v3565
    %v3634 = vunpack.c.l.b16 %v3566
    %v3635 = vunpack.c.l.b16 %v3567
    %v3636 = vunpack.c.l.b16 %v3568
    %v3637 = vunpack.c.l.b16 %v3569
    %v3638 = vunpack.c.l.b16 %v3570
    %v3639 = vpack.c.b16 %v3608, %v3607
    %v3640 = vpack.c.b16 %v3610, %v3609
    %v3641 = vpack.c.b16 %v3612, %v3611
    %v3642 = vpack.c.b16 %v3614, %v3613
    %v3643 = vpack.c.b16 %v3616, %v3615
    %v3644 = vpack.c.b16 %v3618, %v3617
    %v3645 = vpack.c.b16 %v3620, %v3619
    %v3646 = vpack.c.b16 %v3622, %v3621
    %v3647 = vpack.c.b16 %v3624, %v3623
    %v3648 = vpack.c.b16 %v3626, %v3625
    %v3649 = vpack.c.b16 %v3628, %v3627
    %v3650 = vpack.c.b16 %v3630, %v3629
    %v3651 = vpack.c.b16 %v3632, %v3631
    %v3652 = vpack.c.b16 %v3634, %v3633
    %v3653 = vpack.c.b16 %v3636, %v3635
    %v3654 = vpack.c.b16 %v3638, %v3637
    %3671 = vmatpush.bf16.msra.mxu0 %v3646
    %3672 = vmatpush.bf16.msra.mxu0 %v3645
    %3673 = vmatpush.bf16.msra.mxu0 %v3644
    %3674 = vmatpush.bf16.msra.mxu0 %v3643
    %3675 = vmatpush.bf16.msra.mxu0 %v3642
    %3676 = vmatpush.bf16.msra.mxu0 %v3641
    %3677 = vmatpush.bf16.msra.mxu0 %v3640
    %3678 = vmatpush.bf16.msra.mxu0 %v3639
    %3679 = vmatmul.bf16.gmra.mxu0 %v3537
    %v3680 = vpop.f32.mrf.mxu0
    %v3681 = vadd.f32 %v3573, %v3680
    %v3682 = vpop.f32.mrf.mxu0
    %3683 = vdwg.mxu0
    %3684 = vmatpush.bf16.msra.mxu0 %v3654
    %3685 = vmatpush.bf16.msra.mxu0 %v3653
    %3686 = vmatpush.bf16.msra.mxu0 %v3652
    %3687 = vmatpush.bf16.msra.mxu0 %v3651
    %3688 = vmatpush.bf16.msra.mxu0 %v3650
    %3689 = vmatpush.bf16.msra.mxu0 %v3649
    %3690 = vmatpush.bf16.msra.mxu0 %v3648
    %3691 = vmatpush.bf16.msra.mxu0 %v3647
    %3692 = vmatmul.bf16.gmra.mxu0 %v3538
    %v3693 = vpop.f32.mrf.mxu0
    %v3694 = vadd.f32 %v3681, %v3693
    %v3695 = vpop.f32.mrf.mxu0
    %3696 = vdwg.mxu0
    %v3697 = vmax.f32 %v3694, 0.0
    %v3698 = vpack.c.bf16 %v3697, %v3697
    %v3699 = vld [vmem:[#allocation17] sm:$0xf]
    %v3700 = vld [vmem:[#allocation17 + $0x4] sm:$0xf]
    %v3701 = vld [vmem:[#allocation17 + $0x8] sm:$0xf]
    %v3702 = vld [vmem:[#allocation17 + $0xc] sm:$0xf]
    %v3703 = vld [vmem:[#allocation17 + $0x10] sm:$0xf]
    %v3704 = vld [vmem:[#allocation17 + $0x14] sm:$0xf]
    %v3705 = vld [vmem:[#allocation17 + $0x18] sm:$0xf]
    %v3706 = vld [vmem:[#allocation17 + $0x1c] sm:$0xf]
    %v3707 = vld [vmem:[#allocation17 + $0x20] sm:$0xf]
    %v3708 = vld [vmem:[#allocation17 + $0x24] sm:$0xf]
    %v3709 = vld [vmem:[#allocation17 + $0x28] sm:$0xf]
    %v3710 = vld [vmem:[#allocation17 + $0x2c] sm:$0xf]
    %v3711 = vld [vmem:[#allocation17 + $0x30] sm:$0xf]
    %v3712 = vld [vmem:[#allocation17 + $0x34] sm:$0xf]
    %v3713 = vld [vmem:[#allocation17 + $0x38] sm:$0xf]
    %v3714 = vld [vmem:[#allocation17 + $0x3c] sm:$0xf]
    %v3715 = vld [vmem:[%s12] sm:$0x1]
    %v3717 = vperm.slane %v3715, 0
    %v3735 = vunpack.c.l.b16 %v3699
    %v3736 = vunpack.c.l.b16 %v3700
    %v3737 = vunpack.c.l.b16 %v3701
    %v3738 = vunpack.c.l.b16 %v3702
    %v3739 = vunpack.c.l.b16 %v3703
    %v3740 = vunpack.c.l.b16 %v3704
    %v3741 = vunpack.c.l.b16 %v3705
    %v3742 = vunpack.c.l.b16 %v3706
    %v3743 = vunpack.c.l.b16 %v3707
    %v3744 = vunpack.c.l.b16 %v3708
    %v3745 = vunpack.c.l.b16 %v3709
    %v3746 = vunpack.c.l.b16 %v3710
    %v3747 = vunpack.c.l.b16 %v3711
    %v3748 = vunpack.c.l.b16 %v3712
    %v3749 = vunpack.c.l.b16 %v3713
    %v3750 = vunpack.c.l.b16 %v3714
    %v3751 = vpack.c.b16 %v3736, %v3735
    %v3752 = vpack.c.b16 %v3738, %v3737
    %v3753 = vpack.c.b16 %v3740, %v3739
    %v3754 = vpack.c.b16 %v3742, %v3741
    %v3755 = vpack.c.b16 %v3744, %v3743
    %v3756 = vpack.c.b16 %v3746, %v3745
    %v3757 = vpack.c.b16 %v3748, %v3747
    %v3758 = vpack.c.b16 %v3750, %v3749
    %3767 = vmatpush.bf16.msra.mxu0 %v3758
    %3768 = vmatpush.bf16.msra.mxu0 %v3757
    %3769 = vmatpush.bf16.msra.mxu0 %v3756
    %3770 = vmatpush.bf16.msra.mxu0 %v3755
    %3771 = vmatpush.bf16.msra.mxu0 %v3754
    %3772 = vmatpush.bf16.msra.mxu0 %v3753
    %3773 = vmatpush.bf16.msra.mxu0 %v3752
    %3774 = vmatpush.bf16.msra.mxu0 %v3751
    %3775 = vmatmul.bf16.gmra.mxu0 %v3698
    %v3776 = vpop.f32.mrf.mxu0
    %v3777 = vadd.f32 %v3717, %v3776
    %v3778 = vpop.f32.mrf.mxu0
    %3779 = vdwg.mxu0
    %3780 = vst [vmem:[#allocation20] sm:$0xff] %v3777
    // Predicated region
    $region94: #{tpu_custom_call.1} parent=1 // pred_check
      _
    $region95: #{tpu_custom_call.1} parent=1 // pred_check_branch
      %3782 = sbr.rel (0) target = $region97
    $region96: #{tpu_custom_call.1} parent=1 // pred_region
      %3784 = vsyncadd [#allocation4], 0
      %s3786 = sshll.u32 [#allocation19], 4
      %s3787 = int_to_ptr.vmem [resolvable:$true] %s3786
      %s3788 = sshll.u32 %s13, 4
      %s3789 = int_to_ptr.hbm [resolvable:$true] %s3788
      %3791 = dma.vmem_to_hbm [thread:$0]  %s3787, 1024, %s3789, [#allocation4]
    $region97: #{tpu_custom_call.1} parent=1 // pred_fallthru
      _
    // Predicated region
    $region98: #{tpu_custom_call.1} parent=1 // pred_check
      _
    $region99: #{tpu_custom_call.1} parent=1 // pred_check_branch
      %3793 = sbr.rel (0) target = $region101
    $region100: #{tpu_custom_call.1} parent=1 // pred_region
      %3795 = vsyncadd [#allocation21], 0
      %s3797 = sshll.u32 [#allocation20], 4
      %s3798 = int_to_ptr.vmem [resolvable:$true] %s3797
      %s3799 = sshll.u32 %s14, 4
      %s3800 = int_to_ptr.hbm [resolvable:$true] %s3799
      %3802 = dma.vmem_to_hbm [thread:$0]  %s3798, 128, %s3800, [#allocation21]
    $region101: #{tpu_custom_call.1} parent=1 // pred_fallthru
      _
    // Predicated region
    $region102: #{tpu_custom_call.1} parent=1 // pred_check
      _
    $region103: #{tpu_custom_call.1} parent=1 // pred_check_branch
      %3804 = sbr.rel (0) target = $region105
    $region104: #{tpu_custom_call.1} parent=1 // pred_region
      %3806 = dma.done [#allocation4], 1024
    $region105: #{tpu_custom_call.1} parent=1 // pred_fallthru
      _
    // Predicated region
    $region106: #{tpu_custom_call.1} parent=1 // pred_check
      _
    $region107: #{tpu_custom_call.1} parent=1 // pred_check_branch
      %3808 = sbr.rel (0) target = $region109
    $region108: #{tpu_custom_call.1} parent=1 // pred_region
      %3810 = dma.done [#allocation21], 128
    $region109: #{tpu_custom_call.1} parent=1 // pred_fallthru
      _
    %3811 = vsyncpa [#allocation3], 1
    %3812 = vsyncpa [#allocation6], 1
    %3813 = vsyncpa [#allocation9], 1
    %3814 = vsyncpa [#allocation12], 1
    %3815 = vsyncpa [#allocation15], 1
    %3816 = vsyncpa [#allocation18], 1
    %3817 = vsyncpa [#allocation4], 1
    %3818 = vsyncpa [#allocation21], 1

</llo_original>
